<compile_context>
chip_gen: v6e
topology: v6e:2x2x1
jax: 0.10.0
libtpu: 0.0.40
codegen_flags: <defaults>
</compile_context>

<pallas_src>
import functools
import math

import jax
import jax.numpy as jnp
from jax.experimental import pallas as pl
from jax.experimental.pallas import tpu as pltpu


# ----------------------------------------------------------------------------
# in-kernel helpers (traced inside pallas kernels, f32 math)
# ----------------------------------------------------------------------------
def _ln(x, g, b):
    mu = jnp.mean(x, axis=-1, keepdims=True)
    xc = x - mu
    var = jnp.mean(xc * xc, axis=-1, keepdims=True)
    return xc * jax.lax.rsqrt(var + 1e-5) * g + b


def _mha_heads(q, k, v, n_heads):
    """q:(Lq,D) k,v:(Lk,D) f32 -> (Lq,D) f32. bf16 MXU operands, f32 softmax."""
    _, D = q.shape
    Dh = D // n_heads
    scale = 1.0 / math.sqrt(Dh)
    outs = []
    for h in range(n_heads):
        sl = slice(h * Dh, (h + 1) * Dh)
        qh = q[:, sl].astype(jnp.bfloat16)
        kh = k[:, sl].astype(jnp.bfloat16)
        vh = v[:, sl].astype(jnp.bfloat16)
        s = jax.lax.dot_general(qh, kh, (((1,), (1,)), ((), ())),
                                preferred_element_type=jnp.float32) * scale
        s = s - jnp.max(s, axis=-1, keepdims=True)
        p = jnp.exp(s)
        p = p * pl.reciprocal(jnp.sum(p, axis=-1, keepdims=True), approx=True)
        outs.append(jnp.dot(p.astype(jnp.bfloat16), vh,
                            preferred_element_type=jnp.float32))
    return jnp.concatenate(outs, axis=-1)


def _bdot(x_f32, w_bf16_ref, b_f32_ref=None):
    y = jnp.dot(x_f32.astype(jnp.bfloat16), w_bf16_ref[...],
                preferred_element_type=jnp.float32)
    if b_f32_ref is not None:
        y = y + b_f32_ref[...]
    return y


# ----------------------------------------------------------------------------
# fused stem: backbone stand-in linear + 1x1 conv + positional add
# ----------------------------------------------------------------------------
def _stem_kernel(feats_ref, bw_ref, bb_ref, cw_ref, cb_ref, pos_ref, o_ref):
    f = jnp.maximum(_bdot(feats_ref[...], bw_ref, bb_ref), 0.0)   # (HW, 2048)
    h = _bdot(f, cw_ref, cb_ref)                                  # (HW, D)
    o_ref[...] = pos_ref[...] + h


def stem(feats, bw, bb, cw, cb, pos):
    HW = feats.shape[0]
    D = cw.shape[1]
    return pl.pallas_call(
        _stem_kernel,
        out_shape=jax.ShapeDtypeStruct((HW, D), jnp.float32),
    )(feats, bw, bb, cw, cb, pos)


# ----------------------------------------------------------------------------
# fused encoder layer (post-norm, eval mode -> dropout == identity)
# ----------------------------------------------------------------------------
def _enc_layer_kernel(src_ref, wqkv_ref, bqkv_ref, wo_ref, bo_ref,
                      ln1g_ref, ln1b_ref,
                      w1_ref, b1_ref, w2_ref, b2_ref,
                      ln2g_ref, ln2b_ref,
                      o_ref, x_scr, acc_scr, *, n_heads):
    kf = pl.program_id(0)
    nf = pl.num_programs(0)

    @pl.when(kf == 0)
    def _():
        src = src_ref[...]                                        # (L, D) f32
        D = src.shape[-1]
        qkv = _bdot(src, wqkv_ref, bqkv_ref)                      # (L, 3D)
        attn = _mha_heads(qkv[:, :D], qkv[:, D:2 * D], qkv[:, 2 * D:], n_heads)
        sa = _bdot(attn, wo_ref, bo_ref)
        x_scr[...] = _ln(src + sa, ln1g_ref[...], ln1b_ref[...])
        acc_scr[...] = jnp.zeros_like(acc_scr)

    # FFN chunk over dim_ff (weight DMA pipelines with MXU across the grid)
    x = x_scr[...]
    hff = jnp.maximum(_bdot(x, w1_ref, b1_ref), 0.0)              # (L, tf)
    acc_scr[...] += jnp.dot(hff.astype(jnp.bfloat16), w2_ref[...],
                            preferred_element_type=jnp.float32)

    @pl.when(kf == nf - 1)
    def _():
        y = _ln(x_scr[...] + acc_scr[...] + b2_ref[...],
                ln2g_ref[...], ln2b_ref[...])
        o_ref[...] = y.astype(o_ref.dtype)


def encoder_layer(src, p, n_heads, ffn_tile=512):
    L, D = src.shape
    F = p["w1"].shape[1]
    assert F % ffn_tile == 0
    KF = F // ffn_tile
    full = lambda shape: pl.BlockSpec(shape, lambda k: (0, 0))
    return pl.pallas_call(
        functools.partial(_enc_layer_kernel, n_heads=n_heads),
        out_shape=jax.ShapeDtypeStruct((L, D), jnp.float32),
        grid=(KF,),
        in_specs=[
            full((L, D)),                                    # src
            full((D, 3 * D)), full((1, 3 * D)),              # wqkv, bqkv
            full((D, D)), full((1, D)),                      # wo, bo
            full((1, D)), full((1, D)),                      # ln1 g, b
            pl.BlockSpec((D, ffn_tile), lambda k: (0, k)),   # w1 chunk
            pl.BlockSpec((1, ffn_tile), lambda k: (0, k)),   # b1 chunk
            pl.BlockSpec((ffn_tile, D), lambda k: (k, 0)),   # w2 chunk
            full((1, D)),                                    # b2
            full((1, D)), full((1, D)),                      # ln2 g, b
        ],
        out_specs=pl.BlockSpec((L, D), lambda k: (0, 0)),
        scratch_shapes=[pltpu.VMEM((L, D), jnp.float32),
                        pltpu.VMEM((L, D), jnp.float32)],
        compiler_params=pltpu.CompilerParams(
            dimension_semantics=("arbitrary",)),
    )(src, p["wqkv"], p["bqkv"], p["wo"], p["bo"],
      p["ln1_g"], p["ln1_b"],
      p["w1"], p["b1"], p["w2"], p["b2"],
      p["ln2_g"], p["ln2_b"])


# ----------------------------------------------------------------------------
# fused decoder layer (self-attn + cross-attn + FFN, post-norm)
# ----------------------------------------------------------------------------
def _dec_layer_kernel(tgt_ref, mem_ref,
                      sa_wqkv_ref, sa_bqkv_ref, sa_wo_ref, sa_bo_ref,
                      ln1g_ref, ln1b_ref,
                      ca_wq_ref, ca_bq_ref, ca_wkv_ref, ca_bkv_ref,
                      ca_wo_ref, ca_bo_ref,
                      ln2g_ref, ln2b_ref,
                      w1_ref, b1_ref, w2_ref, b2_ref,
                      ln3g_ref, ln3b_ref,
                      o_ref, x_scr, acc_scr, *, n_heads):
    kf = pl.program_id(0)
    nf = pl.num_programs(0)

    @pl.when(kf == 0)
    def _():
        tgt = tgt_ref[...]                                        # (T, D)
        mem = mem_ref[...]                                        # (S, D)
        D = tgt.shape[-1]
        # self-attention (fused QKV projection)
        qkv = _bdot(tgt, sa_wqkv_ref, sa_bqkv_ref)
        sa = _mha_heads(qkv[:, :D], qkv[:, D:2 * D], qkv[:, 2 * D:], n_heads)
        sa = _bdot(sa, sa_wo_ref, sa_bo_ref)
        x = _ln(tgt + sa, ln1g_ref[...], ln1b_ref[...])
        # cross-attention (fused KV projection of the memory)
        q = _bdot(x, ca_wq_ref, ca_bq_ref)
        kv = _bdot(mem, ca_wkv_ref, ca_bkv_ref)
        ca = _mha_heads(q, kv[:, :D], kv[:, D:], n_heads)
        ca = _bdot(ca, ca_wo_ref, ca_bo_ref)
        x_scr[...] = _ln(x + ca, ln2g_ref[...], ln2b_ref[...])
        acc_scr[...] = jnp.zeros_like(acc_scr)

    x = x_scr[...]
    hff = jnp.maximum(_bdot(x, w1_ref, b1_ref), 0.0)
    acc_scr[...] += jnp.dot(hff.astype(jnp.bfloat16), w2_ref[...],
                            preferred_element_type=jnp.float32)

    @pl.when(kf == nf - 1)
    def _():
        y = _ln(x_scr[...] + acc_scr[...] + b2_ref[...],
                ln3g_ref[...], ln3b_ref[...])
        o_ref[...] = y.astype(o_ref.dtype)


def decoder_layer(tgt, memory, p, n_heads, ffn_tile=512):
    T, D = tgt.shape
    S = memory.shape[0]
    F = p["w1"].shape[1]
    assert F % ffn_tile == 0
    KF = F // ffn_tile
    full = lambda shape: pl.BlockSpec(shape, lambda k: (0, 0))
    return pl.pallas_call(
        functools.partial(_dec_layer_kernel, n_heads=n_heads),
        out_shape=jax.ShapeDtypeStruct((T, D), jnp.float32),
        grid=(KF,),
        in_specs=[
            full((T, D)), full((S, D)),                          # tgt, memory
            full((D, 3 * D)), full((1, 3 * D)),                  # sa_wqkv, sa_bqkv
            full((D, D)), full((1, D)),                          # sa_wo, sa_bo
            full((1, D)), full((1, D)),                          # ln1 g, b
            full((D, D)), full((1, D)),                          # ca_wq, ca_bq
            full((D, 2 * D)), full((1, 2 * D)),                  # ca_wkv, ca_bkv
            full((D, D)), full((1, D)),                          # ca_wo, ca_bo
            full((1, D)), full((1, D)),                          # ln2 g, b
            pl.BlockSpec((D, ffn_tile), lambda k: (0, k)),       # w1 chunk
            pl.BlockSpec((1, ffn_tile), lambda k: (0, k)),       # b1 chunk
            pl.BlockSpec((ffn_tile, D), lambda k: (k, 0)),       # w2 chunk
            full((1, D)),                                        # b2
            full((1, D)), full((1, D)),                          # ln3 g, b
        ],
        out_specs=pl.BlockSpec((T, D), lambda k: (0, 0)),
        scratch_shapes=[pltpu.VMEM((T, D), jnp.float32),
                        pltpu.VMEM((T, D), jnp.float32)],
        compiler_params=pltpu.CompilerParams(
            dimension_semantics=("arbitrary",)),
    )(tgt, memory,
      p["sa_wqkv"], p["sa_bqkv"], p["sa_wo"], p["sa_bo"],
      p["ln1_g"], p["ln1_b"],
      p["ca_wq"], p["ca_bq"], p["ca_wkv"], p["ca_bkv"],
      p["ca_wo"], p["ca_bo"],
      p["ln2_g"], p["ln2_b"],
      p["w1"], p["b1"], p["w2"], p["b2"],
      p["ln3_g"], p["ln3_b"])


# ----------------------------------------------------------------------------
# standalone LayerNorm (encoder final norm) and fused heads (dec norm + cls/bbox)
# ----------------------------------------------------------------------------
def _ln_kernel(x_ref, g_ref, b_ref, o_ref):
    o_ref[...] = _ln(x_ref[...], g_ref[...], b_ref[...])


def layer_norm(x, g, b):
    return pl.pallas_call(
        _ln_kernel, out_shape=jax.ShapeDtypeStruct(x.shape, jnp.float32),
    )(x, g, b)


def _heads_kernel(x_ref, g_ref, b_ref, wc_ref, bc_ref, wb_ref, bb_ref,
                  logit_ref, box_ref):
    x = _ln(x_ref[...], g_ref[...], b_ref[...])       # final decoder LayerNorm
    logit_ref[...] = _bdot(x, wc_ref, bc_ref)
    box_ref[...] = jax.nn.sigmoid(_bdot(x, wb_ref, bb_ref))


def heads(x, g, b, wc, bc, wb, bb):
    T = x.shape[0]
    nc1 = wc.shape[1]
    return pl.pallas_call(
        _heads_kernel,
        out_shape=(jax.ShapeDtypeStruct((T, nc1), jnp.float32),
                   jax.ShapeDtypeStruct((T, 4), jnp.float32)),
    )(x, g, b, wc, bc, wb, bb)


# ----------------------------------------------------------------------------
# DETR forward
# ----------------------------------------------------------------------------
def detr_forward(params, x, *, hidden_dim, n_heads):
    B, C, Himg, Wimg = x.shape
    assert B == 1, "DETR demo forward (query_pos batch of 1) requires batch=1"
    Hf, Wf = Himg // 32, Wimg // 32

    # TODO(synk): pretrained ResNet50 backbone has no checkpoint here; replaced
    # by a deterministic stride-32 patch-embedding stand-in (8x8 avg-pool per
    # sub-block + fused Pallas linear to 2048 channels + ReLU).
    pooled = x.reshape(B, C, Hf, 4, 8, Wf, 4, 8).mean(axis=(4, 7))   # (B,C,Hf,4,Wf,4)
    feats = pooled.transpose(0, 2, 4, 1, 3, 5).reshape(Hf * Wf, C * 16)

    # positional embedding: cat(col over rows, row over cols)
    col = params["col_embed"][:Wf]                                   # (Wf, D/2)
    row = params["row_embed"][:Hf]                                   # (Hf, D/2)
    pos = jnp.concatenate(
        [jnp.broadcast_to(col[None, :, :], (Hf, Wf, hidden_dim // 2)),
         jnp.broadcast_to(row[:, None, :], (Hf, Wf, hidden_dim // 2))],
        axis=-1).reshape(Hf * Wf, hidden_dim)                        # (HW, D)

    # fused: backbone-standin linear + 1x1 conv (per-pixel linear) + pos add
    src = stem(feats, params["backbone_w"], params["backbone_b"],
               params["conv_w"], params["conv_b"], pos)              # (HW, D)
    tgt = params["query_pos"]                                        # (100, D)

    # encoder stack + final encoder LayerNorm (nn.Transformer default)
    for lp in params["enc_layers"]:
        src = encoder_layer(src, lp, n_heads)
    memory = layer_norm(src, params["enc_norm_g"], params["enc_norm_b"])

    # decoder stack; final decoder LayerNorm is fused into the heads kernel
    out = tgt
    for lp in params["dec_layers"]:
        out = decoder_layer(out, memory, lp, n_heads)

    logits, boxes = heads(out, params["dec_norm_g"], params["dec_norm_b"],
                          params["cls_w"], params["cls_b"],
                          params["bbox_w"], params["bbox_b"])

    # restore the (T, B=1, features) output shape of the PyTorch module
    return logits[:, None, :], boxes[:, None, :]


# ----------------------------------------------------------------------------
# Deterministic parameter init (shapes implied by the module's __init__).
# Weight matrices are stored in bf16 (MXU operands); biases / LN / embeddings f32.
# ----------------------------------------------------------------------------
def init_params(key, num_classes, hidden_dim, n_heads, num_encoder_layers,
                num_decoder_layers, dim_ff=2048, backbone_in=48,
                backbone_out=2048):
    keys = iter(jax.random.split(key, 256))
    D = hidden_dim

    def w(shape, scale=0.02):
        return (scale * jax.random.normal(next(keys), shape)).astype(jnp.bfloat16)

    zeros2 = lambda n: jnp.zeros((1, n), jnp.float32)
    ones2 = lambda n: jnp.ones((1, n), jnp.float32)

    def enc_p():
        return {"wqkv": w((D, 3 * D)), "bqkv": zeros2(3 * D),
                "wo": w((D, D)), "bo": zeros2(D),
                "ln1_g": ones2(D), "ln1_b": zeros2(D),
                "w1": w((D, dim_ff)), "b1": zeros2(dim_ff),
                "w2": w((dim_ff, D)), "b2": zeros2(D),
                "ln2_g": ones2(D), "ln2_b": zeros2(D)}

    def dec_p():
        return {"sa_wqkv": w((D, 3 * D)), "sa_bqkv": zeros2(3 * D),
                "sa_wo": w((D, D)), "sa_bo": zeros2(D),
                "ln1_g": ones2(D), "ln1_b": zeros2(D),
                "ca_wq": w((D, D)), "ca_bq": zeros2(D),
                "ca_wkv": w((D, 2 * D)), "ca_bkv": zeros2(2 * D),
                "ca_wo": w((D, D)), "ca_bo": zeros2(D),
                "ln2_g": ones2(D), "ln2_b": zeros2(D),
                "w1": w((D, dim_ff)), "b1": zeros2(dim_ff),
                "w2": w((dim_ff, D)), "b2": zeros2(D),
                "ln3_g": ones2(D), "ln3_b": zeros2(D)}

    return {
        "backbone_w": w((backbone_in, backbone_out)),
        "backbone_b": zeros2(backbone_out),
        "conv_w": w((backbone_out, D)), "conv_b": zeros2(D),
        "query_pos": jax.random.uniform(next(keys), (100, D), jnp.float32),
        "row_embed": jax.random.uniform(next(keys), (50, D // 2), jnp.float32),
        "col_embed": jax.random.uniform(next(keys), (50, D // 2), jnp.float32),
        "enc_layers": [enc_p() for _ in range(num_encoder_layers)],
        "dec_layers": [dec_p() for _ in range(num_decoder_layers)],
        "enc_norm_g": ones2(D), "enc_norm_b": zeros2(D),
        "dec_norm_g": ones2(D), "dec_norm_b": zeros2(D),
        "cls_w": w((D, num_classes + 1)), "cls_b": zeros2(num_classes + 1),
        "bbox_w": w((D, 4)), "bbox_b": zeros2(4),
    }


if __name__ == "__main__":
    hidden_dim, n_heads = 64, 2
    num_classes = 10
    num_encoder_layers = num_decoder_layers = 1

    key = jax.random.PRNGKey(0)
    pkey, xkey = jax.random.split(key)
    params = init_params(pkey, num_classes, hidden_dim, n_heads,
                         num_encoder_layers, num_decoder_layers)

    # small image: (1, 3, 128, 128) -> stride-32 feature map 4x4 -> seq len 16
    x = jax.random.normal(xkey, (1, 3, 128, 128), dtype=jnp.float32)

    fwd = jax.jit(functools.partial(detr_forward, hidden_dim=hidden_dim,
                                    n_heads=n_heads))
    logits, boxes = fwd(params, x)
    jax.block_until_ready((logits, boxes))

    assert logits.shape == (100, 1, num_classes + 1)
    assert boxes.shape == (100, 1, 4)
    assert bool(jnp.all(jnp.isfinite(logits))) and bool(jnp.all(jnp.isfinite(boxes)))
    assert bool(jnp.all(boxes >= 0.0)) and bool(jnp.all(boxes <= 1.0))
    print("KERNEL_OK")
</pallas_src>

<mosaic_0001>
module attributes {stable_mosaic.version = 11 : i64} {
  func.func @_stem_kernel(%arg0: memref<16x48xf32, #tpu.memory_space<vmem>>, %arg1: memref<48x2048xbf16, #tpu.memory_space<vmem>>, %arg2: memref<1x2048xf32, #tpu.memory_space<vmem>>, %arg3: memref<2048x64xbf16, #tpu.memory_space<vmem>>, %arg4: memref<1x64xf32, #tpu.memory_space<vmem>>, %arg5: memref<16x64xf32, #tpu.memory_space<vmem>>, %arg6: memref<16x64xf32, #tpu.memory_space<vmem>>) attributes {dimension_semantics = [], scalar_prefetch = 0 : i64, scratch_operands = 0 : i64, tpu.core_type = #tpu.core_type<tc>} {
    %c0 = arith.constant 0 : index
    %c0_0 = arith.constant 0 : index
    %0 = vector.load %arg0[%c0, %c0_0] : memref<16x48xf32, #tpu.memory_space<vmem>>, vector<16x48xf32>
    %1 = arith.truncf %0 : vector<16x48xf32> to vector<16x48xbf16>
    %c0_1 = arith.constant 0 : index
    %c0_2 = arith.constant 0 : index
    %2 = vector.load %arg1[%c0_1, %c0_2] : memref<48x2048xbf16, #tpu.memory_space<vmem>>, vector<48x2048xbf16>
    %cst = arith.constant dense<0.000000e+00> : vector<16x2048xf32>
    %3 = tpu.matmul %1, %2, %cst {dimension_numbers = #tpu.dot_dimension_numbers<[1], [0], [0], [1], [0, 0, 1, 1], [], []>} : vector<16x48xbf16>, vector<48x2048xbf16>, vector<16x2048xf32> -> vector<16x2048xf32>
    %c0_3 = arith.constant 0 : index
    %c0_4 = arith.constant 0 : index
    %4 = vector.load %arg2[%c0_3, %c0_4] : memref<1x2048xf32, #tpu.memory_space<vmem>>, vector<1x2048xf32>
    %5 = vector.broadcast %4 : vector<1x2048xf32> to vector<16x2048xf32>
    %6 = arith.addf %3, %5 : vector<16x2048xf32>
    %cst_5 = arith.constant 0.000000e+00 : f32
    %7 = vector.broadcast %cst_5 : f32 to vector<16x2048xf32>
    %8 = arith.maximumf %6, %7 : vector<16x2048xf32>
    %9 = arith.truncf %8 : vector<16x2048xf32> to vector<16x2048xbf16>
    %c0_6 = arith.constant 0 : index
    %c0_7 = arith.constant 0 : index
    %10 = vector.load %arg3[%c0_6, %c0_7] : memref<2048x64xbf16, #tpu.memory_space<vmem>>, vector<2048x64xbf16>
    %cst_8 = arith.constant dense<0.000000e+00> : vector<16x64xf32>
    %11 = tpu.matmul %9, %10, %cst_8 {dimension_numbers = #tpu.dot_dimension_numbers<[1], [0], [0], [1], [0, 0, 1, 1], [], []>} : vector<16x2048xbf16>, vector<2048x64xbf16>, vector<16x64xf32> -> vector<16x64xf32>
    %c0_9 = arith.constant 0 : index
    %c0_10 = arith.constant 0 : index
    %12 = vector.load %arg4[%c0_9, %c0_10] : memref<1x64xf32, #tpu.memory_space<vmem>>, vector<1x64xf32>
    %13 = vector.broadcast %12 : vector<1x64xf32> to vector<16x64xf32>
    %14 = arith.addf %11, %13 : vector<16x64xf32>
    %c0_11 = arith.constant 0 : index
    %c0_12 = arith.constant 0 : index
    %15 = vector.load %arg5[%c0_11, %c0_12] : memref<16x64xf32, #tpu.memory_space<vmem>>, vector<16x64xf32>
    %16 = arith.addf %15, %14 : vector<16x64xf32>
    %c0_13 = arith.constant 0 : index
    %c0_14 = arith.constant 0 : index
    %17 = vector.load %arg6[%c0_13, %c0_14] : memref<16x64xf32, #tpu.memory_space<vmem>>, vector<16x64xf32>
    tpu.vector_store %arg6[%c0_13, %c0_14], %16 {strides = array<i32>} : memref<16x64xf32, #tpu.memory_space<vmem>>, vector<16x64xf32>,
    return
  }
}

module attributes {stable_mosaic.version = 11 : i64} {
  func.func @_enc_layer_kernel(%arg0: i32, %arg1: memref<16x64xf32, #tpu.memory_space<vmem>>, %arg2: memref<64x192xbf16, #tpu.memory_space<vmem>>, %arg3: memref<1x192xf32, #tpu.memory_space<vmem>>, %arg4: memref<64x64xbf16, #tpu.memory_space<vmem>>, %arg5: memref<1x64xf32, #tpu.memory_space<vmem>>, %arg6: memref<1x64xf32, #tpu.memory_space<vmem>>, %arg7: memref<1x64xf32, #tpu.memory_space<vmem>>, %arg8: memref<64x512xbf16, #tpu.memory_space<vmem>>, %arg9: memref<1x512xf32, #tpu.memory_space<vmem>>, %arg10: memref<512x64xbf16, #tpu.memory_space<vmem>>, %arg11: memref<1x64xf32, #tpu.memory_space<vmem>>, %arg12: memref<1x64xf32, #tpu.memory_space<vmem>>, %arg13: memref<1x64xf32, #tpu.memory_space<vmem>>, %arg14: memref<16x64xf32, #tpu.memory_space<vmem>>, %arg15: memref<16x64xf32, #tpu.memory_space<vmem>>, %arg16: memref<16x64xf32, #tpu.memory_space<vmem>>) attributes {dimension_semantics = [#tpu.dimension_semantics<arbitrary>], iteration_bounds = array<i64: 4>, scalar_prefetch = 0 : i64, scratch_operands = 2 : i64, tpu.core_type = #tpu.core_type<tc>, window_params = [{pipeline_mode = #tpu.pipeline_mode<synchronous>, transform_indices = @transform_0, window_bounds = array<i64: 16, 64>}, {pipeline_mode = #tpu.pipeline_mode<synchronous>, transform_indices = @transform_1, window_bounds = array<i64: 64, 192>}, {pipeline_mode = #tpu.pipeline_mode<synchronous>, transform_indices = @transform_2, window_bounds = array<i64: 1, 192>}, {pipeline_mode = #tpu.pipeline_mode<synchronous>, transform_indices = @transform_3, window_bounds = array<i64: 64, 64>}, {pipeline_mode = #tpu.pipeline_mode<synchronous>, transform_indices = @transform_4, window_bounds = array<i64: 1, 64>}, {pipeline_mode = #tpu.pipeline_mode<synchronous>, transform_indices = @transform_5, window_bounds = array<i64: 1, 64>}, {pipeline_mode = #tpu.pipeline_mode<synchronous>, transform_indices = @transform_6, window_bounds = array<i64: 1, 64>}, {transform_indices = @transform_7, window_bounds = array<i64: 64, 512>}, {transform_indices = @transform_8, window_bounds = array<i64: 1, 512>}, {transform_indices = @transform_9, window_bounds = array<i64: 512, 64>}, {pipeline_mode = #tpu.pipeline_mode<synchronous>, transform_indices = @transform_10, window_bounds = array<i64: 1, 64>}, {pipeline_mode = #tpu.pipeline_mode<synchronous>, transform_indices = @transform_11, window_bounds = array<i64: 1, 64>}, {pipeline_mode = #tpu.pipeline_mode<synchronous>, transform_indices = @transform_12, window_bounds = array<i64: 1, 64>}, {pipeline_mode = #tpu.pipeline_mode<synchronous>, transform_indices = @transform_13, window_bounds = array<i64: 16, 64>}]} {
    %c0_i32 = arith.constant 0 : i32
    %0 = arith.cmpi eq, %arg0, %c0_i32 : i32
    %1 = arith.extui %0 : i1 to i32
    %c0_i32_0 = arith.constant 0 : i32
    %2 = arith.cmpi ne, %1, %c0_i32_0 : i32
    scf.if %2 {
      %c0_15 = arith.constant 0 : index
      %c0_16 = arith.constant 0 : index
      %21 = vector.load %arg1[%c0_15, %c0_16] : memref<16x64xf32, #tpu.memory_space<vmem>>, vector<16x64xf32>
      %22 = arith.truncf %21 : vector<16x64xf32> to vector<16x64xbf16>
      %c0_17 = arith.constant 0 : index
      %c0_18 = arith.constant 0 : index
      %23 = vector.load %arg2[%c0_17, %c0_18] : memref<64x192xbf16, #tpu.memory_space<vmem>>, vector<64x192xbf16>
      %cst_19 = arith.constant dense<0.000000e+00> : vector<16x192xf32>
      %24 = tpu.matmul %22, %23, %cst_19 {dimension_numbers = #tpu.dot_dimension_numbers<[1], [0], [0], [1], [0, 0, 1, 1], [], []>} : vector<16x64xbf16>, vector<64x192xbf16>, vector<16x192xf32> -> vector<16x192xf32>
      %c0_20 = arith.constant 0 : index
      %c0_21 = arith.constant 0 : index
      %25 = vector.load %arg3[%c0_20, %c0_21] : memref<1x192xf32, #tpu.memory_space<vmem>>, vector<1x192xf32>
      %26 = vector.broadcast %25 : vector<1x192xf32> to vector<16x192xf32>
      %27 = arith.addf %24, %26 : vector<16x192xf32>
      %28 = vector.extract_strided_slice %27 {offsets = [0, 0], sizes = [16, 64], strides = [1, 1]} : vector<16x192xf32> to vector<16x64xf32>
      %29 = vector.extract_strided_slice %27 {offsets = [0, 64], sizes = [16, 64], strides = [1, 1]} : vector<16x192xf32> to vector<16x64xf32>
      %30 = vector.extract_strided_slice %27 {offsets = [0, 128], sizes = [16, 64], strides = [1, 1]} : vector<16x192xf32> to vector<16x64xf32>
      %31 = vector.extract_strided_slice %28 {offsets = [0, 0], sizes = [16, 32], strides = [1, 1]} : vector<16x64xf32> to vector<16x32xf32>
      %32 = arith.truncf %31 : vector<16x32xf32> to vector<16x32xbf16>
      %33 = vector.extract_strided_slice %29 {offsets = [0, 0], sizes = [16, 32], strides = [1, 1]} : vector<16x64xf32> to vector<16x32xf32>
      %34 = arith.truncf %33 : vector<16x32xf32> to vector<16x32xbf16>
      %35 = vector.extract_strided_slice %30 {offsets = [0, 0], sizes = [16, 32], strides = [1, 1]} : vector<16x64xf32> to vector<16x32xf32>
      %36 = arith.truncf %35 : vector<16x32xf32> to vector<16x32xbf16>
      %cst_22 = arith.constant dense<0.000000e+00> : vector<16x16xf32>
      %37 = tpu.matmul %32, %34, %cst_22 {dimension_numbers = #tpu.dot_dimension_numbers<[1], [1], [0], [0], [0, 0, 1, 0], [], []>} : vector<16x32xbf16>, vector<16x32xbf16>, vector<16x16xf32> -> vector<16x16xf32>
      %cst_23 = arith.constant 0.176776692 : f32
      %38 = vector.broadcast %cst_23 : f32 to vector<16x16xf32>
      %39 = arith.mulf %37, %38 : vector<16x16xf32>
      %cst_24 = arith.constant dense<0xFF800000> : vector<16xf32>
      %40 = vector.multi_reduction <maximumf>, %39, %cst_24 [1] : vector<16x16xf32> to vector<16xf32>
      %41 = vector.shape_cast %40 : vector<16xf32> to vector<16x1xf32>
      %42 = vector.broadcast %41 : vector<16x1xf32> to vector<16x16xf32>
      %43 = arith.subf %39, %42 : vector<16x16xf32>
      %44 = math.exp %43 : vector<16x16xf32>
      %cst_25 = arith.constant dense<0.000000e+00> : vector<16xf32>
      %45 = vector.multi_reduction <add>, %44, %cst_25 [1] : vector<16x16xf32> to vector<16xf32>
      %46 = vector.shape_cast %45 : vector<16xf32> to vector<16x1xf32>
      %47 = tpu.reciprocal %46 {approx = true} : vector<16x1xf32> -> vector<16x1xf32>
      %48 = vector.broadcast %47 : vector<16x1xf32> to vector<16x16xf32>
      %49 = arith.mulf %44, %48 : vector<16x16xf32>
      %50 = arith.truncf %49 : vector<16x16xf32> to vector<16x16xbf16>
      %cst_26 = arith.constant dense<0.000000e+00> : vector<16x32xf32>
      %51 = tpu.matmul %50, %36, %cst_26 {dimension_numbers = #tpu.dot_dimension_numbers<[1], [0], [0], [1], [0, 0, 1, 1], [], []>} : vector<16x16xbf16>, vector<16x32xbf16>, vector<16x32xf32> -> vector<16x32xf32>
      %52 = vector.extract_strided_slice %28 {offsets = [0, 32], sizes = [16, 32], strides = [1, 1]} : vector<16x64xf32> to vector<16x32xf32>
      %53 = arith.truncf %52 : vector<16x32xf32> to vector<16x32xbf16>
      %54 = vector.extract_strided_slice %29 {offsets = [0, 32], sizes = [16, 32], strides = [1, 1]} : vector<16x64xf32> to vector<16x32xf32>
      %55 = arith.truncf %54 : vector<16x32xf32> to vector<16x32xbf16>
      %56 = vector.extract_strided_slice %30 {offsets = [0, 32], sizes = [16, 32], strides = [1, 1]} : vector<16x64xf32> to vector<16x32xf32>
      %57 = arith.truncf %56 : vector<16x32xf32> to vector<16x32xbf16>
      %cst_27 = arith.constant dense<0.000000e+00> : vector<16x16xf32>
      %58 = tpu.matmul %53, %55, %cst_27 {dimension_numbers = #tpu.dot_dimension_numbers<[1], [1], [0], [0], [0, 0, 1, 0], [], []>} : vector<16x32xbf16>, vector<16x32xbf16>, vector<16x16xf32> -> vector<16x16xf32>
      %cst_28 = arith.constant 0.176776692 : f32
      %59 = vector.broadcast %cst_28 : f32 to vector<16x16xf32>
      %60 = arith.mulf %58, %59 : vector<16x16xf32>
      %cst_29 = arith.constant dense<0xFF800000> : vector<16xf32>
      %61 = vector.multi_reduction <maximumf>, %60, %cst_29 [1] : vector<16x16xf32> to vector<16xf32>
      %62 = vector.shape_cast %61 : vector<16xf32> to vector<16x1xf32>
      %63 = vector.broadcast %62 : vector<16x1xf32> to vector<16x16xf32>
      %64 = arith.subf %60, %63 : vector<16x16xf32>
      %65 = math.exp %64 : vector<16x16xf32>
      %cst_30 = arith.constant dense<0.000000e+00> : vector<16xf32>
      %66 = vector.multi_reduction <add>, %65, %cst_30 [1] : vector<16x16xf32> to vector<16xf32>
      %67 = vector.shape_cast %66 : vector<16xf32> to vector<16x1xf32>
      %68 = tpu.reciprocal %67 {approx = true} : vector<16x1xf32> -> vector<16x1xf32>
      %69 = vector.broadcast %68 : vector<16x1xf32> to vector<16x16xf32>
      %70 = arith.mulf %65, %69 : vector<16x16xf32>
      %71 = arith.truncf %70 : vector<16x16xf32> to vector<16x16xbf16>
      %cst_31 = arith.constant dense<0.000000e+00> : vector<16x32xf32>
      %72 = tpu.matmul %71, %57, %cst_31 {dimension_numbers = #tpu.dot_dimension_numbers<[1], [0], [0], [1], [0, 0, 1, 1], [], []>} : vector<16x16xbf16>, vector<16x32xbf16>, vector<16x32xf32> -> vector<16x32xf32>
      %73 = tpu.concatenate %51, %72 in 1 : vector<16x32xf32>, vector<16x32xf32> -> vector<16x64xf32>
      %74 = arith.truncf %73 : vector<16x64xf32> to vector<16x64xbf16>
      %c0_32 = arith.constant 0 : index
      %c0_33 = arith.constant 0 : index
      %75 = vector.load %arg4[%c0_32, %c0_33] : memref<64x64xbf16, #tpu.memory_space<vmem>>, vector<64x64xbf16>
      %cst_34 = arith.constant dense<0.000000e+00> : vector<16x64xf32>
      %76 = tpu.matmul %74, %75, %cst_34 {dimension_numbers = #tpu.dot_dimension_numbers<[1], [0], [0], [1], [0, 0, 1, 1], [], []>} : vector<16x64xbf16>, vector<64x64xbf16>, vector<16x64xf32> -> vector<16x64xf32>
      %c0_35 = arith.constant 0 : index
      %c0_36 = arith.constant 0 : index
      %77 = vector.load %arg5[%c0_35, %c0_36] : memref<1x64xf32, #tpu.memory_space<vmem>>, vector<1x64xf32>
      %78 = vector.broadcast %77 : vector<1x64xf32> to vector<16x64xf32>
      %79 = arith.addf %76, %78 : vector<16x64xf32>
      %80 = arith.addf %21, %79 : vector<16x64xf32>
      %c0_37 = arith.constant 0 : index
      %c0_38 = arith.constant 0 : index
      %81 = vector.load %arg6[%c0_37, %c0_38] : memref<1x64xf32, #tpu.memory_space<vmem>>, vector<1x64xf32>
      %c0_39 = arith.constant 0 : index
      %c0_40 = arith.constant 0 : index
      %82 = vector.load %arg7[%c0_39, %c0_40] : memref<1x64xf32, #tpu.memory_space<vmem>>, vector<1x64xf32>
      %cst_41 = arith.constant dense<0.000000e+00> : vector<16xf32>
      %83 = vector.multi_reduction <add>, %80, %cst_41 [1] : vector<16x64xf32> to vector<16xf32>
      %84 = vector.shape_cast %83 : vector<16xf32> to vector<16x1xf32>
      %cst_42 = arith.constant 6.400000e+01 : f32
      %85 = vector.broadcast %cst_42 : f32 to vector<16x1xf32>
      %86 = arith.divf %84, %85 : vector<16x1xf32>
      %87 = vector.broadcast %86 : vector<16x1xf32> to vector<16x64xf32>
      %88 = arith.subf %80, %87 : vector<16x64xf32>
      %89 = arith.mulf %88, %88 : vector<16x64xf32>
      %cst_43 = arith.constant dense<0.000000e+00> : vector<16xf32>
      %90 = vector.multi_reduction <add>, %89, %cst_43 [1] : vector<16x64xf32> to vector<16xf32>
      %91 = vector.shape_cast %90 : vector<16xf32> to vector<16x1xf32>
      %cst_44 = arith.constant 6.400000e+01 : f32
      %92 = vector.broadcast %cst_44 : f32 to vector<16x1xf32>
      %93 = arith.divf %91, %92 : vector<16x1xf32>
      %cst_45 = arith.constant 9.99999974E-6 : f32
      %94 = vector.broadcast %cst_45 : f32 to vector<16x1xf32>
      %95 = arith.addf %93, %94 : vector<16x1xf32>
      %96 = math.rsqrt %95 : vector<16x1xf32>
      %97 = vector.broadcast %96 : vector<16x1xf32> to vector<16x64xf32>
      %98 = arith.mulf %88, %97 : vector<16x64xf32>
      %99 = vector.broadcast %81 : vector<1x64xf32> to vector<16x64xf32>
      %100 = arith.mulf %98, %99 : vector<16x64xf32>
      %101 = vector.broadcast %82 : vector<1x64xf32> to vector<16x64xf32>
      %102 = arith.addf %100, %101 : vector<16x64xf32>
      %c0_46 = arith.constant 0 : index
      %c0_47 = arith.constant 0 : index
      %103 = vector.load %arg15[%c0_46, %c0_47] : memref<16x64xf32, #tpu.memory_space<vmem>>, vector<16x64xf32>
      tpu.vector_store %arg15[%c0_46, %c0_47], %102 {strides = array<i32>} : memref<16x64xf32, #tpu.memory_space<vmem>>, vector<16x64xf32>,
      %cst_48 = arith.constant 0.000000e+00 : f32
      %104 = vector.broadcast %cst_48 : f32 to vector<16x64xf32>
      %c0_49 = arith.constant 0 : index
      %c0_50 = arith.constant 0 : index
      %105 = vector.load %arg16[%c0_49, %c0_50] : memref<16x64xf32, #tpu.memory_space<vmem>>, vector<16x64xf32>
      tpu.vector_store %arg16[%c0_49, %c0_50], %104 {strides = array<i32>} : memref<16x64xf32, #tpu.memory_space<vmem>>, vector<16x64xf32>,
    } else {
    }
    %c0 = arith.constant 0 : index
    %c0_1 = arith.constant 0 : index
    %3 = vector.load %arg15[%c0, %c0_1] : memref<16x64xf32, #tpu.memory_space<vmem>>, vector<16x64xf32>
    %4 = arith.truncf %3 : vector<16x64xf32> to vector<16x64xbf16>
    %c0_2 = arith.constant 0 : index
    %c0_3 = arith.constant 0 : index
    %5 = vector.load %arg8[%c0_2, %c0_3] : memref<64x512xbf16, #tpu.memory_space<vmem>>, vector<64x512xbf16>
    %cst = arith.constant dense<0.000000e+00> : vector<16x512xf32>
    %6 = tpu.matmul %4, %5, %cst {dimension_numbers = #tpu.dot_dimension_numbers<[1], [0], [0], [1], [0, 0, 1, 1], [], []>} : vector<16x64xbf16>, vector<64x512xbf16>, vector<16x512xf32> -> vector<16x512xf32>
    %c0_4 = arith.constant 0 : index
    %c0_5 = arith.constant 0 : index
    %7 = vector.load %arg9[%c0_4, %c0_5] : memref<1x512xf32, #tpu.memory_space<vmem>>, vector<1x512xf32>
    %8 = vector.broadcast %7 : vector<1x512xf32> to vector<16x512xf32>
    %9 = arith.addf %6, %8 : vector<16x512xf32>
    %cst_6 = arith.constant 0.000000e+00 : f32
    %10 = vector.broadcast %cst_6 : f32 to vector<16x512xf32>
    %11 = arith.maximumf %9, %10 : vector<16x512xf32>
    %c0_7 = arith.constant 0 : index
    %c0_8 = arith.constant 0 : index
    %12 = vector.load %arg16[%c0_7, %c0_8] : memref<16x64xf32, #tpu.memory_space<vmem>>, vector<16x64xf32>
    %13 = arith.truncf %11 : vector<16x512xf32> to vector<16x512xbf16>
    %c0_9 = arith.constant 0 : index
    %c0_10 = arith.constant 0 : index
    %14 = vector.load %arg10[%c0_9, %c0_10] : memref<512x64xbf16, #tpu.memory_space<vmem>>, vector<512x64xbf16>
    %cst_11 = arith.constant dense<0.000000e+00> : vector<16x64xf32>
    %15 = tpu.matmul %13, %14, %cst_11 {dimension_numbers = #tpu.dot_dimension_numbers<[1], [0], [0], [1], [0, 0, 1, 1], [], []>} : vector<16x512xbf16>, vector<512x64xbf16>, vector<16x64xf32> -> vector<16x64xf32>
    %16 = arith.addf %12, %15 : vector<16x64xf32>
    %c0_12 = arith.constant 0 : index
    %c0_13 = arith.constant 0 : index
    %17 = vector.load %arg16[%c0_12, %c0_13] : memref<16x64xf32, #tpu.memory_space<vmem>>, vector<16x64xf32>
    tpu.vector_store %arg16[%c0_12, %c0_13], %16 {strides = array<i32>} : memref<16x64xf32, #tpu.memory_space<vmem>>, vector<16x64xf32>,
    %c3_i32 = arith.constant 3 : i32
    %18 = arith.cmpi eq, %arg0, %c3_i32 : i32
    %19 = arith.extui %18 : i1 to i32
    %c0_i32_14 = arith.constant 0 : i32
    %20 = arith.cmpi ne, %19, %c0_i32_14 : i32
    scf.if %20 {
      %c0_15 = arith.constant 0 : index
      %c0_16 = arith.constant 0 : index
      %21 = vector.load %arg15[%c0_15, %c0_16] : memref<16x64xf32, #tpu.memory_space<vmem>>, vector<16x64xf32>
      %c0_17 = arith.constant 0 : index
      %c0_18 = arith.constant 0 : index
      %22 = vector.load %arg16[%c0_17, %c0_18] : memref<16x64xf32, #tpu.memory_space<vmem>>, vector<16x64xf32>
      %23 = arith.addf %21, %22 : vector<16x64xf32>
      %c0_19 = arith.constant 0 : index
      %c0_20 = arith.constant 0 : index
      %24 = vector.load %arg11[%c0_19, %c0_20] : memref<1x64xf32, #tpu.memory_space<vmem>>, vector<1x64xf32>
      %25 = vector.broadcast %24 : vector<1x64xf32> to vector<16x64xf32>
      %26 = arith.addf %23, %25 : vector<16x64xf32>
      %c0_21 = arith.constant 0 : index
      %c0_22 = arith.constant 0 : index
      %27 = vector.load %arg12[%c0_21, %c0_22] : memref<1x64xf32, #tpu.memory_space<vmem>>, vector<1x64xf32>
      %c0_23 = arith.constant 0 : index
      %c0_24 = arith.constant 0 : index
      %28 = vector.load %arg13[%c0_23, %c0_24] : memref<1x64xf32, #tpu.memory_space<vmem>>, vector<1x64xf32>
      %cst_25 = arith.constant dense<0.000000e+00> : vector<16xf32>
      %29 = vector.multi_reduction <add>, %26, %cst_25 [1] : vector<16x64xf32> to vector<16xf32>
      %30 = vector.shape_cast %29 : vector<16xf32> to vector<16x1xf32>
      %cst_26 = arith.constant 6.400000e+01 : f32
      %31 = vector.broadcast %cst_26 : f32 to vector<16x1xf32>
      %32 = arith.divf %30, %31 : vector<16x1xf32>
      %33 = vector.broadcast %32 : vector<16x1xf32> to vector<16x64xf32>
      %34 = arith.subf %26, %33 : vector<16x64xf32>
      %35 = arith.mulf %34, %34 : vector<16x64xf32>
      %cst_27 = arith.constant dense<0.000000e+00> : vector<16xf32>
      %36 = vector.multi_reduction <add>, %35, %cst_27 [1] : vector<16x64xf32> to vector<16xf32>
      %37 = vector.shape_cast %36 : vector<16xf32> to vector<16x1xf32>
      %cst_28 = arith.constant 6.400000e+01 : f32
      %38 = vector.broadcast %cst_28 : f32 to vector<16x1xf32>
      %39 = arith.divf %37, %38 : vector<16x1xf32>
      %cst_29 = arith.constant 9.99999974E-6 : f32
      %40 = vector.broadcast %cst_29 : f32 to vector<16x1xf32>
      %41 = arith.addf %39, %40 : vector<16x1xf32>
      %42 = math.rsqrt %41 : vector<16x1xf32>
      %43 = vector.broadcast %42 : vector<16x1xf32> to vector<16x64xf32>
      %44 = arith.mulf %34, %43 : vector<16x64xf32>
      %45 = vector.broadcast %27 : vector<1x64xf32> to vector<16x64xf32>
      %46 = arith.mulf %44, %45 : vector<16x64xf32>
      %47 = vector.broadcast %28 : vector<1x64xf32> to vector<16x64xf32>
      %48 = arith.addf %46, %47 : vector<16x64xf32>
      %c0_30 = arith.constant 0 : index
      %c0_31 = arith.constant 0 : index
      %49 = vector.load %arg14[%c0_30, %c0_31] : memref<16x64xf32, #tpu.memory_space<vmem>>, vector<16x64xf32>
      tpu.vector_store %arg14[%c0_30, %c0_31], %48 {strides = array<i32>} : memref<16x64xf32, #tpu.memory_space<vmem>>, vector<16x64xf32>,
    } else {
    }
    return
  }
  func.func @transform_0(%arg0: i32) -> (i32, i32) {
    %c0_i32 = arith.constant 0 : i32
    %c0_i32_0 = arith.constant 0 : i32
    %c0_i32_1 = arith.constant 0 : i32
    return %c0_i32, %c0_i32_0 : i32, i32
  }
  func.func @transform_1(%arg0: i32) -> (i32, i32) {
    %c0_i32 = arith.constant 0 : i32
    %c0_i32_0 = arith.constant 0 : i32
    %c0_i32_1 = arith.constant 0 : i32
    return %c0_i32, %c0_i32_0 : i32, i32
  }
  func.func @transform_2(%arg0: i32) -> (i32, i32) {
    %c0_i32 = arith.constant 0 : i32
    %c0_i32_0 = arith.constant 0 : i32
    %c0_i32_1 = arith.constant 0 : i32
    return %c0_i32, %c0_i32_0 : i32, i32
  }
  func.func @transform_3(%arg0: i32) -> (i32, i32) {
    %c0_i32 = arith.constant 0 : i32
    %c0_i32_0 = arith.constant 0 : i32
    %c0_i32_1 = arith.constant 0 : i32
    return %c0_i32, %c0_i32_0 : i32, i32
  }
  func.func @transform_4(%arg0: i32) -> (i32, i32) {
    %c0_i32 = arith.constant 0 : i32
    %c0_i32_0 = arith.constant 0 : i32
    %c0_i32_1 = arith.constant 0 : i32
    return %c0_i32, %c0_i32_0 : i32, i32
  }
  func.func @transform_5(%arg0: i32) -> (i32, i32) {
    %c0_i32 = arith.constant 0 : i32
    %c0_i32_0 = arith.constant 0 : i32
    %c0_i32_1 = arith.constant 0 : i32
    return %c0_i32, %c0_i32_0 : i32, i32
  }
  func.func @transform_6(%arg0: i32) -> (i32, i32) {
    %c0_i32 = arith.constant 0 : i32
    %c0_i32_0 = arith.constant 0 : i32
    %c0_i32_1 = arith.constant 0 : i32
    return %c0_i32, %c0_i32_0 : i32, i32
  }
  func.func @transform_7(%arg0: i32) -> (i32, i32) {
    %c0_i32 = arith.constant 0 : i32
    %c0_i32_0 = arith.constant 0 : i32
    return %c0_i32, %arg0 : i32, i32
  }
  func.func @transform_8(%arg0: i32) -> (i32, i32) {
    %c0_i32 = arith.constant 0 : i32
    %c0_i32_0 = arith.constant 0 : i32
    return %c0_i32, %arg0 : i32, i32
  }
  func.func @transform_9(%arg0: i32) -> (i32, i32) {
    %c0_i32 = arith.constant 0 : i32
    %c0_i32_0 = arith.constant 0 : i32
    return %arg0, %c0_i32 : i32, i32
  }
  func.func @transform_10(%arg0: i32) -> (i32, i32) {
    %c0_i32 = arith.constant 0 : i32
    %c0_i32_0 = arith.constant 0 : i32
    %c0_i32_1 = arith.constant 0 : i32
    return %c0_i32, %c0_i32_0 : i32, i32
  }
  func.func @transform_11(%arg0: i32) -> (i32, i32) {
    %c0_i32 = arith.constant 0 : i32
    %c0_i32_0 = arith.constant 0 : i32
    %c0_i32_1 = arith.constant 0 : i32
    return %c0_i32, %c0_i32_0 : i32, i32
  }
  func.func @transform_12(%arg0: i32) -> (i32, i32) {
    %c0_i32 = arith.constant 0 : i32
    %c0_i32_0 = arith.constant 0 : i32
    %c0_i32_1 = arith.constant 0 : i32
    return %c0_i32, %c0_i32_0 : i32, i32
  }
  func.func @transform_13(%arg0: i32) -> (i32, i32) {
    %c0_i32 = arith.constant 0 : i32
    %c0_i32_0 = arith.constant 0 : i32
    %c0_i32_1 = arith.constant 0 : i32
    return %c0_i32, %c0_i32_0 : i32, i32
  }
}

module attributes {stable_mosaic.version = 11 : i64} {
  func.func @_ln_kernel(%arg0: memref<16x64xf32, #tpu.memory_space<vmem>>, %arg1: memref<1x64xf32, #tpu.memory_space<vmem>>, %arg2: memref<1x64xf32, #tpu.memory_space<vmem>>, %arg3: memref<16x64xf32, #tpu.memory_space<vmem>>) attributes {dimension_semantics = [], scalar_prefetch = 0 : i64, scratch_operands = 0 : i64, tpu.core_type = #tpu.core_type<tc>} {
    %c0 = arith.constant 0 : index
    %c0_0 = arith.constant 0 : index
    %0 = vector.load %arg0[%c0, %c0_0] : memref<16x64xf32, #tpu.memory_space<vmem>>, vector<16x64xf32>
    %c0_1 = arith.constant 0 : index
    %c0_2 = arith.constant 0 : index
    %1 = vector.load %arg1[%c0_1, %c0_2] : memref<1x64xf32, #tpu.memory_space<vmem>>, vector<1x64xf32>
    %c0_3 = arith.constant 0 : index
    %c0_4 = arith.constant 0 : index
    %2 = vector.load %arg2[%c0_3, %c0_4] : memref<1x64xf32, #tpu.memory_space<vmem>>, vector<1x64xf32>
    %cst = arith.constant dense<0.000000e+00> : vector<16xf32>
    %3 = vector.multi_reduction <add>, %0, %cst [1] : vector<16x64xf32> to vector<16xf32>
    %4 = vector.shape_cast %3 : vector<16xf32> to vector<16x1xf32>
    %cst_5 = arith.constant 6.400000e+01 : f32
    %5 = vector.broadcast %cst_5 : f32 to vector<16x1xf32>
    %6 = arith.divf %4, %5 : vector<16x1xf32>
    %7 = vector.broadcast %6 : vector<16x1xf32> to vector<16x64xf32>
    %8 = arith.subf %0, %7 : vector<16x64xf32>
    %9 = arith.mulf %8, %8 : vector<16x64xf32>
    %cst_6 = arith.constant dense<0.000000e+00> : vector<16xf32>
    %10 = vector.multi_reduction <add>, %9, %cst_6 [1] : vector<16x64xf32> to vector<16xf32>
    %11 = vector.shape_cast %10 : vector<16xf32> to vector<16x1xf32>
    %cst_7 = arith.constant 6.400000e+01 : f32
    %12 = vector.broadcast %cst_7 : f32 to vector<16x1xf32>
    %13 = arith.divf %11, %12 : vector<16x1xf32>
    %cst_8 = arith.constant 9.99999974E-6 : f32
    %14 = vector.broadcast %cst_8 : f32 to vector<16x1xf32>
    %15 = arith.addf %13, %14 : vector<16x1xf32>
    %16 = math.rsqrt %15 : vector<16x1xf32>
    %17 = vector.broadcast %16 : vector<16x1xf32> to vector<16x64xf32>
    %18 = arith.mulf %8, %17 : vector<16x64xf32>
    %19 = vector.broadcast %1 : vector<1x64xf32> to vector<16x64xf32>
    %20 = arith.mulf %18, %19 : vector<16x64xf32>
    %21 = vector.broadcast %2 : vector<1x64xf32> to vector<16x64xf32>
    %22 = arith.addf %20, %21 : vector<16x64xf32>
    %c0_9 = arith.constant 0 : index
    %c0_10 = arith.constant 0 : index
    %23 = vector.load %arg3[%c0_9, %c0_10] : memref<16x64xf32, #tpu.memory_space<vmem>>, vector<16x64xf32>
    tpu.vector_store %arg3[%c0_9, %c0_10], %22 {strides = array<i32>} : memref<16x64xf32, #tpu.memory_space<vmem>>, vector<16x64xf32>,
    return
  }
}

module attributes {stable_mosaic.version = 11 : i64} {
  func.func @_dec_layer_kernel(%arg0: i32, %arg1: memref<100x64xf32, #tpu.memory_space<vmem>>, %arg2: memref<16x64xf32, #tpu.memory_space<vmem>>, %arg3: memref<64x192xbf16, #tpu.memory_space<vmem>>, %arg4: memref<1x192xf32, #tpu.memory_space<vmem>>, %arg5: memref<64x64xbf16, #tpu.memory_space<vmem>>, %arg6: memref<1x64xf32, #tpu.memory_space<vmem>>, %arg7: memref<1x64xf32, #tpu.memory_space<vmem>>, %arg8: memref<1x64xf32, #tpu.memory_space<vmem>>, %arg9: memref<64x64xbf16, #tpu.memory_space<vmem>>, %arg10: memref<1x64xf32, #tpu.memory_space<vmem>>, %arg11: memref<64x128xbf16, #tpu.memory_space<vmem>>, %arg12: memref<1x128xf32, #tpu.memory_space<vmem>>, %arg13: memref<64x64xbf16, #tpu.memory_space<vmem>>, %arg14: memref<1x64xf32, #tpu.memory_space<vmem>>, %arg15: memref<1x64xf32, #tpu.memory_space<vmem>>, %arg16: memref<1x64xf32, #tpu.memory_space<vmem>>, %arg17: memref<64x512xbf16, #tpu.memory_space<vmem>>, %arg18: memref<1x512xf32, #tpu.memory_space<vmem>>, %arg19: memref<512x64xbf16, #tpu.memory_space<vmem>>, %arg20: memref<1x64xf32, #tpu.memory_space<vmem>>, %arg21: memref<1x64xf32, #tpu.memory_space<vmem>>, %arg22: memref<1x64xf32, #tpu.memory_space<vmem>>, %arg23: memref<100x64xf32, #tpu.memory_space<vmem>>, %arg24: memref<100x64xf32, #tpu.memory_space<vmem>>, %arg25: memref<100x64xf32, #tpu.memory_space<vmem>>) attributes {dimension_semantics = [#tpu.dimension_semantics<arbitrary>], iteration_bounds = array<i64: 4>, scalar_prefetch = 0 : i64, scratch_operands = 2 : i64, tpu.core_type = #tpu.core_type<tc>, window_params = [{pipeline_mode = #tpu.pipeline_mode<synchronous>, transform_indices = @transform_0, window_bounds = array<i64: 100, 64>}, {pipeline_mode = #tpu.pipeline_mode<synchronous>, transform_indices = @transform_1, window_bounds = array<i64: 16, 64>}, {pipeline_mode = #tpu.pipeline_mode<synchronous>, transform_indices = @transform_2, window_bounds = array<i64: 64, 192>}, {pipeline_mode = #tpu.pipeline_mode<synchronous>, transform_indices = @transform_3, window_bounds = array<i64: 1, 192>}, {pipeline_mode = #tpu.pipeline_mode<synchronous>, transform_indices = @transform_4, window_bounds = array<i64: 64, 64>}, {pipeline_mode = #tpu.pipeline_mode<synchronous>, transform_indices = @transform_5, window_bounds = array<i64: 1, 64>}, {pipeline_mode = #tpu.pipeline_mode<synchronous>, transform_indices = @transform_6, window_bounds = array<i64: 1, 64>}, {pipeline_mode = #tpu.pipeline_mode<synchronous>, transform_indices = @transform_7, window_bounds = array<i64: 1, 64>}, {pipeline_mode = #tpu.pipeline_mode<synchronous>, transform_indices = @transform_8, window_bounds = array<i64: 64, 64>}, {pipeline_mode = #tpu.pipeline_mode<synchronous>, transform_indices = @transform_9, window_bounds = array<i64: 1, 64>}, {pipeline_mode = #tpu.pipeline_mode<synchronous>, transform_indices = @transform_10, window_bounds = array<i64: 64, 128>}, {pipeline_mode = #tpu.pipeline_mode<synchronous>, transform_indices = @transform_11, window_bounds = array<i64: 1, 128>}, {pipeline_mode = #tpu.pipeline_mode<synchronous>, transform_indices = @transform_12, window_bounds = array<i64: 64, 64>}, {pipeline_mode = #tpu.pipeline_mode<synchronous>, transform_indices = @transform_13, window_bounds = array<i64: 1, 64>}, {pipeline_mode = #tpu.pipeline_mode<synchronous>, transform_indices = @transform_14, window_bounds = array<i64: 1, 64>}, {pipeline_mode = #tpu.pipeline_mode<synchronous>, transform_indices = @transform_15, window_bounds = array<i64: 1, 64>}, {transform_indices = @transform_16, window_bounds = array<i64: 64, 512>}, {transform_indices = @transform_17, window_bounds = array<i64: 1, 512>}, {transform_indices = @transform_18, window_bounds = array<i64: 512, 64>}, {pipeline_mode = #tpu.pipeline_mode<synchronous>, transform_indices = @transform_19, window_bounds = array<i64: 1, 64>}, {pipeline_mode = #tpu.pipeline_mode<synchronous>, transform_indices = @transform_20, window_bounds = array<i64: 1, 64>}, {pipeline_mode = #tpu.pipeline_mode<synchronous>, transform_indices = @transform_21, window_bounds = array<i64: 1, 64>}, {pipeline_mode = #tpu.pipeline_mode<synchronous>, transform_indices = @transform_22, window_bounds = array<i64: 100, 64>}]} {
    %c0_i32 = arith.constant 0 : i32
    %0 = arith.cmpi eq, %arg0, %c0_i32 : i32
    %1 = arith.extui %0 : i1 to i32
    %c0_i32_0 = arith.constant 0 : i32
    %2 = arith.cmpi ne, %1, %c0_i32_0 : i32
    scf.if %2 {
      %c0_15 = arith.constant 0 : index
      %c0_16 = arith.constant 0 : index
      %21 = vector.load %arg1[%c0_15, %c0_16] : memref<100x64xf32, #tpu.memory_space<vmem>>, vector<100x64xf32>
      %c0_17 = arith.constant 0 : index
      %c0_18 = arith.constant 0 : index
      %22 = vector.load %arg2[%c0_17, %c0_18] : memref<16x64xf32, #tpu.memory_space<vmem>>, vector<16x64xf32>
      %23 = arith.truncf %21 : vector<100x64xf32> to vector<100x64xbf16>
      %c0_19 = arith.constant 0 : index
      %c0_20 = arith.constant 0 : index
      %24 = vector.load %arg3[%c0_19, %c0_20] : memref<64x192xbf16, #tpu.memory_space<vmem>>, vector<64x192xbf16>
      %cst_21 = arith.constant dense<0.000000e+00> : vector<100x192xf32>
      %25 = tpu.matmul %23, %24, %cst_21 {dimension_numbers = #tpu.dot_dimension_numbers<[1], [0], [0], [1], [0, 0, 1, 1], [], []>} : vector<100x64xbf16>, vector<64x192xbf16>, vector<100x192xf32> -> vector<100x192xf32>
      %c0_22 = arith.constant 0 : index
      %c0_23 = arith.constant 0 : index
      %26 = vector.load %arg4[%c0_22, %c0_23] : memref<1x192xf32, #tpu.memory_space<vmem>>, vector<1x192xf32>
      %27 = vector.broadcast %26 : vector<1x192xf32> to vector<100x192xf32>
      %28 = arith.addf %25, %27 : vector<100x192xf32>
      %29 = vector.extract_strided_slice %28 {offsets = [0, 0], sizes = [100, 64], strides = [1, 1]} : vector<100x192xf32> to vector<100x64xf32>
      %30 = vector.extract_strided_slice %28 {offsets = [0, 64], sizes = [100, 64], strides = [1, 1]} : vector<100x192xf32> to vector<100x64xf32>
      %31 = vector.extract_strided_slice %28 {offsets = [0, 128], sizes = [100, 64], strides = [1, 1]} : vector<100x192xf32> to vector<100x64xf32>
      %32 = vector.extract_strided_slice %29 {offsets = [0, 0], sizes = [100, 32], strides = [1, 1]} : vector<100x64xf32> to vector<100x32xf32>
      %33 = arith.truncf %32 : vector<100x32xf32> to vector<100x32xbf16>
      %34 = vector.extract_strided_slice %30 {offsets = [0, 0], sizes = [100, 32], strides = [1, 1]} : vector<100x64xf32> to vector<100x32xf32>
      %35 = arith.truncf %34 : vector<100x32xf32> to vector<100x32xbf16>
      %36 = vector.extract_strided_slice %31 {offsets = [0, 0], sizes = [100, 32], strides = [1, 1]} : vector<100x64xf32> to vector<100x32xf32>
      %37 = arith.truncf %36 : vector<100x32xf32> to vector<100x32xbf16>
      %cst_24 = arith.constant dense<0.000000e+00> : vector<100x100xf32>
      %38 = tpu.matmul %33, %35, %cst_24 {dimension_numbers = #tpu.dot_dimension_numbers<[1], [1], [0], [0], [0, 0, 1, 0], [], []>} : vector<100x32xbf16>, vector<100x32xbf16>, vector<100x100xf32> -> vector<100x100xf32>
      %cst_25 = arith.constant 0.176776692 : f32
      %39 = vector.broadcast %cst_25 : f32 to vector<100x100xf32>
      %40 = arith.mulf %38, %39 : vector<100x100xf32>
      %cst_26 = arith.constant dense<0xFF800000> : vector<100xf32>
      %41 = vector.multi_reduction <maximumf>, %40, %cst_26 [1] : vector<100x100xf32> to vector<100xf32>
      %42 = vector.shape_cast %41 : vector<100xf32> to vector<100x1xf32>
      %43 = vector.broadcast %42 : vector<100x1xf32> to vector<100x100xf32>
      %44 = arith.subf %40, %43 : vector<100x100xf32>
      %45 = math.exp %44 : vector<100x100xf32>
      %cst_27 = arith.constant dense<0.000000e+00> : vector<100xf32>
      %46 = vector.multi_reduction <add>, %45, %cst_27 [1] : vector<100x100xf32> to vector<100xf32>
      %47 = vector.shape_cast %46 : vector<100xf32> to vector<100x1xf32>
      %48 = tpu.reciprocal %47 {approx = true} : vector<100x1xf32> -> vector<100x1xf32>
      %49 = vector.broadcast %48 : vector<100x1xf32> to vector<100x100xf32>
      %50 = arith.mulf %45, %49 : vector<100x100xf32>
      %51 = arith.truncf %50 : vector<100x100xf32> to vector<100x100xbf16>
      %cst_28 = arith.constant dense<0.000000e+00> : vector<100x32xf32>
      %52 = tpu.matmul %51, %37, %cst_28 {dimension_numbers = #tpu.dot_dimension_numbers<[1], [0], [0], [1], [0, 0, 1, 1], [], []>} : vector<100x100xbf16>, vector<100x32xbf16>, vector<100x32xf32> -> vector<100x32xf32>
      %53 = vector.extract_strided_slice %29 {offsets = [0, 32], sizes = [100, 32], strides = [1, 1]} : vector<100x64xf32> to vector<100x32xf32>
      %54 = arith.truncf %53 : vector<100x32xf32> to vector<100x32xbf16>
      %55 = vector.extract_strided_slice %30 {offsets = [0, 32], sizes = [100, 32], strides = [1, 1]} : vector<100x64xf32> to vector<100x32xf32>
      %56 = arith.truncf %55 : vector<100x32xf32> to vector<100x32xbf16>
      %57 = vector.extract_strided_slice %31 {offsets = [0, 32], sizes = [100, 32], strides = [1, 1]} : vector<100x64xf32> to vector<100x32xf32>
      %58 = arith.truncf %57 : vector<100x32xf32> to vector<100x32xbf16>
      %cst_29 = arith.constant dense<0.000000e+00> : vector<100x100xf32>
      %59 = tpu.matmul %54, %56, %cst_29 {dimension_numbers = #tpu.dot_dimension_numbers<[1], [1], [0], [0], [0, 0, 1, 0], [], []>} : vector<100x32xbf16>, vector<100x32xbf16>, vector<100x100xf32> -> vector<100x100xf32>
      %cst_30 = arith.constant 0.176776692 : f32
      %60 = vector.broadcast %cst_30 : f32 to vector<100x100xf32>
      %61 = arith.mulf %59, %60 : vector<100x100xf32>
      %cst_31 = arith.constant dense<0xFF800000> : vector<100xf32>
      %62 = vector.multi_reduction <maximumf>, %61, %cst_31 [1] : vector<100x100xf32> to vector<100xf32>
      %63 = vector.shape_cast %62 : vector<100xf32> to vector<100x1xf32>
      %64 = vector.broadcast %63 : vector<100x1xf32> to vector<100x100xf32>
      %65 = arith.subf %61, %64 : vector<100x100xf32>
      %66 = math.exp %65 : vector<100x100xf32>
      %cst_32 = arith.constant dense<0.000000e+00> : vector<100xf32>
      %67 = vector.multi_reduction <add>, %66, %cst_32 [1] : vector<100x100xf32> to vector<100xf32>
      %68 = vector.shape_cast %67 : vector<100xf32> to vector<100x1xf32>
      %69 = tpu.reciprocal %68 {approx = true} : vector<100x1xf32> -> vector<100x1xf32>
      %70 = vector.broadcast %69 : vector<100x1xf32> to vector<100x100xf32>
      %71 = arith.mulf %66, %70 : vector<100x100xf32>
      %72 = arith.truncf %71 : vector<100x100xf32> to vector<100x100xbf16>
      %cst_33 = arith.constant dense<0.000000e+00> : vector<100x32xf32>
      %73 = tpu.matmul %72, %58, %cst_33 {dimension_numbers = #tpu.dot_dimension_numbers<[1], [0], [0], [1], [0, 0, 1, 1], [], []>} : vector<100x100xbf16>, vector<100x32xbf16>, vector<100x32xf32> -> vector<100x32xf32>
      %74 = tpu.concatenate %52, %73 in 1 : vector<100x32xf32>, vector<100x32xf32> -> vector<100x64xf32>
      %75 = arith.truncf %74 : vector<100x64xf32> to vector<100x64xbf16>
      %c0_34 = arith.constant 0 : index
      %c0_35 = arith.constant 0 : index
      %76 = vector.load %arg5[%c0_34, %c0_35] : memref<64x64xbf16, #tpu.memory_space<vmem>>, vector<64x64xbf16>
      %cst_36 = arith.constant dense<0.000000e+00> : vector<100x64xf32>
      %77 = tpu.matmul %75, %76, %cst_36 {dimension_numbers = #tpu.dot_dimension_numbers<[1], [0], [0], [1], [0, 0, 1, 1], [], []>} : vector<100x64xbf16>, vector<64x64xbf16>, vector<100x64xf32> -> vector<100x64xf32>
      %c0_37 = arith.constant 0 : index
      %c0_38 = arith.constant 0 : index
      %78 = vector.load %arg6[%c0_37, %c0_38] : memref<1x64xf32, #tpu.memory_space<vmem>>, vector<1x64xf32>
      %79 = vector.broadcast %78 : vector<1x64xf32> to vector<100x64xf32>
      %80 = arith.addf %77, %79 : vector<100x64xf32>
      %81 = arith.addf %21, %80 : vector<100x64xf32>
      %c0_39 = arith.constant 0 : index
      %c0_40 = arith.constant 0 : index
      %82 = vector.load %arg7[%c0_39, %c0_40] : memref<1x64xf32, #tpu.memory_space<vmem>>, vector<1x64xf32>
      %c0_41 = arith.constant 0 : index
      %c0_42 = arith.constant 0 : index
      %83 = vector.load %arg8[%c0_41, %c0_42] : memref<1x64xf32, #tpu.memory_space<vmem>>, vector<1x64xf32>
      %cst_43 = arith.constant dense<0.000000e+00> : vector<100xf32>
      %84 = vector.multi_reduction <add>, %81, %cst_43 [1] : vector<100x64xf32> to vector<100xf32>
      %85 = vector.shape_cast %84 : vector<100xf32> to vector<100x1xf32>
      %cst_44 = arith.constant 6.400000e+01 : f32
      %86 = vector.broadcast %cst_44 : f32 to vector<100x1xf32>
      %87 = arith.divf %85, %86 : vector<100x1xf32>
      %88 = vector.broadcast %87 : vector<100x1xf32> to vector<100x64xf32>
      %89 = arith.subf %81, %88 : vector<100x64xf32>
      %90 = arith.mulf %89, %89 : vector<100x64xf32>
      %cst_45 = arith.constant dense<0.000000e+00> : vector<100xf32>
      %91 = vector.multi_reduction <add>, %90, %cst_45 [1] : vector<100x64xf32> to vector<100xf32>
      %92 = vector.shape_cast %91 : vector<100xf32> to vector<100x1xf32>
      %cst_46 = arith.constant 6.400000e+01 : f32
      %93 = vector.broadcast %cst_46 : f32 to vector<100x1xf32>
      %94 = arith.divf %92, %93 : vector<100x1xf32>
      %cst_47 = arith.constant 9.99999974E-6 : f32
      %95 = vector.broadcast %cst_47 : f32 to vector<100x1xf32>
      %96 = arith.addf %94, %95 : vector<100x1xf32>
      %97 = math.rsqrt %96 : vector<100x1xf32>
      %98 = vector.broadcast %97 : vector<100x1xf32> to vector<100x64xf32>
      %99 = arith.mulf %89, %98 : vector<100x64xf32>
      %100 = vector.broadcast %82 : vector<1x64xf32> to vector<100x64xf32>
      %101 = arith.mulf %99, %100 : vector<100x64xf32>
      %102 = vector.broadcast %83 : vector<1x64xf32> to vector<100x64xf32>
      %103 = arith.addf %101, %102 : vector<100x64xf32>
      %104 = arith.truncf %103 : vector<100x64xf32> to vector<100x64xbf16>
      %c0_48 = arith.constant 0 : index
      %c0_49 = arith.constant 0 : index
      %105 = vector.load %arg9[%c0_48, %c0_49] : memref<64x64xbf16, #tpu.memory_space<vmem>>, vector<64x64xbf16>
      %cst_50 = arith.constant dense<0.000000e+00> : vector<100x64xf32>
      %106 = tpu.matmul %104, %105, %cst_50 {dimension_numbers = #tpu.dot_dimension_numbers<[1], [0], [0], [1], [0, 0, 1, 1], [], []>} : vector<100x64xbf16>, vector<64x64xbf16>, vector<100x64xf32> -> vector<100x64xf32>
      %c0_51 = arith.constant 0 : index
      %c0_52 = arith.constant 0 : index
      %107 = vector.load %arg10[%c0_51, %c0_52] : memref<1x64xf32, #tpu.memory_space<vmem>>, vector<1x64xf32>
      %108 = vector.broadcast %107 : vector<1x64xf32> to vector<100x64xf32>
      %109 = arith.addf %106, %108 : vector<100x64xf32>
      %110 = arith.truncf %22 : vector<16x64xf32> to vector<16x64xbf16>
      %c0_53 = arith.constant 0 : index
      %c0_54 = arith.constant 0 : index
      %111 = vector.load %arg11[%c0_53, %c0_54] : memref<64x128xbf16, #tpu.memory_space<vmem>>, vector<64x128xbf16>
      %cst_55 = arith.constant dense<0.000000e+00> : vector<16x128xf32>
      %112 = tpu.matmul %110, %111, %cst_55 {dimension_numbers = #tpu.dot_dimension_numbers<[1], [0], [0], [1], [0, 0, 1, 1], [], []>} : vector<16x64xbf16>, vector<64x128xbf16>, vector<16x128xf32> -> vector<16x128xf32>
      %c0_56 = arith.constant 0 : index
      %c0_57 = arith.constant 0 : index
      %113 = vector.load %arg12[%c0_56, %c0_57] : memref<1x128xf32, #tpu.memory_space<vmem>>, vector<1x128xf32>
      %114 = vector.broadcast %113 : vector<1x128xf32> to vector<16x128xf32>
      %115 = arith.addf %112, %114 : vector<16x128xf32>
      %116 = vector.extract_strided_slice %115 {offsets = [0, 0], sizes = [16, 64], strides = [1, 1]} : vector<16x128xf32> to vector<16x64xf32>
      %117 = vector.extract_strided_slice %115 {offsets = [0, 64], sizes = [16, 64], strides = [1, 1]} : vector<16x128xf32> to vector<16x64xf32>
      %118 = vector.extract_strided_slice %109 {offsets = [0, 0], sizes = [100, 32], strides = [1, 1]} : vector<100x64xf32> to vector<100x32xf32>
      %119 = arith.truncf %118 : vector<100x32xf32> to vector<100x32xbf16>
      %120 = vector.extract_strided_slice %116 {offsets = [0, 0], sizes = [16, 32], strides = [1, 1]} : vector<16x64xf32> to vector<16x32xf32>
      %121 = arith.truncf %120 : vector<16x32xf32> to vector<16x32xbf16>
      %122 = vector.extract_strided_slice %117 {offsets = [0, 0], sizes = [16, 32], strides = [1, 1]} : vector<16x64xf32> to vector<16x32xf32>
      %123 = arith.truncf %122 : vector<16x32xf32> to vector<16x32xbf16>
      %cst_58 = arith.constant dense<0.000000e+00> : vector<100x16xf32>
      %124 = tpu.matmul %119, %121, %cst_58 {dimension_numbers = #tpu.dot_dimension_numbers<[1], [1], [0], [0], [0, 0, 1, 0], [], []>} : vector<100x32xbf16>, vector<16x32xbf16>, vector<100x16xf32> -> vector<100x16xf32>
      %cst_59 = arith.constant 0.176776692 : f32
      %125 = vector.broadcast %cst_59 : f32 to vector<100x16xf32>
      %126 = arith.mulf %124, %125 : vector<100x16xf32>
      %cst_60 = arith.constant dense<0xFF800000> : vector<100xf32>
      %127 = vector.multi_reduction <maximumf>, %126, %cst_60 [1] : vector<100x16xf32> to vector<100xf32>
      %128 = vector.shape_cast %127 : vector<100xf32> to vector<100x1xf32>
      %129 = vector.broadcast %128 : vector<100x1xf32> to vector<100x16xf32>
      %130 = arith.subf %126, %129 : vector<100x16xf32>
      %131 = math.exp %130 : vector<100x16xf32>
      %cst_61 = arith.constant dense<0.000000e+00> : vector<100xf32>
      %132 = vector.multi_reduction <add>, %131, %cst_61 [1] : vector<100x16xf32> to vector<100xf32>
      %133 = vector.shape_cast %132 : vector<100xf32> to vector<100x1xf32>
      %134 = tpu.reciprocal %133 {approx = true} : vector<100x1xf32> -> vector<100x1xf32>
      %135 = vector.broadcast %134 : vector<100x1xf32> to vector<100x16xf32>
      %136 = arith.mulf %131, %135 : vector<100x16xf32>
      %137 = arith.truncf %136 : vector<100x16xf32> to vector<100x16xbf16>
      %cst_62 = arith.constant dense<0.000000e+00> : vector<100x32xf32>
      %138 = tpu.matmul %137, %123, %cst_62 {dimension_numbers = #tpu.dot_dimension_numbers<[1], [0], [0], [1], [0, 0, 1, 1], [], []>} : vector<100x16xbf16>, vector<16x32xbf16>, vector<100x32xf32> -> vector<100x32xf32>
      %139 = vector.extract_strided_slice %109 {offsets = [0, 32], sizes = [100, 32], strides = [1, 1]} : vector<100x64xf32> to vector<100x32xf32>
      %140 = arith.truncf %139 : vector<100x32xf32> to vector<100x32xbf16>
      %141 = vector.extract_strided_slice %116 {offsets = [0, 32], sizes = [16, 32], strides = [1, 1]} : vector<16x64xf32> to vector<16x32xf32>
      %142 = arith.truncf %141 : vector<16x32xf32> to vector<16x32xbf16>
      %143 = vector.extract_strided_slice %117 {offsets = [0, 32], sizes = [16, 32], strides = [1, 1]} : vector<16x64xf32> to vector<16x32xf32>
      %144 = arith.truncf %143 : vector<16x32xf32> to vector<16x32xbf16>
      %cst_63 = arith.constant dense<0.000000e+00> : vector<100x16xf32>
      %145 = tpu.matmul %140, %142, %cst_63 {dimension_numbers = #tpu.dot_dimension_numbers<[1], [1], [0], [0], [0, 0, 1, 0], [], []>} : vector<100x32xbf16>, vector<16x32xbf16>, vector<100x16xf32> -> vector<100x16xf32>
      %cst_64 = arith.constant 0.176776692 : f32
      %146 = vector.broadcast %cst_64 : f32 to vector<100x16xf32>
      %147 = arith.mulf %145, %146 : vector<100x16xf32>
      %cst_65 = arith.constant dense<0xFF800000> : vector<100xf32>
      %148 = vector.multi_reduction <maximumf>, %147, %cst_65 [1] : vector<100x16xf32> to vector<100xf32>
      %149 = vector.shape_cast %148 : vector<100xf32> to vector<100x1xf32>
      %150 = vector.broadcast %149 : vector<100x1xf32> to vector<100x16xf32>
      %151 = arith.subf %147, %150 : vector<100x16xf32>
      %152 = math.exp %151 : vector<100x16xf32>
      %cst_66 = arith.constant dense<0.000000e+00> : vector<100xf32>
      %153 = vector.multi_reduction <add>, %152, %cst_66 [1] : vector<100x16xf32> to vector<100xf32>
      %154 = vector.shape_cast %153 : vector<100xf32> to vector<100x1xf32>
      %155 = tpu.reciprocal %154 {approx = true} : vector<100x1xf32> -> vector<100x1xf32>
      %156 = vector.broadcast %155 : vector<100x1xf32> to vector<100x16xf32>
      %157 = arith.mulf %152, %156 : vector<100x16xf32>
      %158 = arith.truncf %157 : vector<100x16xf32> to vector<100x16xbf16>
      %cst_67 = arith.constant dense<0.000000e+00> : vector<100x32xf32>
      %159 = tpu.matmul %158, %144, %cst_67 {dimension_numbers = #tpu.dot_dimension_numbers<[1], [0], [0], [1], [0, 0, 1, 1], [], []>} : vector<100x16xbf16>, vector<16x32xbf16>, vector<100x32xf32> -> vector<100x32xf32>
      %160 = tpu.concatenate %138, %159 in 1 : vector<100x32xf32>, vector<100x32xf32> -> vector<100x64xf32>
      %161 = arith.truncf %160 : vector<100x64xf32> to vector<100x64xbf16>
      %c0_68 = arith.constant 0 : index
      %c0_69 = arith.constant 0 : index
      %162 = vector.load %arg13[%c0_68, %c0_69] : memref<64x64xbf16, #tpu.memory_space<vmem>>, vector<64x64xbf16>
      %cst_70 = arith.constant dense<0.000000e+00> : vector<100x64xf32>
      %163 = tpu.matmul %161, %162, %cst_70 {dimension_numbers = #tpu.dot_dimension_numbers<[1], [0], [0], [1], [0, 0, 1, 1], [], []>} : vector<100x64xbf16>, vector<64x64xbf16>, vector<100x64xf32> -> vector<100x64xf32>
      %c0_71 = arith.constant 0 : index
      %c0_72 = arith.constant 0 : index
      %164 = vector.load %arg14[%c0_71, %c0_72] : memref<1x64xf32, #tpu.memory_space<vmem>>, vector<1x64xf32>
      %165 = vector.broadcast %164 : vector<1x64xf32> to vector<100x64xf32>
      %166 = arith.addf %163, %165 : vector<100x64xf32>
      %167 = arith.addf %103, %166 : vector<100x64xf32>
      %c0_73 = arith.constant 0 : index
      %c0_74 = arith.constant 0 : index
      %168 = vector.load %arg15[%c0_73, %c0_74] : memref<1x64xf32, #tpu.memory_space<vmem>>, vector<1x64xf32>
      %c0_75 = arith.constant 0 : index
      %c0_76 = arith.constant 0 : index
      %169 = vector.load %arg16[%c0_75, %c0_76] : memref<1x64xf32, #tpu.memory_space<vmem>>, vector<1x64xf32>
      %cst_77 = arith.constant dense<0.000000e+00> : vector<100xf32>
      %170 = vector.multi_reduction <add>, %167, %cst_77 [1] : vector<100x64xf32> to vector<100xf32>
      %171 = vector.shape_cast %170 : vector<100xf32> to vector<100x1xf32>
      %cst_78 = arith.constant 6.400000e+01 : f32
      %172 = vector.broadcast %cst_78 : f32 to vector<100x1xf32>
      %173 = arith.divf %171, %172 : vector<100x1xf32>
      %174 = vector.broadcast %173 : vector<100x1xf32> to vector<100x64xf32>
      %175 = arith.subf %167, %174 : vector<100x64xf32>
      %176 = arith.mulf %175, %175 : vector<100x64xf32>
      %cst_79 = arith.constant dense<0.000000e+00> : vector<100xf32>
      %177 = vector.multi_reduction <add>, %176, %cst_79 [1] : vector<100x64xf32> to vector<100xf32>
      %178 = vector.shape_cast %177 : vector<100xf32> to vector<100x1xf32>
      %cst_80 = arith.constant 6.400000e+01 : f32
      %179 = vector.broadcast %cst_80 : f32 to vector<100x1xf32>
      %180 = arith.divf %178, %179 : vector<100x1xf32>
      %cst_81 = arith.constant 9.99999974E-6 : f32
      %181 = vector.broadcast %cst_81 : f32 to vector<100x1xf32>
      %182 = arith.addf %180, %181 : vector<100x1xf32>
      %183 = math.rsqrt %182 : vector<100x1xf32>
      %184 = vector.broadcast %183 : vector<100x1xf32> to vector<100x64xf32>
      %185 = arith.mulf %175, %184 : vector<100x64xf32>
      %186 = vector.broadcast %168 : vector<1x64xf32> to vector<100x64xf32>
      %187 = arith.mulf %185, %186 : vector<100x64xf32>
      %188 = vector.broadcast %169 : vector<1x64xf32> to vector<100x64xf32>
      %189 = arith.addf %187, %188 : vector<100x64xf32>
      %c0_82 = arith.constant 0 : index
      %c0_83 = arith.constant 0 : index
      %190 = vector.load %arg24[%c0_82, %c0_83] : memref<100x64xf32, #tpu.memory_space<vmem>>, vector<100x64xf32>
      tpu.vector_store %arg24[%c0_82, %c0_83], %189 {strides = array<i32>} : memref<100x64xf32, #tpu.memory_space<vmem>>, vector<100x64xf32>,
      %cst_84 = arith.constant 0.000000e+00 : f32
      %191 = vector.broadcast %cst_84 : f32 to vector<100x64xf32>
      %c0_85 = arith.constant 0 : index
      %c0_86 = arith.constant 0 : index
      %192 = vector.load %arg25[%c0_85, %c0_86] : memref<100x64xf32, #tpu.memory_space<vmem>>, vector<100x64xf32>
      tpu.vector_store %arg25[%c0_85, %c0_86], %191 {strides = array<i32>} : memref<100x64xf32, #tpu.memory_space<vmem>>, vector<100x64xf32>,
    } else {
    }
    %c0 = arith.constant 0 : index
    %c0_1 = arith.constant 0 : index
    %3 = vector.load %arg24[%c0, %c0_1] : memref<100x64xf32, #tpu.memory_space<vmem>>, vector<100x64xf32>
    %4 = arith.truncf %3 : vector<100x64xf32> to vector<100x64xbf16>
    %c0_2 = arith.constant 0 : index
    %c0_3 = arith.constant 0 : index
    %5 = vector.load %arg17[%c0_2, %c0_3] : memref<64x512xbf16, #tpu.memory_space<vmem>>, vector<64x512xbf16>
    %cst = arith.constant dense<0.000000e+00> : vector<100x512xf32>
    %6 = tpu.matmul %4, %5, %cst {dimension_numbers = #tpu.dot_dimension_numbers<[1], [0], [0], [1], [0, 0, 1, 1], [], []>} : vector<100x64xbf16>, vector<64x512xbf16>, vector<100x512xf32> -> vector<100x512xf32>
    %c0_4 = arith.constant 0 : index
    %c0_5 = arith.constant 0 : index
    %7 = vector.load %arg18[%c0_4, %c0_5] : memref<1x512xf32, #tpu.memory_space<vmem>>, vector<1x512xf32>
    %8 = vector.broadcast %7 : vector<1x512xf32> to vector<100x512xf32>
    %9 = arith.addf %6, %8 : vector<100x512xf32>
    %cst_6 = arith.constant 0.000000e+00 : f32
    %10 = vector.broadcast %cst_6 : f32 to vector<100x512xf32>
    %11 = arith.maximumf %9, %10 : vector<100x512xf32>
    %c0_7 = arith.constant 0 : index
    %c0_8 = arith.constant 0 : index
    %12 = vector.load %arg25[%c0_7, %c0_8] : memref<100x64xf32, #tpu.memory_space<vmem>>, vector<100x64xf32>
    %13 = arith.truncf %11 : vector<100x512xf32> to vector<100x512xbf16>
    %c0_9 = arith.constant 0 : index
    %c0_10 = arith.constant 0 : index
    %14 = vector.load %arg19[%c0_9, %c0_10] : memref<512x64xbf16, #tpu.memory_space<vmem>>, vector<512x64xbf16>
    %cst_11 = arith.constant dense<0.000000e+00> : vector<100x64xf32>
    %15 = tpu.matmul %13, %14, %cst_11 {dimension_numbers = #tpu.dot_dimension_numbers<[1], [0], [0], [1], [0, 0, 1, 1], [], []>} : vector<100x512xbf16>, vector<512x64xbf16>, vector<100x64xf32> -> vector<100x64xf32>
    %16 = arith.addf %12, %15 : vector<100x64xf32>
    %c0_12 = arith.constant 0 : index
    %c0_13 = arith.constant 0 : index
    %17 = vector.load %arg25[%c0_12, %c0_13] : memref<100x64xf32, #tpu.memory_space<vmem>>, vector<100x64xf32>
    tpu.vector_store %arg25[%c0_12, %c0_13], %16 {strides = array<i32>} : memref<100x64xf32, #tpu.memory_space<vmem>>, vector<100x64xf32>,
    %c3_i32 = arith.constant 3 : i32
    %18 = arith.cmpi eq, %arg0, %c3_i32 : i32
    %19 = arith.extui %18 : i1 to i32
    %c0_i32_14 = arith.constant 0 : i32
    %20 = arith.cmpi ne, %19, %c0_i32_14 : i32
    scf.if %20 {
      %c0_15 = arith.constant 0 : index
      %c0_16 = arith.constant 0 : index
      %21 = vector.load %arg24[%c0_15, %c0_16] : memref<100x64xf32, #tpu.memory_space<vmem>>, vector<100x64xf32>
      %c0_17 = arith.constant 0 : index
      %c0_18 = arith.constant 0 : index
      %22 = vector.load %arg25[%c0_17, %c0_18] : memref<100x64xf32, #tpu.memory_space<vmem>>, vector<100x64xf32>
      %23 = arith.addf %21, %22 : vector<100x64xf32>
      %c0_19 = arith.constant 0 : index
      %c0_20 = arith.constant 0 : index
      %24 = vector.load %arg20[%c0_19, %c0_20] : memref<1x64xf32, #tpu.memory_space<vmem>>, vector<1x64xf32>
      %25 = vector.broadcast %24 : vector<1x64xf32> to vector<100x64xf32>
      %26 = arith.addf %23, %25 : vector<100x64xf32>
      %c0_21 = arith.constant 0 : index
      %c0_22 = arith.constant 0 : index
      %27 = vector.load %arg21[%c0_21, %c0_22] : memref<1x64xf32, #tpu.memory_space<vmem>>, vector<1x64xf32>
      %c0_23 = arith.constant 0 : index
      %c0_24 = arith.constant 0 : index
      %28 = vector.load %arg22[%c0_23, %c0_24] : memref<1x64xf32, #tpu.memory_space<vmem>>, vector<1x64xf32>
      %cst_25 = arith.constant dense<0.000000e+00> : vector<100xf32>
      %29 = vector.multi_reduction <add>, %26, %cst_25 [1] : vector<100x64xf32> to vector<100xf32>
      %30 = vector.shape_cast %29 : vector<100xf32> to vector<100x1xf32>
      %cst_26 = arith.constant 6.400000e+01 : f32
      %31 = vector.broadcast %cst_26 : f32 to vector<100x1xf32>
      %32 = arith.divf %30, %31 : vector<100x1xf32>
      %33 = vector.broadcast %32 : vector<100x1xf32> to vector<100x64xf32>
      %34 = arith.subf %26, %33 : vector<100x64xf32>
      %35 = arith.mulf %34, %34 : vector<100x64xf32>
      %cst_27 = arith.constant dense<0.000000e+00> : vector<100xf32>
      %36 = vector.multi_reduction <add>, %35, %cst_27 [1] : vector<100x64xf32> to vector<100xf32>
      %37 = vector.shape_cast %36 : vector<100xf32> to vector<100x1xf32>
      %cst_28 = arith.constant 6.400000e+01 : f32
      %38 = vector.broadcast %cst_28 : f32 to vector<100x1xf32>
      %39 = arith.divf %37, %38 : vector<100x1xf32>
      %cst_29 = arith.constant 9.99999974E-6 : f32
      %40 = vector.broadcast %cst_29 : f32 to vector<100x1xf32>
      %41 = arith.addf %39, %40 : vector<100x1xf32>
      %42 = math.rsqrt %41 : vector<100x1xf32>
      %43 = vector.broadcast %42 : vector<100x1xf32> to vector<100x64xf32>
      %44 = arith.mulf %34, %43 : vector<100x64xf32>
      %45 = vector.broadcast %27 : vector<1x64xf32> to vector<100x64xf32>
      %46 = arith.mulf %44, %45 : vector<100x64xf32>
      %47 = vector.broadcast %28 : vector<1x64xf32> to vector<100x64xf32>
      %48 = arith.addf %46, %47 : vector<100x64xf32>
      %c0_30 = arith.constant 0 : index
      %c0_31 = arith.constant 0 : index
      %49 = vector.load %arg23[%c0_30, %c0_31] : memref<100x64xf32, #tpu.memory_space<vmem>>, vector<100x64xf32>
      tpu.vector_store %arg23[%c0_30, %c0_31], %48 {strides = array<i32>} : memref<100x64xf32, #tpu.memory_space<vmem>>, vector<100x64xf32>,
    } else {
    }
    return
  }
  func.func @transform_0(%arg0: i32) -> (i32, i32) {
    %c0_i32 = arith.constant 0 : i32
    %c0_i32_0 = arith.constant 0 : i32
    %c0_i32_1 = arith.constant 0 : i32
    return %c0_i32, %c0_i32_0 : i32, i32
  }
  func.func @transform_1(%arg0: i32) -> (i32, i32) {
    %c0_i32 = arith.constant 0 : i32
    %c0_i32_0 = arith.constant 0 : i32
    %c0_i32_1 = arith.constant 0 : i32
    return %c0_i32, %c0_i32_0 : i32, i32
  }
  func.func @transform_2(%arg0: i32) -> (i32, i32) {
    %c0_i32 = arith.constant 0 : i32
    %c0_i32_0 = arith.constant 0 : i32
    %c0_i32_1 = arith.constant 0 : i32
    return %c0_i32, %c0_i32_0 : i32, i32
  }
  func.func @transform_3(%arg0: i32) -> (i32, i32) {
    %c0_i32 = arith.constant 0 : i32
    %c0_i32_0 = arith.constant 0 : i32
    %c0_i32_1 = arith.constant 0 : i32
    return %c0_i32, %c0_i32_0 : i32, i32
  }
  func.func @transform_4(%arg0: i32) -> (i32, i32) {
    %c0_i32 = arith.constant 0 : i32
    %c0_i32_0 = arith.constant 0 : i32
    %c0_i32_1 = arith.constant 0 : i32
    return %c0_i32, %c0_i32_0 : i32, i32
  }
  func.func @transform_5(%arg0: i32) -> (i32, i32) {
    %c0_i32 = arith.constant 0 : i32
    %c0_i32_0 = arith.constant 0 : i32
    %c0_i32_1 = arith.constant 0 : i32
    return %c0_i32, %c0_i32_0 : i32, i32
  }
  func.func @transform_6(%arg0: i32) -> (i32, i32) {
    %c0_i32 = arith.constant 0 : i32
    %c0_i32_0 = arith.constant 0 : i32
    %c0_i32_1 = arith.constant 0 : i32
    return %c0_i32, %c0_i32_0 : i32, i32
  }
  func.func @transform_7(%arg0: i32) -> (i32, i32) {
    %c0_i32 = arith.constant 0 : i32
    %c0_i32_0 = arith.constant 0 : i32
    %c0_i32_1 = arith.constant 0 : i32
    return %c0_i32, %c0_i32_0 : i32, i32
  }
  func.func @transform_8(%arg0: i32) -> (i32, i32) {
    %c0_i32 = arith.constant 0 : i32
    %c0_i32_0 = arith.constant 0 : i32
    %c0_i32_1 = arith.constant 0 : i32
    return %c0_i32, %c0_i32_0 : i32, i32
  }
  func.func @transform_9(%arg0: i32) -> (i32, i32) {
    %c0_i32 = arith.constant 0 : i32
    %c0_i32_0 = arith.constant 0 : i32
    %c0_i32_1 = arith.constant 0 : i32
    return %c0_i32, %c0_i32_0 : i32, i32
  }
  func.func @transform_10(%arg0: i32) -> (i32, i32) {
    %c0_i32 = arith.constant 0 : i32
    %c0_i32_0 = arith.constant 0 : i32
    %c0_i32_1 = arith.constant 0 : i32
    return %c0_i32, %c0_i32_0 : i32, i32
  }
  func.func @transform_11(%arg0: i32) -> (i32, i32) {
    %c0_i32 = arith.constant 0 : i32
    %c0_i32_0 = arith.constant 0 : i32
    %c0_i32_1 = arith.constant 0 : i32
    return %c0_i32, %c0_i32_0 : i32, i32
  }
  func.func @transform_12(%arg0: i32) -> (i32, i32) {
    %c0_i32 = arith.constant 0 : i32
    %c0_i32_0 = arith.constant 0 : i32
    %c0_i32_1 = arith.constant 0 : i32
    return %c0_i32, %c0_i32_0 : i32, i32
  }
  func.func @transform_13(%arg0: i32) -> (i32, i32) {
    %c0_i32 = arith.constant 0 : i32
    %c0_i32_0 = arith.constant 0 : i32
    %c0_i32_1 = arith.constant 0 : i32
    return %c0_i32, %c0_i32_0 : i32, i32
  }
  func.func @transform_14(%arg0: i32) -> (i32, i32) {
    %c0_i32 = arith.constant 0 : i32
    %c0_i32_0 = arith.constant 0 : i32
    %c0_i32_1 = arith.constant 0 : i32
    return %c0_i32, %c0_i32_0 : i32, i32
  }
  func.func @transform_15(%arg0: i32) -> (i32, i32) {
    %c0_i32 = arith.constant 0 : i32
    %c0_i32_0 = arith.constant 0 : i32
    %c0_i32_1 = arith.constant 0 : i32
    return %c0_i32, %c0_i32_0 : i32, i32
  }
  func.func @transform_16(%arg0: i32) -> (i32, i32) {
    %c0_i32 = arith.constant 0 : i32
    %c0_i32_0 = arith.constant 0 : i32
    return %c0_i32, %arg0 : i32, i32
  }
  func.func @transform_17(%arg0: i32) -> (i32, i32) {
    %c0_i32 = arith.constant 0 : i32
    %c0_i32_0 = arith.constant 0 : i32
    return %c0_i32, %arg0 : i32, i32
  }
  func.func @transform_18(%arg0: i32) -> (i32, i32) {
    %c0_i32 = arith.constant 0 : i32
    %c0_i32_0 = arith.constant 0 : i32
    return %arg0, %c0_i32 : i32, i32
  }
  func.func @transform_19(%arg0: i32) -> (i32, i32) {
    %c0_i32 = arith.constant 0 : i32
    %c0_i32_0 = arith.constant 0 : i32
    %c0_i32_1 = arith.constant 0 : i32
    return %c0_i32, %c0_i32_0 : i32, i32
  }
  func.func @transform_20(%arg0: i32) -> (i32, i32) {
    %c0_i32 = arith.constant 0 : i32
    %c0_i32_0 = arith.constant 0 : i32
    %c0_i32_1 = arith.constant 0 : i32
    return %c0_i32, %c0_i32_0 : i32, i32
  }
  func.func @transform_21(%arg0: i32) -> (i32, i32) {
    %c0_i32 = arith.constant 0 : i32
    %c0_i32_0 = arith.constant 0 : i32
    %c0_i32_1 = arith.constant 0 : i32
    return %c0_i32, %c0_i32_0 : i32, i32
  }
  func.func @transform_22(%arg0: i32) -> (i32, i32) {
    %c0_i32 = arith.constant 0 : i32
    %c0_i32_0 = arith.constant 0 : i32
    %c0_i32_1 = arith.constant 0 : i32
    return %c0_i32, %c0_i32_0 : i32, i32
  }
}

module attributes {stable_mosaic.version = 11 : i64} {
  func.func @_heads_kernel(%arg0: memref<100x64xf32, #tpu.memory_space<vmem>>, %arg1: memref<1x64xf32, #tpu.memory_space<vmem>>, %arg2: memref<1x64xf32, #tpu.memory_space<vmem>>, %arg3: memref<64x11xbf16, #tpu.memory_space<vmem>>, %arg4: memref<1x11xf32, #tpu.memory_space<vmem>>, %arg5: memref<64x4xbf16, #tpu.memory_space<vmem>>, %arg6: memref<1x4xf32, #tpu.memory_space<vmem>>, %arg7: memref<100x11xf32, #tpu.memory_space<vmem>>, %arg8: memref<100x4xf32, #tpu.memory_space<vmem>>) attributes {dimension_semantics = [], scalar_prefetch = 0 : i64, scratch_operands = 0 : i64, tpu.core_type = #tpu.core_type<tc>} {
    %c0 = arith.constant 0 : index
    %c0_0 = arith.constant 0 : index
    %0 = vector.load %arg0[%c0, %c0_0] : memref<100x64xf32, #tpu.memory_space<vmem>>, vector<100x64xf32>
    %c0_1 = arith.constant 0 : index
    %c0_2 = arith.constant 0 : index
    %1 = vector.load %arg1[%c0_1, %c0_2] : memref<1x64xf32, #tpu.memory_space<vmem>>, vector<1x64xf32>
    %c0_3 = arith.constant 0 : index
    %c0_4 = arith.constant 0 : index
    %2 = vector.load %arg2[%c0_3, %c0_4] : memref<1x64xf32, #tpu.memory_space<vmem>>, vector<1x64xf32>
    %cst = arith.constant dense<0.000000e+00> : vector<100xf32>
    %3 = vector.multi_reduction <add>, %0, %cst [1] : vector<100x64xf32> to vector<100xf32>
    %4 = vector.shape_cast %3 : vector<100xf32> to vector<100x1xf32>
    %cst_5 = arith.constant 6.400000e+01 : f32
    %5 = vector.broadcast %cst_5 : f32 to vector<100x1xf32>
    %6 = arith.divf %4, %5 : vector<100x1xf32>
    %7 = vector.broadcast %6 : vector<100x1xf32> to vector<100x64xf32>
    %8 = arith.subf %0, %7 : vector<100x64xf32>
    %9 = arith.mulf %8, %8 : vector<100x64xf32>
    %cst_6 = arith.constant dense<0.000000e+00> : vector<100xf32>
    %10 = vector.multi_reduction <add>, %9, %cst_6 [1] : vector<100x64xf32> to vector<100xf32>
    %11 = vector.shape_cast %10 : vector<100xf32> to vector<100x1xf32>
    %cst_7 = arith.constant 6.400000e+01 : f32
    %12 = vector.broadcast %cst_7 : f32 to vector<100x1xf32>
    %13 = arith.divf %11, %12 : vector<100x1xf32>
    %cst_8 = arith.constant 9.99999974E-6 : f32
    %14 = vector.broadcast %cst_8 : f32 to vector<100x1xf32>
    %15 = arith.addf %13, %14 : vector<100x1xf32>
    %16 = math.rsqrt %15 : vector<100x1xf32>
    %17 = vector.broadcast %16 : vector<100x1xf32> to vector<100x64xf32>
    %18 = arith.mulf %8, %17 : vector<100x64xf32>
    %19 = vector.broadcast %1 : vector<1x64xf32> to vector<100x64xf32>
    %20 = arith.mulf %18, %19 : vector<100x64xf32>
    %21 = vector.broadcast %2 : vector<1x64xf32> to vector<100x64xf32>
    %22 = arith.addf %20, %21 : vector<100x64xf32>
    %23 = arith.truncf %22 : vector<100x64xf32> to vector<100x64xbf16>
    %c0_9 = arith.constant 0 : index
    %c0_10 = arith.constant 0 : index
    %24 = vector.load %arg3[%c0_9, %c0_10] : memref<64x11xbf16, #tpu.memory_space<vmem>>, vector<64x11xbf16>
    %cst_11 = arith.constant dense<0.000000e+00> : vector<100x11xf32>
    %25 = tpu.matmul %23, %24, %cst_11 {dimension_numbers = #tpu.dot_dimension_numbers<[1], [0], [0], [1], [0, 0, 1, 1], [], []>} : vector<100x64xbf16>, vector<64x11xbf16>, vector<100x11xf32> -> vector<100x11xf32>
    %c0_12 = arith.constant 0 : index
    %c0_13 = arith.constant 0 : index
    %26 = vector.load %arg4[%c0_12, %c0_13] : memref<1x11xf32, #tpu.memory_space<vmem>>, vector<1x11xf32>
    %27 = vector.broadcast %26 : vector<1x11xf32> to vector<100x11xf32>
    %28 = arith.addf %25, %27 : vector<100x11xf32>
    %c0_14 = arith.constant 0 : index
    %c0_15 = arith.constant 0 : index
    %29 = vector.load %arg7[%c0_14, %c0_15] : memref<100x11xf32, #tpu.memory_space<vmem>>, vector<100x11xf32>
    tpu.vector_store %arg7[%c0_14, %c0_15], %28 {strides = array<i32>} : memref<100x11xf32, #tpu.memory_space<vmem>>, vector<100x11xf32>,
    %30 = arith.truncf %22 : vector<100x64xf32> to vector<100x64xbf16>
    %c0_16 = arith.constant 0 : index
    %c0_17 = arith.constant 0 : index
    %31 = vector.load %arg5[%c0_16, %c0_17] : memref<64x4xbf16, #tpu.memory_space<vmem>>, vector<64x4xbf16>
    %cst_18 = arith.constant dense<0.000000e+00> : vector<100x4xf32>
    %32 = tpu.matmul %30, %31, %cst_18 {dimension_numbers = #tpu.dot_dimension_numbers<[1], [0], [0], [1], [0, 0, 1, 1], [], []>} : vector<100x64xbf16>, vector<64x4xbf16>, vector<100x4xf32> -> vector<100x4xf32>
    %c0_19 = arith.constant 0 : index
    %c0_20 = arith.constant 0 : index
    %33 = vector.load %arg6[%c0_19, %c0_20] : memref<1x4xf32, #tpu.memory_space<vmem>>, vector<1x4xf32>
    %34 = vector.broadcast %33 : vector<1x4xf32> to vector<100x4xf32>
    %35 = arith.addf %32, %34 : vector<100x4xf32>
    %36 = arith.negf %35 : vector<100x4xf32>
    %37 = math.exp %36 : vector<100x4xf32>
    %cst_21 = arith.constant 1.000000e+00 : f32
    %38 = vector.broadcast %cst_21 : f32 to vector<100x4xf32>
    %39 = arith.addf %38, %37 : vector<100x4xf32>
    %40 = arith.divf %38, %39 : vector<100x4xf32>
    %c0_22 = arith.constant 0 : index
    %c0_23 = arith.constant 0 : index
    %41 = vector.load %arg8[%c0_22, %c0_23] : memref<100x4xf32, #tpu.memory_space<vmem>>, vector<100x4xf32>
    tpu.vector_store %arg8[%c0_22, %c0_23], %40 {strides = array<i32>} : memref<100x4xf32, #tpu.memory_space<vmem>>, vector<100x4xf32>,
    return
  }
}

</mosaic_0001>

<llo_original>
// kernel: detr_forward.6
$region0: #{detr_forward.6}
  #allocation0 [shape = 'u32[]', space=smem, size = 0x4, offset = 0x4, fixed_abs, tag = 'smem constant byte address 0x4 - core index']
  #allocation1 [shape = 'u32[144,128]{1,0:T(1,128)}', space=vmem, size = 0x12000, scoped, tag = 'internal scratch']
  #allocation2 [shape = 'f32[16,64]{1,0:T(8,128)}', space=vmem, size = 0x2000, scoped, tag = 'scratch operand']
  #allocation3 [shape = 'f32[16,64]{1,0:T(8,128)}', space=vmem, size = 0x2000, scoped, tag = 'scratch operand']
  %s0 = inlined_call_operand.vmem [shape: f32[16,64], index: 0, kind: input, shape index: {}]
  %s1 = inlined_call_operand.vmem [shape: bf16[64,192], index: 1, kind: input, shape index: {}]
  %s2 = inlined_call_operand.vmem [shape: f32[1,192], index: 2, kind: input, shape index: {}]
  %s3 = inlined_call_operand.vmem [shape: bf16[64,64], index: 3, kind: input, shape index: {}]
  %s4 = inlined_call_operand.vmem [shape: f32[1,64], index: 4, kind: input, shape index: {}]
  %s5 = inlined_call_operand.vmem [shape: f32[1,64], index: 5, kind: input, shape index: {}]
  %s6 = inlined_call_operand.vmem [shape: f32[1,64], index: 6, kind: input, shape index: {}]
  %s7 = inlined_call_operand.vmem [shape: bf16[64,2048], index: 7, kind: input, shape index: {}]
  %s8 = inlined_call_operand.vmem [shape: f32[1,2048], index: 8, kind: input, shape index: {}]
  %s9 = inlined_call_operand.vmem [shape: bf16[2048,64], index: 9, kind: input, shape index: {}]
  %s10 = inlined_call_operand.vmem [shape: f32[1,64], index: 10, kind: input, shape index: {}]
  %s11 = inlined_call_operand.vmem [shape: f32[1,64], index: 11, kind: input, shape index: {}]
  %s12 = inlined_call_operand.vmem [shape: f32[1,64], index: 12, kind: input, shape index: {}]
  %s13 = inlined_call_operand.vmem [shape: f32[16,64], index: 13, kind: output, shape index: {}]
  %s14 = sld [smem:[#allocation0]]
  $region116: #{detr_forward.6} parent=0
    _
  %s16 = ssub.s32 1, %s14
  %s17 = scalar_select 0, %s16, %s14
  $region1: #{detr_forward.6} parent=0
    #allocation4 [shape = 'u8[131072]{0}', space=vmem, size = 0x20000, scoped, tag = 'input window, operand 7']
    loop: start=0, step=1, limit=6
    $region2: #{detr_forward.6} parent=1 // loop_pre_header
      _
    $region3: #{detr_forward.6} parent=1 // loop_header
      %s19 = sphi 0, %s23
      %p20 = scmp.ge.s32.totalorder %s19, 6
      %s27 = sphi 0, %s27
      %s29 = sphi 0, %s27
      %s30 = sphi 0, %s29
      %s44 = sphi 0, %s30
      %s48 = sphi 0, %s48
      %s50 = sphi 0, %s48
      %s51 = sphi 0, %s50
      %s65 = sphi 0, %s51
      %s69 = sphi 0, %s69
      %s71 = sphi 0, %s69
      %s72 = sphi 0, %s71
      %s86 = sphi 0, %s72
      %s90 = sphi 0, %s90
      %s92 = sphi 0, %s90
      %s93 = sphi 0, %s92
      %s107 = sphi 0, %s93
      %s111 = sphi 0, %s111
      %s113 = sphi 0, %s111
      %s114 = sphi 0, %s113
      %s128 = sphi 0, %s114
      %s132 = sphi 0, %s132
      %s134 = sphi 0, %s132
      %s135 = sphi 0, %s134
      %s149 = sphi 0, %s135
      %s153 = sphi 0, %s153
      %s155 = sphi 0, %s153
      %s156 = sphi 0, %s155
      %s170 = sphi 0, %s156
      %s176 = sphi 0, %s178
      %s179 = sphi 0, %s176
      %s180 = sphi 0, %s179
      %s196 = sphi 0, %s180
      %s202 = sphi 0, %s204
      %s205 = sphi 0, %s202
      %s206 = sphi 0, %s205
      %s222 = sphi 0, %s206
      %s228 = sphi 0, %s230
      %s231 = sphi 0, %s228
      %s232 = sphi 0, %s231
      %s248 = sphi 0, %s232
      %s252 = sphi 0, %s252
      %s254 = sphi 0, %s252
      %s255 = sphi 0, %s254
      %s269 = sphi 0, %s255
      %s273 = sphi 0, %s273
      %s275 = sphi 0, %s273
      %s276 = sphi 0, %s275
      %s290 = sphi 0, %s276
      %s294 = sphi 0, %s294
      %s296 = sphi 0, %s294
      %s297 = sphi 0, %s296
      %s311 = sphi 0, %s297
      %s315 = sphi 0, %s315
      %s317 = sphi 0, %s315
      %s318 = sphi 0, %s317
      %s332 = sphi 0, %s318
    $region4: #{detr_forward.6} parent=1 // loop_header_branch
      %22 = sbr.rel (%p20) target = $region8
    $region5: #{detr_forward.6} parent=1 // loop_body
      %s24 = ssub.s32 %s19, 1
      %s25 = ssub.s32 %s19, 2
      %s26 = sadd.s32 %s19, 1
      %s28 = sadd.s32 %s27, 1
      %p31 = scmp.eq.s32.totalorder %s19, 3
      %p32 = scmp.ne.s32.totalorder %s27, %s29
      %p33 = scmp.eq.s32.totalorder %s19, 0
      %p34 = por %p32, %p33
      %p35 = scmp.ne.s32.totalorder %s27, %s29
      %p36 = scmp.eq.s32.totalorder %s24, 3
      %p37 = por %p35, %p36
      %p38 = scmp.ne.s32.totalorder %s29, %s30
      %p39 = scmp.eq.s32.totalorder %s24, 0
      %p40 = por %p38, %p39
      %p41 = scmp.ne.s32.totalorder %s29, %s30
      %p42 = scmp.eq.s32.totalorder %s25, 3
      %p43 = por %p41, %p42
      %p45 = scmp.ne.s32.totalorder %s30, %s44
      %p46 = scmp.eq.s32.totalorder %s25, 0
      %p47 = por %p45, %p46
      %s49 = sadd.s32 %s48, 1
      %p52 = scmp.eq.s32.totalorder %s19, 3
      %p53 = scmp.ne.s32.totalorder %s48, %s50
      %p54 = scmp.eq.s32.totalorder %s19, 0
      %p55 = por %p53, %p54
      %p56 = scmp.ne.s32.totalorder %s48, %s50
      %p57 = scmp.eq.s32.totalorder %s24, 3
      %p58 = por %p56, %p57
      %p59 = scmp.ne.s32.totalorder %s50, %s51
      %p60 = scmp.eq.s32.totalorder %s24, 0
      %p61 = por %p59, %p60
      %p62 = scmp.ne.s32.totalorder %s50, %s51
      %p63 = scmp.eq.s32.totalorder %s25, 3
      %p64 = por %p62, %p63
      %p66 = scmp.ne.s32.totalorder %s51, %s65
      %p67 = scmp.eq.s32.totalorder %s25, 0
      %p68 = por %p66, %p67
      %s70 = sadd.s32 %s69, 1
      %p73 = scmp.eq.s32.totalorder %s19, 3
      %p74 = scmp.ne.s32.totalorder %s69, %s71
      %p75 = scmp.eq.s32.totalorder %s19, 0
      %p76 = por %p74, %p75
      %p77 = scmp.ne.s32.totalorder %s69, %s71
      %p78 = scmp.eq.s32.totalorder %s24, 3
      %p79 = por %p77, %p78
      %p80 = scmp.ne.s32.totalorder %s71, %s72
      %p81 = scmp.eq.s32.totalorder %s24, 0
      %p82 = por %p80, %p81
      %p83 = scmp.ne.s32.totalorder %s71, %s72
      %p84 = scmp.eq.s32.totalorder %s25, 3
      %p85 = por %p83, %p84
      %p87 = scmp.ne.s32.totalorder %s72, %s86
      %p88 = scmp.eq.s32.totalorder %s25, 0
      %p89 = por %p87, %p88
      %s91 = sadd.s32 %s90, 1
      %p94 = scmp.eq.s32.totalorder %s19, 3
      %p95 = scmp.ne.s32.totalorder %s90, %s92
      %p96 = scmp.eq.s32.totalorder %s19, 0
      %p97 = por %p95, %p96
      %p98 = scmp.ne.s32.totalorder %s90, %s92
      %p99 = scmp.eq.s32.totalorder %s24, 3
      %p100 = por %p98, %p99
      %p101 = scmp.ne.s32.totalorder %s92, %s93
      %p102 = scmp.eq.s32.totalorder %s24, 0
      %p103 = por %p101, %p102
      %p104 = scmp.ne.s32.totalorder %s92, %s93
      %p105 = scmp.eq.s32.totalorder %s25, 3
      %p106 = por %p104, %p105
      %p108 = scmp.ne.s32.totalorder %s93, %s107
      %p109 = scmp.eq.s32.totalorder %s25, 0
      %p110 = por %p108, %p109
      %s112 = sadd.s32 %s111, 1
      %p115 = scmp.eq.s32.totalorder %s19, 3
      %p116 = scmp.ne.s32.totalorder %s111, %s113
      %p117 = scmp.eq.s32.totalorder %s19, 0
      %p118 = por %p116, %p117
      %p119 = scmp.ne.s32.totalorder %s111, %s113
      %p120 = scmp.eq.s32.totalorder %s24, 3
      %p121 = por %p119, %p120
      %p122 = scmp.ne.s32.totalorder %s113, %s114
      %p123 = scmp.eq.s32.totalorder %s24, 0
      %p124 = por %p122, %p123
      %p125 = scmp.ne.s32.totalorder %s113, %s114
      %p126 = scmp.eq.s32.totalorder %s25, 3
      %p127 = por %p125, %p126
      %p129 = scmp.ne.s32.totalorder %s114, %s128
      %p130 = scmp.eq.s32.totalorder %s25, 0
      %p131 = por %p129, %p130
      %s133 = sadd.s32 %s132, 1
      %p136 = scmp.eq.s32.totalorder %s19, 3
      %p137 = scmp.ne.s32.totalorder %s132, %s134
      %p138 = scmp.eq.s32.totalorder %s19, 0
      %p139 = por %p137, %p138
      %p140 = scmp.ne.s32.totalorder %s132, %s134
      %p141 = scmp.eq.s32.totalorder %s24, 3
      %p142 = por %p140, %p141
      %p143 = scmp.ne.s32.totalorder %s134, %s135
      %p144 = scmp.eq.s32.totalorder %s24, 0
      %p145 = por %p143, %p144
      %p146 = scmp.ne.s32.totalorder %s134, %s135
      %p147 = scmp.eq.s32.totalorder %s25, 3
      %p148 = por %p146, %p147
      %p150 = scmp.ne.s32.totalorder %s135, %s149
      %p151 = scmp.eq.s32.totalorder %s25, 0
      %p152 = por %p150, %p151
      %s154 = sadd.s32 %s153, 1
      %p157 = scmp.eq.s32.totalorder %s19, 3
      %p158 = scmp.ne.s32.totalorder %s153, %s155
      %p159 = scmp.eq.s32.totalorder %s19, 0
      %p160 = por %p158, %p159
      %p161 = scmp.ne.s32.totalorder %s153, %s155
      %p162 = scmp.eq.s32.totalorder %s24, 3
      %p163 = por %p161, %p162
      %p164 = scmp.ne.s32.totalorder %s155, %s156
      %p165 = scmp.eq.s32.totalorder %s24, 0
      %p166 = por %p164, %p165
      %p167 = scmp.ne.s32.totalorder %s155, %s156
      %p168 = scmp.eq.s32.totalorder %s25, 3
      %p169 = por %p167, %p168
      %p171 = scmp.ne.s32.totalorder %s156, %s170
      %p172 = scmp.eq.s32.totalorder %s25, 0
      %p173 = por %p171, %p172
      %s174 = ssub.s32 %s19, %s26
      %p175 = scmp.eq.s32.totalorder %s174, 0
      %s177 = sadd.s32 %s176, 1
      %s178 = scalar_select %p175, %s176, %s177
      %p181 = pneg %p175
      %p182 = scmp.eq.s32.totalorder %s19, 3
      %p183 = por %p181, %p182
      %p184 = scmp.ne.s32.totalorder %s176, %s179
      %p185 = scmp.eq.s32.totalorder %s19, 0
      %p186 = por %p184, %p185
      %p187 = scmp.ne.s32.totalorder %s176, %s179
      %p188 = scmp.eq.s32.totalorder %s24, 3
      %p189 = por %p187, %p188
      %p190 = scmp.ne.s32.totalorder %s179, %s180
      %p191 = scmp.eq.s32.totalorder %s24, 0
      %p192 = por %p190, %p191
      %p193 = scmp.ne.s32.totalorder %s179, %s180
      %p194 = scmp.eq.s32.totalorder %s25, 3
      %p195 = por %p193, %p194
      %p197 = scmp.ne.s32.totalorder %s180, %s196
      %p198 = scmp.eq.s32.totalorder %s25, 0
      %p199 = por %p197, %p198
      %s200 = ssub.s32 %s19, %s26
      %p201 = scmp.eq.s32.totalorder %s200, 0
      %s203 = sadd.s32 %s202, 1
      %s204 = scalar_select %p201, %s202, %s203
      %p207 = pneg %p201
      %p208 = scmp.eq.s32.totalorder %s19, 3
      %p209 = por %p207, %p208
      %p210 = scmp.ne.s32.totalorder %s202, %s205
      %p211 = scmp.eq.s32.totalorder %s19, 0
      %p212 = por %p210, %p211
      %p213 = scmp.ne.s32.totalorder %s202, %s205
      %p214 = scmp.eq.s32.totalorder %s24, 3
      %p215 = por %p213, %p214
      %p216 = scmp.ne.s32.totalorder %s205, %s206
      %p217 = scmp.eq.s32.totalorder %s24, 0
      %p218 = por %p216, %p217
      %p219 = scmp.ne.s32.totalorder %s205, %s206
      %p220 = scmp.eq.s32.totalorder %s25, 3
      %p221 = por %p219, %p220
      %p223 = scmp.ne.s32.totalorder %s206, %s222
      %p224 = scmp.eq.s32.totalorder %s25, 0
      %p225 = por %p223, %p224
      %s226 = ssub.s32 %s19, %s26
      %p227 = scmp.eq.s32.totalorder %s226, 0
      %s229 = sadd.s32 %s228, 1
      %s230 = scalar_select %p227, %s228, %s229
      %p233 = pneg %p227
      %p234 = scmp.eq.s32.totalorder %s19, 3
      %p235 = por %p233, %p234
      %p236 = scmp.ne.s32.totalorder %s228, %s231
      %p237 = scmp.eq.s32.totalorder %s19, 0
      %p238 = por %p236, %p237
      %p239 = scmp.ne.s32.totalorder %s228, %s231
      %p240 = scmp.eq.s32.totalorder %s24, 3
      %p241 = por %p239, %p240
      %p242 = scmp.ne.s32.totalorder %s231, %s232
      %p243 = scmp.eq.s32.totalorder %s24, 0
      %p244 = por %p242, %p243
      %p245 = scmp.ne.s32.totalorder %s231, %s232
      %p246 = scmp.eq.s32.totalorder %s25, 3
      %p247 = por %p245, %p246
      %p249 = scmp.ne.s32.totalorder %s232, %s248
      %p250 = scmp.eq.s32.totalorder %s25, 0
      %p251 = por %p249, %p250
      %s253 = sadd.s32 %s252, 1
      %p256 = scmp.eq.s32.totalorder %s19, 3
      %p257 = scmp.ne.s32.totalorder %s252, %s254
      %p258 = scmp.eq.s32.totalorder %s19, 0
      %p259 = por %p257, %p258
      %p260 = scmp.ne.s32.totalorder %s252, %s254
      %p261 = scmp.eq.s32.totalorder %s24, 3
      %p262 = por %p260, %p261
      %p263 = scmp.ne.s32.totalorder %s254, %s255
      %p264 = scmp.eq.s32.totalorder %s24, 0
      %p265 = por %p263, %p264
      %p266 = scmp.ne.s32.totalorder %s254, %s255
      %p267 = scmp.eq.s32.totalorder %s25, 3
      %p268 = por %p266, %p267
      %p270 = scmp.ne.s32.totalorder %s255, %s269
      %p271 = scmp.eq.s32.totalorder %s25, 0
      %p272 = por %p270, %p271
      %s274 = sadd.s32 %s273, 1
      %p277 = scmp.eq.s32.totalorder %s19, 3
      %p278 = scmp.ne.s32.totalorder %s273, %s275
      %p279 = scmp.eq.s32.totalorder %s19, 0
      %p280 = por %p278, %p279
      %p281 = scmp.ne.s32.totalorder %s273, %s275
      %p282 = scmp.eq.s32.totalorder %s24, 3
      %p283 = por %p281, %p282
      %p284 = scmp.ne.s32.totalorder %s275, %s276
      %p285 = scmp.eq.s32.totalorder %s24, 0
      %p286 = por %p284, %p285
      %p287 = scmp.ne.s32.totalorder %s275, %s276
      %p288 = scmp.eq.s32.totalorder %s25, 3
      %p289 = por %p287, %p288
      %p291 = scmp.ne.s32.totalorder %s276, %s290
      %p292 = scmp.eq.s32.totalorder %s25, 0
      %p293 = por %p291, %p292
      %s295 = sadd.s32 %s294, 1
      %p298 = scmp.eq.s32.totalorder %s19, 3
      %p299 = scmp.ne.s32.totalorder %s294, %s296
      %p300 = scmp.eq.s32.totalorder %s19, 0
      %p301 = por %p299, %p300
      %p302 = scmp.ne.s32.totalorder %s294, %s296
      %p303 = scmp.eq.s32.totalorder %s24, 3
      %p304 = por %p302, %p303
      %p305 = scmp.ne.s32.totalorder %s296, %s297
      %p306 = scmp.eq.s32.totalorder %s24, 0
      %p307 = por %p305, %p306
      %p308 = scmp.ne.s32.totalorder %s296, %s297
      %p309 = scmp.eq.s32.totalorder %s25, 3
      %p310 = por %p308, %p309
      %p312 = scmp.ne.s32.totalorder %s297, %s311
      %p313 = scmp.eq.s32.totalorder %s25, 0
      %p314 = por %p312, %p313
      %s316 = sadd.s32 %s315, 1
      %p319 = scmp.eq.s32.totalorder %s19, 3
      %p320 = scmp.ne.s32.totalorder %s315, %s317
      %p321 = scmp.eq.s32.totalorder %s19, 0
      %p322 = por %p320, %p321
      %p323 = scmp.ne.s32.totalorder %s315, %s317
      %p324 = scmp.eq.s32.totalorder %s24, 3
      %p325 = por %p323, %p324
      %p326 = scmp.ne.s32.totalorder %s317, %s318
      %p327 = scmp.eq.s32.totalorder %s24, 0
      %p328 = por %p326, %p327
      %p329 = scmp.ne.s32.totalorder %s317, %s318
      %p330 = scmp.eq.s32.totalorder %s25, 3
      %p331 = por %p329, %p330
      %p333 = scmp.ne.s32.totalorder %s318, %s332
      %p334 = scmp.eq.s32.totalorder %s25, 0
      %p335 = por %p333, %p334
      %p336 = scmp.le.s32.totalorder 1, %s19
      %p337 = scmp.lt.s32.totalorder %s19, 5
      %p338 = pnand %p336, %p337
      %p339 = pneg %p338
      // Predicated region
      $region9: #{detr_forward.6} parent=5 // pred_check
        _
      $region10: #{detr_forward.6} parent=5 // pred_check_branch
        %341 = sbr.rel (%p338) target = $region12
      $region11: #{detr_forward.6} parent=5 // pred_region
        %s342 = ssub.s32 %s19, 1
        // Predicated region
        $region13: #{detr_forward.6} parent=11 // pred_check
          %p343 = pneg %p40
        $region14: #{detr_forward.6} parent=11 // pred_check_branch
          %345 = sbr.rel (%p343) target = $region16
        $region15: #{detr_forward.6} parent=11 // pred_region
          _
        $region16: #{detr_forward.6} parent=11 // pred_fallthru
          _
        // Predicated region
        $region17: #{detr_forward.6} parent=11 // pred_check
          %p346 = pneg %p61
        $region18: #{detr_forward.6} parent=11 // pred_check_branch
          %348 = sbr.rel (%p346) target = $region20
        $region19: #{detr_forward.6} parent=11 // pred_region
          _
        $region20: #{detr_forward.6} parent=11 // pred_fallthru
          _
        // Predicated region
        $region21: #{detr_forward.6} parent=11 // pred_check
          %p349 = pneg %p82
        $region22: #{detr_forward.6} parent=11 // pred_check_branch
          %351 = sbr.rel (%p349) target = $region24
        $region23: #{detr_forward.6} parent=11 // pred_region
          _
        $region24: #{detr_forward.6} parent=11 // pred_fallthru
          _
        // Predicated region
        $region25: #{detr_forward.6} parent=11 // pred_check
          %p352 = pneg %p103
        $region26: #{detr_forward.6} parent=11 // pred_check_branch
          %354 = sbr.rel (%p352) target = $region28
        $region27: #{detr_forward.6} parent=11 // pred_region
          _
        $region28: #{detr_forward.6} parent=11 // pred_fallthru
          _
        // Predicated region
        $region29: #{detr_forward.6} parent=11 // pred_check
          %p355 = pneg %p124
        $region30: #{detr_forward.6} parent=11 // pred_check_branch
          %357 = sbr.rel (%p355) target = $region32
        $region31: #{detr_forward.6} parent=11 // pred_region
          _
        $region32: #{detr_forward.6} parent=11 // pred_fallthru
          _
        // Predicated region
        $region33: #{detr_forward.6} parent=11 // pred_check
          %p358 = pneg %p145
        $region34: #{detr_forward.6} parent=11 // pred_check_branch
          %360 = sbr.rel (%p358) target = $region36
        $region35: #{detr_forward.6} parent=11 // pred_region
          _
        $region36: #{detr_forward.6} parent=11 // pred_fallthru
          _
        // Predicated region
        $region37: #{detr_forward.6} parent=11 // pred_check
          %p361 = pneg %p166
        $region38: #{detr_forward.6} parent=11 // pred_check_branch
          %363 = sbr.rel (%p361) target = $region40
        $region39: #{detr_forward.6} parent=11 // pred_region
          _
        $region40: #{detr_forward.6} parent=11 // pred_fallthru
          _
        // Predicated region
        $region41: #{detr_forward.6} parent=11 // pred_check
          %p364 = pneg %p265
        $region42: #{detr_forward.6} parent=11 // pred_check_branch
          %366 = sbr.rel (%p364) target = $region44
        $region43: #{detr_forward.6} parent=11 // pred_region
          _
        $region44: #{detr_forward.6} parent=11 // pred_fallthru
          _
        // Predicated region
        $region45: #{detr_forward.6} parent=11 // pred_check
          %p367 = pneg %p286
        $region46: #{detr_forward.6} parent=11 // pred_check_branch
          %369 = sbr.rel (%p367) target = $region48
        $region47: #{detr_forward.6} parent=11 // pred_region
          _
        $region48: #{detr_forward.6} parent=11 // pred_fallthru
          _
        // Predicated region
        $region49: #{detr_forward.6} parent=11 // pred_check
          %p370 = pneg %p307
        $region50: #{detr_forward.6} parent=11 // pred_check_branch
          %372 = sbr.rel (%p370) target = $region52
        $region51: #{detr_forward.6} parent=11 // pred_region
          _
        $region52: #{detr_forward.6} parent=11 // pred_fallthru
          _
      $region12: #{detr_forward.6} parent=5 // pred_fallthru
        _
      %p373 = scmp.lt.s32.totalorder %s19, 4
      // Predicated region
      $region53: #{detr_forward.6} parent=5 // pred_check
        %p374 = pneg %p373
      $region54: #{detr_forward.6} parent=5 // pred_check_branch
        %376 = sbr.rel (%p374) target = $region56
      $region55: #{detr_forward.6} parent=5 // pred_region
        // Predicated region
        $region57: #{detr_forward.6} parent=55 // pred_check
          %p377 = pneg %p186
        $region58: #{detr_forward.6} parent=55 // pred_check_branch
          %379 = sbr.rel (%p377) target = $region60
        $region59: #{detr_forward.6} parent=55 // pred_region
          %s380 = sand.u32 %s176, 1
          %s381 = sand.u32 %s176, 1
          %s382 = smul.addr %s381, 128
          %s383 = scalar_lea.vmem [#allocation4], %s382
          %s384 = smul.u32 4, %s19
          %s385 = smul.addr %s384, 4
          %s386 = scalar_lea.vmem %s7, %s385
          // Predicated region
          $region61: #{detr_forward.6} parent=59 // pred_check
            _
          $region62: #{detr_forward.6} parent=59 // pred_check_branch
            %388 = sbr.rel (0) target = $region64
          $region63: #{detr_forward.6} parent=59 // pred_region
            // Predicated region
            $region65: #{detr_forward.6} parent=63 // pred_check
              _
            $region66: #{detr_forward.6} parent=63 // pred_check_branch
              %390 = sbr.rel (0) target = $region68
            $region67: #{detr_forward.6} parent=63 // pred_region
              loop: start=0, step=1, limit=1
              $region69: #{detr_forward.6} parent=67 // loop_pre_header
                _
              $region70: #{detr_forward.6} parent=67 // loop_header
                %s392 = sphi 0, %s396
                %p393 = scmp.ge.s32.totalorder %s392, 1
                %s397 = sphi %s386, %s386
                %s398 = sphi %s383, %s383
              $region71: #{detr_forward.6} parent=67 // loop_header_branch
                %395 = sbr.rel (%p393) target = $region75
              $region72: #{detr_forward.6} parent=67 // loop_body
                %v399 = vld [vmem:[%s397] sm:$0xff]
                %400 = vst [vmem:[%s398] sm:$0xff] %v399
                %v401 = vld [vmem:[%s397 + $0x8] sm:$0xff]
                %402 = vst [vmem:[%s398 + $0x8] sm:$0xff] %v401
                %v403 = vld [vmem:[%s397 + $0x40] sm:$0xff]
                %404 = vst [vmem:[%s398 + $0x10] sm:$0xff] %v403
                %v405 = vld [vmem:[%s397 + $0x48] sm:$0xff]
                %406 = vst [vmem:[%s398 + $0x18] sm:$0xff] %v405
                %v407 = vld [vmem:[%s397 + $0x80] sm:$0xff]
                %408 = vst [vmem:[%s398 + $0x20] sm:$0xff] %v407
                %v409 = vld [vmem:[%s397 + $0x88] sm:$0xff]
                %410 = vst [vmem:[%s398 + $0x28] sm:$0xff] %v409
                %v411 = vld [vmem:[%s397 + $0xc0] sm:$0xff]
                %412 = vst [vmem:[%s398 + $0x30] sm:$0xff] %v411
                %v413 = vld [vmem:[%s397 + $0xc8] sm:$0xff]
                %414 = vst [vmem:[%s398 + $0x38] sm:$0xff] %v413
                %v415 = vld [vmem:[%s397 + $0x100] sm:$0xff]
                %416 = vst [vmem:[%s398 + $0x40] sm:$0xff] %v415
                %v417 = vld [vmem:[%s397 + $0x108] sm:$0xff]
                %418 = vst [vmem:[%s398 + $0x48] sm:$0xff] %v417
                %v419 = vld [vmem:[%s397 + $0x140] sm:$0xff]
                %420 = vst [vmem:[%s398 + $0x50] sm:$0xff] %v419
                %v421 = vld [vmem:[%s397 + $0x148] sm:$0xff]
                %422 = vst [vmem:[%s398 + $0x58] sm:$0xff] %v421
                %v423 = vld [vmem:[%s397 + $0x180] sm:$0xff]
                %424 = vst [vmem:[%s398 + $0x60] sm:$0xff] %v423
                %v425 = vld [vmem:[%s397 + $0x188] sm:$0xff]
                %426 = vst [vmem:[%s398 + $0x68] sm:$0xff] %v425
                %v427 = vld [vmem:[%s397 + $0x1c0] sm:$0xff]
                %428 = vst [vmem:[%s398 + $0x70] sm:$0xff] %v427
                %v429 = vld [vmem:[%s397 + $0x1c8] sm:$0xff]
                %430 = vst [vmem:[%s398 + $0x78] sm:$0xff] %v429
              $region73: #{detr_forward.6} parent=67 // loop_footer
                %s396 = sadd.s32 1, %s392
              $region74: #{detr_forward.6} parent=67 // loop_footer_branch
                %391 = sbr.rel target = $region70
              $region75: #{detr_forward.6} parent=67 // loop_exit
                _
            $region68: #{detr_forward.6} parent=63 // pred_fallthru
              _
            // Predicated region
            $region76: #{detr_forward.6} parent=63 // pred_check
              _
            $region77: #{detr_forward.6} parent=63 // pred_check_branch
              %432 = sbr.rel target = $region79
            $region78: #{detr_forward.6} parent=63 // pred_region
              _
            $region79: #{detr_forward.6} parent=63 // pred_fallthru
              _
          $region64: #{detr_forward.6} parent=59 // pred_fallthru
            _
          %433 = vnop
        $region60: #{detr_forward.6} parent=55 // pred_fallthru
          _
        // Predicated region
        $region80: #{detr_forward.6} parent=55 // pred_check
          %p434 = pneg %p212
        $region81: #{detr_forward.6} parent=55 // pred_check_branch
          %436 = sbr.rel (%p434) target = $region83
        $region82: #{detr_forward.6} parent=55 // pred_region
          %s437 = smul.u32 4, %s19
          %p438 = scmp.lt.s32.totalorder %s437, 15
          %s439 = scalar_select %p438, %s437, 15
          %s440 = scalar_lea.vmem %s8, %s439
          %s441 = smul.u32 4, %s19
        $region83: #{detr_forward.6} parent=55 // pred_fallthru
          _
        // Predicated region
        $region84: #{detr_forward.6} parent=55 // pred_check
          %p442 = pneg %p238
        $region85: #{detr_forward.6} parent=55 // pred_check_branch
          %444 = sbr.rel (%p442) target = $region87
        $region86: #{detr_forward.6} parent=55 // pred_region
          %s445 = smul.u32 64, %s19
          %p446 = scmp.lt.s32.totalorder %s445, 255
          %s447 = scalar_select %p446, %s445, 255
          %s448 = smul.addr %s447, 4
          %s449 = scalar_lea.vmem %s9, %s448
          %s450 = smul.u32 64, %s19
        $region87: #{detr_forward.6} parent=55 // pred_fallthru
          _
      $region56: #{detr_forward.6} parent=5 // pred_fallthru
        _
      %p451 = scmp.le.s32.totalorder 1, %s19
      %p452 = scmp.lt.s32.totalorder %s19, 5
      %p453 = pnand %p451, %p452
      %p454 = pneg %p453
      // Predicated region
      $region88: #{detr_forward.6} parent=5 // pred_check
        _
      $region89: #{detr_forward.6} parent=5 // pred_check_branch
        %456 = sbr.rel (%p453) target = $region91
      $region90: #{detr_forward.6} parent=5 // pred_region
        %s457 = ssub.s32 %s19, 1
        %s458 = sand.u32 %s179, 1
        %s459 = sand.u32 %s179, 1
        %s460 = smul.addr %s459, 128
        %s461 = scalar_lea.vmem [#allocation4], %s460
        // Predicated region
        $region92: #{detr_forward.6} parent=90 // pred_check
          %p462 = pneg %p192
        $region93: #{detr_forward.6} parent=90 // pred_check_branch
          %464 = sbr.rel (%p462) target = $region95
        $region94: #{detr_forward.6} parent=90 // pred_region
          _
        $region95: #{detr_forward.6} parent=90 // pred_fallthru
          _
        %p465 = pneg %p40
        %p466 = pneg %p37
        %p467 = pneg %p61
        %p468 = pneg %p58
        %p469 = pneg %p82
        %p470 = pneg %p79
        %p471 = pneg %p103
        %p472 = pneg %p100
        %p473 = pneg %p124
        %p474 = pneg %p121
        %p475 = pneg %p145
        %p476 = pneg %p142
        %p477 = pneg %p166
        %p478 = pneg %p163
        %s479 = sand.u32 %s179, 1
        %s480 = sand.u32 %s179, 1
        %s481 = smul.addr %s480, 128
        %s482 = scalar_lea.vmem [#allocation4], %s481
        %p483 = pneg %p192
        %p484 = pneg %p189
        %s485 = smul.u32 4, %s24
        %p486 = scmp.lt.s32.totalorder %s485, 15
        %s487 = scalar_select %p486, %s485, 15
        %s488 = scalar_lea.vmem %s8, %s487
        %p489 = pneg %p218
        %p490 = pneg %p215
        %s491 = smul.u32 64, %s24
        %p492 = scmp.lt.s32.totalorder %s491, 255
        %s493 = scalar_select %p492, %s491, 255
        %s494 = smul.addr %s493, 4
        %s495 = scalar_lea.vmem %s9, %s494
        %p496 = pneg %p244
        %p497 = pneg %p241
        %p498 = pneg %p265
        %p499 = pneg %p262
        %p500 = pneg %p286
        %p501 = pneg %p283
        %p502 = pneg %p307
        %p503 = pneg %p304
        %p504 = pneg %p328
        %p505 = pneg %p325
        %s506 = smul.u32 4, %s24
        %s507 = smul.u32 4, %s24
        %p508 = scmp.lt.s32.totalorder %s507, 15
        %s509 = scalar_select %p508, %s507, 15
        %s510 = scalar_lea.vmem %s8, %s509
        %s511 = smul.u32 4, %s24
        %s512 = smul.u32 64, %s24
        %p513 = scmp.lt.s32.totalorder %s512, 255
        %s514 = scalar_select %p513, %s512, 255
        %s515 = smul.addr %s514, 4
        %s516 = scalar_lea.vmem %s9, %s515
        %s517 = smul.u32 64, %s24
        %p519 = scmp.eq.s32.totalorder %s24, 0
        // Predicated region
        $region96: #{detr_forward.6} parent=90 // pred_check
          %p520 = pneg %p519
        $region97: #{detr_forward.6} parent=90 // pred_check_branch
          %522 = sbr.rel (%p520) target = $region99
        $region98: #{detr_forward.6} parent=90 // pred_region
          %v523 = vld [vmem:[%s0] sm:$0xff]
          %v524 = vld [vmem:[%s0 + $0x8] sm:$0xff]
          %v525 = vpack.c.bf16 %v524, %v523
          %v526 = vld [vmem:[%s1] sm:$0xff]
          %v527 = vld [vmem:[%s1 + $0x8] sm:$0xff]
          %v528 = vld [vmem:[%s1 + $0x10] sm:$0xff]
          %v529 = vld [vmem:[%s1 + $0x18] sm:$0xff]
          %v530 = vld [vmem:[%s1 + $0x20] sm:$0xff]
          %v531 = vld [vmem:[%s1 + $0x28] sm:$0xff]
          %v532 = vld [vmem:[%s1 + $0x30] sm:$0xff]
          %v533 = vld [vmem:[%s1 + $0x38] sm:$0xff]
          %v534 = vld [vmem:[%s2] sm:$0x3]
          %v536 = vlaneseq
          %v537 = vshrl.u32 %v536, 7
          %v538 = vsub.s32 0, %v537
          %v539 = vrot.slane %v534, %v538
          %v540 = vlaneseq
          %v541 = vshrl.u32 %v540, 7
          %v542 = vsub.s32 1, %v541
          %v543 = vrot.slane %v534, %v542
          %v554 = vunpack.c.l.b16 %v526
          %v555 = vunpack.c.h.b16 %v526
          %v556 = vunpack.c.l.b16 %v527
          %v557 = vunpack.c.h.b16 %v527
          %v558 = vunpack.c.l.b16 %v528
          %v559 = vunpack.c.h.b16 %v528
          %v560 = vunpack.c.l.b16 %v529
          %v561 = vunpack.c.h.b16 %v529
          %v562 = vunpack.c.l.b16 %v530
          %v563 = vunpack.c.h.b16 %v530
          %v564 = vunpack.c.l.b16 %v531
          %v565 = vunpack.c.h.b16 %v531
          %v566 = vunpack.c.l.b16 %v532
          %v567 = vunpack.c.h.b16 %v532
          %v568 = vunpack.c.l.b16 %v533
          %v569 = vunpack.c.h.b16 %v533
          %v570 = vpack.c.b16 %v556, %v554
          %v571 = vpack.c.b16 %v557, %v555
          %v572 = vpack.c.b16 %v560, %v558
          %v573 = vpack.c.b16 %v561, %v559
          %v574 = vpack.c.b16 %v564, %v562
          %v575 = vpack.c.b16 %v565, %v563
          %v576 = vpack.c.b16 %v568, %v566
          %v577 = vpack.c.b16 %v569, %v567
          %vm586 = vcmask 523264
          %v588 = vsel %vm586, %v525, 0
          %590 = vmatprep.subr.bf16.mxu0 0
          %591 = vmatpush1.bf16.msra.mxu0 0
          %592 = vmatprep.subr.bf16.mxu0 0
          %593 = vmatpush1.bf16.msra.mxu0 0
          %594 = vmatprep.subr.bf16.mxu0 0
          %595 = vmatpush1.bf16.msra.mxu0 0
          %596 = vmatprep.subr.bf16.mxu0 0
          %597 = vmatpush1.bf16.msra.mxu0 0
          %598 = vmatprep.subr.bf16.mxu0 %v577
          %599 = vmatpush1.bf16.msra.mxu0 %v576
          %600 = vmatprep.subr.bf16.mxu0 %v575
          %601 = vmatpush1.bf16.msra.mxu0 %v574
          %602 = vmatprep.subr.bf16.mxu0 %v573
          %603 = vmatpush1.bf16.msra.mxu0 %v572
          %604 = vmatprep.subr.bf16.mxu0 %v571
          %605 = vmatpush1.bf16.msra.mxu0 %v570
          %606 = vmatprep.subr.bf16.mxu0 0
          %607 = vmatpush2.bf16.msra.mxu0 0
          %608 = vmatprep.subr.bf16.mxu0 0
          %609 = vmatpush2.bf16.msra.mxu0 0
          %610 = vmatprep.subr.bf16.mxu0 0
          %611 = vmatpush2.bf16.msra.mxu0 0
          %612 = vmatprep.subr.bf16.mxu0 0
          %613 = vmatpush2.bf16.msra.mxu0 0
          %614 = vmatprep.subr.bf16.mxu0 0
          %615 = vmatpush2.bf16.msra.mxu0 0
          %616 = vmatprep.subr.bf16.mxu0 0
          %617 = vmatpush2.bf16.msra.mxu0 0
          %618 = vmatprep.subr.bf16.mxu0 0
          %619 = vmatpush2.bf16.msra.mxu0 0
          %620 = vmatprep.subr.bf16.mxu0 0
          %621 = vmatpush2.bf16.msra.mxu0 0
          %622 = vmatprep.mubr.bf16.mxu0 0
          %623 = vmatmul.mubr.bf16.gmra.mxu0 %v588
          %v624 = vpop.f32.mrf.mxu0
          %v625 = vadd.f32 %v539, %v624
          %v626 = vpop.f32.mrf.mxu0
          %v627 = vadd.f32 %v543, %v626
          %v628 = vpop.f32.mrf.mxu0
          %v629 = vadd.f32 %v539, %v628
          %v630 = vpop.f32.mrf.mxu0
          %v631 = vadd.f32 %v543, %v630
          %632 = vdwg.mxu0
          %v633 = vpack.c.bf16 %v629, %v625
          %v634 = vpack.c.bf16 %v631, %v627
          %636 = vrot.lane.b32.xlu0 %v633, 64
          %v637 = vpop.permute.xlu0 %636
          %vm638 = vcmask 261120
          %v640 = vsel %vm638, %v633, 0
          %v643 = vsel %vm638, %v637, 0
          %645 = vmatprep.subr.bf16.mxu0 0
          %646 = vmatpush1.bf16.xpose.msra.mxu0 0
          %647 = vmatprep.subr.bf16.mxu0 0
          %648 = vmatpush1.bf16.xpose.msra.mxu0 0
          %649 = vmatprep.subr.bf16.mxu0 0
          %650 = vmatpush1.bf16.xpose.msra.mxu0 0
          %651 = vmatprep.subr.bf16.mxu0 0
          %652 = vmatpush1.bf16.xpose.msra.mxu0 0
          %653 = vmatprep.subr.bf16.mxu0 0
          %654 = vmatpush1.bf16.xpose.msra.mxu0 0
          %655 = vmatprep.subr.bf16.mxu0 0
          %656 = vmatpush1.bf16.xpose.msra.mxu0 0
          %657 = vmatprep.subr.bf16.mxu0 0
          %658 = vmatpush1.bf16.xpose.msra.mxu0 0
          %659 = vmatprep.subr.bf16.mxu0 0
          %660 = vmatpush1.bf16.xpose.msra.mxu0 %v643
          %661 = vmatprep.subr.bf16.mxu0 0
          %662 = vmatpush2.bf16.xpose.msra.mxu0 0
          %663 = vmatprep.subr.bf16.mxu0 0
          %664 = vmatpush2.bf16.xpose.msra.mxu0 0
          %665 = vmatprep.subr.bf16.mxu0 0
          %666 = vmatpush2.bf16.xpose.msra.mxu0 0
          %667 = vmatprep.subr.bf16.mxu0 0
          %668 = vmatpush2.bf16.xpose.msra.mxu0 0
          %669 = vmatprep.subr.bf16.mxu0 0
          %670 = vmatpush2.bf16.xpose.msra.mxu0 0
          %671 = vmatprep.subr.bf16.mxu0 0
          %672 = vmatpush2.bf16.xpose.msra.mxu0 0
          %673 = vmatprep.subr.bf16.mxu0 0
          %674 = vmatpush2.bf16.xpose.msra.mxu0 0
          %675 = vmatprep.subr.bf16.mxu0 0
          %676 = vmatpush2.bf16.xpose.msra.mxu0 0
          %677 = vmatprep.mubr.bf16.mxu0 0
          %678 = vmatmul.mubr.bf16.gmra.mxu0 %v640
          %v679 = vpop.f32.mrf.mxu0
          %v680 = vadd.f32 0.0, %v679
          %v681 = vpop.f32.mrf.mxu0
          %v682 = vpop.f32.mrf.mxu0
          %v683 = vadd.f32 0.0, %v682
          %v684 = vpop.f32.mrf.mxu0
          %685 = vdwg.mxu0
          %v686 = vmul.f32 %v680, 0.17677669
          %v687 = vmul.f32 %v683, 0.17677669
          %vm688 = vcmask 130048
          %v689 = vsel %vm688, %v686, -inf
          %690 = vmax.xlane.f32.xlu0 %v689
          %v691 = vpop.xlane.xlu0 %690
          %v692 = vsel %vm688, %v687, -inf
          %693 = vmax.xlane.f32.xlu0 %v692
          %v694 = vpop.xlane.xlu0 %693
          %v695 = vsub.f32 %v686, %v691
          %v696 = vsub.f32 %v687, %v694
          %v697 = vmul.f32 %v695, 1.442695
          %v698 = vpow.pop %v697
          %v699 = vmul.f32 %v696, 1.442695
          %v700 = vpow.pop %v699
          %v701 = vsel %vm688, %v698, 0.0
          %702 = vadd.xlane.f32.xlu0 %v701
          %v703 = vpop.xlane.xlu0 %702
          %v704 = vsel %vm688, %v700, 0.0
          %705 = vadd.xlane.f32.xlu0 %v704
          %v706 = vpop.xlane.xlu0 %705
          %v707 = vrcp.pop %v703
          %v708 = vrcp.pop %v706
          %v709 = vmul.f32 %v698, %v707
          %v710 = vmul.f32 %v700, %v708
          %v711 = vpack.c.bf16 %v710, %v709
          %v713 = vsel %vm688, %v711, 0
          %715 = vmatprep.subr.bf16.mxu0 0
          %716 = vmatpush1.bf16.msra.mxu0 0
          %717 = vmatprep.subr.bf16.mxu0 0
          %718 = vmatpush1.bf16.msra.mxu0 0
          %719 = vmatprep.subr.bf16.mxu0 0
          %720 = vmatpush1.bf16.msra.mxu0 0
          %721 = vmatprep.subr.bf16.mxu0 0
          %722 = vmatpush1.bf16.msra.mxu0 0
          %723 = vmatprep.subr.bf16.mxu0 0
          %724 = vmatpush1.bf16.msra.mxu0 0
          %725 = vmatprep.subr.bf16.mxu0 0
          %726 = vmatpush1.bf16.msra.mxu0 0
          %727 = vmatprep.subr.bf16.mxu0 0
          %728 = vmatpush1.bf16.msra.mxu0 0
          %729 = vmatprep.subr.bf16.mxu0 0
          %730 = vmatpush1.bf16.msra.mxu0 %v634
          %731 = vmatprep.subr.bf16.mxu0 0
          %732 = vmatpush2.bf16.msra.mxu0 0
          %733 = vmatprep.subr.bf16.mxu0 0
          %734 = vmatpush2.bf16.msra.mxu0 0
          %735 = vmatprep.subr.bf16.mxu0 0
          %736 = vmatpush2.bf16.msra.mxu0 0
          %737 = vmatprep.subr.bf16.mxu0 0
          %738 = vmatpush2.bf16.msra.mxu0 0
          %739 = vmatprep.subr.bf16.mxu0 0
          %740 = vmatpush2.bf16.msra.mxu0 0
          %741 = vmatprep.subr.bf16.mxu0 0
          %742 = vmatpush2.bf16.msra.mxu0 0
          %743 = vmatprep.subr.bf16.mxu0 0
          %744 = vmatpush2.bf16.msra.mxu0 0
          %745 = vmatprep.subr.bf16.mxu0 0
          %746 = vmatpush2.bf16.msra.mxu0 0
          %747 = vmatprep.mubr.bf16.mxu0 0
          %748 = vmatmul.mubr.bf16.gmra.mxu0 %v713
          %v749 = vpop.f32.mrf.mxu0
          %v750 = vadd.f32 0.0, %v749
          %v751 = vpop.f32.mrf.mxu0
          %v752 = vpop.f32.mrf.mxu0
          %v753 = vadd.f32 0.0, %v752
          %v754 = vpop.f32.mrf.mxu0
          %755 = vdwg.mxu0
          %756 = vrot.lane.b32.xlu0 %v633, 96
          %v757 = vpop.permute.xlu0 %756
          %758 = vrot.lane.b32.xlu0 %v633, 32
          %v759 = vpop.permute.xlu0 %758
          %v761 = vsel %vm638, %v757, 0
          %v764 = vsel %vm638, %v759, 0
          %766 = vmatprep.subr.bf16.mxu0 0
          %767 = vmatpush1.bf16.xpose.msra.mxu0 0
          %768 = vmatprep.subr.bf16.mxu0 0
          %769 = vmatpush1.bf16.xpose.msra.mxu0 0
          %770 = vmatprep.subr.bf16.mxu0 0
          %771 = vmatpush1.bf16.xpose.msra.mxu0 0
          %772 = vmatprep.subr.bf16.mxu0 0
          %773 = vmatpush1.bf16.xpose.msra.mxu0 0
          %774 = vmatprep.subr.bf16.mxu0 0
          %775 = vmatpush1.bf16.xpose.msra.mxu0 0
          %776 = vmatprep.subr.bf16.mxu0 0
          %777 = vmatpush1.bf16.xpose.msra.mxu0 0
          %778 = vmatprep.subr.bf16.mxu0 0
          %779 = vmatpush1.bf16.xpose.msra.mxu0 0
          %780 = vmatprep.subr.bf16.mxu0 0
          %781 = vmatpush1.bf16.xpose.msra.mxu0 %v764
          %782 = vmatprep.subr.bf16.mxu0 0
          %783 = vmatpush2.bf16.xpose.msra.mxu0 0
          %784 = vmatprep.subr.bf16.mxu0 0
          %785 = vmatpush2.bf16.xpose.msra.mxu0 0
          %786 = vmatprep.subr.bf16.mxu0 0
          %787 = vmatpush2.bf16.xpose.msra.mxu0 0
          %788 = vmatprep.subr.bf16.mxu0 0
          %789 = vmatpush2.bf16.xpose.msra.mxu0 0
          %790 = vmatprep.subr.bf16.mxu0 0
          %791 = vmatpush2.bf16.xpose.msra.mxu0 0
          %792 = vmatprep.subr.bf16.mxu0 0
          %793 = vmatpush2.bf16.xpose.msra.mxu0 0
          %794 = vmatprep.subr.bf16.mxu0 0
          %795 = vmatpush2.bf16.xpose.msra.mxu0 0
          %796 = vmatprep.subr.bf16.mxu0 0
          %797 = vmatpush2.bf16.xpose.msra.mxu0 0
          %798 = vmatprep.mubr.bf16.mxu0 0
          %799 = vmatmul.mubr.bf16.gmra.mxu0 %v761
          %v800 = vpop.f32.mrf.mxu0
          %v801 = vadd.f32 0.0, %v800
          %v802 = vpop.f32.mrf.mxu0
          %v803 = vpop.f32.mrf.mxu0
          %v804 = vadd.f32 0.0, %v803
          %v805 = vpop.f32.mrf.mxu0
          %806 = vdwg.mxu0
          %v807 = vmul.f32 %v801, 0.17677669
          %v808 = vmul.f32 %v804, 0.17677669
          %v809 = vsel %vm688, %v807, -inf
          %810 = vmax.xlane.f32.xlu0 %v809
          %v811 = vpop.xlane.xlu0 %810
          %v812 = vsel %vm688, %v808, -inf
          %813 = vmax.xlane.f32.xlu0 %v812
          %v814 = vpop.xlane.xlu0 %813
          %v815 = vsub.f32 %v807, %v811
          %v816 = vsub.f32 %v808, %v814
          %v817 = vmul.f32 %v815, 1.442695
          %v818 = vpow.pop %v817
          %v819 = vmul.f32 %v816, 1.442695
          %v820 = vpow.pop %v819
          %v821 = vsel %vm688, %v818, 0.0
          %822 = vadd.xlane.f32.xlu0 %v821
          %v823 = vpop.xlane.xlu0 %822
          %v824 = vsel %vm688, %v820, 0.0
          %825 = vadd.xlane.f32.xlu0 %v824
          %v826 = vpop.xlane.xlu0 %825
          %v827 = vrcp.pop %v823
          %v828 = vrcp.pop %v826
          %v829 = vmul.f32 %v818, %v827
          %v830 = vmul.f32 %v820, %v828
          %v831 = vpack.c.bf16 %v830, %v829
          %833 = vrot.lane.b32.xlu0 %v634, 96
          %v834 = vpop.permute.xlu0 %833
          %v837 = vsel %vm688, %v831, 0
          %839 = vmatprep.subr.bf16.mxu0 0
          %840 = vmatpush1.bf16.msra.mxu0 0
          %841 = vmatprep.subr.bf16.mxu0 0
          %842 = vmatpush1.bf16.msra.mxu0 0
          %843 = vmatprep.subr.bf16.mxu0 0
          %844 = vmatpush1.bf16.msra.mxu0 0
          %845 = vmatprep.subr.bf16.mxu0 0
          %846 = vmatpush1.bf16.msra.mxu0 0
          %847 = vmatprep.subr.bf16.mxu0 0
          %848 = vmatpush1.bf16.msra.mxu0 0
          %849 = vmatprep.subr.bf16.mxu0 0
          %850 = vmatpush1.bf16.msra.mxu0 0
          %851 = vmatprep.subr.bf16.mxu0 0
          %852 = vmatpush1.bf16.msra.mxu0 0
          %853 = vmatprep.subr.bf16.mxu0 0
          %854 = vmatpush1.bf16.msra.mxu0 %v834
          %855 = vmatprep.subr.bf16.mxu0 0
          %856 = vmatpush2.bf16.msra.mxu0 0
          %857 = vmatprep.subr.bf16.mxu0 0
          %858 = vmatpush2.bf16.msra.mxu0 0
          %859 = vmatprep.subr.bf16.mxu0 0
          %860 = vmatpush2.bf16.msra.mxu0 0
          %861 = vmatprep.subr.bf16.mxu0 0
          %862 = vmatpush2.bf16.msra.mxu0 0
          %863 = vmatprep.subr.bf16.mxu0 0
          %864 = vmatpush2.bf16.msra.mxu0 0
          %865 = vmatprep.subr.bf16.mxu0 0
          %866 = vmatpush2.bf16.msra.mxu0 0
          %867 = vmatprep.subr.bf16.mxu0 0
          %868 = vmatpush2.bf16.msra.mxu0 0
          %869 = vmatprep.subr.bf16.mxu0 0
          %870 = vmatpush2.bf16.msra.mxu0 0
          %871 = vmatprep.mubr.bf16.mxu0 0
          %872 = vmatmul.mubr.bf16.gmra.mxu0 %v837
          %v873 = vpop.f32.mrf.mxu0
          %v874 = vadd.f32 0.0, %v873
          %v875 = vpop.f32.mrf.mxu0
          %v876 = vpop.f32.mrf.mxu0
          %v877 = vadd.f32 0.0, %v876
          %v878 = vpop.f32.mrf.mxu0
          %879 = vdwg.mxu0
          %882 = vrot.lane.b32.xlu0 %v874, 32
          %v883 = vpop.permute.xlu0 %882
          %884 = vrot.lane.b32.xlu0 %v877, 32
          %v885 = vpop.permute.xlu0 %884
          %v888 = vsel %vm638, %v750, %v883
          %v889 = vsel %vm638, %v753, %v885
          %v890 = vpack.c.bf16 %v889, %v888
          %v891 = vld [vmem:[%s3] sm:$0xf]
          %v892 = vld [vmem:[%s3 + $0x4] sm:$0xf]
          %v893 = vld [vmem:[%s3 + $0x8] sm:$0xf]
          %v894 = vld [vmem:[%s3 + $0xc] sm:$0xf]
          %v895 = vld [vmem:[%s3 + $0x10] sm:$0xf]
          %v896 = vld [vmem:[%s3 + $0x14] sm:$0xf]
          %v897 = vld [vmem:[%s3 + $0x18] sm:$0xf]
          %v898 = vld [vmem:[%s3 + $0x1c] sm:$0xf]
          %v899 = vld [vmem:[%s4] sm:$0x1]
          %v901 = vlaneseq
          %v902 = vshrl.u32 %v901, 7
          %v903 = vsub.s32 0, %v902
          %v904 = vrot.slane %v899, %v903
          %v914 = vunpack.c.l.b16 %v891
          %v915 = vunpack.c.l.b16 %v892
          %v916 = vunpack.c.l.b16 %v893
          %v917 = vunpack.c.l.b16 %v894
          %v918 = vunpack.c.l.b16 %v895
          %v919 = vunpack.c.l.b16 %v896
          %v920 = vunpack.c.l.b16 %v897
          %v921 = vunpack.c.l.b16 %v898
          %v922 = vpack.c.b16 %v915, %v914
          %v923 = vpack.c.b16 %v917, %v916
          %v924 = vpack.c.b16 %v919, %v918
          %v925 = vpack.c.b16 %v921, %v920
          %v931 = vsel %vm586, %v890, 0
          %933 = vmatprep.subr.bf16.mxu0 0
          %934 = vmatpush1.bf16.msra.mxu0 0
          %935 = vmatprep.subr.bf16.mxu0 0
          %936 = vmatpush1.bf16.msra.mxu0 0
          %937 = vmatprep.subr.bf16.mxu0 0
          %938 = vmatpush1.bf16.msra.mxu0 0
          %939 = vmatprep.subr.bf16.mxu0 0
          %940 = vmatpush1.bf16.msra.mxu0 0
          %941 = vmatprep.subr.bf16.mxu0 0
          %942 = vmatpush1.bf16.msra.mxu0 %v925
          %943 = vmatprep.subr.bf16.mxu0 0
          %944 = vmatpush1.bf16.msra.mxu0 %v924
          %945 = vmatprep.subr.bf16.mxu0 0
          %946 = vmatpush1.bf16.msra.mxu0 %v923
          %947 = vmatprep.subr.bf16.mxu0 0
          %948 = vmatpush1.bf16.msra.mxu0 %v922
          %949 = vmatprep.subr.bf16.mxu0 0
          %950 = vmatpush2.bf16.msra.mxu0 0
          %951 = vmatprep.subr.bf16.mxu0 0
          %952 = vmatpush2.bf16.msra.mxu0 0
          %953 = vmatprep.subr.bf16.mxu0 0
          %954 = vmatpush2.bf16.msra.mxu0 0
          %955 = vmatprep.subr.bf16.mxu0 0
          %956 = vmatpush2.bf16.msra.mxu0 0
          %957 = vmatprep.subr.bf16.mxu0 0
          %958 = vmatpush2.bf16.msra.mxu0 0
          %959 = vmatprep.subr.bf16.mxu0 0
          %960 = vmatpush2.bf16.msra.mxu0 0
          %961 = vmatprep.subr.bf16.mxu0 0
          %962 = vmatpush2.bf16.msra.mxu0 0
          %963 = vmatprep.subr.bf16.mxu0 0
          %964 = vmatpush2.bf16.msra.mxu0 0
          %965 = vmatprep.mubr.bf16.mxu0 0
          %966 = vmatmul.mubr.bf16.gmra.mxu0 %v931
          %v967 = vpop.f32.mrf.mxu0
          %v968 = vadd.f32 %v904, %v967
          %v969 = vpop.f32.mrf.mxu0
          %v970 = vpop.f32.mrf.mxu0
          %v971 = vadd.f32 %v904, %v970
          %v972 = vpop.f32.mrf.mxu0
          %973 = vdwg.mxu0
          %v974 = vadd.f32 %v523, %v968
          %v975 = vadd.f32 %v524, %v971
          %v976 = vld [vmem:[%s5] sm:$0x1]
          %v977 = vld [vmem:[%s6] sm:$0x1]
          %v978 = vsel %vm586, %v974, 0.0
          %979 = vadd.xlane.f32.xlu0 %v978
          %v980 = vpop.xlane.xlu0 %979
          %v981 = vsel %vm586, %v975, 0.0
          %982 = vadd.xlane.f32.xlu0 %v981
          %v983 = vpop.xlane.xlu0 %982
          %v984 = vrcp.pop 64.0
          %v985 = vmul.f32 %v980, %v984
          %v986 = vmul.f32 %v983, %v984
          %v987 = vsub.f32 %v974, %v985
          %v988 = vsub.f32 %v975, %v986
          %v989 = vmul.f32 %v987, %v987
          %v990 = vmul.f32 %v988, %v988
          %v991 = vsel %vm586, %v989, 0.0
          %992 = vadd.xlane.f32.xlu0 %v991
          %v993 = vpop.xlane.xlu0 %992
          %v994 = vsel %vm586, %v990, 0.0
          %995 = vadd.xlane.f32.xlu0 %v994
          %v996 = vpop.xlane.xlu0 %995
          %v997 = vmul.f32 %v993, %v984
          %v998 = vmul.f32 %v996, %v984
          %v999 = vadd.f32 %v997, 1e-05
          %v1000 = vadd.f32 %v998, 1e-05
          %v1001 = vrsqrt.pop %v999
          %v1002 = vrsqrt.pop %v1000
          %v1003 = vmul.f32 %v987, %v1001
          %v1004 = vmul.f32 %v988, %v1002
          %v1006 = vlaneseq
          %v1007 = vshrl.u32 %v1006, 7
          %v1008 = vsub.s32 0, %v1007
          %v1009 = vrot.slane %v976, %v1008
          %v1011 = vmul.f32 %v1003, %v1009
          %v1012 = vmul.f32 %v1004, %v1009
          %v1014 = vlaneseq
          %v1015 = vshrl.u32 %v1014, 7
          %v1016 = vsub.s32 0, %v1015
          %v1017 = vrot.slane %v977, %v1016
          %v1019 = vadd.f32 %v1011, %v1017
          %v1020 = vadd.f32 %v1012, %v1017
          %1021 = vst.msk [vmem:[#allocation2] sm:$0xff] %vm586, %v1019
          %1022 = vst.msk [vmem:[#allocation2 + $0x8] sm:$0xff] %vm586, %v1020
          %1023 = vst.msk [vmem:[#allocation3] sm:$0xff] %vm586, 0.0
          %1024 = vst.msk [vmem:[#allocation3 + $0x8] sm:$0xff] %vm586, 0.0
        $region99: #{detr_forward.6} parent=90 // pred_fallthru
          _
        %v1025 = vld [vmem:[#allocation2] sm:$0xff]
        %v1026 = vld [vmem:[#allocation2 + $0x8] sm:$0xff]
        %v1027 = vpack.c.bf16 %v1026, %v1025
        %v1028 = vld [vmem:[%s461] sm:$0xff]
        %v1029 = vld [vmem:[%s461 + $0x8] sm:$0xff]
        %v1030 = vld [vmem:[%s461 + $0x10] sm:$0xff]
        %v1031 = vld [vmem:[%s461 + $0x18] sm:$0xff]
        %v1032 = vld [vmem:[%s461 + $0x20] sm:$0xff]
        %v1033 = vld [vmem:[%s461 + $0x28] sm:$0xff]
        %v1034 = vld [vmem:[%s461 + $0x30] sm:$0xff]
        %v1035 = vld [vmem:[%s461 + $0x38] sm:$0xff]
        %v1036 = vld [vmem:[%s461 + $0x40] sm:$0xff]
        %v1037 = vld [vmem:[%s461 + $0x48] sm:$0xff]
        %v1038 = vld [vmem:[%s461 + $0x50] sm:$0xff]
        %v1039 = vld [vmem:[%s461 + $0x58] sm:$0xff]
        %v1040 = vld [vmem:[%s461 + $0x60] sm:$0xff]
        %v1041 = vld [vmem:[%s461 + $0x68] sm:$0xff]
        %v1042 = vld [vmem:[%s461 + $0x70] sm:$0xff]
        %v1043 = vld [vmem:[%s461 + $0x78] sm:$0xff]
        %v1044 = vld [vmem:[%s510] sm:$0xf]
        %v1046 = vlaneseq
        %v1047 = vshrl.u32 %v1046, 7
        %v1048 = vsub.s32 0, %v1047
        %v1049 = vrot.slane %v1044, %v1048
        %v1050 = vlaneseq
        %v1051 = vshrl.u32 %v1050, 7
        %v1052 = vsub.s32 1, %v1051
        %v1053 = vrot.slane %v1044, %v1052
        %v1054 = vlaneseq
        %v1055 = vshrl.u32 %v1054, 7
        %v1056 = vsub.s32 2, %v1055
        %v1057 = vrot.slane %v1044, %v1056
        %v1058 = vlaneseq
        %v1059 = vshrl.u32 %v1058, 7
        %v1060 = vsub.s32 3, %v1059
        %v1061 = vrot.slane %v1044, %v1060
        %v1082 = vunpack.c.l.b16 %v1028
        %v1083 = vunpack.c.h.b16 %v1028
        %v1084 = vunpack.c.l.b16 %v1029
        %v1085 = vunpack.c.h.b16 %v1029
        %v1086 = vunpack.c.l.b16 %v1030
        %v1087 = vunpack.c.h.b16 %v1030
        %v1088 = vunpack.c.l.b16 %v1031
        %v1089 = vunpack.c.h.b16 %v1031
        %v1090 = vunpack.c.l.b16 %v1032
        %v1091 = vunpack.c.h.b16 %v1032
        %v1092 = vunpack.c.l.b16 %v1033
        %v1093 = vunpack.c.h.b16 %v1033
        %v1094 = vunpack.c.l.b16 %v1034
        %v1095 = vunpack.c.h.b16 %v1034
        %v1096 = vunpack.c.l.b16 %v1035
        %v1097 = vunpack.c.h.b16 %v1035
        %v1098 = vunpack.c.l.b16 %v1036
        %v1099 = vunpack.c.h.b16 %v1036
        %v1100 = vunpack.c.l.b16 %v1037
        %v1101 = vunpack.c.h.b16 %v1037
        %v1102 = vunpack.c.l.b16 %v1038
        %v1103 = vunpack.c.h.b16 %v1038
        %v1104 = vunpack.c.l.b16 %v1039
        %v1105 = vunpack.c.h.b16 %v1039
        %v1106 = vunpack.c.l.b16 %v1040
        %v1107 = vunpack.c.h.b16 %v1040
        %v1108 = vunpack.c.l.b16 %v1041
        %v1109 = vunpack.c.h.b16 %v1041
        %v1110 = vunpack.c.l.b16 %v1042
        %v1111 = vunpack.c.h.b16 %v1042
        %v1112 = vunpack.c.l.b16 %v1043
        %v1113 = vunpack.c.h.b16 %v1043
        %v1114 = vpack.c.b16 %v1086, %v1082
        %v1115 = vpack.c.b16 %v1087, %v1083
        %v1116 = vpack.c.b16 %v1088, %v1084
        %v1117 = vpack.c.b16 %v1089, %v1085
        %v1118 = vpack.c.b16 %v1094, %v1090
        %v1119 = vpack.c.b16 %v1095, %v1091
        %v1120 = vpack.c.b16 %v1096, %v1092
        %v1121 = vpack.c.b16 %v1097, %v1093
        %v1122 = vpack.c.b16 %v1102, %v1098
        %v1123 = vpack.c.b16 %v1103, %v1099
        %v1124 = vpack.c.b16 %v1104, %v1100
        %v1125 = vpack.c.b16 %v1105, %v1101
        %v1126 = vpack.c.b16 %v1110, %v1106
        %v1127 = vpack.c.b16 %v1111, %v1107
        %v1128 = vpack.c.b16 %v1112, %v1108
        %v1129 = vpack.c.b16 %v1113, %v1109
        %vm1146 = vcmask 523264
        %v1148 = vsel %vm1146, %v1027, 0
        %1150 = vmatprep.subr.bf16.mxu0 0
        %1151 = vmatpush1.bf16.msra.mxu0 0
        %1152 = vmatprep.subr.bf16.mxu0 0
        %1153 = vmatpush1.bf16.msra.mxu0 0
        %1154 = vmatprep.subr.bf16.mxu0 0
        %1155 = vmatpush1.bf16.msra.mxu0 0
        %1156 = vmatprep.subr.bf16.mxu0 0
        %1157 = vmatpush1.bf16.msra.mxu0 0
        %1158 = vmatprep.subr.bf16.mxu0 %v1127
        %1159 = vmatpush1.bf16.msra.mxu0 %v1126
        %1160 = vmatprep.subr.bf16.mxu0 %v1123
        %1161 = vmatpush1.bf16.msra.mxu0 %v1122
        %1162 = vmatprep.subr.bf16.mxu0 %v1119
        %1163 = vmatpush1.bf16.msra.mxu0 %v1118
        %1164 = vmatprep.subr.bf16.mxu0 %v1115
        %1165 = vmatpush1.bf16.msra.mxu0 %v1114
        %1166 = vmatprep.subr.bf16.mxu0 0
        %1167 = vmatpush2.bf16.msra.mxu0 0
        %1168 = vmatprep.subr.bf16.mxu0 0
        %1169 = vmatpush2.bf16.msra.mxu0 0
        %1170 = vmatprep.subr.bf16.mxu0 0
        %1171 = vmatpush2.bf16.msra.mxu0 0
        %1172 = vmatprep.subr.bf16.mxu0 0
        %1173 = vmatpush2.bf16.msra.mxu0 0
        %1174 = vmatprep.subr.bf16.mxu0 0
        %1175 = vmatpush2.bf16.msra.mxu0 0
        %1176 = vmatprep.subr.bf16.mxu0 0
        %1177 = vmatpush2.bf16.msra.mxu0 0
        %1178 = vmatprep.subr.bf16.mxu0 0
        %1179 = vmatpush2.bf16.msra.mxu0 0
        %1180 = vmatprep.subr.bf16.mxu0 0
        %1181 = vmatpush2.bf16.msra.mxu0 0
        %1182 = vmatprep.mubr.bf16.mxu0 0
        %1183 = vmatmul.mubr.bf16.gmra.mxu0 %v1148
        %v1184 = vpop.f32.mrf.mxu0
        %v1185 = vadd.f32 %v1049, %v1184
        %v1186 = vpop.f32.mrf.mxu0
        %v1187 = vadd.f32 %v1053, %v1186
        %v1188 = vpop.f32.mrf.mxu0
        %v1189 = vadd.f32 %v1049, %v1188
        %v1190 = vpop.f32.mrf.mxu0
        %v1191 = vadd.f32 %v1053, %v1190
        %1192 = vdwg.mxu0
        %1193 = vmatprep.subr.bf16.mxu0 0
        %1194 = vmatpush1.bf16.msra.mxu0 0
        %1195 = vmatprep.subr.bf16.mxu0 0
        %1196 = vmatpush1.bf16.msra.mxu0 0
        %1197 = vmatprep.subr.bf16.mxu0 0
        %1198 = vmatpush1.bf16.msra.mxu0 0
        %1199 = vmatprep.subr.bf16.mxu0 0
        %1200 = vmatpush1.bf16.msra.mxu0 0
        %1201 = vmatprep.subr.bf16.mxu0 %v1129
        %1202 = vmatpush1.bf16.msra.mxu0 %v1128
        %1203 = vmatprep.subr.bf16.mxu0 %v1125
        %1204 = vmatpush1.bf16.msra.mxu0 %v1124
        %1205 = vmatprep.subr.bf16.mxu0 %v1121
        %1206 = vmatpush1.bf16.msra.mxu0 %v1120
        %1207 = vmatprep.subr.bf16.mxu0 %v1117
        %1208 = vmatpush1.bf16.msra.mxu0 %v1116
        %1209 = vmatprep.subr.bf16.mxu0 0
        %1210 = vmatpush2.bf16.msra.mxu0 0
        %1211 = vmatprep.subr.bf16.mxu0 0
        %1212 = vmatpush2.bf16.msra.mxu0 0
        %1213 = vmatprep.subr.bf16.mxu0 0
        %1214 = vmatpush2.bf16.msra.mxu0 0
        %1215 = vmatprep.subr.bf16.mxu0 0
        %1216 = vmatpush2.bf16.msra.mxu0 0
        %1217 = vmatprep.subr.bf16.mxu0 0
        %1218 = vmatpush2.bf16.msra.mxu0 0
        %1219 = vmatprep.subr.bf16.mxu0 0
        %1220 = vmatpush2.bf16.msra.mxu0 0
        %1221 = vmatprep.subr.bf16.mxu0 0
        %1222 = vmatpush2.bf16.msra.mxu0 0
        %1223 = vmatprep.subr.bf16.mxu0 0
        %1224 = vmatpush2.bf16.msra.mxu0 0
        %1225 = vmatprep.mubr.bf16.mxu0 0
        %1226 = vmatmul.mubr.bf16.gmra.mxu0 %v1148
        %v1227 = vpop.f32.mrf.mxu0
        %v1228 = vadd.f32 %v1057, %v1227
        %v1229 = vpop.f32.mrf.mxu0
        %v1230 = vadd.f32 %v1061, %v1229
        %v1231 = vpop.f32.mrf.mxu0
        %v1232 = vadd.f32 %v1057, %v1231
        %v1233 = vpop.f32.mrf.mxu0
        %v1234 = vadd.f32 %v1061, %v1233
        %1235 = vdwg.mxu0
        %v1236 = vmax.f32 %v1185, 0.0
        %v1237 = vmax.f32 %v1187, 0.0
        %v1238 = vmax.f32 %v1228, 0.0
        %v1239 = vmax.f32 %v1230, 0.0
        %v1240 = vmax.f32 %v1189, 0.0
        %v1241 = vmax.f32 %v1191, 0.0
        %v1242 = vmax.f32 %v1232, 0.0
        %v1243 = vmax.f32 %v1234, 0.0
        %v1244 = vld [vmem:[#allocation3] sm:$0xff]
        %v1245 = vld [vmem:[#allocation3 + $0x8] sm:$0xff]
        %v1246 = vpack.c.bf16 %v1240, %v1236
        %v1247 = vpack.c.bf16 %v1241, %v1237
        %v1248 = vpack.c.bf16 %v1242, %v1238
        %v1249 = vpack.c.bf16 %v1243, %v1239
        %v1250 = vld [vmem:[%s516] sm:$0xf]
        %v1251 = vld [vmem:[%s516 + $0x4] sm:$0xf]
        %v1252 = vld [vmem:[%s516 + $0x8] sm:$0xf]
        %v1253 = vld [vmem:[%s516 + $0xc] sm:$0xf]
        %v1254 = vld [vmem:[%s516 + $0x10] sm:$0xf]
        %v1255 = vld [vmem:[%s516 + $0x14] sm:$0xf]
        %v1256 = vld [vmem:[%s516 + $0x18] sm:$0xf]
        %v1257 = vld [vmem:[%s516 + $0x1c] sm:$0xf]
        %v1258 = vld [vmem:[%s516 + $0x20] sm:$0xf]
        %v1259 = vld [vmem:[%s516 + $0x24] sm:$0xf]
        %v1260 = vld [vmem:[%s516 + $0x28] sm:$0xf]
        %v1261 = vld [vmem:[%s516 + $0x2c] sm:$0xf]
        %v1262 = vld [vmem:[%s516 + $0x30] sm:$0xf]
        %v1263 = vld [vmem:[%s516 + $0x34] sm:$0xf]
        %v1264 = vld [vmem:[%s516 + $0x38] sm:$0xf]
        %v1265 = vld [vmem:[%s516 + $0x3c] sm:$0xf]
        %v1266 = vld [vmem:[%s516 + $0x40] sm:$0xf]
        %v1267 = vld [vmem:[%s516 + $0x44] sm:$0xf]
        %v1268 = vld [vmem:[%s516 + $0x48] sm:$0xf]
        %v1269 = vld [vmem:[%s516 + $0x4c] sm:$0xf]
        %v1270 = vld [vmem:[%s516 + $0x50] sm:$0xf]
        %v1271 = vld [vmem:[%s516 + $0x54] sm:$0xf]
        %v1272 = vld [vmem:[%s516 + $0x58] sm:$0xf]
        %v1273 = vld [vmem:[%s516 + $0x5c] sm:$0xf]
        %v1274 = vld [vmem:[%s516 + $0x60] sm:$0xf]
        %v1275 = vld [vmem:[%s516 + $0x64] sm:$0xf]
        %v1276 = vld [vmem:[%s516 + $0x68] sm:$0xf]
        %v1277 = vld [vmem:[%s516 + $0x6c] sm:$0xf]
        %v1278 = vld [vmem:[%s516 + $0x70] sm:$0xf]
        %v1279 = vld [vmem:[%s516 + $0x74] sm:$0xf]
        %v1280 = vld [vmem:[%s516 + $0x78] sm:$0xf]
        %v1281 = vld [vmem:[%s516 + $0x7c] sm:$0xf]
        %v1282 = vld [vmem:[%s516 + $0x80] sm:$0xf]
        %v1283 = vld [vmem:[%s516 + $0x84] sm:$0xf]
        %v1284 = vld [vmem:[%s516 + $0x88] sm:$0xf]
        %v1285 = vld [vmem:[%s516 + $0x8c] sm:$0xf]
        %v1286 = vld [vmem:[%s516 + $0x90] sm:$0xf]
        %v1287 = vld [vmem:[%s516 + $0x94] sm:$0xf]
        %v1288 = vld [vmem:[%s516 + $0x98] sm:$0xf]
        %v1289 = vld [vmem:[%s516 + $0x9c] sm:$0xf]
        %v1290 = vld [vmem:[%s516 + $0xa0] sm:$0xf]
        %v1291 = vld [vmem:[%s516 + $0xa4] sm:$0xf]
        %v1292 = vld [vmem:[%s516 + $0xa8] sm:$0xf]
        %v1293 = vld [vmem:[%s516 + $0xac] sm:$0xf]
        %v1294 = vld [vmem:[%s516 + $0xb0] sm:$0xf]
        %v1295 = vld [vmem:[%s516 + $0xb4] sm:$0xf]
        %v1296 = vld [vmem:[%s516 + $0xb8] sm:$0xf]
        %v1297 = vld [vmem:[%s516 + $0xbc] sm:$0xf]
        %v1298 = vld [vmem:[%s516 + $0xc0] sm:$0xf]
        %v1299 = vld [vmem:[%s516 + $0xc4] sm:$0xf]
        %v1300 = vld [vmem:[%s516 + $0xc8] sm:$0xf]
        %v1301 = vld [vmem:[%s516 + $0xcc] sm:$0xf]
        %v1302 = vld [vmem:[%s516 + $0xd0] sm:$0xf]
        %v1303 = vld [vmem:[%s516 + $0xd4] sm:$0xf]
        %v1304 = vld [vmem:[%s516 + $0xd8] sm:$0xf]
        %v1305 = vld [vmem:[%s516 + $0xdc] sm:$0xf]
        %v1306 = vld [vmem:[%s516 + $0xe0] sm:$0xf]
        %v1307 = vld [vmem:[%s516 + $0xe4] sm:$0xf]
        %v1308 = vld [vmem:[%s516 + $0xe8] sm:$0xf]
        %v1309 = vld [vmem:[%s516 + $0xec] sm:$0xf]
        %v1310 = vld [vmem:[%s516 + $0xf0] sm:$0xf]
        %v1311 = vld [vmem:[%s516 + $0xf4] sm:$0xf]
        %v1312 = vld [vmem:[%s516 + $0xf8] sm:$0xf]
        %v1313 = vld [vmem:[%s516 + $0xfc] sm:$0xf]
        %v1378 = vunpack.c.l.b16 %v1250
        %v1379 = vunpack.c.l.b16 %v1251
        %v1380 = vunpack.c.l.b16 %v1252
        %v1381 = vunpack.c.l.b16 %v1253
        %v1382 = vunpack.c.l.b16 %v1254
        %v1383 = vunpack.c.l.b16 %v1255
        %v1384 = vunpack.c.l.b16 %v1256
        %v1385 = vunpack.c.l.b16 %v1257
        %v1386 = vunpack.c.l.b16 %v1258
        %v1387 = vunpack.c.l.b16 %v1259
        %v1388 = vunpack.c.l.b16 %v1260
        %v1389 = vunpack.c.l.b16 %v1261
        %v1390 = vunpack.c.l.b16 %v1262
        %v1391 = vunpack.c.l.b16 %v1263
        %v1392 = vunpack.c.l.b16 %v1264
        %v1393 = vunpack.c.l.b16 %v1265
        %v1394 = vunpack.c.l.b16 %v1266
        %v1395 = vunpack.c.l.b16 %v1267
        %v1396 = vunpack.c.l.b16 %v1268
        %v1397 = vunpack.c.l.b16 %v1269
        %v1398 = vunpack.c.l.b16 %v1270
        %v1399 = vunpack.c.l.b16 %v1271
        %v1400 = vunpack.c.l.b16 %v1272
        %v1401 = vunpack.c.l.b16 %v1273
        %v1402 = vunpack.c.l.b16 %v1274
        %v1403 = vunpack.c.l.b16 %v1275
        %v1404 = vunpack.c.l.b16 %v1276
        %v1405 = vunpack.c.l.b16 %v1277
        %v1406 = vunpack.c.l.b16 %v1278
        %v1407 = vunpack.c.l.b16 %v1279
        %v1408 = vunpack.c.l.b16 %v1280
        %v1409 = vunpack.c.l.b16 %v1281
        %v1410 = vunpack.c.l.b16 %v1282
        %v1411 = vunpack.c.l.b16 %v1283
        %v1412 = vunpack.c.l.b16 %v1284
        %v1413 = vunpack.c.l.b16 %v1285
        %v1414 = vunpack.c.l.b16 %v1286
        %v1415 = vunpack.c.l.b16 %v1287
        %v1416 = vunpack.c.l.b16 %v1288
        %v1417 = vunpack.c.l.b16 %v1289
        %v1418 = vunpack.c.l.b16 %v1290
        %v1419 = vunpack.c.l.b16 %v1291
        %v1420 = vunpack.c.l.b16 %v1292
        %v1421 = vunpack.c.l.b16 %v1293
        %v1422 = vunpack.c.l.b16 %v1294
        %v1423 = vunpack.c.l.b16 %v1295
        %v1424 = vunpack.c.l.b16 %v1296
        %v1425 = vunpack.c.l.b16 %v1297
        %v1426 = vunpack.c.l.b16 %v1298
        %v1427 = vunpack.c.l.b16 %v1299
        %v1428 = vunpack.c.l.b16 %v1300
        %v1429 = vunpack.c.l.b16 %v1301
        %v1430 = vunpack.c.l.b16 %v1302
        %v1431 = vunpack.c.l.b16 %v1303
        %v1432 = vunpack.c.l.b16 %v1304
        %v1433 = vunpack.c.l.b16 %v1305
        %v1434 = vunpack.c.l.b16 %v1306
        %v1435 = vunpack.c.l.b16 %v1307
        %v1436 = vunpack.c.l.b16 %v1308
        %v1437 = vunpack.c.l.b16 %v1309
        %v1438 = vunpack.c.l.b16 %v1310
        %v1439 = vunpack.c.l.b16 %v1311
        %v1440 = vunpack.c.l.b16 %v1312
        %v1441 = vunpack.c.l.b16 %v1313
        %v1442 = vpack.c.b16 %v1379, %v1378
        %v1443 = vpack.c.b16 %v1381, %v1380
        %v1444 = vpack.c.b16 %v1383, %v1382
        %v1445 = vpack.c.b16 %v1385, %v1384
        %v1446 = vpack.c.b16 %v1387, %v1386
        %v1447 = vpack.c.b16 %v1389, %v1388
        %v1448 = vpack.c.b16 %v1391, %v1390
        %v1449 = vpack.c.b16 %v1393, %v1392
        %v1450 = vpack.c.b16 %v1395, %v1394
        %v1451 = vpack.c.b16 %v1397, %v1396
        %v1452 = vpack.c.b16 %v1399, %v1398
        %v1453 = vpack.c.b16 %v1401, %v1400
        %v1454 = vpack.c.b16 %v1403, %v1402
        %v1455 = vpack.c.b16 %v1405, %v1404
        %v1456 = vpack.c.b16 %v1407, %v1406
        %v1457 = vpack.c.b16 %v1409, %v1408
        %v1458 = vpack.c.b16 %v1411, %v1410
        %v1459 = vpack.c.b16 %v1413, %v1412
        %v1460 = vpack.c.b16 %v1415, %v1414
        %v1461 = vpack.c.b16 %v1417, %v1416
        %v1462 = vpack.c.b16 %v1419, %v1418
        %v1463 = vpack.c.b16 %v1421, %v1420
        %v1464 = vpack.c.b16 %v1423, %v1422
        %v1465 = vpack.c.b16 %v1425, %v1424
        %v1466 = vpack.c.b16 %v1427, %v1426
        %v1467 = vpack.c.b16 %v1429, %v1428
        %v1468 = vpack.c.b16 %v1431, %v1430
        %v1469 = vpack.c.b16 %v1433, %v1432
        %v1470 = vpack.c.b16 %v1435, %v1434
        %v1471 = vpack.c.b16 %v1437, %v1436
        %v1472 = vpack.c.b16 %v1439, %v1438
        %v1473 = vpack.c.b16 %v1441, %v1440
        %1506 = vmatprep.subr.bf16.mxu0 0
        %1507 = vmatpush1.bf16.msra.mxu0 %v1449
        %1508 = vmatprep.subr.bf16.mxu0 0
        %1509 = vmatpush1.bf16.msra.mxu0 %v1448
        %1510 = vmatprep.subr.bf16.mxu0 0
        %1511 = vmatpush1.bf16.msra.mxu0 %v1447
        %1512 = vmatprep.subr.bf16.mxu0 0
        %1513 = vmatpush1.bf16.msra.mxu0 %v1446
        %1514 = vmatprep.subr.bf16.mxu0 0
        %1515 = vmatpush1.bf16.msra.mxu0 %v1445
        %1516 = vmatprep.subr.bf16.mxu0 0
        %1517 = vmatpush1.bf16.msra.mxu0 %v1444
        %1518 = vmatprep.subr.bf16.mxu0 0
        %1519 = vmatpush1.bf16.msra.mxu0 %v1443
        %1520 = vmatprep.subr.bf16.mxu0 0
        %1521 = vmatpush1.bf16.msra.mxu0 %v1442
        %1522 = vmatprep.subr.bf16.mxu0 0
        %1523 = vmatpush2.bf16.msra.mxu0 %v1457
        %1524 = vmatprep.subr.bf16.mxu0 0
        %1525 = vmatpush2.bf16.msra.mxu0 %v1456
        %1526 = vmatprep.subr.bf16.mxu0 0
        %1527 = vmatpush2.bf16.msra.mxu0 %v1455
        %1528 = vmatprep.subr.bf16.mxu0 0
        %1529 = vmatpush2.bf16.msra.mxu0 %v1454
        %1530 = vmatprep.subr.bf16.mxu0 0
        %1531 = vmatpush2.bf16.msra.mxu0 %v1453
        %1532 = vmatprep.subr.bf16.mxu0 0
        %1533 = vmatpush2.bf16.msra.mxu0 %v1452
        %1534 = vmatprep.subr.bf16.mxu0 0
        %1535 = vmatpush2.bf16.msra.mxu0 %v1451
        %1536 = vmatprep.subr.bf16.mxu0 0
        %1537 = vmatpush2.bf16.msra.mxu0 %v1450
        %1538 = vmatprep.mubr.bf16.mxu0 %v1247
        %1539 = vmatmul.mubr.bf16.gmra.mxu0 %v1246
        %v1540 = vpop.f32.mrf.mxu0
        %v1541 = vadd.f32 0.0, %v1540
        %v1542 = vpop.f32.mrf.mxu0
        %v1543 = vpop.f32.mrf.mxu0
        %v1544 = vadd.f32 0.0, %v1543
        %v1545 = vpop.f32.mrf.mxu0
        %1546 = vdwg.mxu0
        %1547 = vmatprep.subr.bf16.mxu0 0
        %1548 = vmatpush1.bf16.msra.mxu0 %v1465
        %1549 = vmatprep.subr.bf16.mxu0 0
        %1550 = vmatpush1.bf16.msra.mxu0 %v1464
        %1551 = vmatprep.subr.bf16.mxu0 0
        %1552 = vmatpush1.bf16.msra.mxu0 %v1463
        %1553 = vmatprep.subr.bf16.mxu0 0
        %1554 = vmatpush1.bf16.msra.mxu0 %v1462
        %1555 = vmatprep.subr.bf16.mxu0 0
        %1556 = vmatpush1.bf16.msra.mxu0 %v1461
        %1557 = vmatprep.subr.bf16.mxu0 0
        %1558 = vmatpush1.bf16.msra.mxu0 %v1460
        %1559 = vmatprep.subr.bf16.mxu0 0
        %1560 = vmatpush1.bf16.msra.mxu0 %v1459
        %1561 = vmatprep.subr.bf16.mxu0 0
        %1562 = vmatpush1.bf16.msra.mxu0 %v1458
        %1563 = vmatprep.subr.bf16.mxu0 0
        %1564 = vmatpush2.bf16.msra.mxu0 %v1473
        %1565 = vmatprep.subr.bf16.mxu0 0
        %1566 = vmatpush2.bf16.msra.mxu0 %v1472
        %1567 = vmatprep.subr.bf16.mxu0 0
        %1568 = vmatpush2.bf16.msra.mxu0 %v1471
        %1569 = vmatprep.subr.bf16.mxu0 0
        %1570 = vmatpush2.bf16.msra.mxu0 %v1470
        %1571 = vmatprep.subr.bf16.mxu0 0
        %1572 = vmatpush2.bf16.msra.mxu0 %v1469
        %1573 = vmatprep.subr.bf16.mxu0 0
        %1574 = vmatpush2.bf16.msra.mxu0 %v1468
        %1575 = vmatprep.subr.bf16.mxu0 0
        %1576 = vmatpush2.bf16.msra.mxu0 %v1467
        %1577 = vmatprep.subr.bf16.mxu0 0
        %1578 = vmatpush2.bf16.msra.mxu0 %v1466
        %1579 = vmatprep.mubr.bf16.mxu0 %v1249
        %1580 = vmatmul.mubr.bf16.gmra.mxu0 %v1248
        %v1581 = vpop.f32.mrf.mxu0
        %v1582 = vadd.f32 %v1541, %v1581
        %v1583 = vpop.f32.mrf.mxu0
        %v1584 = vpop.f32.mrf.mxu0
        %v1585 = vadd.f32 %v1544, %v1584
        %v1586 = vpop.f32.mrf.mxu0
        %1587 = vdwg.mxu0
        %v1588 = vadd.f32 %v1244, %v1582
        %v1589 = vadd.f32 %v1245, %v1585
        %1590 = vst.msk [vmem:[#allocation3] sm:$0xff] %vm1146, %v1588
        %1591 = vst.msk [vmem:[#allocation3 + $0x8] sm:$0xff] %vm1146, %v1589
        %p1592 = scmp.eq.s32.totalorder %s24, 3
        // Predicated region
        $region100: #{detr_forward.6} parent=90 // pred_check
          %p1593 = pneg %p1592
        $region101: #{detr_forward.6} parent=90 // pred_check_branch
          %1595 = sbr.rel (%p1593) target = $region103
        $region102: #{detr_forward.6} parent=90 // pred_region
          %v1596 = vld [vmem:[#allocation2] sm:$0xff]
          %v1597 = vld [vmem:[#allocation2 + $0x8] sm:$0xff]
          %v1598 = vld [vmem:[#allocation3] sm:$0xff]
          %v1599 = vld [vmem:[#allocation3 + $0x8] sm:$0xff]
          %v1600 = vadd.f32 %v1596, %v1598
          %v1601 = vadd.f32 %v1597, %v1599
          %v1602 = vld [vmem:[%s10] sm:$0x1]
          %v1604 = vlaneseq
          %v1605 = vshrl.u32 %v1604, 7
          %v1606 = vsub.s32 0, %v1605
          %v1607 = vrot.slane %v1602, %v1606
          %v1609 = vadd.f32 %v1600, %v1607
          %v1610 = vadd.f32 %v1601, %v1607
          %v1611 = vld [vmem:[%s11] sm:$0x1]
          %v1612 = vld [vmem:[%s12] sm:$0x1]
          %v1613 = vsel %vm1146, %v1609, 0.0
          %1614 = vadd.xlane.f32.xlu0 %v1613
          %v1615 = vpop.xlane.xlu0 %1614
          %v1616 = vsel %vm1146, %v1610, 0.0
          %1617 = vadd.xlane.f32.xlu0 %v1616
          %v1618 = vpop.xlane.xlu0 %1617
          %v1619 = vrcp.pop 64.0
          %v1620 = vmul.f32 %v1615, %v1619
          %v1621 = vmul.f32 %v1618, %v1619
          %v1622 = vsub.f32 %v1609, %v1620
          %v1623 = vsub.f32 %v1610, %v1621
          %v1624 = vmul.f32 %v1622, %v1622
          %v1625 = vmul.f32 %v1623, %v1623
          %v1626 = vsel %vm1146, %v1624, 0.0
          %1627 = vadd.xlane.f32.xlu0 %v1626
          %v1628 = vpop.xlane.xlu0 %1627
          %v1629 = vsel %vm1146, %v1625, 0.0
          %1630 = vadd.xlane.f32.xlu0 %v1629
          %v1631 = vpop.xlane.xlu0 %1630
          %v1632 = vmul.f32 %v1628, %v1619
          %v1633 = vmul.f32 %v1631, %v1619
          %v1634 = vadd.f32 %v1632, 1e-05
          %v1635 = vadd.f32 %v1633, 1e-05
          %v1636 = vrsqrt.pop %v1634
          %v1637 = vrsqrt.pop %v1635
          %v1638 = vmul.f32 %v1622, %v1636
          %v1639 = vmul.f32 %v1623, %v1637
          %v1641 = vlaneseq
          %v1642 = vshrl.u32 %v1641, 7
          %v1643 = vsub.s32 0, %v1642
          %v1644 = vrot.slane %v1611, %v1643
          %v1646 = vmul.f32 %v1638, %v1644
          %v1647 = vmul.f32 %v1639, %v1644
          %v1649 = vlaneseq
          %v1650 = vshrl.u32 %v1649, 7
          %v1651 = vsub.s32 0, %v1650
          %v1652 = vrot.slane %v1612, %v1651
          %v1654 = vadd.f32 %v1646, %v1652
          %v1655 = vadd.f32 %v1647, %v1652
          %1656 = vst.msk [vmem:[%s13] sm:$0xff] %vm1146, %v1654
          %1657 = vst.msk [vmem:[%s13 + $0x8] sm:$0xff] %vm1146, %v1655
        $region103: #{detr_forward.6} parent=90 // pred_fallthru
          _
        // Predicated region
        $region104: #{detr_forward.6} parent=90 // pred_check
          %p1658 = pneg %p325
        $region105: #{detr_forward.6} parent=90 // pred_check_branch
          %1660 = sbr.rel (%p1658) target = $region107
        $region106: #{detr_forward.6} parent=90 // pred_region
          _
        $region107: #{detr_forward.6} parent=90 // pred_fallthru
          _
        // Predicated region
        $region108: #{detr_forward.6} parent=90 // pred_check
          %p1661 = pneg %p325
        $region109: #{detr_forward.6} parent=90 // pred_check_branch
          %1663 = sbr.rel (%p1661) target = $region111
        $region110: #{detr_forward.6} parent=90 // pred_region
          _
        $region111: #{detr_forward.6} parent=90 // pred_fallthru
          _
      $region91: #{detr_forward.6} parent=5 // pred_fallthru
        _
      %p1664 = scmp.le.s32.totalorder 2, %s19
      // Predicated region
      $region112: #{detr_forward.6} parent=5 // pred_check
        %p1665 = pneg %p1664
      $region113: #{detr_forward.6} parent=5 // pred_check_branch
        %1667 = sbr.rel (%p1665) target = $region115
      $region114: #{detr_forward.6} parent=5 // pred_region
        %s1668 = ssub.s32 %s19, 2
      $region115: #{detr_forward.6} parent=5 // pred_fallthru
        _
    $region6: #{detr_forward.6} parent=1 // loop_footer
      %s23 = sadd.s32 1, %s19
    $region7: #{detr_forward.6} parent=1 // loop_footer_branch
      %18 = sbr.rel target = $region3
    $region8: #{detr_forward.6} parent=1 // loop_exit
      _

// kernel: detr_forward.5
$region0: #{detr_forward.5}
  #allocation0 [shape = 'u32[]', space=smem, size = 0x4, offset = 0x4, fixed_abs, tag = 'smem constant byte address 0x4 - core index']
  #allocation1 [shape = 'u32[144,128]{1,0:T(1,128)}', space=vmem, size = 0x12000, scoped, tag = 'internal scratch']
  %s0 = inlined_call_operand.vmem [shape: f32[16,48], index: 0, kind: input, shape index: {}]
  %s1 = inlined_call_operand.vmem [shape: bf16[48,2048], index: 1, kind: input, shape index: {}]
  %s2 = inlined_call_operand.vmem [shape: f32[1,2048], index: 2, kind: input, shape index: {}]
  %s3 = inlined_call_operand.vmem [shape: bf16[2048,64], index: 3, kind: input, shape index: {}]
  %s4 = inlined_call_operand.vmem [shape: f32[1,64], index: 4, kind: input, shape index: {}]
  %s5 = inlined_call_operand.vmem [shape: f32[16,64], index: 5, kind: input, shape index: {}]
  %s6 = inlined_call_operand.vmem [shape: f32[16,64], index: 6, kind: output, shape index: {}]
  %s7 = sld [smem:[#allocation0]]
  $region34: #{detr_forward.5} parent=0
    _
  %s9 = ssub.s32 1, %s7
  %s10 = scalar_select 0, %s9, %s7
  // Predicated region
  $region2: #{detr_forward.5} parent=0 // pred_check
    _
  $region3: #{detr_forward.5} parent=0 // pred_check_branch
    %12 = sbr.rel (0) target = $region5
  $region4: #{detr_forward.5} parent=0 // pred_region
    _
  $region5: #{detr_forward.5} parent=0 // pred_fallthru
    _
  // Predicated region
  $region6: #{detr_forward.5} parent=0 // pred_check
    _
  $region7: #{detr_forward.5} parent=0 // pred_check_branch
    %14 = sbr.rel (0) target = $region9
  $region8: #{detr_forward.5} parent=0 // pred_region
    _
  $region9: #{detr_forward.5} parent=0 // pred_fallthru
    _
  // Predicated region
  $region10: #{detr_forward.5} parent=0 // pred_check
    _
  $region11: #{detr_forward.5} parent=0 // pred_check_branch
    %16 = sbr.rel (0) target = $region13
  $region12: #{detr_forward.5} parent=0 // pred_region
    _
  $region13: #{detr_forward.5} parent=0 // pred_fallthru
    _
  // Predicated region
  $region14: #{detr_forward.5} parent=0 // pred_check
    _
  $region15: #{detr_forward.5} parent=0 // pred_check_branch
    %18 = sbr.rel (0) target = $region17
  $region16: #{detr_forward.5} parent=0 // pred_region
    _
  $region17: #{detr_forward.5} parent=0 // pred_fallthru
    _
  // Predicated region
  $region18: #{detr_forward.5} parent=0 // pred_check
    _
  $region19: #{detr_forward.5} parent=0 // pred_check_branch
    %20 = sbr.rel (0) target = $region21
  $region20: #{detr_forward.5} parent=0 // pred_region
    _
  $region21: #{detr_forward.5} parent=0 // pred_fallthru
    _
  // Predicated region
  $region22: #{detr_forward.5} parent=0 // pred_check
    _
  $region23: #{detr_forward.5} parent=0 // pred_check_branch
    %22 = sbr.rel (0) target = $region25
  $region24: #{detr_forward.5} parent=0 // pred_region
    _
  $region25: #{detr_forward.5} parent=0 // pred_fallthru
    _
  %v24 = vld [vmem:[%s0] sm:$0xff]
  %v25 = vld [vmem:[%s0 + $0x8] sm:$0xff]
  %v26 = vpack.c.bf16 %v25, %v24
  %v27 = vld [vmem:[%s1] sm:$0xff]
  %v28 = vld [vmem:[%s1 + $0x8] sm:$0xff]
  %v29 = vld [vmem:[%s1 + $0x10] sm:$0xff]
  %v30 = vld [vmem:[%s1 + $0x18] sm:$0xff]
  %v31 = vld [vmem:[%s1 + $0x20] sm:$0xff]
  %v32 = vld [vmem:[%s1 + $0x28] sm:$0xff]
  %v33 = vld [vmem:[%s1 + $0x30] sm:$0xff]
  %v34 = vld [vmem:[%s1 + $0x38] sm:$0xff]
  %v35 = vld [vmem:[%s1 + $0x40] sm:$0xff]
  %v36 = vld [vmem:[%s1 + $0x48] sm:$0xff]
  %v37 = vld [vmem:[%s1 + $0x50] sm:$0xff]
  %v38 = vld [vmem:[%s1 + $0x58] sm:$0xff]
  %v39 = vld [vmem:[%s1 + $0x60] sm:$0xff]
  %v40 = vld [vmem:[%s1 + $0x68] sm:$0xff]
  %v41 = vld [vmem:[%s1 + $0x70] sm:$0xff]
  %v42 = vld [vmem:[%s1 + $0x78] sm:$0xff]
  %v43 = vld [vmem:[%s1 + $0x80] sm:$0xff]
  %v44 = vld [vmem:[%s1 + $0x88] sm:$0xff]
  %v45 = vld [vmem:[%s1 + $0x90] sm:$0xff]
  %v46 = vld [vmem:[%s1 + $0x98] sm:$0xff]
  %v47 = vld [vmem:[%s1 + $0xa0] sm:$0xff]
  %v48 = vld [vmem:[%s1 + $0xa8] sm:$0xff]
  %v49 = vld [vmem:[%s1 + $0xb0] sm:$0xff]
  %v50 = vld [vmem:[%s1 + $0xb8] sm:$0xff]
  %v51 = vld [vmem:[%s1 + $0xc0] sm:$0xff]
  %v52 = vld [vmem:[%s1 + $0xc8] sm:$0xff]
  %v53 = vld [vmem:[%s1 + $0xd0] sm:$0xff]
  %v54 = vld [vmem:[%s1 + $0xd8] sm:$0xff]
  %v55 = vld [vmem:[%s1 + $0xe0] sm:$0xff]
  %v56 = vld [vmem:[%s1 + $0xe8] sm:$0xff]
  %v57 = vld [vmem:[%s1 + $0xf0] sm:$0xff]
  %v58 = vld [vmem:[%s1 + $0xf8] sm:$0xff]
  %v59 = vld [vmem:[%s1 + $0x100] sm:$0xff]
  %v60 = vld [vmem:[%s1 + $0x108] sm:$0xff]
  %v61 = vld [vmem:[%s1 + $0x110] sm:$0xff]
  %v62 = vld [vmem:[%s1 + $0x118] sm:$0xff]
  %v63 = vld [vmem:[%s1 + $0x120] sm:$0xff]
  %v64 = vld [vmem:[%s1 + $0x128] sm:$0xff]
  %v65 = vld [vmem:[%s1 + $0x130] sm:$0xff]
  %v66 = vld [vmem:[%s1 + $0x138] sm:$0xff]
  %v67 = vld [vmem:[%s1 + $0x140] sm:$0xff]
  %v68 = vld [vmem:[%s1 + $0x148] sm:$0xff]
  %v69 = vld [vmem:[%s1 + $0x150] sm:$0xff]
  %v70 = vld [vmem:[%s1 + $0x158] sm:$0xff]
  %v71 = vld [vmem:[%s1 + $0x160] sm:$0xff]
  %v72 = vld [vmem:[%s1 + $0x168] sm:$0xff]
  %v73 = vld [vmem:[%s1 + $0x170] sm:$0xff]
  %v74 = vld [vmem:[%s1 + $0x178] sm:$0xff]
  %v75 = vld [vmem:[%s2] sm:$0xff]
  %v76 = vld [vmem:[%s2 + $0x8] sm:$0xff]
  %v79 = vlaneseq
  %v80 = vshrl.u32 %v79, 7
  %v81 = vsub.s32 0, %v80
  %v82 = vrot.slane %v75, %v81
  %v83 = vlaneseq
  %v84 = vshrl.u32 %v83, 7
  %v85 = vsub.s32 1, %v84
  %v86 = vrot.slane %v75, %v85
  %v87 = vlaneseq
  %v88 = vshrl.u32 %v87, 7
  %v89 = vsub.s32 2, %v88
  %v90 = vrot.slane %v75, %v89
  %v91 = vlaneseq
  %v92 = vshrl.u32 %v91, 7
  %v93 = vsub.s32 3, %v92
  %v94 = vrot.slane %v75, %v93
  %v95 = vlaneseq
  %v96 = vshrl.u32 %v95, 7
  %v97 = vsub.s32 4, %v96
  %v98 = vrot.slane %v75, %v97
  %v99 = vlaneseq
  %v100 = vshrl.u32 %v99, 7
  %v101 = vsub.s32 5, %v100
  %v102 = vrot.slane %v75, %v101
  %v103 = vlaneseq
  %v104 = vshrl.u32 %v103, 7
  %v105 = vsub.s32 6, %v104
  %v106 = vrot.slane %v75, %v105
  %v107 = vlaneseq
  %v108 = vshrl.u32 %v107, 7
  %v109 = vsub.s32 7, %v108
  %v110 = vrot.slane %v75, %v109
  %v111 = vlaneseq
  %v112 = vshrl.u32 %v111, 7
  %v113 = vsub.s32 0, %v112
  %v114 = vrot.slane %v76, %v113
  %v115 = vlaneseq
  %v116 = vshrl.u32 %v115, 7
  %v117 = vsub.s32 1, %v116
  %v118 = vrot.slane %v76, %v117
  %v119 = vlaneseq
  %v120 = vshrl.u32 %v119, 7
  %v121 = vsub.s32 2, %v120
  %v122 = vrot.slane %v76, %v121
  %v123 = vlaneseq
  %v124 = vshrl.u32 %v123, 7
  %v125 = vsub.s32 3, %v124
  %v126 = vrot.slane %v76, %v125
  %v127 = vlaneseq
  %v128 = vshrl.u32 %v127, 7
  %v129 = vsub.s32 4, %v128
  %v130 = vrot.slane %v76, %v129
  %v131 = vlaneseq
  %v132 = vshrl.u32 %v131, 7
  %v133 = vsub.s32 5, %v132
  %v134 = vrot.slane %v76, %v133
  %v135 = vlaneseq
  %v136 = vshrl.u32 %v135, 7
  %v137 = vsub.s32 6, %v136
  %v138 = vrot.slane %v76, %v137
  %v139 = vlaneseq
  %v140 = vshrl.u32 %v139, 7
  %v141 = vsub.s32 7, %v140
  %v142 = vrot.slane %v76, %v141
  %v207 = vunpack.c.l.b16 %v27
  %v208 = vunpack.c.h.b16 %v27
  %v209 = vunpack.c.l.b16 %v28
  %v210 = vunpack.c.h.b16 %v28
  %v211 = vunpack.c.l.b16 %v29
  %v212 = vunpack.c.h.b16 %v29
  %v213 = vunpack.c.l.b16 %v30
  %v214 = vunpack.c.h.b16 %v30
  %v215 = vunpack.c.l.b16 %v31
  %v216 = vunpack.c.h.b16 %v31
  %v217 = vunpack.c.l.b16 %v32
  %v218 = vunpack.c.h.b16 %v32
  %v219 = vunpack.c.l.b16 %v33
  %v220 = vunpack.c.h.b16 %v33
  %v221 = vunpack.c.l.b16 %v34
  %v222 = vunpack.c.h.b16 %v34
  %v223 = vunpack.c.l.b16 %v35
  %v224 = vunpack.c.h.b16 %v35
  %v225 = vunpack.c.l.b16 %v36
  %v226 = vunpack.c.h.b16 %v36
  %v227 = vunpack.c.l.b16 %v37
  %v228 = vunpack.c.h.b16 %v37
  %v229 = vunpack.c.l.b16 %v38
  %v230 = vunpack.c.h.b16 %v38
  %v231 = vunpack.c.l.b16 %v39
  %v232 = vunpack.c.h.b16 %v39
  %v233 = vunpack.c.l.b16 %v40
  %v234 = vunpack.c.h.b16 %v40
  %v235 = vunpack.c.l.b16 %v41
  %v236 = vunpack.c.h.b16 %v41
  %v237 = vunpack.c.l.b16 %v42
  %v238 = vunpack.c.h.b16 %v42
  %v239 = vunpack.c.l.b16 %v43
  %v240 = vunpack.c.h.b16 %v43
  %v241 = vunpack.c.l.b16 %v44
  %v242 = vunpack.c.h.b16 %v44
  %v243 = vunpack.c.l.b16 %v45
  %v244 = vunpack.c.h.b16 %v45
  %v245 = vunpack.c.l.b16 %v46
  %v246 = vunpack.c.h.b16 %v46
  %v247 = vunpack.c.l.b16 %v47
  %v248 = vunpack.c.h.b16 %v47
  %v249 = vunpack.c.l.b16 %v48
  %v250 = vunpack.c.h.b16 %v48
  %v251 = vunpack.c.l.b16 %v49
  %v252 = vunpack.c.h.b16 %v49
  %v253 = vunpack.c.l.b16 %v50
  %v254 = vunpack.c.h.b16 %v50
  %v255 = vunpack.c.l.b16 %v51
  %v256 = vunpack.c.h.b16 %v51
  %v257 = vunpack.c.l.b16 %v52
  %v258 = vunpack.c.h.b16 %v52
  %v259 = vunpack.c.l.b16 %v53
  %v260 = vunpack.c.h.b16 %v53
  %v261 = vunpack.c.l.b16 %v54
  %v262 = vunpack.c.h.b16 %v54
  %v263 = vunpack.c.l.b16 %v55
  %v264 = vunpack.c.h.b16 %v55
  %v265 = vunpack.c.l.b16 %v56
  %v266 = vunpack.c.h.b16 %v56
  %v267 = vunpack.c.l.b16 %v57
  %v268 = vunpack.c.h.b16 %v57
  %v269 = vunpack.c.l.b16 %v58
  %v270 = vunpack.c.h.b16 %v58
  %v271 = vunpack.c.l.b16 %v59
  %v272 = vunpack.c.h.b16 %v59
  %v273 = vunpack.c.l.b16 %v60
  %v274 = vunpack.c.h.b16 %v60
  %v275 = vunpack.c.l.b16 %v61
  %v276 = vunpack.c.h.b16 %v61
  %v277 = vunpack.c.l.b16 %v62
  %v278 = vunpack.c.h.b16 %v62
  %v279 = vunpack.c.l.b16 %v63
  %v280 = vunpack.c.h.b16 %v63
  %v281 = vunpack.c.l.b16 %v64
  %v282 = vunpack.c.h.b16 %v64
  %v283 = vunpack.c.l.b16 %v65
  %v284 = vunpack.c.h.b16 %v65
  %v285 = vunpack.c.l.b16 %v66
  %v286 = vunpack.c.h.b16 %v66
  %v287 = vunpack.c.l.b16 %v67
  %v288 = vunpack.c.h.b16 %v67
  %v289 = vunpack.c.l.b16 %v68
  %v290 = vunpack.c.h.b16 %v68
  %v291 = vunpack.c.l.b16 %v69
  %v292 = vunpack.c.h.b16 %v69
  %v293 = vunpack.c.l.b16 %v70
  %v294 = vunpack.c.h.b16 %v70
  %v295 = vunpack.c.l.b16 %v71
  %v296 = vunpack.c.h.b16 %v71
  %v297 = vunpack.c.l.b16 %v72
  %v298 = vunpack.c.h.b16 %v72
  %v299 = vunpack.c.l.b16 %v73
  %v300 = vunpack.c.h.b16 %v73
  %v301 = vunpack.c.l.b16 %v74
  %v302 = vunpack.c.h.b16 %v74
  %v303 = vpack.c.b16 %v223, %v207
  %v304 = vpack.c.b16 %v224, %v208
  %v305 = vpack.c.b16 %v225, %v209
  %v306 = vpack.c.b16 %v226, %v210
  %v307 = vpack.c.b16 %v227, %v211
  %v308 = vpack.c.b16 %v228, %v212
  %v309 = vpack.c.b16 %v229, %v213
  %v310 = vpack.c.b16 %v230, %v214
  %v311 = vpack.c.b16 %v231, %v215
  %v312 = vpack.c.b16 %v232, %v216
  %v313 = vpack.c.b16 %v233, %v217
  %v314 = vpack.c.b16 %v234, %v218
  %v315 = vpack.c.b16 %v235, %v219
  %v316 = vpack.c.b16 %v236, %v220
  %v317 = vpack.c.b16 %v237, %v221
  %v318 = vpack.c.b16 %v238, %v222
  %v319 = vpack.c.b16 %v255, %v239
  %v320 = vpack.c.b16 %v256, %v240
  %v321 = vpack.c.b16 %v257, %v241
  %v322 = vpack.c.b16 %v258, %v242
  %v323 = vpack.c.b16 %v259, %v243
  %v324 = vpack.c.b16 %v260, %v244
  %v325 = vpack.c.b16 %v261, %v245
  %v326 = vpack.c.b16 %v262, %v246
  %v327 = vpack.c.b16 %v263, %v247
  %v328 = vpack.c.b16 %v264, %v248
  %v329 = vpack.c.b16 %v265, %v249
  %v330 = vpack.c.b16 %v266, %v250
  %v331 = vpack.c.b16 %v267, %v251
  %v332 = vpack.c.b16 %v268, %v252
  %v333 = vpack.c.b16 %v269, %v253
  %v334 = vpack.c.b16 %v270, %v254
  %v335 = vpack.c.b16 %v287, %v271
  %v336 = vpack.c.b16 %v288, %v272
  %v337 = vpack.c.b16 %v289, %v273
  %v338 = vpack.c.b16 %v290, %v274
  %v339 = vpack.c.b16 %v291, %v275
  %v340 = vpack.c.b16 %v292, %v276
  %v341 = vpack.c.b16 %v293, %v277
  %v342 = vpack.c.b16 %v294, %v278
  %v343 = vpack.c.b16 %v295, %v279
  %v344 = vpack.c.b16 %v296, %v280
  %v345 = vpack.c.b16 %v297, %v281
  %v346 = vpack.c.b16 %v298, %v282
  %v347 = vpack.c.b16 %v299, %v283
  %v348 = vpack.c.b16 %v300, %v284
  %v349 = vpack.c.b16 %v301, %v285
  %v350 = vpack.c.b16 %v302, %v286
  %vm399 = vcmask 392192
  %v401 = vsel %vm399, %v26, 0
  %403 = vmatprep.subr.bf16.mxu0 0
  %404 = vmatpush1.bf16.msra.mxu0 0
  %405 = vmatprep.subr.bf16.mxu0 0
  %406 = vmatpush1.bf16.msra.mxu0 0
  %407 = vmatprep.subr.bf16.mxu0 0
  %408 = vmatpush1.bf16.msra.mxu0 0
  %409 = vmatprep.subr.bf16.mxu0 0
  %410 = vmatpush1.bf16.msra.mxu0 0
  %411 = vmatprep.subr.bf16.mxu0 0
  %412 = vmatpush1.bf16.msra.mxu0 0
  %413 = vmatprep.subr.bf16.mxu0 %v336
  %414 = vmatpush1.bf16.msra.mxu0 %v335
  %415 = vmatprep.subr.bf16.mxu0 %v320
  %416 = vmatpush1.bf16.msra.mxu0 %v319
  %417 = vmatprep.subr.bf16.mxu0 %v304
  %418 = vmatpush1.bf16.msra.mxu0 %v303
  %419 = vmatprep.subr.bf16.mxu0 0
  %420 = vmatpush2.bf16.msra.mxu0 0
  %421 = vmatprep.subr.bf16.mxu0 0
  %422 = vmatpush2.bf16.msra.mxu0 0
  %423 = vmatprep.subr.bf16.mxu0 0
  %424 = vmatpush2.bf16.msra.mxu0 0
  %425 = vmatprep.subr.bf16.mxu0 0
  %426 = vmatpush2.bf16.msra.mxu0 0
  %427 = vmatprep.subr.bf16.mxu0 0
  %428 = vmatpush2.bf16.msra.mxu0 0
  %429 = vmatprep.subr.bf16.mxu0 0
  %430 = vmatpush2.bf16.msra.mxu0 0
  %431 = vmatprep.subr.bf16.mxu0 0
  %432 = vmatpush2.bf16.msra.mxu0 0
  %433 = vmatprep.subr.bf16.mxu0 0
  %434 = vmatpush2.bf16.msra.mxu0 0
  %435 = vmatprep.mubr.bf16.mxu0 0
  %436 = vmatmul.mubr.bf16.gmra.mxu0 %v401
  %v437 = vpop.f32.mrf.mxu0
  %v438 = vadd.f32 %v82, %v437
  %v439 = vpop.f32.mrf.mxu0
  %v440 = vadd.f32 %v86, %v439
  %v441 = vpop.f32.mrf.mxu0
  %v442 = vadd.f32 %v82, %v441
  %v443 = vpop.f32.mrf.mxu0
  %v444 = vadd.f32 %v86, %v443
  %445 = vdwg.mxu0
  %446 = vmatprep.subr.bf16.mxu0 0
  %447 = vmatpush1.bf16.msra.mxu0 0
  %448 = vmatprep.subr.bf16.mxu0 0
  %449 = vmatpush1.bf16.msra.mxu0 0
  %450 = vmatprep.subr.bf16.mxu0 0
  %451 = vmatpush1.bf16.msra.mxu0 0
  %452 = vmatprep.subr.bf16.mxu0 0
  %453 = vmatpush1.bf16.msra.mxu0 0
  %454 = vmatprep.subr.bf16.mxu0 0
  %455 = vmatpush1.bf16.msra.mxu0 0
  %456 = vmatprep.subr.bf16.mxu0 %v338
  %457 = vmatpush1.bf16.msra.mxu0 %v337
  %458 = vmatprep.subr.bf16.mxu0 %v322
  %459 = vmatpush1.bf16.msra.mxu0 %v321
  %460 = vmatprep.subr.bf16.mxu0 %v306
  %461 = vmatpush1.bf16.msra.mxu0 %v305
  %462 = vmatprep.subr.bf16.mxu0 0
  %463 = vmatpush2.bf16.msra.mxu0 0
  %464 = vmatprep.subr.bf16.mxu0 0
  %465 = vmatpush2.bf16.msra.mxu0 0
  %466 = vmatprep.subr.bf16.mxu0 0
  %467 = vmatpush2.bf16.msra.mxu0 0
  %468 = vmatprep.subr.bf16.mxu0 0
  %469 = vmatpush2.bf16.msra.mxu0 0
  %470 = vmatprep.subr.bf16.mxu0 0
  %471 = vmatpush2.bf16.msra.mxu0 0
  %472 = vmatprep.subr.bf16.mxu0 0
  %473 = vmatpush2.bf16.msra.mxu0 0
  %474 = vmatprep.subr.bf16.mxu0 0
  %475 = vmatpush2.bf16.msra.mxu0 0
  %476 = vmatprep.subr.bf16.mxu0 0
  %477 = vmatpush2.bf16.msra.mxu0 0
  %478 = vmatprep.mubr.bf16.mxu0 0
  %479 = vmatmul.mubr.bf16.gmra.mxu0 %v401
  %v480 = vpop.f32.mrf.mxu0
  %v481 = vadd.f32 %v90, %v480
  %v482 = vpop.f32.mrf.mxu0
  %v483 = vadd.f32 %v94, %v482
  %v484 = vpop.f32.mrf.mxu0
  %v485 = vadd.f32 %v90, %v484
  %v486 = vpop.f32.mrf.mxu0
  %v487 = vadd.f32 %v94, %v486
  %488 = vdwg.mxu0
  %489 = vmatprep.subr.bf16.mxu0 0
  %490 = vmatpush1.bf16.msra.mxu0 0
  %491 = vmatprep.subr.bf16.mxu0 0
  %492 = vmatpush1.bf16.msra.mxu0 0
  %493 = vmatprep.subr.bf16.mxu0 0
  %494 = vmatpush1.bf16.msra.mxu0 0
  %495 = vmatprep.subr.bf16.mxu0 0
  %496 = vmatpush1.bf16.msra.mxu0 0
  %497 = vmatprep.subr.bf16.mxu0 0
  %498 = vmatpush1.bf16.msra.mxu0 0
  %499 = vmatprep.subr.bf16.mxu0 %v340
  %500 = vmatpush1.bf16.msra.mxu0 %v339
  %501 = vmatprep.subr.bf16.mxu0 %v324
  %502 = vmatpush1.bf16.msra.mxu0 %v323
  %503 = vmatprep.subr.bf16.mxu0 %v308
  %504 = vmatpush1.bf16.msra.mxu0 %v307
  %505 = vmatprep.subr.bf16.mxu0 0
  %506 = vmatpush2.bf16.msra.mxu0 0
  %507 = vmatprep.subr.bf16.mxu0 0
  %508 = vmatpush2.bf16.msra.mxu0 0
  %509 = vmatprep.subr.bf16.mxu0 0
  %510 = vmatpush2.bf16.msra.mxu0 0
  %511 = vmatprep.subr.bf16.mxu0 0
  %512 = vmatpush2.bf16.msra.mxu0 0
  %513 = vmatprep.subr.bf16.mxu0 0
  %514 = vmatpush2.bf16.msra.mxu0 0
  %515 = vmatprep.subr.bf16.mxu0 0
  %516 = vmatpush2.bf16.msra.mxu0 0
  %517 = vmatprep.subr.bf16.mxu0 0
  %518 = vmatpush2.bf16.msra.mxu0 0
  %519 = vmatprep.subr.bf16.mxu0 0
  %520 = vmatpush2.bf16.msra.mxu0 0
  %521 = vmatprep.mubr.bf16.mxu0 0
  %522 = vmatmul.mubr.bf16.gmra.mxu0 %v401
  %v523 = vpop.f32.mrf.mxu0
  %v524 = vadd.f32 %v98, %v523
  %v525 = vpop.f32.mrf.mxu0
  %v526 = vadd.f32 %v102, %v525
  %v527 = vpop.f32.mrf.mxu0
  %v528 = vadd.f32 %v98, %v527
  %v529 = vpop.f32.mrf.mxu0
  %v530 = vadd.f32 %v102, %v529
  %531 = vdwg.mxu0
  %532 = vmatprep.subr.bf16.mxu0 0
  %533 = vmatpush1.bf16.msra.mxu0 0
  %534 = vmatprep.subr.bf16.mxu0 0
  %535 = vmatpush1.bf16.msra.mxu0 0
  %536 = vmatprep.subr.bf16.mxu0 0
  %537 = vmatpush1.bf16.msra.mxu0 0
  %538 = vmatprep.subr.bf16.mxu0 0
  %539 = vmatpush1.bf16.msra.mxu0 0
  %540 = vmatprep.subr.bf16.mxu0 0
  %541 = vmatpush1.bf16.msra.mxu0 0
  %542 = vmatprep.subr.bf16.mxu0 %v342
  %543 = vmatpush1.bf16.msra.mxu0 %v341
  %544 = vmatprep.subr.bf16.mxu0 %v326
  %545 = vmatpush1.bf16.msra.mxu0 %v325
  %546 = vmatprep.subr.bf16.mxu0 %v310
  %547 = vmatpush1.bf16.msra.mxu0 %v309
  %548 = vmatprep.subr.bf16.mxu0 0
  %549 = vmatpush2.bf16.msra.mxu0 0
  %550 = vmatprep.subr.bf16.mxu0 0
  %551 = vmatpush2.bf16.msra.mxu0 0
  %552 = vmatprep.subr.bf16.mxu0 0
  %553 = vmatpush2.bf16.msra.mxu0 0
  %554 = vmatprep.subr.bf16.mxu0 0
  %555 = vmatpush2.bf16.msra.mxu0 0
  %556 = vmatprep.subr.bf16.mxu0 0
  %557 = vmatpush2.bf16.msra.mxu0 0
  %558 = vmatprep.subr.bf16.mxu0 0
  %559 = vmatpush2.bf16.msra.mxu0 0
  %560 = vmatprep.subr.bf16.mxu0 0
  %561 = vmatpush2.bf16.msra.mxu0 0
  %562 = vmatprep.subr.bf16.mxu0 0
  %563 = vmatpush2.bf16.msra.mxu0 0
  %564 = vmatprep.mubr.bf16.mxu0 0
  %565 = vmatmul.mubr.bf16.gmra.mxu0 %v401
  %v566 = vpop.f32.mrf.mxu0
  %v567 = vadd.f32 %v106, %v566
  %v568 = vpop.f32.mrf.mxu0
  %v569 = vadd.f32 %v110, %v568
  %v570 = vpop.f32.mrf.mxu0
  %v571 = vadd.f32 %v106, %v570
  %v572 = vpop.f32.mrf.mxu0
  %v573 = vadd.f32 %v110, %v572
  %574 = vdwg.mxu0
  %575 = vmatprep.subr.bf16.mxu0 0
  %576 = vmatpush1.bf16.msra.mxu0 0
  %577 = vmatprep.subr.bf16.mxu0 0
  %578 = vmatpush1.bf16.msra.mxu0 0
  %579 = vmatprep.subr.bf16.mxu0 0
  %580 = vmatpush1.bf16.msra.mxu0 0
  %581 = vmatprep.subr.bf16.mxu0 0
  %582 = vmatpush1.bf16.msra.mxu0 0
  %583 = vmatprep.subr.bf16.mxu0 0
  %584 = vmatpush1.bf16.msra.mxu0 0
  %585 = vmatprep.subr.bf16.mxu0 %v344
  %586 = vmatpush1.bf16.msra.mxu0 %v343
  %587 = vmatprep.subr.bf16.mxu0 %v328
  %588 = vmatpush1.bf16.msra.mxu0 %v327
  %589 = vmatprep.subr.bf16.mxu0 %v312
  %590 = vmatpush1.bf16.msra.mxu0 %v311
  %591 = vmatprep.subr.bf16.mxu0 0
  %592 = vmatpush2.bf16.msra.mxu0 0
  %593 = vmatprep.subr.bf16.mxu0 0
  %594 = vmatpush2.bf16.msra.mxu0 0
  %595 = vmatprep.subr.bf16.mxu0 0
  %596 = vmatpush2.bf16.msra.mxu0 0
  %597 = vmatprep.subr.bf16.mxu0 0
  %598 = vmatpush2.bf16.msra.mxu0 0
  %599 = vmatprep.subr.bf16.mxu0 0
  %600 = vmatpush2.bf16.msra.mxu0 0
  %601 = vmatprep.subr.bf16.mxu0 0
  %602 = vmatpush2.bf16.msra.mxu0 0
  %603 = vmatprep.subr.bf16.mxu0 0
  %604 = vmatpush2.bf16.msra.mxu0 0
  %605 = vmatprep.subr.bf16.mxu0 0
  %606 = vmatpush2.bf16.msra.mxu0 0
  %607 = vmatprep.mubr.bf16.mxu0 0
  %608 = vmatmul.mubr.bf16.gmra.mxu0 %v401
  %v609 = vpop.f32.mrf.mxu0
  %v610 = vadd.f32 %v114, %v609
  %v611 = vpop.f32.mrf.mxu0
  %v612 = vadd.f32 %v118, %v611
  %v613 = vpop.f32.mrf.mxu0
  %v614 = vadd.f32 %v114, %v613
  %v615 = vpop.f32.mrf.mxu0
  %v616 = vadd.f32 %v118, %v615
  %617 = vdwg.mxu0
  %618 = vmatprep.subr.bf16.mxu0 0
  %619 = vmatpush1.bf16.msra.mxu0 0
  %620 = vmatprep.subr.bf16.mxu0 0
  %621 = vmatpush1.bf16.msra.mxu0 0
  %622 = vmatprep.subr.bf16.mxu0 0
  %623 = vmatpush1.bf16.msra.mxu0 0
  %624 = vmatprep.subr.bf16.mxu0 0
  %625 = vmatpush1.bf16.msra.mxu0 0
  %626 = vmatprep.subr.bf16.mxu0 0
  %627 = vmatpush1.bf16.msra.mxu0 0
  %628 = vmatprep.subr.bf16.mxu0 %v346
  %629 = vmatpush1.bf16.msra.mxu0 %v345
  %630 = vmatprep.subr.bf16.mxu0 %v330
  %631 = vmatpush1.bf16.msra.mxu0 %v329
  %632 = vmatprep.subr.bf16.mxu0 %v314
  %633 = vmatpush1.bf16.msra.mxu0 %v313
  %634 = vmatprep.subr.bf16.mxu0 0
  %635 = vmatpush2.bf16.msra.mxu0 0
  %636 = vmatprep.subr.bf16.mxu0 0
  %637 = vmatpush2.bf16.msra.mxu0 0
  %638 = vmatprep.subr.bf16.mxu0 0
  %639 = vmatpush2.bf16.msra.mxu0 0
  %640 = vmatprep.subr.bf16.mxu0 0
  %641 = vmatpush2.bf16.msra.mxu0 0
  %642 = vmatprep.subr.bf16.mxu0 0
  %643 = vmatpush2.bf16.msra.mxu0 0
  %644 = vmatprep.subr.bf16.mxu0 0
  %645 = vmatpush2.bf16.msra.mxu0 0
  %646 = vmatprep.subr.bf16.mxu0 0
  %647 = vmatpush2.bf16.msra.mxu0 0
  %648 = vmatprep.subr.bf16.mxu0 0
  %649 = vmatpush2.bf16.msra.mxu0 0
  %650 = vmatprep.mubr.bf16.mxu0 0
  %651 = vmatmul.mubr.bf16.gmra.mxu0 %v401
  %v652 = vpop.f32.mrf.mxu0
  %v653 = vadd.f32 %v122, %v652
  %v654 = vpop.f32.mrf.mxu0
  %v655 = vadd.f32 %v126, %v654
  %v656 = vpop.f32.mrf.mxu0
  %v657 = vadd.f32 %v122, %v656
  %v658 = vpop.f32.mrf.mxu0
  %v659 = vadd.f32 %v126, %v658
  %660 = vdwg.mxu0
  %661 = vmatprep.subr.bf16.mxu0 0
  %662 = vmatpush1.bf16.msra.mxu0 0
  %663 = vmatprep.subr.bf16.mxu0 0
  %664 = vmatpush1.bf16.msra.mxu0 0
  %665 = vmatprep.subr.bf16.mxu0 0
  %666 = vmatpush1.bf16.msra.mxu0 0
  %667 = vmatprep.subr.bf16.mxu0 0
  %668 = vmatpush1.bf16.msra.mxu0 0
  %669 = vmatprep.subr.bf16.mxu0 0
  %670 = vmatpush1.bf16.msra.mxu0 0
  %671 = vmatprep.subr.bf16.mxu0 %v348
  %672 = vmatpush1.bf16.msra.mxu0 %v347
  %673 = vmatprep.subr.bf16.mxu0 %v332
  %674 = vmatpush1.bf16.msra.mxu0 %v331
  %675 = vmatprep.subr.bf16.mxu0 %v316
  %676 = vmatpush1.bf16.msra.mxu0 %v315
  %677 = vmatprep.subr.bf16.mxu0 0
  %678 = vmatpush2.bf16.msra.mxu0 0
  %679 = vmatprep.subr.bf16.mxu0 0
  %680 = vmatpush2.bf16.msra.mxu0 0
  %681 = vmatprep.subr.bf16.mxu0 0
  %682 = vmatpush2.bf16.msra.mxu0 0
  %683 = vmatprep.subr.bf16.mxu0 0
  %684 = vmatpush2.bf16.msra.mxu0 0
  %685 = vmatprep.subr.bf16.mxu0 0
  %686 = vmatpush2.bf16.msra.mxu0 0
  %687 = vmatprep.subr.bf16.mxu0 0
  %688 = vmatpush2.bf16.msra.mxu0 0
  %689 = vmatprep.subr.bf16.mxu0 0
  %690 = vmatpush2.bf16.msra.mxu0 0
  %691 = vmatprep.subr.bf16.mxu0 0
  %692 = vmatpush2.bf16.msra.mxu0 0
  %693 = vmatprep.mubr.bf16.mxu0 0
  %694 = vmatmul.mubr.bf16.gmra.mxu0 %v401
  %v695 = vpop.f32.mrf.mxu0
  %v696 = vadd.f32 %v130, %v695
  %v697 = vpop.f32.mrf.mxu0
  %v698 = vadd.f32 %v134, %v697
  %v699 = vpop.f32.mrf.mxu0
  %v700 = vadd.f32 %v130, %v699
  %v701 = vpop.f32.mrf.mxu0
  %v702 = vadd.f32 %v134, %v701
  %703 = vdwg.mxu0
  %704 = vmatprep.subr.bf16.mxu0 0
  %705 = vmatpush1.bf16.msra.mxu0 0
  %706 = vmatprep.subr.bf16.mxu0 0
  %707 = vmatpush1.bf16.msra.mxu0 0
  %708 = vmatprep.subr.bf16.mxu0 0
  %709 = vmatpush1.bf16.msra.mxu0 0
  %710 = vmatprep.subr.bf16.mxu0 0
  %711 = vmatpush1.bf16.msra.mxu0 0
  %712 = vmatprep.subr.bf16.mxu0 0
  %713 = vmatpush1.bf16.msra.mxu0 0
  %714 = vmatprep.subr.bf16.mxu0 %v350
  %715 = vmatpush1.bf16.msra.mxu0 %v349
  %716 = vmatprep.subr.bf16.mxu0 %v334
  %717 = vmatpush1.bf16.msra.mxu0 %v333
  %718 = vmatprep.subr.bf16.mxu0 %v318
  %719 = vmatpush1.bf16.msra.mxu0 %v317
  %720 = vmatprep.subr.bf16.mxu0 0
  %721 = vmatpush2.bf16.msra.mxu0 0
  %722 = vmatprep.subr.bf16.mxu0 0
  %723 = vmatpush2.bf16.msra.mxu0 0
  %724 = vmatprep.subr.bf16.mxu0 0
  %725 = vmatpush2.bf16.msra.mxu0 0
  %726 = vmatprep.subr.bf16.mxu0 0
  %727 = vmatpush2.bf16.msra.mxu0 0
  %728 = vmatprep.subr.bf16.mxu0 0
  %729 = vmatpush2.bf16.msra.mxu0 0
  %730 = vmatprep.subr.bf16.mxu0 0
  %731 = vmatpush2.bf16.msra.mxu0 0
  %732 = vmatprep.subr.bf16.mxu0 0
  %733 = vmatpush2.bf16.msra.mxu0 0
  %734 = vmatprep.subr.bf16.mxu0 0
  %735 = vmatpush2.bf16.msra.mxu0 0
  %736 = vmatprep.mubr.bf16.mxu0 0
  %737 = vmatmul.mubr.bf16.gmra.mxu0 %v401
  %v738 = vpop.f32.mrf.mxu0
  %v739 = vadd.f32 %v138, %v738
  %v740 = vpop.f32.mrf.mxu0
  %v741 = vadd.f32 %v142, %v740
  %v742 = vpop.f32.mrf.mxu0
  %v743 = vadd.f32 %v138, %v742
  %v744 = vpop.f32.mrf.mxu0
  %v745 = vadd.f32 %v142, %v744
  %746 = vdwg.mxu0
  %v747 = vmax.f32 %v438, 0.0
  %v748 = vmax.f32 %v440, 0.0
  %v749 = vmax.f32 %v481, 0.0
  %v750 = vmax.f32 %v483, 0.0
  %v751 = vmax.f32 %v524, 0.0
  %v752 = vmax.f32 %v526, 0.0
  %v753 = vmax.f32 %v567, 0.0
  %v754 = vmax.f32 %v569, 0.0
  %v755 = vmax.f32 %v610, 0.0
  %v756 = vmax.f32 %v612, 0.0
  %v757 = vmax.f32 %v653, 0.0
  %v758 = vmax.f32 %v655, 0.0
  %v759 = vmax.f32 %v696, 0.0
  %v760 = vmax.f32 %v698, 0.0
  %v761 = vmax.f32 %v739, 0.0
  %v762 = vmax.f32 %v741, 0.0
  %v763 = vmax.f32 %v442, 0.0
  %v764 = vmax.f32 %v444, 0.0
  %v765 = vmax.f32 %v485, 0.0
  %v766 = vmax.f32 %v487, 0.0
  %v767 = vmax.f32 %v528, 0.0
  %v768 = vmax.f32 %v530, 0.0
  %v769 = vmax.f32 %v571, 0.0
  %v770 = vmax.f32 %v573, 0.0
  %v771 = vmax.f32 %v614, 0.0
  %v772 = vmax.f32 %v616, 0.0
  %v773 = vmax.f32 %v657, 0.0
  %v774 = vmax.f32 %v659, 0.0
  %v775 = vmax.f32 %v700, 0.0
  %v776 = vmax.f32 %v702, 0.0
  %v777 = vmax.f32 %v743, 0.0
  %v778 = vmax.f32 %v745, 0.0
  %v779 = vpack.c.bf16 %v763, %v747
  %v780 = vpack.c.bf16 %v764, %v748
  %v781 = vpack.c.bf16 %v765, %v749
  %v782 = vpack.c.bf16 %v766, %v750
  %v783 = vpack.c.bf16 %v767, %v751
  %v784 = vpack.c.bf16 %v768, %v752
  %v785 = vpack.c.bf16 %v769, %v753
  %v786 = vpack.c.bf16 %v770, %v754
  %v787 = vpack.c.bf16 %v771, %v755
  %v788 = vpack.c.bf16 %v772, %v756
  %v789 = vpack.c.bf16 %v773, %v757
  %v790 = vpack.c.bf16 %v774, %v758
  %v791 = vpack.c.bf16 %v775, %v759
  %v792 = vpack.c.bf16 %v776, %v760
  %v793 = vpack.c.bf16 %v777, %v761
  %v794 = vpack.c.bf16 %v778, %v762
  %v795 = vld [vmem:[%s3] sm:$0xf]
  %v796 = vld [vmem:[%s3 + $0x4] sm:$0xf]
  %v797 = vld [vmem:[%s3 + $0x8] sm:$0xf]
  %v798 = vld [vmem:[%s3 + $0xc] sm:$0xf]
  %v799 = vld [vmem:[%s3 + $0x10] sm:$0xf]
  %v800 = vld [vmem:[%s3 + $0x14] sm:$0xf]
  %v801 = vld [vmem:[%s3 + $0x18] sm:$0xf]
  %v802 = vld [vmem:[%s3 + $0x1c] sm:$0xf]
  %v803 = vld [vmem:[%s3 + $0x20] sm:$0xf]
  %v804 = vld [vmem:[%s3 + $0x24] sm:$0xf]
  %v805 = vld [vmem:[%s3 + $0x28] sm:$0xf]
  %v806 = vld [vmem:[%s3 + $0x2c] sm:$0xf]
  %v807 = vld [vmem:[%s3 + $0x30] sm:$0xf]
  %v808 = vld [vmem:[%s3 + $0x34] sm:$0xf]
  %v809 = vld [vmem:[%s3 + $0x38] sm:$0xf]
  %v810 = vld [vmem:[%s3 + $0x3c] sm:$0xf]
  %v811 = vld [vmem:[%s3 + $0x40] sm:$0xf]
  %v812 = vld [vmem:[%s3 + $0x44] sm:$0xf]
  %v813 = vld [vmem:[%s3 + $0x48] sm:$0xf]
  %v814 = vld [vmem:[%s3 + $0x4c] sm:$0xf]
  %v815 = vld [vmem:[%s3 + $0x50] sm:$0xf]
  %v816 = vld [vmem:[%s3 + $0x54] sm:$0xf]
  %v817 = vld [vmem:[%s3 + $0x58] sm:$0xf]
  %v818 = vld [vmem:[%s3 + $0x5c] sm:$0xf]
  %v819 = vld [vmem:[%s3 + $0x60] sm:$0xf]
  %v820 = vld [vmem:[%s3 + $0x64] sm:$0xf]
  %v821 = vld [vmem:[%s3 + $0x68] sm:$0xf]
  %v822 = vld [vmem:[%s3 + $0x6c] sm:$0xf]
  %v823 = vld [vmem:[%s3 + $0x70] sm:$0xf]
  %v824 = vld [vmem:[%s3 + $0x74] sm:$0xf]
  %v825 = vld [vmem:[%s3 + $0x78] sm:$0xf]
  %v826 = vld [vmem:[%s3 + $0x7c] sm:$0xf]
  %v827 = vld [vmem:[%s3 + $0x80] sm:$0xf]
  %v828 = vld [vmem:[%s3 + $0x84] sm:$0xf]
  %v829 = vld [vmem:[%s3 + $0x88] sm:$0xf]
  %v830 = vld [vmem:[%s3 + $0x8c] sm:$0xf]
  %v831 = vld [vmem:[%s3 + $0x90] sm:$0xf]
  %v832 = vld [vmem:[%s3 + $0x94] sm:$0xf]
  %v833 = vld [vmem:[%s3 + $0x98] sm:$0xf]
  %v834 = vld [vmem:[%s3 + $0x9c] sm:$0xf]
  %v835 = vld [vmem:[%s3 + $0xa0] sm:$0xf]
  %v836 = vld [vmem:[%s3 + $0xa4] sm:$0xf]
  %v837 = vld [vmem:[%s3 + $0xa8] sm:$0xf]
  %v838 = vld [vmem:[%s3 + $0xac] sm:$0xf]
  %v839 = vld [vmem:[%s3 + $0xb0] sm:$0xf]
  %v840 = vld [vmem:[%s3 + $0xb4] sm:$0xf]
  %v841 = vld [vmem:[%s3 + $0xb8] sm:$0xf]
  %v842 = vld [vmem:[%s3 + $0xbc] sm:$0xf]
  %v843 = vld [vmem:[%s3 + $0xc0] sm:$0xf]
  %v844 = vld [vmem:[%s3 + $0xc4] sm:$0xf]
  %v845 = vld [vmem:[%s3 + $0xc8] sm:$0xf]
  %v846 = vld [vmem:[%s3 + $0xcc] sm:$0xf]
  %v847 = vld [vmem:[%s3 + $0xd0] sm:$0xf]
  %v848 = vld [vmem:[%s3 + $0xd4] sm:$0xf]
  %v849 = vld [vmem:[%s3 + $0xd8] sm:$0xf]
  %v850 = vld [vmem:[%s3 + $0xdc] sm:$0xf]
  %v851 = vld [vmem:[%s3 + $0xe0] sm:$0xf]
  %v852 = vld [vmem:[%s3 + $0xe4] sm:$0xf]
  %v853 = vld [vmem:[%s3 + $0xe8] sm:$0xf]
  %v854 = vld [vmem:[%s3 + $0xec] sm:$0xf]
  %v855 = vld [vmem:[%s3 + $0xf0] sm:$0xf]
  %v856 = vld [vmem:[%s3 + $0xf4] sm:$0xf]
  %v857 = vld [vmem:[%s3 + $0xf8] sm:$0xf]
  %v858 = vld [vmem:[%s3 + $0xfc] sm:$0xf]
  %v859 = vld [vmem:[%s3 + $0x100] sm:$0xf]
  %v860 = vld [vmem:[%s3 + $0x104] sm:$0xf]
  %v861 = vld [vmem:[%s3 + $0x108] sm:$0xf]
  %v862 = vld [vmem:[%s3 + $0x10c] sm:$0xf]
  %v863 = vld [vmem:[%s3 + $0x110] sm:$0xf]
  %v864 = vld [vmem:[%s3 + $0x114] sm:$0xf]
  %v865 = vld [vmem:[%s3 + $0x118] sm:$0xf]
  %v866 = vld [vmem:[%s3 + $0x11c] sm:$0xf]
  %v867 = vld [vmem:[%s3 + $0x120] sm:$0xf]
  %v868 = vld [vmem:[%s3 + $0x124] sm:$0xf]
  %v869 = vld [vmem:[%s3 + $0x128] sm:$0xf]
  %v870 = vld [vmem:[%s3 + $0x12c] sm:$0xf]
  %v871 = vld [vmem:[%s3 + $0x130] sm:$0xf]
  %v872 = vld [vmem:[%s3 + $0x134] sm:$0xf]
  %v873 = vld [vmem:[%s3 + $0x138] sm:$0xf]
  %v874 = vld [vmem:[%s3 + $0x13c] sm:$0xf]
  %v875 = vld [vmem:[%s3 + $0x140] sm:$0xf]
  %v876 = vld [vmem:[%s3 + $0x144] sm:$0xf]
  %v877 = vld [vmem:[%s3 + $0x148] sm:$0xf]
  %v878 = vld [vmem:[%s3 + $0x14c] sm:$0xf]
  %v879 = vld [vmem:[%s3 + $0x150] sm:$0xf]
  %v880 = vld [vmem:[%s3 + $0x154] sm:$0xf]
  %v881 = vld [vmem:[%s3 + $0x158] sm:$0xf]
  %v882 = vld [vmem:[%s3 + $0x15c] sm:$0xf]
  %v883 = vld [vmem:[%s3 + $0x160] sm:$0xf]
  %v884 = vld [vmem:[%s3 + $0x164] sm:$0xf]
  %v885 = vld [vmem:[%s3 + $0x168] sm:$0xf]
  %v886 = vld [vmem:[%s3 + $0x16c] sm:$0xf]
  %v887 = vld [vmem:[%s3 + $0x170] sm:$0xf]
  %v888 = vld [vmem:[%s3 + $0x174] sm:$0xf]
  %v889 = vld [vmem:[%s3 + $0x178] sm:$0xf]
  %v890 = vld [vmem:[%s3 + $0x17c] sm:$0xf]
  %v891 = vld [vmem:[%s3 + $0x180] sm:$0xf]
  %v892 = vld [vmem:[%s3 + $0x184] sm:$0xf]
  %v893 = vld [vmem:[%s3 + $0x188] sm:$0xf]
  %v894 = vld [vmem:[%s3 + $0x18c] sm:$0xf]
  %v895 = vld [vmem:[%s3 + $0x190] sm:$0xf]
  %v896 = vld [vmem:[%s3 + $0x194] sm:$0xf]
  %v897 = vld [vmem:[%s3 + $0x198] sm:$0xf]
  %v898 = vld [vmem:[%s3 + $0x19c] sm:$0xf]
  %v899 = vld [vmem:[%s3 + $0x1a0] sm:$0xf]
  %v900 = vld [vmem:[%s3 + $0x1a4] sm:$0xf]
  %v901 = vld [vmem:[%s3 + $0x1a8] sm:$0xf]
  %v902 = vld [vmem:[%s3 + $0x1ac] sm:$0xf]
  %v903 = vld [vmem:[%s3 + $0x1b0] sm:$0xf]
  %v904 = vld [vmem:[%s3 + $0x1b4] sm:$0xf]
  %v905 = vld [vmem:[%s3 + $0x1b8] sm:$0xf]
  %v906 = vld [vmem:[%s3 + $0x1bc] sm:$0xf]
  %v907 = vld [vmem:[%s3 + $0x1c0] sm:$0xf]
  %v908 = vld [vmem:[%s3 + $0x1c4] sm:$0xf]
  %v909 = vld [vmem:[%s3 + $0x1c8] sm:$0xf]
  %v910 = vld [vmem:[%s3 + $0x1cc] sm:$0xf]
  %v911 = vld [vmem:[%s3 + $0x1d0] sm:$0xf]
  %v912 = vld [vmem:[%s3 + $0x1d4] sm:$0xf]
  %v913 = vld [vmem:[%s3 + $0x1d8] sm:$0xf]
  %v914 = vld [vmem:[%s3 + $0x1dc] sm:$0xf]
  %v915 = vld [vmem:[%s3 + $0x1e0] sm:$0xf]
  %v916 = vld [vmem:[%s3 + $0x1e4] sm:$0xf]
  %v917 = vld [vmem:[%s3 + $0x1e8] sm:$0xf]
  %v918 = vld [vmem:[%s3 + $0x1ec] sm:$0xf]
  %v919 = vld [vmem:[%s3 + $0x1f0] sm:$0xf]
  %v920 = vld [vmem:[%s3 + $0x1f4] sm:$0xf]
  %v921 = vld [vmem:[%s3 + $0x1f8] sm:$0xf]
  %v922 = vld [vmem:[%s3 + $0x1fc] sm:$0xf]
  %v923 = vld [vmem:[%s3 + $0x200] sm:$0xf]
  %v924 = vld [vmem:[%s3 + $0x204] sm:$0xf]
  %v925 = vld [vmem:[%s3 + $0x208] sm:$0xf]
  %v926 = vld [vmem:[%s3 + $0x20c] sm:$0xf]
  %v927 = vld [vmem:[%s3 + $0x210] sm:$0xf]
  %v928 = vld [vmem:[%s3 + $0x214] sm:$0xf]
  %v929 = vld [vmem:[%s3 + $0x218] sm:$0xf]
  %v930 = vld [vmem:[%s3 + $0x21c] sm:$0xf]
  %v931 = vld [vmem:[%s3 + $0x220] sm:$0xf]
  %v932 = vld [vmem:[%s3 + $0x224] sm:$0xf]
  %v933 = vld [vmem:[%s3 + $0x228] sm:$0xf]
  %v934 = vld [vmem:[%s3 + $0x22c] sm:$0xf]
  %v935 = vld [vmem:[%s3 + $0x230] sm:$0xf]
  %v936 = vld [vmem:[%s3 + $0x234] sm:$0xf]
  %v937 = vld [vmem:[%s3 + $0x238] sm:$0xf]
  %v938 = vld [vmem:[%s3 + $0x23c] sm:$0xf]
  %v939 = vld [vmem:[%s3 + $0x240] sm:$0xf]
  %v940 = vld [vmem:[%s3 + $0x244] sm:$0xf]
  %v941 = vld [vmem:[%s3 + $0x248] sm:$0xf]
  %v942 = vld [vmem:[%s3 + $0x24c] sm:$0xf]
  %v943 = vld [vmem:[%s3 + $0x250] sm:$0xf]
  %v944 = vld [vmem:[%s3 + $0x254] sm:$0xf]
  %v945 = vld [vmem:[%s3 + $0x258] sm:$0xf]
  %v946 = vld [vmem:[%s3 + $0x25c] sm:$0xf]
  %v947 = vld [vmem:[%s3 + $0x260] sm:$0xf]
  %v948 = vld [vmem:[%s3 + $0x264] sm:$0xf]
  %v949 = vld [vmem:[%s3 + $0x268] sm:$0xf]
  %v950 = vld [vmem:[%s3 + $0x26c] sm:$0xf]
  %v951 = vld [vmem:[%s3 + $0x270] sm:$0xf]
  %v952 = vld [vmem:[%s3 + $0x274] sm:$0xf]
  %v953 = vld [vmem:[%s3 + $0x278] sm:$0xf]
  %v954 = vld [vmem:[%s3 + $0x27c] sm:$0xf]
  %v955 = vld [vmem:[%s3 + $0x280] sm:$0xf]
  %v956 = vld [vmem:[%s3 + $0x284] sm:$0xf]
  %v957 = vld [vmem:[%s3 + $0x288] sm:$0xf]
  %v958 = vld [vmem:[%s3 + $0x28c] sm:$0xf]
  %v959 = vld [vmem:[%s3 + $0x290] sm:$0xf]
  %v960 = vld [vmem:[%s3 + $0x294] sm:$0xf]
  %v961 = vld [vmem:[%s3 + $0x298] sm:$0xf]
  %v962 = vld [vmem:[%s3 + $0x29c] sm:$0xf]
  %v963 = vld [vmem:[%s3 + $0x2a0] sm:$0xf]
  %v964 = vld [vmem:[%s3 + $0x2a4] sm:$0xf]
  %v965 = vld [vmem:[%s3 + $0x2a8] sm:$0xf]
  %v966 = vld [vmem:[%s3 + $0x2ac] sm:$0xf]
  %v967 = vld [vmem:[%s3 + $0x2b0] sm:$0xf]
  %v968 = vld [vmem:[%s3 + $0x2b4] sm:$0xf]
  %v969 = vld [vmem:[%s3 + $0x2b8] sm:$0xf]
  %v970 = vld [vmem:[%s3 + $0x2bc] sm:$0xf]
  %v971 = vld [vmem:[%s3 + $0x2c0] sm:$0xf]
  %v972 = vld [vmem:[%s3 + $0x2c4] sm:$0xf]
  %v973 = vld [vmem:[%s3 + $0x2c8] sm:$0xf]
  %v974 = vld [vmem:[%s3 + $0x2cc] sm:$0xf]
  %v975 = vld [vmem:[%s3 + $0x2d0] sm:$0xf]
  %v976 = vld [vmem:[%s3 + $0x2d4] sm:$0xf]
  %v977 = vld [vmem:[%s3 + $0x2d8] sm:$0xf]
  %v978 = vld [vmem:[%s3 + $0x2dc] sm:$0xf]
  %v979 = vld [vmem:[%s3 + $0x2e0] sm:$0xf]
  %v980 = vld [vmem:[%s3 + $0x2e4] sm:$0xf]
  %v981 = vld [vmem:[%s3 + $0x2e8] sm:$0xf]
  %v982 = vld [vmem:[%s3 + $0x2ec] sm:$0xf]
  %v983 = vld [vmem:[%s3 + $0x2f0] sm:$0xf]
  %v984 = vld [vmem:[%s3 + $0x2f4] sm:$0xf]
  %v985 = vld [vmem:[%s3 + $0x2f8] sm:$0xf]
  %v986 = vld [vmem:[%s3 + $0x2fc] sm:$0xf]
  %v987 = vld [vmem:[%s3 + $0x300] sm:$0xf]
  %v988 = vld [vmem:[%s3 + $0x304] sm:$0xf]
  %v989 = vld [vmem:[%s3 + $0x308] sm:$0xf]
  %v990 = vld [vmem:[%s3 + $0x30c] sm:$0xf]
  %v991 = vld [vmem:[%s3 + $0x310] sm:$0xf]
  %v992 = vld [vmem:[%s3 + $0x314] sm:$0xf]
  %v993 = vld [vmem:[%s3 + $0x318] sm:$0xf]
  %v994 = vld [vmem:[%s3 + $0x31c] sm:$0xf]
  %v995 = vld [vmem:[%s3 + $0x320] sm:$0xf]
  %v996 = vld [vmem:[%s3 + $0x324] sm:$0xf]
  %v997 = vld [vmem:[%s3 + $0x328] sm:$0xf]
  %v998 = vld [vmem:[%s3 + $0x32c] sm:$0xf]
  %v999 = vld [vmem:[%s3 + $0x330] sm:$0xf]
  %v1000 = vld [vmem:[%s3 + $0x334] sm:$0xf]
  %v1001 = vld [vmem:[%s3 + $0x338] sm:$0xf]
  %v1002 = vld [vmem:[%s3 + $0x33c] sm:$0xf]
  %v1003 = vld [vmem:[%s3 + $0x340] sm:$0xf]
  %v1004 = vld [vmem:[%s3 + $0x344] sm:$0xf]
  %v1005 = vld [vmem:[%s3 + $0x348] sm:$0xf]
  %v1006 = vld [vmem:[%s3 + $0x34c] sm:$0xf]
  %v1007 = vld [vmem:[%s3 + $0x350] sm:$0xf]
  %v1008 = vld [vmem:[%s3 + $0x354] sm:$0xf]
  %v1009 = vld [vmem:[%s3 + $0x358] sm:$0xf]
  %v1010 = vld [vmem:[%s3 + $0x35c] sm:$0xf]
  %v1011 = vld [vmem:[%s3 + $0x360] sm:$0xf]
  %v1012 = vld [vmem:[%s3 + $0x364] sm:$0xf]
  %v1013 = vld [vmem:[%s3 + $0x368] sm:$0xf]
  %v1014 = vld [vmem:[%s3 + $0x36c] sm:$0xf]
  %v1015 = vld [vmem:[%s3 + $0x370] sm:$0xf]
  %v1016 = vld [vmem:[%s3 + $0x374] sm:$0xf]
  %v1017 = vld [vmem:[%s3 + $0x378] sm:$0xf]
  %v1018 = vld [vmem:[%s3 + $0x37c] sm:$0xf]
  %v1019 = vld [vmem:[%s3 + $0x380] sm:$0xf]
  %v1020 = vld [vmem:[%s3 + $0x384] sm:$0xf]
  %v1021 = vld [vmem:[%s3 + $0x388] sm:$0xf]
  %v1022 = vld [vmem:[%s3 + $0x38c] sm:$0xf]
  %v1023 = vld [vmem:[%s3 + $0x390] sm:$0xf]
  %v1024 = vld [vmem:[%s3 + $0x394] sm:$0xf]
  %v1025 = vld [vmem:[%s3 + $0x398] sm:$0xf]
  %v1026 = vld [vmem:[%s3 + $0x39c] sm:$0xf]
  %v1027 = vld [vmem:[%s3 + $0x3a0] sm:$0xf]
  %v1028 = vld [vmem:[%s3 + $0x3a4] sm:$0xf]
  %v1029 = vld [vmem:[%s3 + $0x3a8] sm:$0xf]
  %v1030 = vld [vmem:[%s3 + $0x3ac] sm:$0xf]
  %v1031 = vld [vmem:[%s3 + $0x3b0] sm:$0xf]
  %v1032 = vld [vmem:[%s3 + $0x3b4] sm:$0xf]
  %v1033 = vld [vmem:[%s3 + $0x3b8] sm:$0xf]
  %v1034 = vld [vmem:[%s3 + $0x3bc] sm:$0xf]
  %v1035 = vld [vmem:[%s3 + $0x3c0] sm:$0xf]
  %v1036 = vld [vmem:[%s3 + $0x3c4] sm:$0xf]
  %v1037 = vld [vmem:[%s3 + $0x3c8] sm:$0xf]
  %v1038 = vld [vmem:[%s3 + $0x3cc] sm:$0xf]
  %v1039 = vld [vmem:[%s3 + $0x3d0] sm:$0xf]
  %v1040 = vld [vmem:[%s3 + $0x3d4] sm:$0xf]
  %v1041 = vld [vmem:[%s3 + $0x3d8] sm:$0xf]
  %v1042 = vld [vmem:[%s3 + $0x3dc] sm:$0xf]
  %v1043 = vld [vmem:[%s3 + $0x3e0] sm:$0xf]
  %v1044 = vld [vmem:[%s3 + $0x3e4] sm:$0xf]
  %v1045 = vld [vmem:[%s3 + $0x3e8] sm:$0xf]
  %v1046 = vld [vmem:[%s3 + $0x3ec] sm:$0xf]
  %v1047 = vld [vmem:[%s3 + $0x3f0] sm:$0xf]
  %v1048 = vld [vmem:[%s3 + $0x3f4] sm:$0xf]
  %v1049 = vld [vmem:[%s3 + $0x3f8] sm:$0xf]
  %v1050 = vld [vmem:[%s3 + $0x3fc] sm:$0xf]
  %v1051 = vld [vmem:[%s4] sm:$0x1]
  %v1053 = vlaneseq
  %v1054 = vshrl.u32 %v1053, 7
  %v1055 = vsub.s32 0, %v1054
  %v1056 = vrot.slane %v1051, %v1055
  %v1314 = vunpack.c.l.b16 %v795
  %v1315 = vunpack.c.l.b16 %v796
  %v1316 = vunpack.c.l.b16 %v797
  %v1317 = vunpack.c.l.b16 %v798
  %v1318 = vunpack.c.l.b16 %v799
  %v1319 = vunpack.c.l.b16 %v800
  %v1320 = vunpack.c.l.b16 %v801
  %v1321 = vunpack.c.l.b16 %v802
  %v1322 = vunpack.c.l.b16 %v803
  %v1323 = vunpack.c.l.b16 %v804
  %v1324 = vunpack.c.l.b16 %v805
  %v1325 = vunpack.c.l.b16 %v806
  %v1326 = vunpack.c.l.b16 %v807
  %v1327 = vunpack.c.l.b16 %v808
  %v1328 = vunpack.c.l.b16 %v809
  %v1329 = vunpack.c.l.b16 %v810
  %v1330 = vunpack.c.l.b16 %v811
  %v1331 = vunpack.c.l.b16 %v812
  %v1332 = vunpack.c.l.b16 %v813
  %v1333 = vunpack.c.l.b16 %v814
  %v1334 = vunpack.c.l.b16 %v815
  %v1335 = vunpack.c.l.b16 %v816
  %v1336 = vunpack.c.l.b16 %v817
  %v1337 = vunpack.c.l.b16 %v818
  %v1338 = vunpack.c.l.b16 %v819
  %v1339 = vunpack.c.l.b16 %v820
  %v1340 = vunpack.c.l.b16 %v821
  %v1341 = vunpack.c.l.b16 %v822
  %v1342 = vunpack.c.l.b16 %v823
  %v1343 = vunpack.c.l.b16 %v824
  %v1344 = vunpack.c.l.b16 %v825
  %v1345 = vunpack.c.l.b16 %v826
  %v1346 = vunpack.c.l.b16 %v827
  %v1347 = vunpack.c.l.b16 %v828
  %v1348 = vunpack.c.l.b16 %v829
  %v1349 = vunpack.c.l.b16 %v830
  %v1350 = vunpack.c.l.b16 %v831
  %v1351 = vunpack.c.l.b16 %v832
  %v1352 = vunpack.c.l.b16 %v833
  %v1353 = vunpack.c.l.b16 %v834
  %v1354 = vunpack.c.l.b16 %v835
  %v1355 = vunpack.c.l.b16 %v836
  %v1356 = vunpack.c.l.b16 %v837
  %v1357 = vunpack.c.l.b16 %v838
  %v1358 = vunpack.c.l.b16 %v839
  %v1359 = vunpack.c.l.b16 %v840
  %v1360 = vunpack.c.l.b16 %v841
  %v1361 = vunpack.c.l.b16 %v842
  %v1362 = vunpack.c.l.b16 %v843
  %v1363 = vunpack.c.l.b16 %v844
  %v1364 = vunpack.c.l.b16 %v845
  %v1365 = vunpack.c.l.b16 %v846
  %v1366 = vunpack.c.l.b16 %v847
  %v1367 = vunpack.c.l.b16 %v848
  %v1368 = vunpack.c.l.b16 %v849
  %v1369 = vunpack.c.l.b16 %v850
  %v1370 = vunpack.c.l.b16 %v851
  %v1371 = vunpack.c.l.b16 %v852
  %v1372 = vunpack.c.l.b16 %v853
  %v1373 = vunpack.c.l.b16 %v854
  %v1374 = vunpack.c.l.b16 %v855
  %v1375 = vunpack.c.l.b16 %v856
  %v1376 = vunpack.c.l.b16 %v857
  %v1377 = vunpack.c.l.b16 %v858
  %v1378 = vunpack.c.l.b16 %v859
  %v1379 = vunpack.c.l.b16 %v860
  %v1380 = vunpack.c.l.b16 %v861
  %v1381 = vunpack.c.l.b16 %v862
  %v1382 = vunpack.c.l.b16 %v863
  %v1383 = vunpack.c.l.b16 %v864
  %v1384 = vunpack.c.l.b16 %v865
  %v1385 = vunpack.c.l.b16 %v866
  %v1386 = vunpack.c.l.b16 %v867
  %v1387 = vunpack.c.l.b16 %v868
  %v1388 = vunpack.c.l.b16 %v869
  %v1389 = vunpack.c.l.b16 %v870
  %v1390 = vunpack.c.l.b16 %v871
  %v1391 = vunpack.c.l.b16 %v872
  %v1392 = vunpack.c.l.b16 %v873
  %v1393 = vunpack.c.l.b16 %v874
  %v1394 = vunpack.c.l.b16 %v875
  %v1395 = vunpack.c.l.b16 %v876
  %v1396 = vunpack.c.l.b16 %v877
  %v1397 = vunpack.c.l.b16 %v878
  %v1398 = vunpack.c.l.b16 %v879
  %v1399 = vunpack.c.l.b16 %v880
  %v1400 = vunpack.c.l.b16 %v881
  %v1401 = vunpack.c.l.b16 %v882
  %v1402 = vunpack.c.l.b16 %v883
  %v1403 = vunpack.c.l.b16 %v884
  %v1404 = vunpack.c.l.b16 %v885
  %v1405 = vunpack.c.l.b16 %v886
  %v1406 = vunpack.c.l.b16 %v887
  %v1407 = vunpack.c.l.b16 %v888
  %v1408 = vunpack.c.l.b16 %v889
  %v1409 = vunpack.c.l.b16 %v890
  %v1410 = vunpack.c.l.b16 %v891
  %v1411 = vunpack.c.l.b16 %v892
  %v1412 = vunpack.c.l.b16 %v893
  %v1413 = vunpack.c.l.b16 %v894
  %v1414 = vunpack.c.l.b16 %v895
  %v1415 = vunpack.c.l.b16 %v896
  %v1416 = vunpack.c.l.b16 %v897
  %v1417 = vunpack.c.l.b16 %v898
  %v1418 = vunpack.c.l.b16 %v899
  %v1419 = vunpack.c.l.b16 %v900
  %v1420 = vunpack.c.l.b16 %v901
  %v1421 = vunpack.c.l.b16 %v902
  %v1422 = vunpack.c.l.b16 %v903
  %v1423 = vunpack.c.l.b16 %v904
  %v1424 = vunpack.c.l.b16 %v905
  %v1425 = vunpack.c.l.b16 %v906
  %v1426 = vunpack.c.l.b16 %v907
  %v1427 = vunpack.c.l.b16 %v908
  %v1428 = vunpack.c.l.b16 %v909
  %v1429 = vunpack.c.l.b16 %v910
  %v1430 = vunpack.c.l.b16 %v911
  %v1431 = vunpack.c.l.b16 %v912
  %v1432 = vunpack.c.l.b16 %v913
  %v1433 = vunpack.c.l.b16 %v914
  %v1434 = vunpack.c.l.b16 %v915
  %v1435 = vunpack.c.l.b16 %v916
  %v1436 = vunpack.c.l.b16 %v917
  %v1437 = vunpack.c.l.b16 %v918
  %v1438 = vunpack.c.l.b16 %v919
  %v1439 = vunpack.c.l.b16 %v920
  %v1440 = vunpack.c.l.b16 %v921
  %v1441 = vunpack.c.l.b16 %v922
  %v1442 = vunpack.c.l.b16 %v923
  %v1443 = vunpack.c.l.b16 %v924
  %v1444 = vunpack.c.l.b16 %v925
  %v1445 = vunpack.c.l.b16 %v926
  %v1446 = vunpack.c.l.b16 %v927
  %v1447 = vunpack.c.l.b16 %v928
  %v1448 = vunpack.c.l.b16 %v929
  %v1449 = vunpack.c.l.b16 %v930
  %v1450 = vunpack.c.l.b16 %v931
  %v1451 = vunpack.c.l.b16 %v932
  %v1452 = vunpack.c.l.b16 %v933
  %v1453 = vunpack.c.l.b16 %v934
  %v1454 = vunpack.c.l.b16 %v935
  %v1455 = vunpack.c.l.b16 %v936
  %v1456 = vunpack.c.l.b16 %v937
  %v1457 = vunpack.c.l.b16 %v938
  %v1458 = vunpack.c.l.b16 %v939
  %v1459 = vunpack.c.l.b16 %v940
  %v1460 = vunpack.c.l.b16 %v941
  %v1461 = vunpack.c.l.b16 %v942
  %v1462 = vunpack.c.l.b16 %v943
  %v1463 = vunpack.c.l.b16 %v944
  %v1464 = vunpack.c.l.b16 %v945
  %v1465 = vunpack.c.l.b16 %v946
  %v1466 = vunpack.c.l.b16 %v947
  %v1467 = vunpack.c.l.b16 %v948
  %v1468 = vunpack.c.l.b16 %v949
  %v1469 = vunpack.c.l.b16 %v950
  %v1470 = vunpack.c.l.b16 %v951
  %v1471 = vunpack.c.l.b16 %v952
  %v1472 = vunpack.c.l.b16 %v953
  %v1473 = vunpack.c.l.b16 %v954
  %v1474 = vunpack.c.l.b16 %v955
  %v1475 = vunpack.c.l.b16 %v956
  %v1476 = vunpack.c.l.b16 %v957
  %v1477 = vunpack.c.l.b16 %v958
  %v1478 = vunpack.c.l.b16 %v959
  %v1479 = vunpack.c.l.b16 %v960
  %v1480 = vunpack.c.l.b16 %v961
  %v1481 = vunpack.c.l.b16 %v962
  %v1482 = vunpack.c.l.b16 %v963
  %v1483 = vunpack.c.l.b16 %v964
  %v1484 = vunpack.c.l.b16 %v965
  %v1485 = vunpack.c.l.b16 %v966
  %v1486 = vunpack.c.l.b16 %v967
  %v1487 = vunpack.c.l.b16 %v968
  %v1488 = vunpack.c.l.b16 %v969
  %v1489 = vunpack.c.l.b16 %v970
  %v1490 = vunpack.c.l.b16 %v971
  %v1491 = vunpack.c.l.b16 %v972
  %v1492 = vunpack.c.l.b16 %v973
  %v1493 = vunpack.c.l.b16 %v974
  %v1494 = vunpack.c.l.b16 %v975
  %v1495 = vunpack.c.l.b16 %v976
  %v1496 = vunpack.c.l.b16 %v977
  %v1497 = vunpack.c.l.b16 %v978
  %v1498 = vunpack.c.l.b16 %v979
  %v1499 = vunpack.c.l.b16 %v980
  %v1500 = vunpack.c.l.b16 %v981
  %v1501 = vunpack.c.l.b16 %v982
  %v1502 = vunpack.c.l.b16 %v983
  %v1503 = vunpack.c.l.b16 %v984
  %v1504 = vunpack.c.l.b16 %v985
  %v1505 = vunpack.c.l.b16 %v986
  %v1506 = vunpack.c.l.b16 %v987
  %v1507 = vunpack.c.l.b16 %v988
  %v1508 = vunpack.c.l.b16 %v989
  %v1509 = vunpack.c.l.b16 %v990
  %v1510 = vunpack.c.l.b16 %v991
  %v1511 = vunpack.c.l.b16 %v992
  %v1512 = vunpack.c.l.b16 %v993
  %v1513 = vunpack.c.l.b16 %v994
  %v1514 = vunpack.c.l.b16 %v995
  %v1515 = vunpack.c.l.b16 %v996
  %v1516 = vunpack.c.l.b16 %v997
  %v1517 = vunpack.c.l.b16 %v998
  %v1518 = vunpack.c.l.b16 %v999
  %v1519 = vunpack.c.l.b16 %v1000
  %v1520 = vunpack.c.l.b16 %v1001
  %v1521 = vunpack.c.l.b16 %v1002
  %v1522 = vunpack.c.l.b16 %v1003
  %v1523 = vunpack.c.l.b16 %v1004
  %v1524 = vunpack.c.l.b16 %v1005
  %v1525 = vunpack.c.l.b16 %v1006
  %v1526 = vunpack.c.l.b16 %v1007
  %v1527 = vunpack.c.l.b16 %v1008
  %v1528 = vunpack.c.l.b16 %v1009
  %v1529 = vunpack.c.l.b16 %v1010
  %v1530 = vunpack.c.l.b16 %v1011
  %v1531 = vunpack.c.l.b16 %v1012
  %v1532 = vunpack.c.l.b16 %v1013
  %v1533 = vunpack.c.l.b16 %v1014
  %v1534 = vunpack.c.l.b16 %v1015
  %v1535 = vunpack.c.l.b16 %v1016
  %v1536 = vunpack.c.l.b16 %v1017
  %v1537 = vunpack.c.l.b16 %v1018
  %v1538 = vunpack.c.l.b16 %v1019
  %v1539 = vunpack.c.l.b16 %v1020
  %v1540 = vunpack.c.l.b16 %v1021
  %v1541 = vunpack.c.l.b16 %v1022
  %v1542 = vunpack.c.l.b16 %v1023
  %v1543 = vunpack.c.l.b16 %v1024
  %v1544 = vunpack.c.l.b16 %v1025
  %v1545 = vunpack.c.l.b16 %v1026
  %v1546 = vunpack.c.l.b16 %v1027
  %v1547 = vunpack.c.l.b16 %v1028
  %v1548 = vunpack.c.l.b16 %v1029
  %v1549 = vunpack.c.l.b16 %v1030
  %v1550 = vunpack.c.l.b16 %v1031
  %v1551 = vunpack.c.l.b16 %v1032
  %v1552 = vunpack.c.l.b16 %v1033
  %v1553 = vunpack.c.l.b16 %v1034
  %v1554 = vunpack.c.l.b16 %v1035
  %v1555 = vunpack.c.l.b16 %v1036
  %v1556 = vunpack.c.l.b16 %v1037
  %v1557 = vunpack.c.l.b16 %v1038
  %v1558 = vunpack.c.l.b16 %v1039
  %v1559 = vunpack.c.l.b16 %v1040
  %v1560 = vunpack.c.l.b16 %v1041
  %v1561 = vunpack.c.l.b16 %v1042
  %v1562 = vunpack.c.l.b16 %v1043
  %v1563 = vunpack.c.l.b16 %v1044
  %v1564 = vunpack.c.l.b16 %v1045
  %v1565 = vunpack.c.l.b16 %v1046
  %v1566 = vunpack.c.l.b16 %v1047
  %v1567 = vunpack.c.l.b16 %v1048
  %v1568 = vunpack.c.l.b16 %v1049
  %v1569 = vunpack.c.l.b16 %v1050
  %v1570 = vpack.c.b16 %v1315, %v1314
  %v1571 = vpack.c.b16 %v1317, %v1316
  %v1572 = vpack.c.b16 %v1319, %v1318
  %v1573 = vpack.c.b16 %v1321, %v1320
  %v1574 = vpack.c.b16 %v1323, %v1322
  %v1575 = vpack.c.b16 %v1325, %v1324
  %v1576 = vpack.c.b16 %v1327, %v1326
  %v1577 = vpack.c.b16 %v1329, %v1328
  %v1578 = vpack.c.b16 %v1331, %v1330
  %v1579 = vpack.c.b16 %v1333, %v1332
  %v1580 = vpack.c.b16 %v1335, %v1334
  %v1581 = vpack.c.b16 %v1337, %v1336
  %v1582 = vpack.c.b16 %v1339, %v1338
  %v1583 = vpack.c.b16 %v1341, %v1340
  %v1584 = vpack.c.b16 %v1343, %v1342
  %v1585 = vpack.c.b16 %v1345, %v1344
  %v1586 = vpack.c.b16 %v1347, %v1346
  %v1587 = vpack.c.b16 %v1349, %v1348
  %v1588 = vpack.c.b16 %v1351, %v1350
  %v1589 = vpack.c.b16 %v1353, %v1352
  %v1590 = vpack.c.b16 %v1355, %v1354
  %v1591 = vpack.c.b16 %v1357, %v1356
  %v1592 = vpack.c.b16 %v1359, %v1358
  %v1593 = vpack.c.b16 %v1361, %v1360
  %v1594 = vpack.c.b16 %v1363, %v1362
  %v1595 = vpack.c.b16 %v1365, %v1364
  %v1596 = vpack.c.b16 %v1367, %v1366
  %v1597 = vpack.c.b16 %v1369, %v1368
  %v1598 = vpack.c.b16 %v1371, %v1370
  %v1599 = vpack.c.b16 %v1373, %v1372
  %v1600 = vpack.c.b16 %v1375, %v1374
  %v1601 = vpack.c.b16 %v1377, %v1376
  %v1602 = vpack.c.b16 %v1379, %v1378
  %v1603 = vpack.c.b16 %v1381, %v1380
  %v1604 = vpack.c.b16 %v1383, %v1382
  %v1605 = vpack.c.b16 %v1385, %v1384
  %v1606 = vpack.c.b16 %v1387, %v1386
  %v1607 = vpack.c.b16 %v1389, %v1388
  %v1608 = vpack.c.b16 %v1391, %v1390
  %v1609 = vpack.c.b16 %v1393, %v1392
  %v1610 = vpack.c.b16 %v1395, %v1394
  %v1611 = vpack.c.b16 %v1397, %v1396
  %v1612 = vpack.c.b16 %v1399, %v1398
  %v1613 = vpack.c.b16 %v1401, %v1400
  %v1614 = vpack.c.b16 %v1403, %v1402
  %v1615 = vpack.c.b16 %v1405, %v1404
  %v1616 = vpack.c.b16 %v1407, %v1406
  %v1617 = vpack.c.b16 %v1409, %v1408
  %v1618 = vpack.c.b16 %v1411, %v1410
  %v1619 = vpack.c.b16 %v1413, %v1412
  %v1620 = vpack.c.b16 %v1415, %v1414
  %v1621 = vpack.c.b16 %v1417, %v1416
  %v1622 = vpack.c.b16 %v1419, %v1418
  %v1623 = vpack.c.b16 %v1421, %v1420
  %v1624 = vpack.c.b16 %v1423, %v1422
  %v1625 = vpack.c.b16 %v1425, %v1424
  %v1626 = vpack.c.b16 %v1427, %v1426
  %v1627 = vpack.c.b16 %v1429, %v1428
  %v1628 = vpack.c.b16 %v1431, %v1430
  %v1629 = vpack.c.b16 %v1433, %v1432
  %v1630 = vpack.c.b16 %v1435, %v1434
  %v1631 = vpack.c.b16 %v1437, %v1436
  %v1632 = vpack.c.b16 %v1439, %v1438
  %v1633 = vpack.c.b16 %v1441, %v1440
  %v1634 = vpack.c.b16 %v1443, %v1442
  %v1635 = vpack.c.b16 %v1445, %v1444
  %v1636 = vpack.c.b16 %v1447, %v1446
  %v1637 = vpack.c.b16 %v1449, %v1448
  %v1638 = vpack.c.b16 %v1451, %v1450
  %v1639 = vpack.c.b16 %v1453, %v1452
  %v1640 = vpack.c.b16 %v1455, %v1454
  %v1641 = vpack.c.b16 %v1457, %v1456
  %v1642 = vpack.c.b16 %v1459, %v1458
  %v1643 = vpack.c.b16 %v1461, %v1460
  %v1644 = vpack.c.b16 %v1463, %v1462
  %v1645 = vpack.c.b16 %v1465, %v1464
  %v1646 = vpack.c.b16 %v1467, %v1466
  %v1647 = vpack.c.b16 %v1469, %v1468
  %v1648 = vpack.c.b16 %v1471, %v1470
  %v1649 = vpack.c.b16 %v1473, %v1472
  %v1650 = vpack.c.b16 %v1475, %v1474
  %v1651 = vpack.c.b16 %v1477, %v1476
  %v1652 = vpack.c.b16 %v1479, %v1478
  %v1653 = vpack.c.b16 %v1481, %v1480
  %v1654 = vpack.c.b16 %v1483, %v1482
  %v1655 = vpack.c.b16 %v1485, %v1484
  %v1656 = vpack.c.b16 %v1487, %v1486
  %v1657 = vpack.c.b16 %v1489, %v1488
  %v1658 = vpack.c.b16 %v1491, %v1490
  %v1659 = vpack.c.b16 %v1493, %v1492
  %v1660 = vpack.c.b16 %v1495, %v1494
  %v1661 = vpack.c.b16 %v1497, %v1496
  %v1662 = vpack.c.b16 %v1499, %v1498
  %v1663 = vpack.c.b16 %v1501, %v1500
  %v1664 = vpack.c.b16 %v1503, %v1502
  %v1665 = vpack.c.b16 %v1505, %v1504
  %v1666 = vpack.c.b16 %v1507, %v1506
  %v1667 = vpack.c.b16 %v1509, %v1508
  %v1668 = vpack.c.b16 %v1511, %v1510
  %v1669 = vpack.c.b16 %v1513, %v1512
  %v1670 = vpack.c.b16 %v1515, %v1514
  %v1671 = vpack.c.b16 %v1517, %v1516
  %v1672 = vpack.c.b16 %v1519, %v1518
  %v1673 = vpack.c.b16 %v1521, %v1520
  %v1674 = vpack.c.b16 %v1523, %v1522
  %v1675 = vpack.c.b16 %v1525, %v1524
  %v1676 = vpack.c.b16 %v1527, %v1526
  %v1677 = vpack.c.b16 %v1529, %v1528
  %v1678 = vpack.c.b16 %v1531, %v1530
  %v1679 = vpack.c.b16 %v1533, %v1532
  %v1680 = vpack.c.b16 %v1535, %v1534
  %v1681 = vpack.c.b16 %v1537, %v1536
  %v1682 = vpack.c.b16 %v1539, %v1538
  %v1683 = vpack.c.b16 %v1541, %v1540
  %v1684 = vpack.c.b16 %v1543, %v1542
  %v1685 = vpack.c.b16 %v1545, %v1544
  %v1686 = vpack.c.b16 %v1547, %v1546
  %v1687 = vpack.c.b16 %v1549, %v1548
  %v1688 = vpack.c.b16 %v1551, %v1550
  %v1689 = vpack.c.b16 %v1553, %v1552
  %v1690 = vpack.c.b16 %v1555, %v1554
  %v1691 = vpack.c.b16 %v1557, %v1556
  %v1692 = vpack.c.b16 %v1559, %v1558
  %v1693 = vpack.c.b16 %v1561, %v1560
  %v1694 = vpack.c.b16 %v1563, %v1562
  %v1695 = vpack.c.b16 %v1565, %v1564
  %v1696 = vpack.c.b16 %v1567, %v1566
  %v1697 = vpack.c.b16 %v1569, %v1568
  %1826 = vmatprep.subr.bf16.mxu0 0
  %1827 = vmatpush1.bf16.msra.mxu0 %v1577
  %1828 = vmatprep.subr.bf16.mxu0 0
  %1829 = vmatpush1.bf16.msra.mxu0 %v1576
  %1830 = vmatprep.subr.bf16.mxu0 0
  %1831 = vmatpush1.bf16.msra.mxu0 %v1575
  %1832 = vmatprep.subr.bf16.mxu0 0
  %1833 = vmatpush1.bf16.msra.mxu0 %v1574
  %1834 = vmatprep.subr.bf16.mxu0 0
  %1835 = vmatpush1.bf16.msra.mxu0 %v1573
  %1836 = vmatprep.subr.bf16.mxu0 0
  %1837 = vmatpush1.bf16.msra.mxu0 %v1572
  %1838 = vmatprep.subr.bf16.mxu0 0
  %1839 = vmatpush1.bf16.msra.mxu0 %v1571
  %1840 = vmatprep.subr.bf16.mxu0 0
  %1841 = vmatpush1.bf16.msra.mxu0 %v1570
  %1842 = vmatprep.subr.bf16.mxu0 0
  %1843 = vmatpush2.bf16.msra.mxu0 %v1585
  %1844 = vmatprep.subr.bf16.mxu0 0
  %1845 = vmatpush2.bf16.msra.mxu0 %v1584
  %1846 = vmatprep.subr.bf16.mxu0 0
  %1847 = vmatpush2.bf16.msra.mxu0 %v1583
  %1848 = vmatprep.subr.bf16.mxu0 0
  %1849 = vmatpush2.bf16.msra.mxu0 %v1582
  %1850 = vmatprep.subr.bf16.mxu0 0
  %1851 = vmatpush2.bf16.msra.mxu0 %v1581
  %1852 = vmatprep.subr.bf16.mxu0 0
  %1853 = vmatpush2.bf16.msra.mxu0 %v1580
  %1854 = vmatprep.subr.bf16.mxu0 0
  %1855 = vmatpush2.bf16.msra.mxu0 %v1579
  %1856 = vmatprep.subr.bf16.mxu0 0
  %1857 = vmatpush2.bf16.msra.mxu0 %v1578
  %1858 = vmatprep.mubr.bf16.mxu0 %v780
  %1859 = vmatmul.mubr.bf16.gmra.mxu0 %v779
  %v1860 = vpop.f32.mrf.mxu0
  %v1861 = vadd.f32 %v1056, %v1860
  %v1862 = vpop.f32.mrf.mxu0
  %v1863 = vpop.f32.mrf.mxu0
  %v1864 = vadd.f32 %v1056, %v1863
  %v1865 = vpop.f32.mrf.mxu0
  %1866 = vdwg.mxu0
  %1867 = vmatprep.subr.bf16.mxu0 0
  %1868 = vmatpush1.bf16.msra.mxu0 %v1593
  %1869 = vmatprep.subr.bf16.mxu0 0
  %1870 = vmatpush1.bf16.msra.mxu0 %v1592
  %1871 = vmatprep.subr.bf16.mxu0 0
  %1872 = vmatpush1.bf16.msra.mxu0 %v1591
  %1873 = vmatprep.subr.bf16.mxu0 0
  %1874 = vmatpush1.bf16.msra.mxu0 %v1590
  %1875 = vmatprep.subr.bf16.mxu0 0
  %1876 = vmatpush1.bf16.msra.mxu0 %v1589
  %1877 = vmatprep.subr.bf16.mxu0 0
  %1878 = vmatpush1.bf16.msra.mxu0 %v1588
  %1879 = vmatprep.subr.bf16.mxu0 0
  %1880 = vmatpush1.bf16.msra.mxu0 %v1587
  %1881 = vmatprep.subr.bf16.mxu0 0
  %1882 = vmatpush1.bf16.msra.mxu0 %v1586
  %1883 = vmatprep.subr.bf16.mxu0 0
  %1884 = vmatpush2.bf16.msra.mxu0 %v1601
  %1885 = vmatprep.subr.bf16.mxu0 0
  %1886 = vmatpush2.bf16.msra.mxu0 %v1600
  %1887 = vmatprep.subr.bf16.mxu0 0
  %1888 = vmatpush2.bf16.msra.mxu0 %v1599
  %1889 = vmatprep.subr.bf16.mxu0 0
  %1890 = vmatpush2.bf16.msra.mxu0 %v1598
  %1891 = vmatprep.subr.bf16.mxu0 0
  %1892 = vmatpush2.bf16.msra.mxu0 %v1597
  %1893 = vmatprep.subr.bf16.mxu0 0
  %1894 = vmatpush2.bf16.msra.mxu0 %v1596
  %1895 = vmatprep.subr.bf16.mxu0 0
  %1896 = vmatpush2.bf16.msra.mxu0 %v1595
  %1897 = vmatprep.subr.bf16.mxu0 0
  %1898 = vmatpush2.bf16.msra.mxu0 %v1594
  %1899 = vmatprep.mubr.bf16.mxu0 %v782
  %1900 = vmatmul.mubr.bf16.gmra.mxu0 %v781
  %v1901 = vpop.f32.mrf.mxu0
  %v1902 = vadd.f32 %v1861, %v1901
  %v1903 = vpop.f32.mrf.mxu0
  %v1904 = vpop.f32.mrf.mxu0
  %v1905 = vadd.f32 %v1864, %v1904
  %v1906 = vpop.f32.mrf.mxu0
  %1907 = vdwg.mxu0
  %1908 = vmatprep.subr.bf16.mxu0 0
  %1909 = vmatpush1.bf16.msra.mxu0 %v1609
  %1910 = vmatprep.subr.bf16.mxu0 0
  %1911 = vmatpush1.bf16.msra.mxu0 %v1608
  %1912 = vmatprep.subr.bf16.mxu0 0
  %1913 = vmatpush1.bf16.msra.mxu0 %v1607
  %1914 = vmatprep.subr.bf16.mxu0 0
  %1915 = vmatpush1.bf16.msra.mxu0 %v1606
  %1916 = vmatprep.subr.bf16.mxu0 0
  %1917 = vmatpush1.bf16.msra.mxu0 %v1605
  %1918 = vmatprep.subr.bf16.mxu0 0
  %1919 = vmatpush1.bf16.msra.mxu0 %v1604
  %1920 = vmatprep.subr.bf16.mxu0 0
  %1921 = vmatpush1.bf16.msra.mxu0 %v1603
  %1922 = vmatprep.subr.bf16.mxu0 0
  %1923 = vmatpush1.bf16.msra.mxu0 %v1602
  %1924 = vmatprep.subr.bf16.mxu0 0
  %1925 = vmatpush2.bf16.msra.mxu0 %v1617
  %1926 = vmatprep.subr.bf16.mxu0 0
  %1927 = vmatpush2.bf16.msra.mxu0 %v1616
  %1928 = vmatprep.subr.bf16.mxu0 0
  %1929 = vmatpush2.bf16.msra.mxu0 %v1615
  %1930 = vmatprep.subr.bf16.mxu0 0
  %1931 = vmatpush2.bf16.msra.mxu0 %v1614
  %1932 = vmatprep.subr.bf16.mxu0 0
  %1933 = vmatpush2.bf16.msra.mxu0 %v1613
  %1934 = vmatprep.subr.bf16.mxu0 0
  %1935 = vmatpush2.bf16.msra.mxu0 %v1612
  %1936 = vmatprep.subr.bf16.mxu0 0
  %1937 = vmatpush2.bf16.msra.mxu0 %v1611
  %1938 = vmatprep.subr.bf16.mxu0 0
  %1939 = vmatpush2.bf16.msra.mxu0 %v1610
  %1940 = vmatprep.mubr.bf16.mxu0 %v784
  %1941 = vmatmul.mubr.bf16.gmra.mxu0 %v783
  %v1942 = vpop.f32.mrf.mxu0
  %v1943 = vadd.f32 %v1902, %v1942
  %v1944 = vpop.f32.mrf.mxu0
  %v1945 = vpop.f32.mrf.mxu0
  %v1946 = vadd.f32 %v1905, %v1945
  %v1947 = vpop.f32.mrf.mxu0
  %1948 = vdwg.mxu0
  %1949 = vmatprep.subr.bf16.mxu0 0
  %1950 = vmatpush1.bf16.msra.mxu0 %v1625
  %1951 = vmatprep.subr.bf16.mxu0 0
  %1952 = vmatpush1.bf16.msra.mxu0 %v1624
  %1953 = vmatprep.subr.bf16.mxu0 0
  %1954 = vmatpush1.bf16.msra.mxu0 %v1623
  %1955 = vmatprep.subr.bf16.mxu0 0
  %1956 = vmatpush1.bf16.msra.mxu0 %v1622
  %1957 = vmatprep.subr.bf16.mxu0 0
  %1958 = vmatpush1.bf16.msra.mxu0 %v1621
  %1959 = vmatprep.subr.bf16.mxu0 0
  %1960 = vmatpush1.bf16.msra.mxu0 %v1620
  %1961 = vmatprep.subr.bf16.mxu0 0
  %1962 = vmatpush1.bf16.msra.mxu0 %v1619
  %1963 = vmatprep.subr.bf16.mxu0 0
  %1964 = vmatpush1.bf16.msra.mxu0 %v1618
  %1965 = vmatprep.subr.bf16.mxu0 0
  %1966 = vmatpush2.bf16.msra.mxu0 %v1633
  %1967 = vmatprep.subr.bf16.mxu0 0
  %1968 = vmatpush2.bf16.msra.mxu0 %v1632
  %1969 = vmatprep.subr.bf16.mxu0 0
  %1970 = vmatpush2.bf16.msra.mxu0 %v1631
  %1971 = vmatprep.subr.bf16.mxu0 0
  %1972 = vmatpush2.bf16.msra.mxu0 %v1630
  %1973 = vmatprep.subr.bf16.mxu0 0
  %1974 = vmatpush2.bf16.msra.mxu0 %v1629
  %1975 = vmatprep.subr.bf16.mxu0 0
  %1976 = vmatpush2.bf16.msra.mxu0 %v1628
  %1977 = vmatprep.subr.bf16.mxu0 0
  %1978 = vmatpush2.bf16.msra.mxu0 %v1627
  %1979 = vmatprep.subr.bf16.mxu0 0
  %1980 = vmatpush2.bf16.msra.mxu0 %v1626
  %1981 = vmatprep.mubr.bf16.mxu0 %v786
  %1982 = vmatmul.mubr.bf16.gmra.mxu0 %v785
  %v1983 = vpop.f32.mrf.mxu0
  %v1984 = vadd.f32 %v1943, %v1983
  %v1985 = vpop.f32.mrf.mxu0
  %v1986 = vpop.f32.mrf.mxu0
  %v1987 = vadd.f32 %v1946, %v1986
  %v1988 = vpop.f32.mrf.mxu0
  %1989 = vdwg.mxu0
  %1990 = vmatprep.subr.bf16.mxu0 0
  %1991 = vmatpush1.bf16.msra.mxu0 %v1641
  %1992 = vmatprep.subr.bf16.mxu0 0
  %1993 = vmatpush1.bf16.msra.mxu0 %v1640
  %1994 = vmatprep.subr.bf16.mxu0 0
  %1995 = vmatpush1.bf16.msra.mxu0 %v1639
  %1996 = vmatprep.subr.bf16.mxu0 0
  %1997 = vmatpush1.bf16.msra.mxu0 %v1638
  %1998 = vmatprep.subr.bf16.mxu0 0
  %1999 = vmatpush1.bf16.msra.mxu0 %v1637
  %2000 = vmatprep.subr.bf16.mxu0 0
  %2001 = vmatpush1.bf16.msra.mxu0 %v1636
  %2002 = vmatprep.subr.bf16.mxu0 0
  %2003 = vmatpush1.bf16.msra.mxu0 %v1635
  %2004 = vmatprep.subr.bf16.mxu0 0
  %2005 = vmatpush1.bf16.msra.mxu0 %v1634
  %2006 = vmatprep.subr.bf16.mxu0 0
  %2007 = vmatpush2.bf16.msra.mxu0 %v1649
  %2008 = vmatprep.subr.bf16.mxu0 0
  %2009 = vmatpush2.bf16.msra.mxu0 %v1648
  %2010 = vmatprep.subr.bf16.mxu0 0
  %2011 = vmatpush2.bf16.msra.mxu0 %v1647
  %2012 = vmatprep.subr.bf16.mxu0 0
  %2013 = vmatpush2.bf16.msra.mxu0 %v1646
  %2014 = vmatprep.subr.bf16.mxu0 0
  %2015 = vmatpush2.bf16.msra.mxu0 %v1645
  %2016 = vmatprep.subr.bf16.mxu0 0
  %2017 = vmatpush2.bf16.msra.mxu0 %v1644
  %2018 = vmatprep.subr.bf16.mxu0 0
  %2019 = vmatpush2.bf16.msra.mxu0 %v1643
  %2020 = vmatprep.subr.bf16.mxu0 0
  %2021 = vmatpush2.bf16.msra.mxu0 %v1642
  %2022 = vmatprep.mubr.bf16.mxu0 %v788
  %2023 = vmatmul.mubr.bf16.gmra.mxu0 %v787
  %v2024 = vpop.f32.mrf.mxu0
  %v2025 = vadd.f32 %v1984, %v2024
  %v2026 = vpop.f32.mrf.mxu0
  %v2027 = vpop.f32.mrf.mxu0
  %v2028 = vadd.f32 %v1987, %v2027
  %v2029 = vpop.f32.mrf.mxu0
  %2030 = vdwg.mxu0
  %2031 = vmatprep.subr.bf16.mxu0 0
  %2032 = vmatpush1.bf16.msra.mxu0 %v1657
  %2033 = vmatprep.subr.bf16.mxu0 0
  %2034 = vmatpush1.bf16.msra.mxu0 %v1656
  %2035 = vmatprep.subr.bf16.mxu0 0
  %2036 = vmatpush1.bf16.msra.mxu0 %v1655
  %2037 = vmatprep.subr.bf16.mxu0 0
  %2038 = vmatpush1.bf16.msra.mxu0 %v1654
  %2039 = vmatprep.subr.bf16.mxu0 0
  %2040 = vmatpush1.bf16.msra.mxu0 %v1653
  %2041 = vmatprep.subr.bf16.mxu0 0
  %2042 = vmatpush1.bf16.msra.mxu0 %v1652
  %2043 = vmatprep.subr.bf16.mxu0 0
  %2044 = vmatpush1.bf16.msra.mxu0 %v1651
  %2045 = vmatprep.subr.bf16.mxu0 0
  %2046 = vmatpush1.bf16.msra.mxu0 %v1650
  %2047 = vmatprep.subr.bf16.mxu0 0
  %2048 = vmatpush2.bf16.msra.mxu0 %v1665
  %2049 = vmatprep.subr.bf16.mxu0 0
  %2050 = vmatpush2.bf16.msra.mxu0 %v1664
  %2051 = vmatprep.subr.bf16.mxu0 0
  %2052 = vmatpush2.bf16.msra.mxu0 %v1663
  %2053 = vmatprep.subr.bf16.mxu0 0
  %2054 = vmatpush2.bf16.msra.mxu0 %v1662
  %2055 = vmatprep.subr.bf16.mxu0 0
  %2056 = vmatpush2.bf16.msra.mxu0 %v1661
  %2057 = vmatprep.subr.bf16.mxu0 0
  %2058 = vmatpush2.bf16.msra.mxu0 %v1660
  %2059 = vmatprep.subr.bf16.mxu0 0
  %2060 = vmatpush2.bf16.msra.mxu0 %v1659
  %2061 = vmatprep.subr.bf16.mxu0 0
  %2062 = vmatpush2.bf16.msra.mxu0 %v1658
  %2063 = vmatprep.mubr.bf16.mxu0 %v790
  %2064 = vmatmul.mubr.bf16.gmra.mxu0 %v789
  %v2065 = vpop.f32.mrf.mxu0
  %v2066 = vadd.f32 %v2025, %v2065
  %v2067 = vpop.f32.mrf.mxu0
  %v2068 = vpop.f32.mrf.mxu0
  %v2069 = vadd.f32 %v2028, %v2068
  %v2070 = vpop.f32.mrf.mxu0
  %2071 = vdwg.mxu0
  %2072 = vmatprep.subr.bf16.mxu0 0
  %2073 = vmatpush1.bf16.msra.mxu0 %v1673
  %2074 = vmatprep.subr.bf16.mxu0 0
  %2075 = vmatpush1.bf16.msra.mxu0 %v1672
  %2076 = vmatprep.subr.bf16.mxu0 0
  %2077 = vmatpush1.bf16.msra.mxu0 %v1671
  %2078 = vmatprep.subr.bf16.mxu0 0
  %2079 = vmatpush1.bf16.msra.mxu0 %v1670
  %2080 = vmatprep.subr.bf16.mxu0 0
  %2081 = vmatpush1.bf16.msra.mxu0 %v1669
  %2082 = vmatprep.subr.bf16.mxu0 0
  %2083 = vmatpush1.bf16.msra.mxu0 %v1668
  %2084 = vmatprep.subr.bf16.mxu0 0
  %2085 = vmatpush1.bf16.msra.mxu0 %v1667
  %2086 = vmatprep.subr.bf16.mxu0 0
  %2087 = vmatpush1.bf16.msra.mxu0 %v1666
  %2088 = vmatprep.subr.bf16.mxu0 0
  %2089 = vmatpush2.bf16.msra.mxu0 %v1681
  %2090 = vmatprep.subr.bf16.mxu0 0
  %2091 = vmatpush2.bf16.msra.mxu0 %v1680
  %2092 = vmatprep.subr.bf16.mxu0 0
  %2093 = vmatpush2.bf16.msra.mxu0 %v1679
  %2094 = vmatprep.subr.bf16.mxu0 0
  %2095 = vmatpush2.bf16.msra.mxu0 %v1678
  %2096 = vmatprep.subr.bf16.mxu0 0
  %2097 = vmatpush2.bf16.msra.mxu0 %v1677
  %2098 = vmatprep.subr.bf16.mxu0 0
  %2099 = vmatpush2.bf16.msra.mxu0 %v1676
  %2100 = vmatprep.subr.bf16.mxu0 0
  %2101 = vmatpush2.bf16.msra.mxu0 %v1675
  %2102 = vmatprep.subr.bf16.mxu0 0
  %2103 = vmatpush2.bf16.msra.mxu0 %v1674
  %2104 = vmatprep.mubr.bf16.mxu0 %v792
  %2105 = vmatmul.mubr.bf16.gmra.mxu0 %v791
  %v2106 = vpop.f32.mrf.mxu0
  %v2107 = vadd.f32 %v2066, %v2106
  %v2108 = vpop.f32.mrf.mxu0
  %v2109 = vpop.f32.mrf.mxu0
  %v2110 = vadd.f32 %v2069, %v2109
  %v2111 = vpop.f32.mrf.mxu0
  %2112 = vdwg.mxu0
  %2113 = vmatprep.subr.bf16.mxu0 0
  %2114 = vmatpush1.bf16.msra.mxu0 %v1689
  %2115 = vmatprep.subr.bf16.mxu0 0
  %2116 = vmatpush1.bf16.msra.mxu0 %v1688
  %2117 = vmatprep.subr.bf16.mxu0 0
  %2118 = vmatpush1.bf16.msra.mxu0 %v1687
  %2119 = vmatprep.subr.bf16.mxu0 0
  %2120 = vmatpush1.bf16.msra.mxu0 %v1686
  %2121 = vmatprep.subr.bf16.mxu0 0
  %2122 = vmatpush1.bf16.msra.mxu0 %v1685
  %2123 = vmatprep.subr.bf16.mxu0 0
  %2124 = vmatpush1.bf16.msra.mxu0 %v1684
  %2125 = vmatprep.subr.bf16.mxu0 0
  %2126 = vmatpush1.bf16.msra.mxu0 %v1683
  %2127 = vmatprep.subr.bf16.mxu0 0
  %2128 = vmatpush1.bf16.msra.mxu0 %v1682
  %2129 = vmatprep.subr.bf16.mxu0 0
  %2130 = vmatpush2.bf16.msra.mxu0 %v1697
  %2131 = vmatprep.subr.bf16.mxu0 0
  %2132 = vmatpush2.bf16.msra.mxu0 %v1696
  %2133 = vmatprep.subr.bf16.mxu0 0
  %2134 = vmatpush2.bf16.msra.mxu0 %v1695
  %2135 = vmatprep.subr.bf16.mxu0 0
  %2136 = vmatpush2.bf16.msra.mxu0 %v1694
  %2137 = vmatprep.subr.bf16.mxu0 0
  %2138 = vmatpush2.bf16.msra.mxu0 %v1693
  %2139 = vmatprep.subr.bf16.mxu0 0
  %2140 = vmatpush2.bf16.msra.mxu0 %v1692
  %2141 = vmatprep.subr.bf16.mxu0 0
  %2142 = vmatpush2.bf16.msra.mxu0 %v1691
  %2143 = vmatprep.subr.bf16.mxu0 0
  %2144 = vmatpush2.bf16.msra.mxu0 %v1690
  %2145 = vmatprep.mubr.bf16.mxu0 %v794
  %2146 = vmatmul.mubr.bf16.gmra.mxu0 %v793
  %v2147 = vpop.f32.mrf.mxu0
  %v2148 = vadd.f32 %v2107, %v2147
  %v2149 = vpop.f32.mrf.mxu0
  %v2150 = vpop.f32.mrf.mxu0
  %v2151 = vadd.f32 %v2110, %v2150
  %v2152 = vpop.f32.mrf.mxu0
  %2153 = vdwg.mxu0
  %v2154 = vld [vmem:[%s5] sm:$0xff]
  %v2155 = vld [vmem:[%s5 + $0x8] sm:$0xff]
  %v2156 = vadd.f32 %v2154, %v2148
  %v2157 = vadd.f32 %v2155, %v2151
  %vm2158 = vcmask 523264
  %2159 = vst.msk [vmem:[%s6] sm:$0xff] %vm2158, %v2156
  %2160 = vst.msk [vmem:[%s6 + $0x8] sm:$0xff] %vm2158, %v2157
  // Predicated region
  $region26: #{detr_forward.5} parent=0 // pred_check
    _
  $region27: #{detr_forward.5} parent=0 // pred_check_branch
    %2162 = sbr.rel (0) target = $region29
  $region28: #{detr_forward.5} parent=0 // pred_region
    _
  $region29: #{detr_forward.5} parent=0 // pred_fallthru
    _
  // Predicated region
  $region30: #{detr_forward.5} parent=0 // pred_check
    _
  $region31: #{detr_forward.5} parent=0 // pred_check_branch
    %2164 = sbr.rel (0) target = $region33
  $region32: #{detr_forward.5} parent=0 // pred_region
    _
  $region33: #{detr_forward.5} parent=0 // pred_fallthru
    _

// kernel: detr_forward.7
$region0: #{detr_forward.7}
  #allocation0 [shape = 'u32[]', space=smem, size = 0x4, offset = 0x4, fixed_abs, tag = 'smem constant byte address 0x4 - core index']
  #allocation1 [shape = 'u32[144,128]{1,0:T(1,128)}', space=vmem, size = 0x12000, scoped, tag = 'internal scratch']
  %s0 = inlined_call_operand.vmem [shape: f32[16,64], index: 0, kind: input, shape index: {}]
  %s1 = inlined_call_operand.hbm [shape: f32[1,64], index: 1, kind: input, shape index: {}]
  %s2 = inlined_call_operand.hbm [shape: f32[1,64], index: 2, kind: input, shape index: {}]
  %s3 = inlined_call_operand.vmem [shape: f32[16,64], index: 3, kind: output, shape index: {}]
  %s4 = sld [smem:[#allocation0]]
  $region30: #{detr_forward.7} parent=0
    _
  %s6 = ssub.s32 1, %s4
  %s7 = scalar_select 0, %s6, %s4
  $region1: #{detr_forward.7} parent=0
    #allocation2 [shape = 'u8[512]{0}', space=vmem, size = 0x400, scoped, tag = 'input window, operand 1, single buffered']
    #allocation3 [shape = 's32[1]{0}', space=sflag, size = 0x4, scoped, tag = 'scoped memory for detr_forward.7']
    #allocation4 [shape = 'u8[512]{0}', space=vmem, size = 0x400, scoped, tag = 'input window, operand 2, single buffered']
    #allocation5 [shape = 's32[1]{0}', space=sflag, size = 0x4, scoped, tag = 'scoped memory for detr_forward.7']
    %8 = vsyncpa [#allocation3], 0
    %9 = vsyncpa [#allocation5], 0
    // Predicated region
    $region2: #{detr_forward.7} parent=1 // pred_check
      _
    $region3: #{detr_forward.7} parent=1 // pred_check_branch
      %11 = sbr.rel (0) target = $region5
    $region4: #{detr_forward.7} parent=1 // pred_region
      _
    $region5: #{detr_forward.7} parent=1 // pred_fallthru
      _
    // Predicated region
    $region6: #{detr_forward.7} parent=1 // pred_check
      _
    $region7: #{detr_forward.7} parent=1 // pred_check_branch
      %13 = sbr.rel (0) target = $region9
    $region8: #{detr_forward.7} parent=1 // pred_region
      %s15 = ssub.s32 16, 16
      %16 = vsyncadd [#allocation3], %s15
      %s18 = sshll.u32 [#allocation2], 4
      %s19 = int_to_ptr.vmem [resolvable:$true] %s18
      %21 = dma.hbm_to_vmem [thread:$0]  %s1, 16, %s19, [#allocation3]
    $region9: #{detr_forward.7} parent=1 // pred_fallthru
      _
    // Predicated region
    $region10: #{detr_forward.7} parent=1 // pred_check
      _
    $region11: #{detr_forward.7} parent=1 // pred_check_branch
      %23 = sbr.rel (0) target = $region13
    $region12: #{detr_forward.7} parent=1 // pred_region
      %s25 = ssub.s32 16, 16
      %26 = vsyncadd [#allocation5], %s25
      %s28 = sshll.u32 [#allocation4], 4
      %s29 = int_to_ptr.vmem [resolvable:$true] %s28
      %31 = dma.hbm_to_vmem [thread:$0]  %s2, 16, %s29, [#allocation5]
    $region13: #{detr_forward.7} parent=1 // pred_fallthru
      _
    // Predicated region
    $region14: #{detr_forward.7} parent=1 // pred_check
      _
    $region15: #{detr_forward.7} parent=1 // pred_check_branch
      %33 = sbr.rel (0) target = $region17
    $region16: #{detr_forward.7} parent=1 // pred_region
      %34 = dma.done [#allocation3], 16
    $region17: #{detr_forward.7} parent=1 // pred_fallthru
      _
    // Predicated region
    $region18: #{detr_forward.7} parent=1 // pred_check
      _
    $region19: #{detr_forward.7} parent=1 // pred_check_branch
      %36 = sbr.rel (0) target = $region21
    $region20: #{detr_forward.7} parent=1 // pred_region
      %37 = dma.done [#allocation5], 16
    $region21: #{detr_forward.7} parent=1 // pred_fallthru
      _
    %v38 = vld [vmem:[%s0] sm:$0xff]
    %v39 = vld [vmem:[%s0 + $0x8] sm:$0xff]
    %v40 = vld [vmem:[#allocation2] sm:$0x1]
    %v41 = vld [vmem:[#allocation4] sm:$0x1]
    %vm42 = vcmask 523264
    %v43 = vsel %vm42, %v38, 0.0
    %44 = vadd.xlane.f32.xlu0 %v43
    %v45 = vpop.xlane.xlu0 %44
    %v46 = vsel %vm42, %v39, 0.0
    %47 = vadd.xlane.f32.xlu0 %v46
    %v48 = vpop.xlane.xlu0 %47
    %v49 = vrcp.pop 64.0
    %v50 = vmul.f32 %v45, %v49
    %v51 = vmul.f32 %v48, %v49
    %v52 = vsub.f32 %v38, %v50
    %v53 = vsub.f32 %v39, %v51
    %v54 = vmul.f32 %v52, %v52
    %v55 = vmul.f32 %v53, %v53
    %v56 = vsel %vm42, %v54, 0.0
    %57 = vadd.xlane.f32.xlu0 %v56
    %v58 = vpop.xlane.xlu0 %57
    %v59 = vsel %vm42, %v55, 0.0
    %60 = vadd.xlane.f32.xlu0 %v59
    %v61 = vpop.xlane.xlu0 %60
    %v62 = vmul.f32 %v58, %v49
    %v63 = vmul.f32 %v61, %v49
    %v64 = vadd.f32 %v62, 1e-05
    %v65 = vadd.f32 %v63, 1e-05
    %v66 = vrsqrt.pop %v64
    %v67 = vrsqrt.pop %v65
    %v68 = vmul.f32 %v52, %v66
    %v69 = vmul.f32 %v53, %v67
    %v71 = vlaneseq
    %v72 = vshrl.u32 %v71, 7
    %v73 = vsub.s32 0, %v72
    %v74 = vrot.slane %v40, %v73
    %v76 = vmul.f32 %v68, %v74
    %v77 = vmul.f32 %v69, %v74
    %v79 = vlaneseq
    %v80 = vshrl.u32 %v79, 7
    %v81 = vsub.s32 0, %v80
    %v82 = vrot.slane %v41, %v81
    %v84 = vadd.f32 %v76, %v82
    %v85 = vadd.f32 %v77, %v82
    %86 = vst.msk [vmem:[%s3] sm:$0xff] %vm42, %v84
    %87 = vst.msk [vmem:[%s3 + $0x8] sm:$0xff] %vm42, %v85
    // Predicated region
    $region22: #{detr_forward.7} parent=1 // pred_check
      _
    $region23: #{detr_forward.7} parent=1 // pred_check_branch
      %89 = sbr.rel (0) target = $region25
    $region24: #{detr_forward.7} parent=1 // pred_region
      _
    $region25: #{detr_forward.7} parent=1 // pred_fallthru
      _
    // Predicated region
    $region26: #{detr_forward.7} parent=1 // pred_check
      _
    $region27: #{detr_forward.7} parent=1 // pred_check_branch
      %91 = sbr.rel (0) target = $region29
    $region28: #{detr_forward.7} parent=1 // pred_region
      _
    $region29: #{detr_forward.7} parent=1 // pred_fallthru
      _
    %92 = vsyncpa [#allocation3], 1
    %93 = vsyncpa [#allocation5], 1

// kernel: detr_forward.9
$region0: #{detr_forward.9}
  #allocation0 [shape = 'u32[]', space=smem, size = 0x4, offset = 0x4, fixed_abs, tag = 'smem constant byte address 0x4 - core index']
  #allocation1 [shape = 'u32[144,128]{1,0:T(1,128)}', space=vmem, size = 0x12000, scoped, tag = 'internal scratch']
  %s0 = inlined_call_operand.vmem [shape: f32[100,64], index: 0, kind: input, shape index: {}]
  %s1 = inlined_call_operand.vmem [shape: f32[1,64], index: 1, kind: input, shape index: {}]
  %s2 = inlined_call_operand.vmem [shape: f32[1,64], index: 2, kind: input, shape index: {}]
  %s3 = inlined_call_operand.vmem [shape: bf16[64,11], index: 3, kind: input, shape index: {}]
  %s4 = inlined_call_operand.hbm [shape: f32[1,11], index: 4, kind: input, shape index: {}]
  %s5 = inlined_call_operand.vmem [shape: bf16[64,4], index: 5, kind: input, shape index: {}]
  %s6 = inlined_call_operand.hbm [shape: f32[1,4], index: 6, kind: input, shape index: {}]
  %s7 = inlined_call_operand.vmem [shape: f32[100,11], index: 7, kind: output, shape index: {0}]
  %s8 = inlined_call_operand.vmem [shape: f32[100,4], index: 8, kind: output, shape index: {1}]
  %9 = xla_tuple %s7, %s8
  %s10 = sld [smem:[#allocation0]]
  $region54: #{detr_forward.9} parent=0
    _
  %s12 = ssub.s32 1, %s10
  %s13 = scalar_select 0, %s12, %s10
  $region1: #{detr_forward.9} parent=0
    #allocation2 [shape = 'u8[512]{0}', space=vmem, size = 0x400, scoped, tag = 'input window, operand 4, single buffered']
    #allocation3 [shape = 's32[1]{0}', space=sflag, size = 0x4, scoped, tag = 'scoped memory for detr_forward.9']
    #allocation4 [shape = 'u8[512]{0}', space=vmem, size = 0x400, scoped, tag = 'input window, operand 6, single buffered']
    #allocation5 [shape = 's32[1]{0}', space=sflag, size = 0x4, scoped, tag = 'scoped memory for detr_forward.9']
    %14 = vsyncpa [#allocation3], 0
    %15 = vsyncpa [#allocation5], 0
    // Predicated region
    $region2: #{detr_forward.9} parent=1 // pred_check
      _
    $region3: #{detr_forward.9} parent=1 // pred_check_branch
      %17 = sbr.rel (0) target = $region5
    $region4: #{detr_forward.9} parent=1 // pred_region
      _
    $region5: #{detr_forward.9} parent=1 // pred_fallthru
      _
    // Predicated region
    $region6: #{detr_forward.9} parent=1 // pred_check
      _
    $region7: #{detr_forward.9} parent=1 // pred_check_branch
      %19 = sbr.rel (0) target = $region9
    $region8: #{detr_forward.9} parent=1 // pred_region
      _
    $region9: #{detr_forward.9} parent=1 // pred_fallthru
      _
    // Predicated region
    $region10: #{detr_forward.9} parent=1 // pred_check
      _
    $region11: #{detr_forward.9} parent=1 // pred_check_branch
      %21 = sbr.rel (0) target = $region13
    $region12: #{detr_forward.9} parent=1 // pred_region
      _
    $region13: #{detr_forward.9} parent=1 // pred_fallthru
      _
    // Predicated region
    $region14: #{detr_forward.9} parent=1 // pred_check
      _
    $region15: #{detr_forward.9} parent=1 // pred_check_branch
      %23 = sbr.rel (0) target = $region17
    $region16: #{detr_forward.9} parent=1 // pred_region
      _
    $region17: #{detr_forward.9} parent=1 // pred_fallthru
      _
    // Predicated region
    $region18: #{detr_forward.9} parent=1 // pred_check
      _
    $region19: #{detr_forward.9} parent=1 // pred_check_branch
      %25 = sbr.rel (0) target = $region21
    $region20: #{detr_forward.9} parent=1 // pred_region
      %s27 = ssub.s32 16, 16
      %28 = vsyncadd [#allocation3], %s27
      %s30 = sshll.u32 [#allocation2], 4
      %s31 = int_to_ptr.vmem [resolvable:$true] %s30
      %33 = dma.hbm_to_vmem [thread:$0]  %s4, 16, %s31, [#allocation3]
    $region21: #{detr_forward.9} parent=1 // pred_fallthru
      _
    // Predicated region
    $region22: #{detr_forward.9} parent=1 // pred_check
      _
    $region23: #{detr_forward.9} parent=1 // pred_check_branch
      %35 = sbr.rel (0) target = $region25
    $region24: #{detr_forward.9} parent=1 // pred_region
      _
    $region25: #{detr_forward.9} parent=1 // pred_fallthru
      _
    // Predicated region
    $region26: #{detr_forward.9} parent=1 // pred_check
      _
    $region27: #{detr_forward.9} parent=1 // pred_check_branch
      %37 = sbr.rel (0) target = $region29
    $region28: #{detr_forward.9} parent=1 // pred_region
      %s39 = ssub.s32 16, 16
      %40 = vsyncadd [#allocation5], %s39
      %s42 = sshll.u32 [#allocation4], 4
      %s43 = int_to_ptr.vmem [resolvable:$true] %s42
      %45 = dma.hbm_to_vmem [thread:$0]  %s6, 16, %s43, [#allocation5]
    $region29: #{detr_forward.9} parent=1 // pred_fallthru
      _
    // Predicated region
    $region30: #{detr_forward.9} parent=1 // pred_check
      _
    $region31: #{detr_forward.9} parent=1 // pred_check_branch
      %47 = sbr.rel (0) target = $region33
    $region32: #{detr_forward.9} parent=1 // pred_region
      %48 = dma.done [#allocation3], 16
    $region33: #{detr_forward.9} parent=1 // pred_fallthru
      _
    // Predicated region
    $region34: #{detr_forward.9} parent=1 // pred_check
      _
    $region35: #{detr_forward.9} parent=1 // pred_check_branch
      %50 = sbr.rel (0) target = $region37
    $region36: #{detr_forward.9} parent=1 // pred_region
      %51 = dma.done [#allocation5], 16
    $region37: #{detr_forward.9} parent=1 // pred_fallthru
      _
    %v53 = vld [vmem:[%s0] sm:$0xff]
    %v54 = vld [vmem:[%s0 + $0x8] sm:$0xff]
    %v55 = vld [vmem:[%s0 + $0x10] sm:$0xff]
    %v56 = vld [vmem:[%s0 + $0x18] sm:$0xff]
    %v57 = vld [vmem:[%s0 + $0x20] sm:$0xff]
    %v58 = vld [vmem:[%s0 + $0x28] sm:$0xff]
    %v59 = vld [vmem:[%s0 + $0x30] sm:$0xff]
    %v60 = vld [vmem:[%s0 + $0x38] sm:$0xff]
    %v61 = vld [vmem:[%s0 + $0x40] sm:$0xff]
    %v62 = vld [vmem:[%s0 + $0x48] sm:$0xff]
    %v63 = vld [vmem:[%s0 + $0x50] sm:$0xff]
    %v64 = vld [vmem:[%s0 + $0x58] sm:$0xff]
    %v65 = vld [vmem:[%s0 + $0x60] sm:$0xf]
    %v66 = vld [vmem:[%s1] sm:$0x1]
    %v67 = vld [vmem:[%s2] sm:$0x1]
    %vm68 = vcmask 523264
    %v69 = vsel %vm68, %v53, 0.0
    %70 = vadd.xlane.f32.xlu0 %v69
    %v71 = vpop.xlane.xlu0 %70
    %v72 = vsel %vm68, %v54, 0.0
    %73 = vadd.xlane.f32.xlu0 %v72
    %v74 = vpop.xlane.xlu0 %73
    %v75 = vsel %vm68, %v55, 0.0
    %76 = vadd.xlane.f32.xlu0 %v75
    %v77 = vpop.xlane.xlu0 %76
    %v78 = vsel %vm68, %v56, 0.0
    %79 = vadd.xlane.f32.xlu0 %v78
    %v80 = vpop.xlane.xlu0 %79
    %v81 = vsel %vm68, %v57, 0.0
    %82 = vadd.xlane.f32.xlu0 %v81
    %v83 = vpop.xlane.xlu0 %82
    %v84 = vsel %vm68, %v58, 0.0
    %85 = vadd.xlane.f32.xlu0 %v84
    %v86 = vpop.xlane.xlu0 %85
    %v87 = vsel %vm68, %v59, 0.0
    %88 = vadd.xlane.f32.xlu0 %v87
    %v89 = vpop.xlane.xlu0 %88
    %v90 = vsel %vm68, %v60, 0.0
    %91 = vadd.xlane.f32.xlu0 %v90
    %v92 = vpop.xlane.xlu0 %91
    %v93 = vsel %vm68, %v61, 0.0
    %94 = vadd.xlane.f32.xlu0 %v93
    %v95 = vpop.xlane.xlu0 %94
    %v96 = vsel %vm68, %v62, 0.0
    %97 = vadd.xlane.f32.xlu0 %v96
    %v98 = vpop.xlane.xlu0 %97
    %v99 = vsel %vm68, %v63, 0.0
    %100 = vadd.xlane.f32.xlu0 %v99
    %v101 = vpop.xlane.xlu0 %100
    %v102 = vsel %vm68, %v64, 0.0
    %103 = vadd.xlane.f32.xlu0 %v102
    %v104 = vpop.xlane.xlu0 %103
    %vm105 = vcmask 519168
    %v106 = vsel %vm105, %v65, 0.0
    %107 = vadd.xlane.f32.xlu0 %v106
    %v108 = vpop.xlane.xlu0 %107
    %v109 = vrcp.pop 64.0
    %v110 = vmul.f32 %v71, %v109
    %v111 = vmul.f32 %v74, %v109
    %v112 = vmul.f32 %v77, %v109
    %v113 = vmul.f32 %v80, %v109
    %v114 = vmul.f32 %v83, %v109
    %v115 = vmul.f32 %v86, %v109
    %v116 = vmul.f32 %v89, %v109
    %v117 = vmul.f32 %v92, %v109
    %v118 = vmul.f32 %v95, %v109
    %v119 = vmul.f32 %v98, %v109
    %v120 = vmul.f32 %v101, %v109
    %v121 = vmul.f32 %v104, %v109
    %v122 = vmul.f32 %v108, %v109
    %v123 = vsub.f32 %v53, %v110
    %v124 = vsub.f32 %v54, %v111
    %v125 = vsub.f32 %v55, %v112
    %v126 = vsub.f32 %v56, %v113
    %v127 = vsub.f32 %v57, %v114
    %v128 = vsub.f32 %v58, %v115
    %v129 = vsub.f32 %v59, %v116
    %v130 = vsub.f32 %v60, %v117
    %v131 = vsub.f32 %v61, %v118
    %v132 = vsub.f32 %v62, %v119
    %v133 = vsub.f32 %v63, %v120
    %v134 = vsub.f32 %v64, %v121
    %v135 = vsub.f32 %v65, %v122
    %v136 = vmul.f32 %v123, %v123
    %v137 = vmul.f32 %v124, %v124
    %v138 = vmul.f32 %v125, %v125
    %v139 = vmul.f32 %v126, %v126
    %v140 = vmul.f32 %v127, %v127
    %v141 = vmul.f32 %v128, %v128
    %v142 = vmul.f32 %v129, %v129
    %v143 = vmul.f32 %v130, %v130
    %v144 = vmul.f32 %v131, %v131
    %v145 = vmul.f32 %v132, %v132
    %v146 = vmul.f32 %v133, %v133
    %v147 = vmul.f32 %v134, %v134
    %v148 = vmul.f32 %v135, %v135
    %v149 = vsel %vm68, %v136, 0.0
    %150 = vadd.xlane.f32.xlu0 %v149
    %v151 = vpop.xlane.xlu0 %150
    %v152 = vsel %vm68, %v137, 0.0
    %153 = vadd.xlane.f32.xlu0 %v152
    %v154 = vpop.xlane.xlu0 %153
    %v155 = vsel %vm68, %v138, 0.0
    %156 = vadd.xlane.f32.xlu0 %v155
    %v157 = vpop.xlane.xlu0 %156
    %v158 = vsel %vm68, %v139, 0.0
    %159 = vadd.xlane.f32.xlu0 %v158
    %v160 = vpop.xlane.xlu0 %159
    %v161 = vsel %vm68, %v140, 0.0
    %162 = vadd.xlane.f32.xlu0 %v161
    %v163 = vpop.xlane.xlu0 %162
    %v164 = vsel %vm68, %v141, 0.0
    %165 = vadd.xlane.f32.xlu0 %v164
    %v166 = vpop.xlane.xlu0 %165
    %v167 = vsel %vm68, %v142, 0.0
    %168 = vadd.xlane.f32.xlu0 %v167
    %v169 = vpop.xlane.xlu0 %168
    %v170 = vsel %vm68, %v143, 0.0
    %171 = vadd.xlane.f32.xlu0 %v170
    %v172 = vpop.xlane.xlu0 %171
    %v173 = vsel %vm68, %v144, 0.0
    %174 = vadd.xlane.f32.xlu0 %v173
    %v175 = vpop.xlane.xlu0 %174
    %v176 = vsel %vm68, %v145, 0.0
    %177 = vadd.xlane.f32.xlu0 %v176
    %v178 = vpop.xlane.xlu0 %177
    %v179 = vsel %vm68, %v146, 0.0
    %180 = vadd.xlane.f32.xlu0 %v179
    %v181 = vpop.xlane.xlu0 %180
    %v182 = vsel %vm68, %v147, 0.0
    %183 = vadd.xlane.f32.xlu0 %v182
    %v184 = vpop.xlane.xlu0 %183
    %v185 = vsel %vm105, %v148, 0.0
    %186 = vadd.xlane.f32.xlu0 %v185
    %v187 = vpop.xlane.xlu0 %186
    %v188 = vmul.f32 %v151, %v109
    %v189 = vmul.f32 %v154, %v109
    %v190 = vmul.f32 %v157, %v109
    %v191 = vmul.f32 %v160, %v109
    %v192 = vmul.f32 %v163, %v109
    %v193 = vmul.f32 %v166, %v109
    %v194 = vmul.f32 %v169, %v109
    %v195 = vmul.f32 %v172, %v109
    %v196 = vmul.f32 %v175, %v109
    %v197 = vmul.f32 %v178, %v109
    %v198 = vmul.f32 %v181, %v109
    %v199 = vmul.f32 %v184, %v109
    %v200 = vmul.f32 %v187, %v109
    %v201 = vadd.f32 %v188, 1e-05
    %v202 = vadd.f32 %v189, 1e-05
    %v203 = vadd.f32 %v190, 1e-05
    %v204 = vadd.f32 %v191, 1e-05
    %v205 = vadd.f32 %v192, 1e-05
    %v206 = vadd.f32 %v193, 1e-05
    %v207 = vadd.f32 %v194, 1e-05
    %v208 = vadd.f32 %v195, 1e-05
    %v209 = vadd.f32 %v196, 1e-05
    %v210 = vadd.f32 %v197, 1e-05
    %v211 = vadd.f32 %v198, 1e-05
    %v212 = vadd.f32 %v199, 1e-05
    %v213 = vadd.f32 %v200, 1e-05
    %v214 = vrsqrt.pop %v201
    %v215 = vrsqrt.pop %v202
    %v216 = vrsqrt.pop %v203
    %v217 = vrsqrt.pop %v204
    %v218 = vrsqrt.pop %v205
    %v219 = vrsqrt.pop %v206
    %v220 = vrsqrt.pop %v207
    %v221 = vrsqrt.pop %v208
    %v222 = vrsqrt.pop %v209
    %v223 = vrsqrt.pop %v210
    %v224 = vrsqrt.pop %v211
    %v225 = vrsqrt.pop %v212
    %v226 = vrsqrt.pop %v213
    %v227 = vmul.f32 %v123, %v214
    %v228 = vmul.f32 %v124, %v215
    %v229 = vmul.f32 %v125, %v216
    %v230 = vmul.f32 %v126, %v217
    %v231 = vmul.f32 %v127, %v218
    %v232 = vmul.f32 %v128, %v219
    %v233 = vmul.f32 %v129, %v220
    %v234 = vmul.f32 %v130, %v221
    %v235 = vmul.f32 %v131, %v222
    %v236 = vmul.f32 %v132, %v223
    %v237 = vmul.f32 %v133, %v224
    %v238 = vmul.f32 %v134, %v225
    %v239 = vmul.f32 %v135, %v226
    %v241 = vlaneseq
    %v242 = vshrl.u32 %v241, 7
    %v243 = vsub.s32 0, %v242
    %v244 = vrot.slane %v66, %v243
    %v246 = vmul.f32 %v227, %v244
    %v247 = vmul.f32 %v228, %v244
    %v248 = vmul.f32 %v229, %v244
    %v249 = vmul.f32 %v230, %v244
    %v250 = vmul.f32 %v231, %v244
    %v251 = vmul.f32 %v232, %v244
    %v252 = vmul.f32 %v233, %v244
    %v253 = vmul.f32 %v234, %v244
    %v254 = vmul.f32 %v235, %v244
    %v255 = vmul.f32 %v236, %v244
    %v256 = vmul.f32 %v237, %v244
    %v257 = vmul.f32 %v238, %v244
    %v258 = vmul.f32 %v239, %v244
    %v260 = vlaneseq
    %v261 = vshrl.u32 %v260, 7
    %v262 = vsub.s32 0, %v261
    %v263 = vrot.slane %v67, %v262
    %v265 = vadd.f32 %v246, %v263
    %v266 = vadd.f32 %v247, %v263
    %v267 = vadd.f32 %v248, %v263
    %v268 = vadd.f32 %v249, %v263
    %v269 = vadd.f32 %v250, %v263
    %v270 = vadd.f32 %v251, %v263
    %v271 = vadd.f32 %v252, %v263
    %v272 = vadd.f32 %v253, %v263
    %v273 = vadd.f32 %v254, %v263
    %v274 = vadd.f32 %v255, %v263
    %v275 = vadd.f32 %v256, %v263
    %v276 = vadd.f32 %v257, %v263
    %v277 = vadd.f32 %v258, %v263
    %v278 = vpack.c.bf16 %v266, %v265
    %v279 = vpack.c.bf16 %v268, %v267
    %v280 = vpack.c.bf16 %v270, %v269
    %v281 = vpack.c.bf16 %v272, %v271
    %v282 = vpack.c.bf16 %v274, %v273
    %v283 = vpack.c.bf16 %v276, %v275
    %v284 = vpack.c.bf16 %v277, %v277
    %v285 = vld [vmem:[%s3] sm:$0xf]
    %v286 = vld [vmem:[%s3 + $0x4] sm:$0xf]
    %v287 = vld [vmem:[%s3 + $0x8] sm:$0xf]
    %v288 = vld [vmem:[%s3 + $0xc] sm:$0xf]
    %v289 = vld [vmem:[%s3 + $0x10] sm:$0xf]
    %v290 = vld [vmem:[%s3 + $0x14] sm:$0xf]
    %v291 = vld [vmem:[%s3 + $0x18] sm:$0xf]
    %v292 = vld [vmem:[%s3 + $0x1c] sm:$0xf]
    %v293 = vld [vmem:[#allocation2] sm:$0x1]
    %v295 = vlaneseq
    %v296 = vshrl.u32 %v295, 7
    %v297 = vsub.s32 0, %v296
    %v298 = vrot.slane %v293, %v297
    %v308 = vunpack.c.l.b16 %v285
    %v309 = vunpack.c.l.b16 %v286
    %v310 = vunpack.c.l.b16 %v287
    %v311 = vunpack.c.l.b16 %v288
    %v312 = vunpack.c.l.b16 %v289
    %v313 = vunpack.c.l.b16 %v290
    %v314 = vunpack.c.l.b16 %v291
    %v315 = vunpack.c.l.b16 %v292
    %v316 = vpack.c.b16 %v309, %v308
    %v317 = vpack.c.b16 %v311, %v310
    %v318 = vpack.c.b16 %v313, %v312
    %v319 = vpack.c.b16 %v315, %v314
    %v325 = vsel %vm68, %v278, 0
    %v328 = vsel %vm68, %v279, 0
    %v331 = vsel %vm68, %v280, 0
    %v334 = vsel %vm68, %v281, 0
    %v337 = vsel %vm68, %v282, 0
    %v340 = vsel %vm68, %v283, 0
    %v343 = vsel %vm68, %v284, 0
    %345 = vmatprep.subr.bf16.mxu0 0
    %346 = vmatpush1.bf16.msra.mxu0 0
    %347 = vmatprep.subr.bf16.mxu0 0
    %348 = vmatpush1.bf16.msra.mxu0 0
    %349 = vmatprep.subr.bf16.mxu0 0
    %350 = vmatpush1.bf16.msra.mxu0 0
    %351 = vmatprep.subr.bf16.mxu0 0
    %352 = vmatpush1.bf16.msra.mxu0 0
    %353 = vmatprep.subr.bf16.mxu0 0
    %354 = vmatpush1.bf16.msra.mxu0 %v319
    %355 = vmatprep.subr.bf16.mxu0 0
    %356 = vmatpush1.bf16.msra.mxu0 %v318
    %357 = vmatprep.subr.bf16.mxu0 0
    %358 = vmatpush1.bf16.msra.mxu0 %v317
    %359 = vmatprep.subr.bf16.mxu0 0
    %360 = vmatpush1.bf16.msra.mxu0 %v316
    %361 = vmatprep.subr.bf16.mxu0 0
    %362 = vmatpush2.bf16.msra.mxu0 0
    %363 = vmatprep.subr.bf16.mxu0 0
    %364 = vmatpush2.bf16.msra.mxu0 0
    %365 = vmatprep.subr.bf16.mxu0 0
    %366 = vmatpush2.bf16.msra.mxu0 0
    %367 = vmatprep.subr.bf16.mxu0 0
    %368 = vmatpush2.bf16.msra.mxu0 0
    %369 = vmatprep.subr.bf16.mxu0 0
    %370 = vmatpush2.bf16.msra.mxu0 0
    %371 = vmatprep.subr.bf16.mxu0 0
    %372 = vmatpush2.bf16.msra.mxu0 0
    %373 = vmatprep.subr.bf16.mxu0 0
    %374 = vmatpush2.bf16.msra.mxu0 0
    %375 = vmatprep.subr.bf16.mxu0 0
    %376 = vmatpush2.bf16.msra.mxu0 0
    %377 = vmatprep.mubr.bf16.mxu0 0
    %378 = vmatmul.mubr.bf16.gmra.mxu0 %v325
    %v379 = vpop.f32.mrf.mxu0
    %v380 = vadd.f32 %v298, %v379
    %v381 = vpop.f32.mrf.mxu0
    %v382 = vpop.f32.mrf.mxu0
    %v383 = vadd.f32 %v298, %v382
    %v384 = vpop.f32.mrf.mxu0
    %385 = vmatprep.mubr.bf16.mxu0 0
    %386 = vmatmul.mubr.bf16.gmra.mxu0 %v328
    %v387 = vpop.f32.mrf.mxu0
    %v388 = vadd.f32 %v298, %v387
    %v389 = vpop.f32.mrf.mxu0
    %v390 = vpop.f32.mrf.mxu0
    %v391 = vadd.f32 %v298, %v390
    %v392 = vpop.f32.mrf.mxu0
    %393 = vmatprep.mubr.bf16.mxu0 0
    %394 = vmatmul.mubr.bf16.gmra.mxu0 %v331
    %v395 = vpop.f32.mrf.mxu0
    %v396 = vadd.f32 %v298, %v395
    %v397 = vpop.f32.mrf.mxu0
    %v398 = vpop.f32.mrf.mxu0
    %v399 = vadd.f32 %v298, %v398
    %v400 = vpop.f32.mrf.mxu0
    %401 = vmatprep.mubr.bf16.mxu0 0
    %402 = vmatmul.mubr.bf16.gmra.mxu0 %v334
    %v403 = vpop.f32.mrf.mxu0
    %v404 = vadd.f32 %v298, %v403
    %v405 = vpop.f32.mrf.mxu0
    %v406 = vpop.f32.mrf.mxu0
    %v407 = vadd.f32 %v298, %v406
    %v408 = vpop.f32.mrf.mxu0
    %409 = vmatprep.mubr.bf16.mxu0 0
    %410 = vmatmul.mubr.bf16.gmra.mxu0 %v337
    %v411 = vpop.f32.mrf.mxu0
    %v412 = vadd.f32 %v298, %v411
    %v413 = vpop.f32.mrf.mxu0
    %v414 = vpop.f32.mrf.mxu0
    %v415 = vadd.f32 %v298, %v414
    %v416 = vpop.f32.mrf.mxu0
    %417 = vmatprep.mubr.bf16.mxu0 0
    %418 = vmatmul.mubr.bf16.gmra.mxu0 %v340
    %v419 = vpop.f32.mrf.mxu0
    %v420 = vadd.f32 %v298, %v419
    %v421 = vpop.f32.mrf.mxu0
    %v422 = vpop.f32.mrf.mxu0
    %v423 = vadd.f32 %v298, %v422
    %v424 = vpop.f32.mrf.mxu0
    %425 = vmatprep.mubr.bf16.mxu0 0
    %426 = vmatmul.mubr.bf16.gmra.mxu0 %v343
    %v427 = vpop.f32.mrf.mxu0
    %v428 = vadd.f32 %v298, %v427
    %v429 = vpop.f32.mrf.mxu0
    %v430 = vpop.f32.mrf.mxu0
    %v431 = vpop.f32.mrf.mxu0
    %432 = vdwg.mxu0
    %vm433 = vcmask 89088
    %434 = vst.msk [vmem:[%s7] sm:$0xff] %vm433, %v380
    %435 = vst.msk [vmem:[%s7 + $0x8] sm:$0xff] %vm433, %v383
    %436 = vst.msk [vmem:[%s7 + $0x10] sm:$0xff] %vm433, %v388
    %437 = vst.msk [vmem:[%s7 + $0x18] sm:$0xff] %vm433, %v391
    %438 = vst.msk [vmem:[%s7 + $0x20] sm:$0xff] %vm433, %v396
    %439 = vst.msk [vmem:[%s7 + $0x28] sm:$0xff] %vm433, %v399
    %440 = vst.msk [vmem:[%s7 + $0x30] sm:$0xff] %vm433, %v404
    %441 = vst.msk [vmem:[%s7 + $0x38] sm:$0xff] %vm433, %v407
    %442 = vst.msk [vmem:[%s7 + $0x40] sm:$0xff] %vm433, %v412
    %443 = vst.msk [vmem:[%s7 + $0x48] sm:$0xff] %vm433, %v415
    %444 = vst.msk [vmem:[%s7 + $0x50] sm:$0xff] %vm433, %v420
    %445 = vst.msk [vmem:[%s7 + $0x58] sm:$0xff] %vm433, %v423
    %vm446 = vcmask 84992
    %447 = vst.msk [vmem:[%s7 + $0x60] sm:$0xf] %vm446, %v428
    %v448 = vld [vmem:[%s5] sm:$0xf]
    %v449 = vld [vmem:[%s5 + $0x4] sm:$0xf]
    %v450 = vld [vmem:[%s5 + $0x8] sm:$0xf]
    %v451 = vld [vmem:[%s5 + $0xc] sm:$0xf]
    %v452 = vld [vmem:[%s5 + $0x10] sm:$0xf]
    %v453 = vld [vmem:[%s5 + $0x14] sm:$0xf]
    %v454 = vld [vmem:[%s5 + $0x18] sm:$0xf]
    %v455 = vld [vmem:[%s5 + $0x1c] sm:$0xf]
    %v456 = vld [vmem:[#allocation4] sm:$0x1]
    %v458 = vlaneseq
    %v459 = vshrl.u32 %v458, 7
    %v460 = vsub.s32 0, %v459
    %v461 = vrot.slane %v456, %v460
    %v471 = vunpack.c.l.b16 %v448
    %v472 = vunpack.c.l.b16 %v449
    %v473 = vunpack.c.l.b16 %v450
    %v474 = vunpack.c.l.b16 %v451
    %v475 = vunpack.c.l.b16 %v452
    %v476 = vunpack.c.l.b16 %v453
    %v477 = vunpack.c.l.b16 %v454
    %v478 = vunpack.c.l.b16 %v455
    %v479 = vpack.c.b16 %v472, %v471
    %v480 = vpack.c.b16 %v474, %v473
    %v481 = vpack.c.b16 %v476, %v475
    %v482 = vpack.c.b16 %v478, %v477
    %487 = vmatprep.subr.bf16.mxu0 0
    %488 = vmatpush1.bf16.msra.mxu0 0
    %489 = vmatprep.subr.bf16.mxu0 0
    %490 = vmatpush1.bf16.msra.mxu0 0
    %491 = vmatprep.subr.bf16.mxu0 0
    %492 = vmatpush1.bf16.msra.mxu0 0
    %493 = vmatprep.subr.bf16.mxu0 0
    %494 = vmatpush1.bf16.msra.mxu0 0
    %495 = vmatprep.subr.bf16.mxu0 0
    %496 = vmatpush1.bf16.msra.mxu0 %v482
    %497 = vmatprep.subr.bf16.mxu0 0
    %498 = vmatpush1.bf16.msra.mxu0 %v481
    %499 = vmatprep.subr.bf16.mxu0 0
    %500 = vmatpush1.bf16.msra.mxu0 %v480
    %501 = vmatprep.subr.bf16.mxu0 0
    %502 = vmatpush1.bf16.msra.mxu0 %v479
    %503 = vmatprep.subr.bf16.mxu0 0
    %504 = vmatpush2.bf16.msra.mxu0 0
    %505 = vmatprep.subr.bf16.mxu0 0
    %506 = vmatpush2.bf16.msra.mxu0 0
    %507 = vmatprep.subr.bf16.mxu0 0
    %508 = vmatpush2.bf16.msra.mxu0 0
    %509 = vmatprep.subr.bf16.mxu0 0
    %510 = vmatpush2.bf16.msra.mxu0 0
    %511 = vmatprep.subr.bf16.mxu0 0
    %512 = vmatpush2.bf16.msra.mxu0 0
    %513 = vmatprep.subr.bf16.mxu0 0
    %514 = vmatpush2.bf16.msra.mxu0 0
    %515 = vmatprep.subr.bf16.mxu0 0
    %516 = vmatpush2.bf16.msra.mxu0 0
    %517 = vmatprep.subr.bf16.mxu0 0
    %518 = vmatpush2.bf16.msra.mxu0 0
    %519 = vmatprep.mubr.bf16.mxu0 0
    %520 = vmatmul.mubr.bf16.gmra.mxu0 %v325
    %v521 = vpop.f32.mrf.mxu0
    %v522 = vadd.f32 %v461, %v521
    %v523 = vpop.f32.mrf.mxu0
    %v524 = vpop.f32.mrf.mxu0
    %v525 = vadd.f32 %v461, %v524
    %v526 = vpop.f32.mrf.mxu0
    %527 = vmatprep.mubr.bf16.mxu0 0
    %528 = vmatmul.mubr.bf16.gmra.mxu0 %v328
    %v529 = vpop.f32.mrf.mxu0
    %v530 = vadd.f32 %v461, %v529
    %v531 = vpop.f32.mrf.mxu0
    %v532 = vpop.f32.mrf.mxu0
    %v533 = vadd.f32 %v461, %v532
    %v534 = vpop.f32.mrf.mxu0
    %535 = vmatprep.mubr.bf16.mxu0 0
    %536 = vmatmul.mubr.bf16.gmra.mxu0 %v331
    %v537 = vpop.f32.mrf.mxu0
    %v538 = vadd.f32 %v461, %v537
    %v539 = vpop.f32.mrf.mxu0
    %v540 = vpop.f32.mrf.mxu0
    %v541 = vadd.f32 %v461, %v540
    %v542 = vpop.f32.mrf.mxu0
    %543 = vmatprep.mubr.bf16.mxu0 0
    %544 = vmatmul.mubr.bf16.gmra.mxu0 %v334
    %v545 = vpop.f32.mrf.mxu0
    %v546 = vadd.f32 %v461, %v545
    %v547 = vpop.f32.mrf.mxu0
    %v548 = vpop.f32.mrf.mxu0
    %v549 = vadd.f32 %v461, %v548
    %v550 = vpop.f32.mrf.mxu0
    %551 = vmatprep.mubr.bf16.mxu0 0
    %552 = vmatmul.mubr.bf16.gmra.mxu0 %v337
    %v553 = vpop.f32.mrf.mxu0
    %v554 = vadd.f32 %v461, %v553
    %v555 = vpop.f32.mrf.mxu0
    %v556 = vpop.f32.mrf.mxu0
    %v557 = vadd.f32 %v461, %v556
    %v558 = vpop.f32.mrf.mxu0
    %559 = vmatprep.mubr.bf16.mxu0 0
    %560 = vmatmul.mubr.bf16.gmra.mxu0 %v340
    %v561 = vpop.f32.mrf.mxu0
    %v562 = vadd.f32 %v461, %v561
    %v563 = vpop.f32.mrf.mxu0
    %v564 = vpop.f32.mrf.mxu0
    %v565 = vadd.f32 %v461, %v564
    %v566 = vpop.f32.mrf.mxu0
    %567 = vmatprep.mubr.bf16.mxu0 0
    %568 = vmatmul.mubr.bf16.gmra.mxu0 %v343
    %v569 = vpop.f32.mrf.mxu0
    %v570 = vadd.f32 %v461, %v569
    %v571 = vpop.f32.mrf.mxu0
    %v572 = vpop.f32.mrf.mxu0
    %v573 = vpop.f32.mrf.mxu0
    %574 = vdwg.mxu0
    %v575 = vxor.u32 %v522, 2147483648
    %v576 = vxor.u32 %v525, 2147483648
    %v577 = vxor.u32 %v530, 2147483648
    %v578 = vxor.u32 %v533, 2147483648
    %v579 = vxor.u32 %v538, 2147483648
    %v580 = vxor.u32 %v541, 2147483648
    %v581 = vxor.u32 %v546, 2147483648
    %v582 = vxor.u32 %v549, 2147483648
    %v583 = vxor.u32 %v554, 2147483648
    %v584 = vxor.u32 %v557, 2147483648
    %v585 = vxor.u32 %v562, 2147483648
    %v586 = vxor.u32 %v565, 2147483648
    %v587 = vxor.u32 %v570, 2147483648
    %v588 = vmul.f32 %v575, 1.442695
    %v589 = vpow.pop %v588
    %v590 = vmul.f32 %v576, 1.442695
    %v591 = vpow.pop %v590
    %v592 = vmul.f32 %v577, 1.442695
    %v593 = vpow.pop %v592
    %v594 = vmul.f32 %v578, 1.442695
    %v595 = vpow.pop %v594
    %v596 = vmul.f32 %v579, 1.442695
    %v597 = vpow.pop %v596
    %v598 = vmul.f32 %v580, 1.442695
    %v599 = vpow.pop %v598
    %v600 = vmul.f32 %v581, 1.442695
    %v601 = vpow.pop %v600
    %v602 = vmul.f32 %v582, 1.442695
    %v603 = vpow.pop %v602
    %v604 = vmul.f32 %v583, 1.442695
    %v605 = vpow.pop %v604
    %v606 = vmul.f32 %v584, 1.442695
    %v607 = vpow.pop %v606
    %v608 = vmul.f32 %v585, 1.442695
    %v609 = vpow.pop %v608
    %v610 = vmul.f32 %v586, 1.442695
    %v611 = vpow.pop %v610
    %v612 = vmul.f32 %v587, 1.442695
    %v613 = vpow.pop %v612
    %v614 = vadd.f32 %v589, 1.0
    %v615 = vadd.f32 %v591, 1.0
    %v616 = vadd.f32 %v593, 1.0
    %v617 = vadd.f32 %v595, 1.0
    %v618 = vadd.f32 %v597, 1.0
    %v619 = vadd.f32 %v599, 1.0
    %v620 = vadd.f32 %v601, 1.0
    %v621 = vadd.f32 %v603, 1.0
    %v622 = vadd.f32 %v605, 1.0
    %v623 = vadd.f32 %v607, 1.0
    %v624 = vadd.f32 %v609, 1.0
    %v625 = vadd.f32 %v611, 1.0
    %v626 = vadd.f32 %v613, 1.0
    %v627 = vrcp.pop %v614
    %v628 = vmul.f32 1.0, %v627
    %v629 = vrcp.pop %v615
    %v630 = vmul.f32 1.0, %v629
    %v631 = vrcp.pop %v616
    %v632 = vmul.f32 1.0, %v631
    %v633 = vrcp.pop %v617
    %v634 = vmul.f32 1.0, %v633
    %v635 = vrcp.pop %v618
    %v636 = vmul.f32 1.0, %v635
    %v637 = vrcp.pop %v619
    %v638 = vmul.f32 1.0, %v637
    %v639 = vrcp.pop %v620
    %v640 = vmul.f32 1.0, %v639
    %v641 = vrcp.pop %v621
    %v642 = vmul.f32 1.0, %v641
    %v643 = vrcp.pop %v622
    %v644 = vmul.f32 1.0, %v643
    %v645 = vrcp.pop %v623
    %v646 = vmul.f32 1.0, %v645
    %v647 = vrcp.pop %v624
    %v648 = vmul.f32 1.0, %v647
    %v649 = vrcp.pop %v625
    %v650 = vmul.f32 1.0, %v649
    %v651 = vrcp.pop %v626
    %v652 = vmul.f32 1.0, %v651
    %vm653 = vcmask 31744
    %654 = vst.msk [vmem:[%s8] sm:$0xff] %vm653, %v628
    %655 = vst.msk [vmem:[%s8 + $0x8] sm:$0xff] %vm653, %v630
    %656 = vst.msk [vmem:[%s8 + $0x10] sm:$0xff] %vm653, %v632
    %657 = vst.msk [vmem:[%s8 + $0x18] sm:$0xff] %vm653, %v634
    %658 = vst.msk [vmem:[%s8 + $0x20] sm:$0xff] %vm653, %v636
    %659 = vst.msk [vmem:[%s8 + $0x28] sm:$0xff] %vm653, %v638
    %660 = vst.msk [vmem:[%s8 + $0x30] sm:$0xff] %vm653, %v640
    %661 = vst.msk [vmem:[%s8 + $0x38] sm:$0xff] %vm653, %v642
    %662 = vst.msk [vmem:[%s8 + $0x40] sm:$0xff] %vm653, %v644
    %663 = vst.msk [vmem:[%s8 + $0x48] sm:$0xff] %vm653, %v646
    %664 = vst.msk [vmem:[%s8 + $0x50] sm:$0xff] %vm653, %v648
    %665 = vst.msk [vmem:[%s8 + $0x58] sm:$0xff] %vm653, %v650
    %vm666 = vcmask 27648
    %667 = vst.msk [vmem:[%s8 + $0x60] sm:$0xf] %vm666, %v652
    // Predicated region
    $region38: #{detr_forward.9} parent=1 // pred_check
      _
    $region39: #{detr_forward.9} parent=1 // pred_check_branch
      %669 = sbr.rel (0) target = $region41
    $region40: #{detr_forward.9} parent=1 // pred_region
      _
    $region41: #{detr_forward.9} parent=1 // pred_fallthru
      _
    // Predicated region
    $region42: #{detr_forward.9} parent=1 // pred_check
      _
    $region43: #{detr_forward.9} parent=1 // pred_check_branch
      %671 = sbr.rel (0) target = $region45
    $region44: #{detr_forward.9} parent=1 // pred_region
      _
    $region45: #{detr_forward.9} parent=1 // pred_fallthru
      _
    // Predicated region
    $region46: #{detr_forward.9} parent=1 // pred_check
      _
    $region47: #{detr_forward.9} parent=1 // pred_check_branch
      %673 = sbr.rel (0) target = $region49
    $region48: #{detr_forward.9} parent=1 // pred_region
      _
    $region49: #{detr_forward.9} parent=1 // pred_fallthru
      _
    // Predicated region
    $region50: #{detr_forward.9} parent=1 // pred_check
      _
    $region51: #{detr_forward.9} parent=1 // pred_check_branch
      %675 = sbr.rel (0) target = $region53
    $region52: #{detr_forward.9} parent=1 // pred_region
      _
    $region53: #{detr_forward.9} parent=1 // pred_fallthru
      _
    %676 = vsyncpa [#allocation3], 1
    %677 = vsyncpa [#allocation5], 1

// kernel: detr_forward.8
$region0: #{detr_forward.8}
  #allocation0 [shape = 'u32[]', space=smem, size = 0x4, offset = 0x4, fixed_abs, tag = 'smem constant byte address 0x4 - core index']
  #allocation1 [shape = 'u32[144,128]{1,0:T(1,128)}', space=vmem, size = 0x12000, scoped, tag = 'internal scratch']
  #allocation2 [shape = 'f32[100,64]{1,0:T(8,128)}', space=vmem, size = 0xd000, scoped, tag = 'scratch operand']
  #allocation3 [shape = 'f32[100,64]{1,0:T(8,128)}', space=vmem, size = 0xd000, scoped, tag = 'scratch operand']
  %s0 = inlined_call_operand.vmem [shape: f32[100,64], index: 0, kind: input, shape index: {}]
  %s1 = inlined_call_operand.vmem [shape: f32[16,64], index: 1, kind: input, shape index: {}]
  %s2 = inlined_call_operand.vmem [shape: bf16[64,192], index: 2, kind: input, shape index: {}]
  %s3 = inlined_call_operand.vmem [shape: f32[1,192], index: 3, kind: input, shape index: {}]
  %s4 = inlined_call_operand.vmem [shape: bf16[64,64], index: 4, kind: input, shape index: {}]
  %s5 = inlined_call_operand.vmem [shape: f32[1,64], index: 5, kind: input, shape index: {}]
  %s6 = inlined_call_operand.vmem [shape: f32[1,64], index: 6, kind: input, shape index: {}]
  %s7 = inlined_call_operand.vmem [shape: f32[1,64], index: 7, kind: input, shape index: {}]
  %s8 = inlined_call_operand.vmem [shape: bf16[64,64], index: 8, kind: input, shape index: {}]
  %s9 = inlined_call_operand.vmem [shape: f32[1,64], index: 9, kind: input, shape index: {}]
  %s10 = inlined_call_operand.vmem [shape: bf16[64,128], index: 10, kind: input, shape index: {}]
  %s11 = inlined_call_operand.vmem [shape: f32[1,128], index: 11, kind: input, shape index: {}]
  %s12 = inlined_call_operand.vmem [shape: bf16[64,64], index: 12, kind: input, shape index: {}]
  %s13 = inlined_call_operand.vmem [shape: f32[1,64], index: 13, kind: input, shape index: {}]
  %s14 = inlined_call_operand.vmem [shape: f32[1,64], index: 14, kind: input, shape index: {}]
  %s15 = inlined_call_operand.vmem [shape: f32[1,64], index: 15, kind: input, shape index: {}]
  %s16 = inlined_call_operand.vmem [shape: bf16[64,2048], index: 16, kind: input, shape index: {}]
  %s17 = inlined_call_operand.vmem [shape: f32[1,2048], index: 17, kind: input, shape index: {}]
  %s18 = inlined_call_operand.vmem [shape: bf16[2048,64], index: 18, kind: input, shape index: {}]
  %s19 = inlined_call_operand.vmem [shape: f32[1,64], index: 19, kind: input, shape index: {}]
  %s20 = inlined_call_operand.vmem [shape: f32[1,64], index: 20, kind: input, shape index: {}]
  %s21 = inlined_call_operand.vmem [shape: f32[1,64], index: 21, kind: input, shape index: {}]
  %s22 = inlined_call_operand.vmem [shape: f32[100,64], index: 22, kind: output, shape index: {}]
  %s23 = sld [smem:[#allocation0]]
  $region152: #{detr_forward.8} parent=0
    _
  %s25 = ssub.s32 1, %s23
  %s26 = scalar_select 0, %s25, %s23
  $region1: #{detr_forward.8} parent=0
    #allocation4 [shape = 'u8[131072]{0}', space=vmem, size = 0x20000, scoped, tag = 'input window, operand 16']
    loop: start=0, step=1, limit=6
    $region2: #{detr_forward.8} parent=1 // loop_pre_header
      _
    $region3: #{detr_forward.8} parent=1 // loop_header
      %s28 = sphi 0, %s32
      %p29 = scmp.ge.s32.totalorder %s28, 6
      %s36 = sphi 0, %s36
      %s38 = sphi 0, %s36
      %s39 = sphi 0, %s38
      %s53 = sphi 0, %s39
      %s57 = sphi 0, %s57
      %s59 = sphi 0, %s57
      %s60 = sphi 0, %s59
      %s74 = sphi 0, %s60
      %s78 = sphi 0, %s78
      %s80 = sphi 0, %s78
      %s81 = sphi 0, %s80
      %s95 = sphi 0, %s81
      %s99 = sphi 0, %s99
      %s101 = sphi 0, %s99
      %s102 = sphi 0, %s101
      %s116 = sphi 0, %s102
      %s120 = sphi 0, %s120
      %s122 = sphi 0, %s120
      %s123 = sphi 0, %s122
      %s137 = sphi 0, %s123
      %s141 = sphi 0, %s141
      %s143 = sphi 0, %s141
      %s144 = sphi 0, %s143
      %s158 = sphi 0, %s144
      %s162 = sphi 0, %s162
      %s164 = sphi 0, %s162
      %s165 = sphi 0, %s164
      %s179 = sphi 0, %s165
      %s183 = sphi 0, %s183
      %s185 = sphi 0, %s183
      %s186 = sphi 0, %s185
      %s200 = sphi 0, %s186
      %s204 = sphi 0, %s204
      %s206 = sphi 0, %s204
      %s207 = sphi 0, %s206
      %s221 = sphi 0, %s207
      %s225 = sphi 0, %s225
      %s227 = sphi 0, %s225
      %s228 = sphi 0, %s227
      %s242 = sphi 0, %s228
      %s246 = sphi 0, %s246
      %s248 = sphi 0, %s246
      %s249 = sphi 0, %s248
      %s263 = sphi 0, %s249
      %s267 = sphi 0, %s267
      %s269 = sphi 0, %s267
      %s270 = sphi 0, %s269
      %s284 = sphi 0, %s270
      %s288 = sphi 0, %s288
      %s290 = sphi 0, %s288
      %s291 = sphi 0, %s290
      %s305 = sphi 0, %s291
      %s309 = sphi 0, %s309
      %s311 = sphi 0, %s309
      %s312 = sphi 0, %s311
      %s326 = sphi 0, %s312
      %s330 = sphi 0, %s330
      %s332 = sphi 0, %s330
      %s333 = sphi 0, %s332
      %s347 = sphi 0, %s333
      %s351 = sphi 0, %s351
      %s353 = sphi 0, %s351
      %s354 = sphi 0, %s353
      %s368 = sphi 0, %s354
      %s374 = sphi 0, %s376
      %s377 = sphi 0, %s374
      %s378 = sphi 0, %s377
      %s394 = sphi 0, %s378
      %s400 = sphi 0, %s402
      %s403 = sphi 0, %s400
      %s404 = sphi 0, %s403
      %s420 = sphi 0, %s404
      %s426 = sphi 0, %s428
      %s429 = sphi 0, %s426
      %s430 = sphi 0, %s429
      %s446 = sphi 0, %s430
      %s450 = sphi 0, %s450
      %s452 = sphi 0, %s450
      %s453 = sphi 0, %s452
      %s467 = sphi 0, %s453
      %s471 = sphi 0, %s471
      %s473 = sphi 0, %s471
      %s474 = sphi 0, %s473
      %s488 = sphi 0, %s474
      %s492 = sphi 0, %s492
      %s494 = sphi 0, %s492
      %s495 = sphi 0, %s494
      %s509 = sphi 0, %s495
      %s513 = sphi 0, %s513
      %s515 = sphi 0, %s513
      %s516 = sphi 0, %s515
      %s530 = sphi 0, %s516
    $region4: #{detr_forward.8} parent=1 // loop_header_branch
      %31 = sbr.rel (%p29) target = $region8
    $region5: #{detr_forward.8} parent=1 // loop_body
      %s33 = ssub.s32 %s28, 1
      %s34 = ssub.s32 %s28, 2
      %s35 = sadd.s32 %s28, 1
      %s37 = sadd.s32 %s36, 1
      %p40 = scmp.eq.s32.totalorder %s28, 3
      %p41 = scmp.ne.s32.totalorder %s36, %s38
      %p42 = scmp.eq.s32.totalorder %s28, 0
      %p43 = por %p41, %p42
      %p44 = scmp.ne.s32.totalorder %s36, %s38
      %p45 = scmp.eq.s32.totalorder %s33, 3
      %p46 = por %p44, %p45
      %p47 = scmp.ne.s32.totalorder %s38, %s39
      %p48 = scmp.eq.s32.totalorder %s33, 0
      %p49 = por %p47, %p48
      %p50 = scmp.ne.s32.totalorder %s38, %s39
      %p51 = scmp.eq.s32.totalorder %s34, 3
      %p52 = por %p50, %p51
      %p54 = scmp.ne.s32.totalorder %s39, %s53
      %p55 = scmp.eq.s32.totalorder %s34, 0
      %p56 = por %p54, %p55
      %s58 = sadd.s32 %s57, 1
      %p61 = scmp.eq.s32.totalorder %s28, 3
      %p62 = scmp.ne.s32.totalorder %s57, %s59
      %p63 = scmp.eq.s32.totalorder %s28, 0
      %p64 = por %p62, %p63
      %p65 = scmp.ne.s32.totalorder %s57, %s59
      %p66 = scmp.eq.s32.totalorder %s33, 3
      %p67 = por %p65, %p66
      %p68 = scmp.ne.s32.totalorder %s59, %s60
      %p69 = scmp.eq.s32.totalorder %s33, 0
      %p70 = por %p68, %p69
      %p71 = scmp.ne.s32.totalorder %s59, %s60
      %p72 = scmp.eq.s32.totalorder %s34, 3
      %p73 = por %p71, %p72
      %p75 = scmp.ne.s32.totalorder %s60, %s74
      %p76 = scmp.eq.s32.totalorder %s34, 0
      %p77 = por %p75, %p76
      %s79 = sadd.s32 %s78, 1
      %p82 = scmp.eq.s32.totalorder %s28, 3
      %p83 = scmp.ne.s32.totalorder %s78, %s80
      %p84 = scmp.eq.s32.totalorder %s28, 0
      %p85 = por %p83, %p84
      %p86 = scmp.ne.s32.totalorder %s78, %s80
      %p87 = scmp.eq.s32.totalorder %s33, 3
      %p88 = por %p86, %p87
      %p89 = scmp.ne.s32.totalorder %s80, %s81
      %p90 = scmp.eq.s32.totalorder %s33, 0
      %p91 = por %p89, %p90
      %p92 = scmp.ne.s32.totalorder %s80, %s81
      %p93 = scmp.eq.s32.totalorder %s34, 3
      %p94 = por %p92, %p93
      %p96 = scmp.ne.s32.totalorder %s81, %s95
      %p97 = scmp.eq.s32.totalorder %s34, 0
      %p98 = por %p96, %p97
      %s100 = sadd.s32 %s99, 1
      %p103 = scmp.eq.s32.totalorder %s28, 3
      %p104 = scmp.ne.s32.totalorder %s99, %s101
      %p105 = scmp.eq.s32.totalorder %s28, 0
      %p106 = por %p104, %p105
      %p107 = scmp.ne.s32.totalorder %s99, %s101
      %p108 = scmp.eq.s32.totalorder %s33, 3
      %p109 = por %p107, %p108
      %p110 = scmp.ne.s32.totalorder %s101, %s102
      %p111 = scmp.eq.s32.totalorder %s33, 0
      %p112 = por %p110, %p111
      %p113 = scmp.ne.s32.totalorder %s101, %s102
      %p114 = scmp.eq.s32.totalorder %s34, 3
      %p115 = por %p113, %p114
      %p117 = scmp.ne.s32.totalorder %s102, %s116
      %p118 = scmp.eq.s32.totalorder %s34, 0
      %p119 = por %p117, %p118
      %s121 = sadd.s32 %s120, 1
      %p124 = scmp.eq.s32.totalorder %s28, 3
      %p125 = scmp.ne.s32.totalorder %s120, %s122
      %p126 = scmp.eq.s32.totalorder %s28, 0
      %p127 = por %p125, %p126
      %p128 = scmp.ne.s32.totalorder %s120, %s122
      %p129 = scmp.eq.s32.totalorder %s33, 3
      %p130 = por %p128, %p129
      %p131 = scmp.ne.s32.totalorder %s122, %s123
      %p132 = scmp.eq.s32.totalorder %s33, 0
      %p133 = por %p131, %p132
      %p134 = scmp.ne.s32.totalorder %s122, %s123
      %p135 = scmp.eq.s32.totalorder %s34, 3
      %p136 = por %p134, %p135
      %p138 = scmp.ne.s32.totalorder %s123, %s137
      %p139 = scmp.eq.s32.totalorder %s34, 0
      %p140 = por %p138, %p139
      %s142 = sadd.s32 %s141, 1
      %p145 = scmp.eq.s32.totalorder %s28, 3
      %p146 = scmp.ne.s32.totalorder %s141, %s143
      %p147 = scmp.eq.s32.totalorder %s28, 0
      %p148 = por %p146, %p147
      %p149 = scmp.ne.s32.totalorder %s141, %s143
      %p150 = scmp.eq.s32.totalorder %s33, 3
      %p151 = por %p149, %p150
      %p152 = scmp.ne.s32.totalorder %s143, %s144
      %p153 = scmp.eq.s32.totalorder %s33, 0
      %p154 = por %p152, %p153
      %p155 = scmp.ne.s32.totalorder %s143, %s144
      %p156 = scmp.eq.s32.totalorder %s34, 3
      %p157 = por %p155, %p156
      %p159 = scmp.ne.s32.totalorder %s144, %s158
      %p160 = scmp.eq.s32.totalorder %s34, 0
      %p161 = por %p159, %p160
      %s163 = sadd.s32 %s162, 1
      %p166 = scmp.eq.s32.totalorder %s28, 3
      %p167 = scmp.ne.s32.totalorder %s162, %s164
      %p168 = scmp.eq.s32.totalorder %s28, 0
      %p169 = por %p167, %p168
      %p170 = scmp.ne.s32.totalorder %s162, %s164
      %p171 = scmp.eq.s32.totalorder %s33, 3
      %p172 = por %p170, %p171
      %p173 = scmp.ne.s32.totalorder %s164, %s165
      %p174 = scmp.eq.s32.totalorder %s33, 0
      %p175 = por %p173, %p174
      %p176 = scmp.ne.s32.totalorder %s164, %s165
      %p177 = scmp.eq.s32.totalorder %s34, 3
      %p178 = por %p176, %p177
      %p180 = scmp.ne.s32.totalorder %s165, %s179
      %p181 = scmp.eq.s32.totalorder %s34, 0
      %p182 = por %p180, %p181
      %s184 = sadd.s32 %s183, 1
      %p187 = scmp.eq.s32.totalorder %s28, 3
      %p188 = scmp.ne.s32.totalorder %s183, %s185
      %p189 = scmp.eq.s32.totalorder %s28, 0
      %p190 = por %p188, %p189
      %p191 = scmp.ne.s32.totalorder %s183, %s185
      %p192 = scmp.eq.s32.totalorder %s33, 3
      %p193 = por %p191, %p192
      %p194 = scmp.ne.s32.totalorder %s185, %s186
      %p195 = scmp.eq.s32.totalorder %s33, 0
      %p196 = por %p194, %p195
      %p197 = scmp.ne.s32.totalorder %s185, %s186
      %p198 = scmp.eq.s32.totalorder %s34, 3
      %p199 = por %p197, %p198
      %p201 = scmp.ne.s32.totalorder %s186, %s200
      %p202 = scmp.eq.s32.totalorder %s34, 0
      %p203 = por %p201, %p202
      %s205 = sadd.s32 %s204, 1
      %p208 = scmp.eq.s32.totalorder %s28, 3
      %p209 = scmp.ne.s32.totalorder %s204, %s206
      %p210 = scmp.eq.s32.totalorder %s28, 0
      %p211 = por %p209, %p210
      %p212 = scmp.ne.s32.totalorder %s204, %s206
      %p213 = scmp.eq.s32.totalorder %s33, 3
      %p214 = por %p212, %p213
      %p215 = scmp.ne.s32.totalorder %s206, %s207
      %p216 = scmp.eq.s32.totalorder %s33, 0
      %p217 = por %p215, %p216
      %p218 = scmp.ne.s32.totalorder %s206, %s207
      %p219 = scmp.eq.s32.totalorder %s34, 3
      %p220 = por %p218, %p219
      %p222 = scmp.ne.s32.totalorder %s207, %s221
      %p223 = scmp.eq.s32.totalorder %s34, 0
      %p224 = por %p222, %p223
      %s226 = sadd.s32 %s225, 1
      %p229 = scmp.eq.s32.totalorder %s28, 3
      %p230 = scmp.ne.s32.totalorder %s225, %s227
      %p231 = scmp.eq.s32.totalorder %s28, 0
      %p232 = por %p230, %p231
      %p233 = scmp.ne.s32.totalorder %s225, %s227
      %p234 = scmp.eq.s32.totalorder %s33, 3
      %p235 = por %p233, %p234
      %p236 = scmp.ne.s32.totalorder %s227, %s228
      %p237 = scmp.eq.s32.totalorder %s33, 0
      %p238 = por %p236, %p237
      %p239 = scmp.ne.s32.totalorder %s227, %s228
      %p240 = scmp.eq.s32.totalorder %s34, 3
      %p241 = por %p239, %p240
      %p243 = scmp.ne.s32.totalorder %s228, %s242
      %p244 = scmp.eq.s32.totalorder %s34, 0
      %p245 = por %p243, %p244
      %s247 = sadd.s32 %s246, 1
      %p250 = scmp.eq.s32.totalorder %s28, 3
      %p251 = scmp.ne.s32.totalorder %s246, %s248
      %p252 = scmp.eq.s32.totalorder %s28, 0
      %p253 = por %p251, %p252
      %p254 = scmp.ne.s32.totalorder %s246, %s248
      %p255 = scmp.eq.s32.totalorder %s33, 3
      %p256 = por %p254, %p255
      %p257 = scmp.ne.s32.totalorder %s248, %s249
      %p258 = scmp.eq.s32.totalorder %s33, 0
      %p259 = por %p257, %p258
      %p260 = scmp.ne.s32.totalorder %s248, %s249
      %p261 = scmp.eq.s32.totalorder %s34, 3
      %p262 = por %p260, %p261
      %p264 = scmp.ne.s32.totalorder %s249, %s263
      %p265 = scmp.eq.s32.totalorder %s34, 0
      %p266 = por %p264, %p265
      %s268 = sadd.s32 %s267, 1
      %p271 = scmp.eq.s32.totalorder %s28, 3
      %p272 = scmp.ne.s32.totalorder %s267, %s269
      %p273 = scmp.eq.s32.totalorder %s28, 0
      %p274 = por %p272, %p273
      %p275 = scmp.ne.s32.totalorder %s267, %s269
      %p276 = scmp.eq.s32.totalorder %s33, 3
      %p277 = por %p275, %p276
      %p278 = scmp.ne.s32.totalorder %s269, %s270
      %p279 = scmp.eq.s32.totalorder %s33, 0
      %p280 = por %p278, %p279
      %p281 = scmp.ne.s32.totalorder %s269, %s270
      %p282 = scmp.eq.s32.totalorder %s34, 3
      %p283 = por %p281, %p282
      %p285 = scmp.ne.s32.totalorder %s270, %s284
      %p286 = scmp.eq.s32.totalorder %s34, 0
      %p287 = por %p285, %p286
      %s289 = sadd.s32 %s288, 1
      %p292 = scmp.eq.s32.totalorder %s28, 3
      %p293 = scmp.ne.s32.totalorder %s288, %s290
      %p294 = scmp.eq.s32.totalorder %s28, 0
      %p295 = por %p293, %p294
      %p296 = scmp.ne.s32.totalorder %s288, %s290
      %p297 = scmp.eq.s32.totalorder %s33, 3
      %p298 = por %p296, %p297
      %p299 = scmp.ne.s32.totalorder %s290, %s291
      %p300 = scmp.eq.s32.totalorder %s33, 0
      %p301 = por %p299, %p300
      %p302 = scmp.ne.s32.totalorder %s290, %s291
      %p303 = scmp.eq.s32.totalorder %s34, 3
      %p304 = por %p302, %p303
      %p306 = scmp.ne.s32.totalorder %s291, %s305
      %p307 = scmp.eq.s32.totalorder %s34, 0
      %p308 = por %p306, %p307
      %s310 = sadd.s32 %s309, 1
      %p313 = scmp.eq.s32.totalorder %s28, 3
      %p314 = scmp.ne.s32.totalorder %s309, %s311
      %p315 = scmp.eq.s32.totalorder %s28, 0
      %p316 = por %p314, %p315
      %p317 = scmp.ne.s32.totalorder %s309, %s311
      %p318 = scmp.eq.s32.totalorder %s33, 3
      %p319 = por %p317, %p318
      %p320 = scmp.ne.s32.totalorder %s311, %s312
      %p321 = scmp.eq.s32.totalorder %s33, 0
      %p322 = por %p320, %p321
      %p323 = scmp.ne.s32.totalorder %s311, %s312
      %p324 = scmp.eq.s32.totalorder %s34, 3
      %p325 = por %p323, %p324
      %p327 = scmp.ne.s32.totalorder %s312, %s326
      %p328 = scmp.eq.s32.totalorder %s34, 0
      %p329 = por %p327, %p328
      %s331 = sadd.s32 %s330, 1
      %p334 = scmp.eq.s32.totalorder %s28, 3
      %p335 = scmp.ne.s32.totalorder %s330, %s332
      %p336 = scmp.eq.s32.totalorder %s28, 0
      %p337 = por %p335, %p336
      %p338 = scmp.ne.s32.totalorder %s330, %s332
      %p339 = scmp.eq.s32.totalorder %s33, 3
      %p340 = por %p338, %p339
      %p341 = scmp.ne.s32.totalorder %s332, %s333
      %p342 = scmp.eq.s32.totalorder %s33, 0
      %p343 = por %p341, %p342
      %p344 = scmp.ne.s32.totalorder %s332, %s333
      %p345 = scmp.eq.s32.totalorder %s34, 3
      %p346 = por %p344, %p345
      %p348 = scmp.ne.s32.totalorder %s333, %s347
      %p349 = scmp.eq.s32.totalorder %s34, 0
      %p350 = por %p348, %p349
      %s352 = sadd.s32 %s351, 1
      %p355 = scmp.eq.s32.totalorder %s28, 3
      %p356 = scmp.ne.s32.totalorder %s351, %s353
      %p357 = scmp.eq.s32.totalorder %s28, 0
      %p358 = por %p356, %p357
      %p359 = scmp.ne.s32.totalorder %s351, %s353
      %p360 = scmp.eq.s32.totalorder %s33, 3
      %p361 = por %p359, %p360
      %p362 = scmp.ne.s32.totalorder %s353, %s354
      %p363 = scmp.eq.s32.totalorder %s33, 0
      %p364 = por %p362, %p363
      %p365 = scmp.ne.s32.totalorder %s353, %s354
      %p366 = scmp.eq.s32.totalorder %s34, 3
      %p367 = por %p365, %p366
      %p369 = scmp.ne.s32.totalorder %s354, %s368
      %p370 = scmp.eq.s32.totalorder %s34, 0
      %p371 = por %p369, %p370
      %s372 = ssub.s32 %s28, %s35
      %p373 = scmp.eq.s32.totalorder %s372, 0
      %s375 = sadd.s32 %s374, 1
      %s376 = scalar_select %p373, %s374, %s375
      %p379 = pneg %p373
      %p380 = scmp.eq.s32.totalorder %s28, 3
      %p381 = por %p379, %p380
      %p382 = scmp.ne.s32.totalorder %s374, %s377
      %p383 = scmp.eq.s32.totalorder %s28, 0
      %p384 = por %p382, %p383
      %p385 = scmp.ne.s32.totalorder %s374, %s377
      %p386 = scmp.eq.s32.totalorder %s33, 3
      %p387 = por %p385, %p386
      %p388 = scmp.ne.s32.totalorder %s377, %s378
      %p389 = scmp.eq.s32.totalorder %s33, 0
      %p390 = por %p388, %p389
      %p391 = scmp.ne.s32.totalorder %s377, %s378
      %p392 = scmp.eq.s32.totalorder %s34, 3
      %p393 = por %p391, %p392
      %p395 = scmp.ne.s32.totalorder %s378, %s394
      %p396 = scmp.eq.s32.totalorder %s34, 0
      %p397 = por %p395, %p396
      %s398 = ssub.s32 %s28, %s35
      %p399 = scmp.eq.s32.totalorder %s398, 0
      %s401 = sadd.s32 %s400, 1
      %s402 = scalar_select %p399, %s400, %s401
      %p405 = pneg %p399
      %p406 = scmp.eq.s32.totalorder %s28, 3
      %p407 = por %p405, %p406
      %p408 = scmp.ne.s32.totalorder %s400, %s403
      %p409 = scmp.eq.s32.totalorder %s28, 0
      %p410 = por %p408, %p409
      %p411 = scmp.ne.s32.totalorder %s400, %s403
      %p412 = scmp.eq.s32.totalorder %s33, 3
      %p413 = por %p411, %p412
      %p414 = scmp.ne.s32.totalorder %s403, %s404
      %p415 = scmp.eq.s32.totalorder %s33, 0
      %p416 = por %p414, %p415
      %p417 = scmp.ne.s32.totalorder %s403, %s404
      %p418 = scmp.eq.s32.totalorder %s34, 3
      %p419 = por %p417, %p418
      %p421 = scmp.ne.s32.totalorder %s404, %s420
      %p422 = scmp.eq.s32.totalorder %s34, 0
      %p423 = por %p421, %p422
      %s424 = ssub.s32 %s28, %s35
      %p425 = scmp.eq.s32.totalorder %s424, 0
      %s427 = sadd.s32 %s426, 1
      %s428 = scalar_select %p425, %s426, %s427
      %p431 = pneg %p425
      %p432 = scmp.eq.s32.totalorder %s28, 3
      %p433 = por %p431, %p432
      %p434 = scmp.ne.s32.totalorder %s426, %s429
      %p435 = scmp.eq.s32.totalorder %s28, 0
      %p436 = por %p434, %p435
      %p437 = scmp.ne.s32.totalorder %s426, %s429
      %p438 = scmp.eq.s32.totalorder %s33, 3
      %p439 = por %p437, %p438
      %p440 = scmp.ne.s32.totalorder %s429, %s430
      %p441 = scmp.eq.s32.totalorder %s33, 0
      %p442 = por %p440, %p441
      %p443 = scmp.ne.s32.totalorder %s429, %s430
      %p444 = scmp.eq.s32.totalorder %s34, 3
      %p445 = por %p443, %p444
      %p447 = scmp.ne.s32.totalorder %s430, %s446
      %p448 = scmp.eq.s32.totalorder %s34, 0
      %p449 = por %p447, %p448
      %s451 = sadd.s32 %s450, 1
      %p454 = scmp.eq.s32.totalorder %s28, 3
      %p455 = scmp.ne.s32.totalorder %s450, %s452
      %p456 = scmp.eq.s32.totalorder %s28, 0
      %p457 = por %p455, %p456
      %p458 = scmp.ne.s32.totalorder %s450, %s452
      %p459 = scmp.eq.s32.totalorder %s33, 3
      %p460 = por %p458, %p459
      %p461 = scmp.ne.s32.totalorder %s452, %s453
      %p462 = scmp.eq.s32.totalorder %s33, 0
      %p463 = por %p461, %p462
      %p464 = scmp.ne.s32.totalorder %s452, %s453
      %p465 = scmp.eq.s32.totalorder %s34, 3
      %p466 = por %p464, %p465
      %p468 = scmp.ne.s32.totalorder %s453, %s467
      %p469 = scmp.eq.s32.totalorder %s34, 0
      %p470 = por %p468, %p469
      %s472 = sadd.s32 %s471, 1
      %p475 = scmp.eq.s32.totalorder %s28, 3
      %p476 = scmp.ne.s32.totalorder %s471, %s473
      %p477 = scmp.eq.s32.totalorder %s28, 0
      %p478 = por %p476, %p477
      %p479 = scmp.ne.s32.totalorder %s471, %s473
      %p480 = scmp.eq.s32.totalorder %s33, 3
      %p481 = por %p479, %p480
      %p482 = scmp.ne.s32.totalorder %s473, %s474
      %p483 = scmp.eq.s32.totalorder %s33, 0
      %p484 = por %p482, %p483
      %p485 = scmp.ne.s32.totalorder %s473, %s474
      %p486 = scmp.eq.s32.totalorder %s34, 3
      %p487 = por %p485, %p486
      %p489 = scmp.ne.s32.totalorder %s474, %s488
      %p490 = scmp.eq.s32.totalorder %s34, 0
      %p491 = por %p489, %p490
      %s493 = sadd.s32 %s492, 1
      %p496 = scmp.eq.s32.totalorder %s28, 3
      %p497 = scmp.ne.s32.totalorder %s492, %s494
      %p498 = scmp.eq.s32.totalorder %s28, 0
      %p499 = por %p497, %p498
      %p500 = scmp.ne.s32.totalorder %s492, %s494
      %p501 = scmp.eq.s32.totalorder %s33, 3
      %p502 = por %p500, %p501
      %p503 = scmp.ne.s32.totalorder %s494, %s495
      %p504 = scmp.eq.s32.totalorder %s33, 0
      %p505 = por %p503, %p504
      %p506 = scmp.ne.s32.totalorder %s494, %s495
      %p507 = scmp.eq.s32.totalorder %s34, 3
      %p508 = por %p506, %p507
      %p510 = scmp.ne.s32.totalorder %s495, %s509
      %p511 = scmp.eq.s32.totalorder %s34, 0
      %p512 = por %p510, %p511
      %s514 = sadd.s32 %s513, 1
      %p517 = scmp.eq.s32.totalorder %s28, 3
      %p518 = scmp.ne.s32.totalorder %s513, %s515
      %p519 = scmp.eq.s32.totalorder %s28, 0
      %p520 = por %p518, %p519
      %p521 = scmp.ne.s32.totalorder %s513, %s515
      %p522 = scmp.eq.s32.totalorder %s33, 3
      %p523 = por %p521, %p522
      %p524 = scmp.ne.s32.totalorder %s515, %s516
      %p525 = scmp.eq.s32.totalorder %s33, 0
      %p526 = por %p524, %p525
      %p527 = scmp.ne.s32.totalorder %s515, %s516
      %p528 = scmp.eq.s32.totalorder %s34, 3
      %p529 = por %p527, %p528
      %p531 = scmp.ne.s32.totalorder %s516, %s530
      %p532 = scmp.eq.s32.totalorder %s34, 0
      %p533 = por %p531, %p532
      %p534 = scmp.le.s32.totalorder 1, %s28
      %p535 = scmp.lt.s32.totalorder %s28, 5
      %p536 = pnand %p534, %p535
      %p537 = pneg %p536
      // Predicated region
      $region9: #{detr_forward.8} parent=5 // pred_check
        _
      $region10: #{detr_forward.8} parent=5 // pred_check_branch
        %539 = sbr.rel (%p536) target = $region12
      $region11: #{detr_forward.8} parent=5 // pred_region
        %s540 = ssub.s32 %s28, 1
        // Predicated region
        $region13: #{detr_forward.8} parent=11 // pred_check
          %p541 = pneg %p49
        $region14: #{detr_forward.8} parent=11 // pred_check_branch
          %543 = sbr.rel (%p541) target = $region16
        $region15: #{detr_forward.8} parent=11 // pred_region
          _
        $region16: #{detr_forward.8} parent=11 // pred_fallthru
          _
        // Predicated region
        $region17: #{detr_forward.8} parent=11 // pred_check
          %p544 = pneg %p70
        $region18: #{detr_forward.8} parent=11 // pred_check_branch
          %546 = sbr.rel (%p544) target = $region20
        $region19: #{detr_forward.8} parent=11 // pred_region
          _
        $region20: #{detr_forward.8} parent=11 // pred_fallthru
          _
        // Predicated region
        $region21: #{detr_forward.8} parent=11 // pred_check
          %p547 = pneg %p91
        $region22: #{detr_forward.8} parent=11 // pred_check_branch
          %549 = sbr.rel (%p547) target = $region24
        $region23: #{detr_forward.8} parent=11 // pred_region
          _
        $region24: #{detr_forward.8} parent=11 // pred_fallthru
          _
        // Predicated region
        $region25: #{detr_forward.8} parent=11 // pred_check
          %p550 = pneg %p112
        $region26: #{detr_forward.8} parent=11 // pred_check_branch
          %552 = sbr.rel (%p550) target = $region28
        $region27: #{detr_forward.8} parent=11 // pred_region
          _
        $region28: #{detr_forward.8} parent=11 // pred_fallthru
          _
        // Predicated region
        $region29: #{detr_forward.8} parent=11 // pred_check
          %p553 = pneg %p133
        $region30: #{detr_forward.8} parent=11 // pred_check_branch
          %555 = sbr.rel (%p553) target = $region32
        $region31: #{detr_forward.8} parent=11 // pred_region
          _
        $region32: #{detr_forward.8} parent=11 // pred_fallthru
          _
        // Predicated region
        $region33: #{detr_forward.8} parent=11 // pred_check
          %p556 = pneg %p154
        $region34: #{detr_forward.8} parent=11 // pred_check_branch
          %558 = sbr.rel (%p556) target = $region36
        $region35: #{detr_forward.8} parent=11 // pred_region
          _
        $region36: #{detr_forward.8} parent=11 // pred_fallthru
          _
        // Predicated region
        $region37: #{detr_forward.8} parent=11 // pred_check
          %p559 = pneg %p175
        $region38: #{detr_forward.8} parent=11 // pred_check_branch
          %561 = sbr.rel (%p559) target = $region40
        $region39: #{detr_forward.8} parent=11 // pred_region
          _
        $region40: #{detr_forward.8} parent=11 // pred_fallthru
          _
        // Predicated region
        $region41: #{detr_forward.8} parent=11 // pred_check
          %p562 = pneg %p196
        $region42: #{detr_forward.8} parent=11 // pred_check_branch
          %564 = sbr.rel (%p562) target = $region44
        $region43: #{detr_forward.8} parent=11 // pred_region
          _
        $region44: #{detr_forward.8} parent=11 // pred_fallthru
          _
        // Predicated region
        $region45: #{detr_forward.8} parent=11 // pred_check
          %p565 = pneg %p217
        $region46: #{detr_forward.8} parent=11 // pred_check_branch
          %567 = sbr.rel (%p565) target = $region48
        $region47: #{detr_forward.8} parent=11 // pred_region
          _
        $region48: #{detr_forward.8} parent=11 // pred_fallthru
          _
        // Predicated region
        $region49: #{detr_forward.8} parent=11 // pred_check
          %p568 = pneg %p238
        $region50: #{detr_forward.8} parent=11 // pred_check_branch
          %570 = sbr.rel (%p568) target = $region52
        $region51: #{detr_forward.8} parent=11 // pred_region
          _
        $region52: #{detr_forward.8} parent=11 // pred_fallthru
          _
        // Predicated region
        $region53: #{detr_forward.8} parent=11 // pred_check
          %p571 = pneg %p259
        $region54: #{detr_forward.8} parent=11 // pred_check_branch
          %573 = sbr.rel (%p571) target = $region56
        $region55: #{detr_forward.8} parent=11 // pred_region
          _
        $region56: #{detr_forward.8} parent=11 // pred_fallthru
          _
        // Predicated region
        $region57: #{detr_forward.8} parent=11 // pred_check
          %p574 = pneg %p280
        $region58: #{detr_forward.8} parent=11 // pred_check_branch
          %576 = sbr.rel (%p574) target = $region60
        $region59: #{detr_forward.8} parent=11 // pred_region
          _
        $region60: #{detr_forward.8} parent=11 // pred_fallthru
          _
        // Predicated region
        $region61: #{detr_forward.8} parent=11 // pred_check
          %p577 = pneg %p301
        $region62: #{detr_forward.8} parent=11 // pred_check_branch
          %579 = sbr.rel (%p577) target = $region64
        $region63: #{detr_forward.8} parent=11 // pred_region
          _
        $region64: #{detr_forward.8} parent=11 // pred_fallthru
          _
        // Predicated region
        $region65: #{detr_forward.8} parent=11 // pred_check
          %p580 = pneg %p322
        $region66: #{detr_forward.8} parent=11 // pred_check_branch
          %582 = sbr.rel (%p580) target = $region68
        $region67: #{detr_forward.8} parent=11 // pred_region
          _
        $region68: #{detr_forward.8} parent=11 // pred_fallthru
          _
        // Predicated region
        $region69: #{detr_forward.8} parent=11 // pred_check
          %p583 = pneg %p343
        $region70: #{detr_forward.8} parent=11 // pred_check_branch
          %585 = sbr.rel (%p583) target = $region72
        $region71: #{detr_forward.8} parent=11 // pred_region
          _
        $region72: #{detr_forward.8} parent=11 // pred_fallthru
          _
        // Predicated region
        $region73: #{detr_forward.8} parent=11 // pred_check
          %p586 = pneg %p364
        $region74: #{detr_forward.8} parent=11 // pred_check_branch
          %588 = sbr.rel (%p586) target = $region76
        $region75: #{detr_forward.8} parent=11 // pred_region
          _
        $region76: #{detr_forward.8} parent=11 // pred_fallthru
          _
        // Predicated region
        $region77: #{detr_forward.8} parent=11 // pred_check
          %p589 = pneg %p463
        $region78: #{detr_forward.8} parent=11 // pred_check_branch
          %591 = sbr.rel (%p589) target = $region80
        $region79: #{detr_forward.8} parent=11 // pred_region
          _
        $region80: #{detr_forward.8} parent=11 // pred_fallthru
          _
        // Predicated region
        $region81: #{detr_forward.8} parent=11 // pred_check
          %p592 = pneg %p484
        $region82: #{detr_forward.8} parent=11 // pred_check_branch
          %594 = sbr.rel (%p592) target = $region84
        $region83: #{detr_forward.8} parent=11 // pred_region
          _
        $region84: #{detr_forward.8} parent=11 // pred_fallthru
          _
        // Predicated region
        $region85: #{detr_forward.8} parent=11 // pred_check
          %p595 = pneg %p505
        $region86: #{detr_forward.8} parent=11 // pred_check_branch
          %597 = sbr.rel (%p595) target = $region88
        $region87: #{detr_forward.8} parent=11 // pred_region
          _
        $region88: #{detr_forward.8} parent=11 // pred_fallthru
          _
      $region12: #{detr_forward.8} parent=5 // pred_fallthru
        _
      %p598 = scmp.lt.s32.totalorder %s28, 4
      // Predicated region
      $region89: #{detr_forward.8} parent=5 // pred_check
        %p599 = pneg %p598
      $region90: #{detr_forward.8} parent=5 // pred_check_branch
        %601 = sbr.rel (%p599) target = $region92
      $region91: #{detr_forward.8} parent=5 // pred_region
        // Predicated region
        $region93: #{detr_forward.8} parent=91 // pred_check
          %p602 = pneg %p384
        $region94: #{detr_forward.8} parent=91 // pred_check_branch
          %604 = sbr.rel (%p602) target = $region96
        $region95: #{detr_forward.8} parent=91 // pred_region
          %s605 = sand.u32 %s374, 1
          %s606 = sand.u32 %s374, 1
          %s607 = smul.addr %s606, 128
          %s608 = scalar_lea.vmem [#allocation4], %s607
          %s609 = smul.u32 4, %s28
          %s610 = smul.addr %s609, 4
          %s611 = scalar_lea.vmem %s16, %s610
          // Predicated region
          $region97: #{detr_forward.8} parent=95 // pred_check
            _
          $region98: #{detr_forward.8} parent=95 // pred_check_branch
            %613 = sbr.rel (0) target = $region100
          $region99: #{detr_forward.8} parent=95 // pred_region
            // Predicated region
            $region101: #{detr_forward.8} parent=99 // pred_check
              _
            $region102: #{detr_forward.8} parent=99 // pred_check_branch
              %615 = sbr.rel (0) target = $region104
            $region103: #{detr_forward.8} parent=99 // pred_region
              loop: start=0, step=1, limit=1
              $region105: #{detr_forward.8} parent=103 // loop_pre_header
                _
              $region106: #{detr_forward.8} parent=103 // loop_header
                %s617 = sphi 0, %s621
                %p618 = scmp.ge.s32.totalorder %s617, 1
                %s622 = sphi %s611, %s611
                %s623 = sphi %s608, %s608
              $region107: #{detr_forward.8} parent=103 // loop_header_branch
                %620 = sbr.rel (%p618) target = $region111
              $region108: #{detr_forward.8} parent=103 // loop_body
                %v624 = vld [vmem:[%s622] sm:$0xff]
                %625 = vst [vmem:[%s623] sm:$0xff] %v624
                %v626 = vld [vmem:[%s622 + $0x8] sm:$0xff]
                %627 = vst [vmem:[%s623 + $0x8] sm:$0xff] %v626
                %v628 = vld [vmem:[%s622 + $0x40] sm:$0xff]
                %629 = vst [vmem:[%s623 + $0x10] sm:$0xff] %v628
                %v630 = vld [vmem:[%s622 + $0x48] sm:$0xff]
                %631 = vst [vmem:[%s623 + $0x18] sm:$0xff] %v630
                %v632 = vld [vmem:[%s622 + $0x80] sm:$0xff]
                %633 = vst [vmem:[%s623 + $0x20] sm:$0xff] %v632
                %v634 = vld [vmem:[%s622 + $0x88] sm:$0xff]
                %635 = vst [vmem:[%s623 + $0x28] sm:$0xff] %v634
                %v636 = vld [vmem:[%s622 + $0xc0] sm:$0xff]
                %637 = vst [vmem:[%s623 + $0x30] sm:$0xff] %v636
                %v638 = vld [vmem:[%s622 + $0xc8] sm:$0xff]
                %639 = vst [vmem:[%s623 + $0x38] sm:$0xff] %v638
                %v640 = vld [vmem:[%s622 + $0x100] sm:$0xff]
                %641 = vst [vmem:[%s623 + $0x40] sm:$0xff] %v640
                %v642 = vld [vmem:[%s622 + $0x108] sm:$0xff]
                %643 = vst [vmem:[%s623 + $0x48] sm:$0xff] %v642
                %v644 = vld [vmem:[%s622 + $0x140] sm:$0xff]
                %645 = vst [vmem:[%s623 + $0x50] sm:$0xff] %v644
                %v646 = vld [vmem:[%s622 + $0x148] sm:$0xff]
                %647 = vst [vmem:[%s623 + $0x58] sm:$0xff] %v646
                %v648 = vld [vmem:[%s622 + $0x180] sm:$0xff]
                %649 = vst [vmem:[%s623 + $0x60] sm:$0xff] %v648
                %v650 = vld [vmem:[%s622 + $0x188] sm:$0xff]
                %651 = vst [vmem:[%s623 + $0x68] sm:$0xff] %v650
                %v652 = vld [vmem:[%s622 + $0x1c0] sm:$0xff]
                %653 = vst [vmem:[%s623 + $0x70] sm:$0xff] %v652
                %v654 = vld [vmem:[%s622 + $0x1c8] sm:$0xff]
                %655 = vst [vmem:[%s623 + $0x78] sm:$0xff] %v654
              $region109: #{detr_forward.8} parent=103 // loop_footer
                %s621 = sadd.s32 1, %s617
              $region110: #{detr_forward.8} parent=103 // loop_footer_branch
                %616 = sbr.rel target = $region106
              $region111: #{detr_forward.8} parent=103 // loop_exit
                _
            $region104: #{detr_forward.8} parent=99 // pred_fallthru
              _
            // Predicated region
            $region112: #{detr_forward.8} parent=99 // pred_check
              _
            $region113: #{detr_forward.8} parent=99 // pred_check_branch
              %657 = sbr.rel target = $region115
            $region114: #{detr_forward.8} parent=99 // pred_region
              _
            $region115: #{detr_forward.8} parent=99 // pred_fallthru
              _
          $region100: #{detr_forward.8} parent=95 // pred_fallthru
            _
          %658 = vnop
        $region96: #{detr_forward.8} parent=91 // pred_fallthru
          _
        // Predicated region
        $region116: #{detr_forward.8} parent=91 // pred_check
          %p659 = pneg %p410
        $region117: #{detr_forward.8} parent=91 // pred_check_branch
          %661 = sbr.rel (%p659) target = $region119
        $region118: #{detr_forward.8} parent=91 // pred_region
          %s662 = smul.u32 4, %s28
          %p663 = scmp.lt.s32.totalorder %s662, 15
          %s664 = scalar_select %p663, %s662, 15
          %s665 = scalar_lea.vmem %s17, %s664
          %s666 = smul.u32 4, %s28
        $region119: #{detr_forward.8} parent=91 // pred_fallthru
          _
        // Predicated region
        $region120: #{detr_forward.8} parent=91 // pred_check
          %p667 = pneg %p436
        $region121: #{detr_forward.8} parent=91 // pred_check_branch
          %669 = sbr.rel (%p667) target = $region123
        $region122: #{detr_forward.8} parent=91 // pred_region
          %s670 = smul.u32 64, %s28
          %p671 = scmp.lt.s32.totalorder %s670, 255
          %s672 = scalar_select %p671, %s670, 255
          %s673 = smul.addr %s672, 4
          %s674 = scalar_lea.vmem %s18, %s673
          %s675 = smul.u32 64, %s28
        $region123: #{detr_forward.8} parent=91 // pred_fallthru
          _
      $region92: #{detr_forward.8} parent=5 // pred_fallthru
        _
      %p676 = scmp.le.s32.totalorder 1, %s28
      %p677 = scmp.lt.s32.totalorder %s28, 5
      %p678 = pnand %p676, %p677
      %p679 = pneg %p678
      // Predicated region
      $region124: #{detr_forward.8} parent=5 // pred_check
        _
      $region125: #{detr_forward.8} parent=5 // pred_check_branch
        %681 = sbr.rel (%p678) target = $region127
      $region126: #{detr_forward.8} parent=5 // pred_region
        %s682 = ssub.s32 %s28, 1
        %s683 = sand.u32 %s377, 1
        %s684 = sand.u32 %s377, 1
        %s685 = smul.addr %s684, 128
        %s686 = scalar_lea.vmem [#allocation4], %s685
        // Predicated region
        $region128: #{detr_forward.8} parent=126 // pred_check
          %p687 = pneg %p390
        $region129: #{detr_forward.8} parent=126 // pred_check_branch
          %689 = sbr.rel (%p687) target = $region131
        $region130: #{detr_forward.8} parent=126 // pred_region
          _
        $region131: #{detr_forward.8} parent=126 // pred_fallthru
          _
        %p690 = pneg %p49
        %p691 = pneg %p46
        %p692 = pneg %p70
        %p693 = pneg %p67
        %p694 = pneg %p91
        %p695 = pneg %p88
        %p696 = pneg %p112
        %p697 = pneg %p109
        %p698 = pneg %p133
        %p699 = pneg %p130
        %p700 = pneg %p154
        %p701 = pneg %p151
        %p702 = pneg %p175
        %p703 = pneg %p172
        %p704 = pneg %p196
        %p705 = pneg %p193
        %p706 = pneg %p217
        %p707 = pneg %p214
        %p708 = pneg %p238
        %p709 = pneg %p235
        %p710 = pneg %p259
        %p711 = pneg %p256
        %p712 = pneg %p280
        %p713 = pneg %p277
        %p714 = pneg %p301
        %p715 = pneg %p298
        %p716 = pneg %p322
        %p717 = pneg %p319
        %p718 = pneg %p343
        %p719 = pneg %p340
        %p720 = pneg %p364
        %p721 = pneg %p361
        %s722 = sand.u32 %s377, 1
        %s723 = sand.u32 %s377, 1
        %s724 = smul.addr %s723, 128
        %s725 = scalar_lea.vmem [#allocation4], %s724
        %p726 = pneg %p390
        %p727 = pneg %p387
        %s728 = smul.u32 4, %s33
        %p729 = scmp.lt.s32.totalorder %s728, 15
        %s730 = scalar_select %p729, %s728, 15
        %s731 = scalar_lea.vmem %s17, %s730
        %p732 = pneg %p416
        %p733 = pneg %p413
        %s734 = smul.u32 64, %s33
        %p735 = scmp.lt.s32.totalorder %s734, 255
        %s736 = scalar_select %p735, %s734, 255
        %s737 = smul.addr %s736, 4
        %s738 = scalar_lea.vmem %s18, %s737
        %p739 = pneg %p442
        %p740 = pneg %p439
        %p741 = pneg %p463
        %p742 = pneg %p460
        %p743 = pneg %p484
        %p744 = pneg %p481
        %p745 = pneg %p505
        %p746 = pneg %p502
        %p747 = pneg %p526
        %p748 = pneg %p523
        %s749 = smul.u32 4, %s33
        %s750 = smul.u32 4, %s33
        %p751 = scmp.lt.s32.totalorder %s750, 15
        %s752 = scalar_select %p751, %s750, 15
        %s753 = scalar_lea.vmem %s17, %s752
        %s754 = smul.u32 4, %s33
        %s755 = smul.u32 64, %s33
        %p756 = scmp.lt.s32.totalorder %s755, 255
        %s757 = scalar_select %p756, %s755, 255
        %s758 = smul.addr %s757, 4
        %s759 = scalar_lea.vmem %s18, %s758
        %s760 = smul.u32 64, %s33
        %p762 = scmp.eq.s32.totalorder %s33, 0
        // Predicated region
        $region132: #{detr_forward.8} parent=126 // pred_check
          %p763 = pneg %p762
        $region133: #{detr_forward.8} parent=126 // pred_check_branch
          %765 = sbr.rel (%p763) target = $region135
        $region134: #{detr_forward.8} parent=126 // pred_region
          %v766 = vld [vmem:[%s0] sm:$0xff]
          %v767 = vld [vmem:[%s0 + $0x8] sm:$0xff]
          %v768 = vld [vmem:[%s0 + $0x10] sm:$0xff]
          %v769 = vld [vmem:[%s0 + $0x18] sm:$0xff]
          %v770 = vld [vmem:[%s0 + $0x20] sm:$0xff]
          %v771 = vld [vmem:[%s0 + $0x28] sm:$0xff]
          %v772 = vld [vmem:[%s0 + $0x30] sm:$0xff]
          %v773 = vld [vmem:[%s0 + $0x38] sm:$0xff]
          %v774 = vld [vmem:[%s0 + $0x40] sm:$0xff]
          %v775 = vld [vmem:[%s0 + $0x48] sm:$0xff]
          %v776 = vld [vmem:[%s0 + $0x50] sm:$0xff]
          %v777 = vld [vmem:[%s0 + $0x58] sm:$0xff]
          %v778 = vld [vmem:[%s0 + $0x60] sm:$0xf]
          %v779 = vld [vmem:[%s1] sm:$0xff]
          %v780 = vld [vmem:[%s1 + $0x8] sm:$0xff]
          %v781 = vpack.c.bf16 %v767, %v766
          %v782 = vpack.c.bf16 %v769, %v768
          %v783 = vpack.c.bf16 %v771, %v770
          %v784 = vpack.c.bf16 %v773, %v772
          %v785 = vpack.c.bf16 %v775, %v774
          %v786 = vpack.c.bf16 %v777, %v776
          %v787 = vpack.c.bf16 %v778, %v778
          %v788 = vld [vmem:[%s2] sm:$0xff]
          %v789 = vld [vmem:[%s2 + $0x8] sm:$0xff]
          %v790 = vld [vmem:[%s2 + $0x10] sm:$0xff]
          %v791 = vld [vmem:[%s2 + $0x18] sm:$0xff]
          %v792 = vld [vmem:[%s2 + $0x20] sm:$0xff]
          %v793 = vld [vmem:[%s2 + $0x28] sm:$0xff]
          %v794 = vld [vmem:[%s2 + $0x30] sm:$0xff]
          %v795 = vld [vmem:[%s2 + $0x38] sm:$0xff]
          %v796 = vld [vmem:[%s3] sm:$0x3]
          %v798 = vlaneseq
          %v799 = vshrl.u32 %v798, 7
          %v800 = vsub.s32 0, %v799
          %v801 = vrot.slane %v796, %v800
          %v802 = vlaneseq
          %v803 = vshrl.u32 %v802, 7
          %v804 = vsub.s32 1, %v803
          %v805 = vrot.slane %v796, %v804
          %v816 = vunpack.c.l.b16 %v788
          %v817 = vunpack.c.h.b16 %v788
          %v818 = vunpack.c.l.b16 %v789
          %v819 = vunpack.c.h.b16 %v789
          %v820 = vunpack.c.l.b16 %v790
          %v821 = vunpack.c.h.b16 %v790
          %v822 = vunpack.c.l.b16 %v791
          %v823 = vunpack.c.h.b16 %v791
          %v824 = vunpack.c.l.b16 %v792
          %v825 = vunpack.c.h.b16 %v792
          %v826 = vunpack.c.l.b16 %v793
          %v827 = vunpack.c.h.b16 %v793
          %v828 = vunpack.c.l.b16 %v794
          %v829 = vunpack.c.h.b16 %v794
          %v830 = vunpack.c.l.b16 %v795
          %v831 = vunpack.c.h.b16 %v795
          %v832 = vpack.c.b16 %v818, %v816
          %v833 = vpack.c.b16 %v819, %v817
          %v834 = vpack.c.b16 %v822, %v820
          %v835 = vpack.c.b16 %v823, %v821
          %v836 = vpack.c.b16 %v826, %v824
          %v837 = vpack.c.b16 %v827, %v825
          %v838 = vpack.c.b16 %v830, %v828
          %v839 = vpack.c.b16 %v831, %v829
          %vm848 = vcmask 523264
          %v850 = vsel %vm848, %v781, 0
          %v853 = vsel %vm848, %v782, 0
          %v856 = vsel %vm848, %v783, 0
          %v859 = vsel %vm848, %v784, 0
          %v862 = vsel %vm848, %v785, 0
          %v865 = vsel %vm848, %v786, 0
          %v868 = vsel %vm848, %v787, 0
          %870 = vmatprep.subr.bf16.mxu0 0
          %871 = vmatpush1.bf16.msra.mxu0 0
          %872 = vmatprep.subr.bf16.mxu0 0
          %873 = vmatpush1.bf16.msra.mxu0 0
          %874 = vmatprep.subr.bf16.mxu0 0
          %875 = vmatpush1.bf16.msra.mxu0 0
          %876 = vmatprep.subr.bf16.mxu0 0
          %877 = vmatpush1.bf16.msra.mxu0 0
          %878 = vmatprep.subr.bf16.mxu0 %v839
          %879 = vmatpush1.bf16.msra.mxu0 %v838
          %880 = vmatprep.subr.bf16.mxu0 %v837
          %881 = vmatpush1.bf16.msra.mxu0 %v836
          %882 = vmatprep.subr.bf16.mxu0 %v835
          %883 = vmatpush1.bf16.msra.mxu0 %v834
          %884 = vmatprep.subr.bf16.mxu0 %v833
          %885 = vmatpush1.bf16.msra.mxu0 %v832
          %886 = vmatprep.subr.bf16.mxu0 0
          %887 = vmatpush2.bf16.msra.mxu0 0
          %888 = vmatprep.subr.bf16.mxu0 0
          %889 = vmatpush2.bf16.msra.mxu0 0
          %890 = vmatprep.subr.bf16.mxu0 0
          %891 = vmatpush2.bf16.msra.mxu0 0
          %892 = vmatprep.subr.bf16.mxu0 0
          %893 = vmatpush2.bf16.msra.mxu0 0
          %894 = vmatprep.subr.bf16.mxu0 0
          %895 = vmatpush2.bf16.msra.mxu0 0
          %896 = vmatprep.subr.bf16.mxu0 0
          %897 = vmatpush2.bf16.msra.mxu0 0
          %898 = vmatprep.subr.bf16.mxu0 0
          %899 = vmatpush2.bf16.msra.mxu0 0
          %900 = vmatprep.subr.bf16.mxu0 0
          %901 = vmatpush2.bf16.msra.mxu0 0
          %902 = vmatprep.mubr.bf16.mxu0 0
          %903 = vmatmul.mubr.bf16.gmra.mxu0 %v850
          %v904 = vpop.f32.mrf.mxu0
          %v905 = vadd.f32 %v801, %v904
          %v906 = vpop.f32.mrf.mxu0
          %v907 = vadd.f32 %v805, %v906
          %v908 = vpop.f32.mrf.mxu0
          %v909 = vadd.f32 %v801, %v908
          %v910 = vpop.f32.mrf.mxu0
          %v911 = vadd.f32 %v805, %v910
          %912 = vmatprep.mubr.bf16.mxu0 0
          %913 = vmatmul.mubr.bf16.gmra.mxu0 %v853
          %v914 = vpop.f32.mrf.mxu0
          %v915 = vadd.f32 %v801, %v914
          %v916 = vpop.f32.mrf.mxu0
          %v917 = vadd.f32 %v805, %v916
          %v918 = vpop.f32.mrf.mxu0
          %v919 = vadd.f32 %v801, %v918
          %v920 = vpop.f32.mrf.mxu0
          %v921 = vadd.f32 %v805, %v920
          %922 = vmatprep.mubr.bf16.mxu0 0
          %923 = vmatmul.mubr.bf16.gmra.mxu0 %v856
          %v924 = vpop.f32.mrf.mxu0
          %v925 = vadd.f32 %v801, %v924
          %v926 = vpop.f32.mrf.mxu0
          %v927 = vadd.f32 %v805, %v926
          %v928 = vpop.f32.mrf.mxu0
          %v929 = vadd.f32 %v801, %v928
          %v930 = vpop.f32.mrf.mxu0
          %v931 = vadd.f32 %v805, %v930
          %932 = vmatprep.mubr.bf16.mxu0 0
          %933 = vmatmul.mubr.bf16.gmra.mxu0 %v859
          %v934 = vpop.f32.mrf.mxu0
          %v935 = vadd.f32 %v801, %v934
          %v936 = vpop.f32.mrf.mxu0
          %v937 = vadd.f32 %v805, %v936
          %v938 = vpop.f32.mrf.mxu0
          %v939 = vadd.f32 %v801, %v938
          %v940 = vpop.f32.mrf.mxu0
          %v941 = vadd.f32 %v805, %v940
          %942 = vmatprep.mubr.bf16.mxu0 0
          %943 = vmatmul.mubr.bf16.gmra.mxu0 %v862
          %v944 = vpop.f32.mrf.mxu0
          %v945 = vadd.f32 %v801, %v944
          %v946 = vpop.f32.mrf.mxu0
          %v947 = vadd.f32 %v805, %v946
          %v948 = vpop.f32.mrf.mxu0
          %v949 = vadd.f32 %v801, %v948
          %v950 = vpop.f32.mrf.mxu0
          %v951 = vadd.f32 %v805, %v950
          %952 = vmatprep.mubr.bf16.mxu0 0
          %953 = vmatmul.mubr.bf16.gmra.mxu0 %v865
          %v954 = vpop.f32.mrf.mxu0
          %v955 = vadd.f32 %v801, %v954
          %v956 = vpop.f32.mrf.mxu0
          %v957 = vadd.f32 %v805, %v956
          %v958 = vpop.f32.mrf.mxu0
          %v959 = vadd.f32 %v801, %v958
          %v960 = vpop.f32.mrf.mxu0
          %v961 = vadd.f32 %v805, %v960
          %962 = vmatprep.mubr.bf16.mxu0 0
          %963 = vmatmul.mubr.bf16.gmra.mxu0 %v868
          %v964 = vpop.f32.mrf.mxu0
          %v965 = vadd.f32 %v801, %v964
          %v966 = vpop.f32.mrf.mxu0
          %v967 = vadd.f32 %v805, %v966
          %v968 = vpop.f32.mrf.mxu0
          %v969 = vpop.f32.mrf.mxu0
          %970 = vdwg.mxu0
          %v971 = vpack.c.bf16 %v909, %v905
          %v972 = vpack.c.bf16 %v919, %v915
          %v973 = vpack.c.bf16 %v929, %v925
          %v974 = vpack.c.bf16 %v939, %v935
          %v975 = vpack.c.bf16 %v949, %v945
          %v976 = vpack.c.bf16 %v959, %v955
          %v977 = vpack.c.bf16 %v965, %v965
          %v978 = vpack.c.bf16 %v911, %v907
          %v979 = vpack.c.bf16 %v921, %v917
          %v980 = vpack.c.bf16 %v931, %v927
          %v981 = vpack.c.bf16 %v941, %v937
          %v982 = vpack.c.bf16 %v951, %v947
          %v983 = vpack.c.bf16 %v961, %v957
          %v984 = vpack.c.bf16 %v967, %v967
          %992 = vrot.lane.b32.xlu0 %v971, 64
          %v993 = vpop.permute.xlu0 %992
          %994 = vrot.lane.b32.xlu0 %v972, 64
          %v995 = vpop.permute.xlu0 %994
          %996 = vrot.lane.b32.xlu0 %v973, 64
          %v997 = vpop.permute.xlu0 %996
          %998 = vrot.lane.b32.xlu0 %v974, 64
          %v999 = vpop.permute.xlu0 %998
          %1000 = vrot.lane.b32.xlu0 %v975, 64
          %v1001 = vpop.permute.xlu0 %1000
          %1002 = vrot.lane.b32.xlu0 %v976, 64
          %v1003 = vpop.permute.xlu0 %1002
          %1004 = vrot.lane.b32.xlu0 %v977, 64
          %v1005 = vpop.permute.xlu0 %1004
          %vm1006 = vcmask 261120
          %v1008 = vsel %vm1006, %v971, 0
          %v1011 = vsel %vm1006, %v972, 0
          %v1014 = vsel %vm1006, %v973, 0
          %v1017 = vsel %vm1006, %v974, 0
          %v1020 = vsel %vm1006, %v975, 0
          %v1023 = vsel %vm1006, %v976, 0
          %v1026 = vsel %vm1006, %v977, 0
          %v1029 = vsel %vm1006, %v993, 0
          %v1032 = vsel %vm1006, %v995, 0
          %v1035 = vsel %vm1006, %v997, 0
          %v1038 = vsel %vm1006, %v999, 0
          %v1041 = vsel %vm1006, %v1001, 0
          %v1044 = vsel %vm1006, %v1003, 0
          %v1047 = vsel %vm1006, %v1005, 0
          %1049 = vmatprep.subr.bf16.mxu0 0
          %1050 = vmatpush1.bf16.xpose.msra.mxu0 0
          %1051 = vmatprep.subr.bf16.mxu0 0
          %1052 = vmatpush1.bf16.xpose.msra.mxu0 %v1047
          %1053 = vmatprep.subr.bf16.mxu0 0
          %1054 = vmatpush1.bf16.xpose.msra.mxu0 %v1044
          %1055 = vmatprep.subr.bf16.mxu0 0
          %1056 = vmatpush1.bf16.xpose.msra.mxu0 %v1041
          %1057 = vmatprep.subr.bf16.mxu0 0
          %1058 = vmatpush1.bf16.xpose.msra.mxu0 %v1038
          %1059 = vmatprep.subr.bf16.mxu0 0
          %1060 = vmatpush1.bf16.xpose.msra.mxu0 %v1035
          %1061 = vmatprep.subr.bf16.mxu0 0
          %1062 = vmatpush1.bf16.xpose.msra.mxu0 %v1032
          %1063 = vmatprep.subr.bf16.mxu0 0
          %1064 = vmatpush1.bf16.xpose.msra.mxu0 %v1029
          %1065 = vmatprep.subr.bf16.mxu0 0
          %1066 = vmatpush2.bf16.xpose.msra.mxu0 0
          %1067 = vmatprep.subr.bf16.mxu0 0
          %1068 = vmatpush2.bf16.xpose.msra.mxu0 0
          %1069 = vmatprep.subr.bf16.mxu0 0
          %1070 = vmatpush2.bf16.xpose.msra.mxu0 0
          %1071 = vmatprep.subr.bf16.mxu0 0
          %1072 = vmatpush2.bf16.xpose.msra.mxu0 0
          %1073 = vmatprep.subr.bf16.mxu0 0
          %1074 = vmatpush2.bf16.xpose.msra.mxu0 0
          %1075 = vmatprep.subr.bf16.mxu0 0
          %1076 = vmatpush2.bf16.xpose.msra.mxu0 0
          %1077 = vmatprep.subr.bf16.mxu0 0
          %1078 = vmatpush2.bf16.xpose.msra.mxu0 0
          %1079 = vmatprep.subr.bf16.mxu0 0
          %1080 = vmatpush2.bf16.xpose.msra.mxu0 0
          %1081 = vmatprep.mubr.bf16.mxu0 0
          %1082 = vmatmul.mubr.bf16.gmra.mxu0 %v1008
          %v1083 = vpop.f32.mrf.mxu0
          %v1084 = vadd.f32 0.0, %v1083
          %v1085 = vpop.f32.mrf.mxu0
          %v1086 = vpop.f32.mrf.mxu0
          %v1087 = vadd.f32 0.0, %v1086
          %v1088 = vpop.f32.mrf.mxu0
          %1089 = vmatprep.mubr.bf16.mxu0 0
          %1090 = vmatmul.mubr.bf16.gmra.mxu0 %v1011
          %v1091 = vpop.f32.mrf.mxu0
          %v1092 = vadd.f32 0.0, %v1091
          %v1093 = vpop.f32.mrf.mxu0
          %v1094 = vpop.f32.mrf.mxu0
          %v1095 = vadd.f32 0.0, %v1094
          %v1096 = vpop.f32.mrf.mxu0
          %1097 = vmatprep.mubr.bf16.mxu0 0
          %1098 = vmatmul.mubr.bf16.gmra.mxu0 %v1014
          %v1099 = vpop.f32.mrf.mxu0
          %v1100 = vadd.f32 0.0, %v1099
          %v1101 = vpop.f32.mrf.mxu0
          %v1102 = vpop.f32.mrf.mxu0
          %v1103 = vadd.f32 0.0, %v1102
          %v1104 = vpop.f32.mrf.mxu0
          %1105 = vmatprep.mubr.bf16.mxu0 0
          %1106 = vmatmul.mubr.bf16.gmra.mxu0 %v1017
          %v1107 = vpop.f32.mrf.mxu0
          %v1108 = vadd.f32 0.0, %v1107
          %v1109 = vpop.f32.mrf.mxu0
          %v1110 = vpop.f32.mrf.mxu0
          %v1111 = vadd.f32 0.0, %v1110
          %v1112 = vpop.f32.mrf.mxu0
          %1113 = vmatprep.mubr.bf16.mxu0 0
          %1114 = vmatmul.mubr.bf16.gmra.mxu0 %v1020
          %v1115 = vpop.f32.mrf.mxu0
          %v1116 = vadd.f32 0.0, %v1115
          %v1117 = vpop.f32.mrf.mxu0
          %v1118 = vpop.f32.mrf.mxu0
          %v1119 = vadd.f32 0.0, %v1118
          %v1120 = vpop.f32.mrf.mxu0
          %1121 = vmatprep.mubr.bf16.mxu0 0
          %1122 = vmatmul.mubr.bf16.gmra.mxu0 %v1023
          %v1123 = vpop.f32.mrf.mxu0
          %v1124 = vadd.f32 0.0, %v1123
          %v1125 = vpop.f32.mrf.mxu0
          %v1126 = vpop.f32.mrf.mxu0
          %v1127 = vadd.f32 0.0, %v1126
          %v1128 = vpop.f32.mrf.mxu0
          %1129 = vmatprep.mubr.bf16.mxu0 0
          %1130 = vmatmul.mubr.bf16.gmra.mxu0 %v1026
          %v1131 = vpop.f32.mrf.mxu0
          %v1132 = vadd.f32 0.0, %v1131
          %v1133 = vpop.f32.mrf.mxu0
          %v1134 = vpop.f32.mrf.mxu0
          %v1135 = vpop.f32.mrf.mxu0
          %1136 = vdwg.mxu0
          %v1137 = vmul.f32 %v1084, 0.17677669
          %v1138 = vmul.f32 %v1087, 0.17677669
          %v1139 = vmul.f32 %v1092, 0.17677669
          %v1140 = vmul.f32 %v1095, 0.17677669
          %v1141 = vmul.f32 %v1100, 0.17677669
          %v1142 = vmul.f32 %v1103, 0.17677669
          %v1143 = vmul.f32 %v1108, 0.17677669
          %v1144 = vmul.f32 %v1111, 0.17677669
          %v1145 = vmul.f32 %v1116, 0.17677669
          %v1146 = vmul.f32 %v1119, 0.17677669
          %v1147 = vmul.f32 %v1124, 0.17677669
          %v1148 = vmul.f32 %v1127, 0.17677669
          %v1149 = vmul.f32 %v1132, 0.17677669
          %vm1150 = vcmask 818176
          %v1151 = vsel %vm1150, %v1137, -inf
          %1152 = vmax.xlane.f32.xlu0 %v1151
          %v1153 = vpop.xlane.xlu0 %1152
          %v1154 = vsel %vm1150, %v1138, -inf
          %1155 = vmax.xlane.f32.xlu0 %v1154
          %v1156 = vpop.xlane.xlu0 %1155
          %v1157 = vsel %vm1150, %v1139, -inf
          %1158 = vmax.xlane.f32.xlu0 %v1157
          %v1159 = vpop.xlane.xlu0 %1158
          %v1160 = vsel %vm1150, %v1140, -inf
          %1161 = vmax.xlane.f32.xlu0 %v1160
          %v1162 = vpop.xlane.xlu0 %1161
          %v1163 = vsel %vm1150, %v1141, -inf
          %1164 = vmax.xlane.f32.xlu0 %v1163
          %v1165 = vpop.xlane.xlu0 %1164
          %v1166 = vsel %vm1150, %v1142, -inf
          %1167 = vmax.xlane.f32.xlu0 %v1166
          %v1168 = vpop.xlane.xlu0 %1167
          %v1169 = vsel %vm1150, %v1143, -inf
          %1170 = vmax.xlane.f32.xlu0 %v1169
          %v1171 = vpop.xlane.xlu0 %1170
          %v1172 = vsel %vm1150, %v1144, -inf
          %1173 = vmax.xlane.f32.xlu0 %v1172
          %v1174 = vpop.xlane.xlu0 %1173
          %v1175 = vsel %vm1150, %v1145, -inf
          %1176 = vmax.xlane.f32.xlu0 %v1175
          %v1177 = vpop.xlane.xlu0 %1176
          %v1178 = vsel %vm1150, %v1146, -inf
          %1179 = vmax.xlane.f32.xlu0 %v1178
          %v1180 = vpop.xlane.xlu0 %1179
          %v1181 = vsel %vm1150, %v1147, -inf
          %1182 = vmax.xlane.f32.xlu0 %v1181
          %v1183 = vpop.xlane.xlu0 %1182
          %v1184 = vsel %vm1150, %v1148, -inf
          %1185 = vmax.xlane.f32.xlu0 %v1184
          %v1186 = vpop.xlane.xlu0 %1185
          %vm1187 = vcmask 814080
          %v1188 = vsel %vm1187, %v1149, -inf
          %1189 = vmax.xlane.f32.xlu0 %v1188
          %v1190 = vpop.xlane.xlu0 %1189
          %v1191 = vsub.f32 %v1137, %v1153
          %v1192 = vsub.f32 %v1138, %v1156
          %v1193 = vsub.f32 %v1139, %v1159
          %v1194 = vsub.f32 %v1140, %v1162
          %v1195 = vsub.f32 %v1141, %v1165
          %v1196 = vsub.f32 %v1142, %v1168
          %v1197 = vsub.f32 %v1143, %v1171
          %v1198 = vsub.f32 %v1144, %v1174
          %v1199 = vsub.f32 %v1145, %v1177
          %v1200 = vsub.f32 %v1146, %v1180
          %v1201 = vsub.f32 %v1147, %v1183
          %v1202 = vsub.f32 %v1148, %v1186
          %v1203 = vsub.f32 %v1149, %v1190
          %v1204 = vmul.f32 %v1191, 1.442695
          %v1205 = vpow.pop %v1204
          %v1206 = vmul.f32 %v1192, 1.442695
          %v1207 = vpow.pop %v1206
          %v1208 = vmul.f32 %v1193, 1.442695
          %v1209 = vpow.pop %v1208
          %v1210 = vmul.f32 %v1194, 1.442695
          %v1211 = vpow.pop %v1210
          %v1212 = vmul.f32 %v1195, 1.442695
          %v1213 = vpow.pop %v1212
          %v1214 = vmul.f32 %v1196, 1.442695
          %v1215 = vpow.pop %v1214
          %v1216 = vmul.f32 %v1197, 1.442695
          %v1217 = vpow.pop %v1216
          %v1218 = vmul.f32 %v1198, 1.442695
          %v1219 = vpow.pop %v1218
          %v1220 = vmul.f32 %v1199, 1.442695
          %v1221 = vpow.pop %v1220
          %v1222 = vmul.f32 %v1200, 1.442695
          %v1223 = vpow.pop %v1222
          %v1224 = vmul.f32 %v1201, 1.442695
          %v1225 = vpow.pop %v1224
          %v1226 = vmul.f32 %v1202, 1.442695
          %v1227 = vpow.pop %v1226
          %v1228 = vmul.f32 %v1203, 1.442695
          %v1229 = vpow.pop %v1228
          %v1230 = vsel %vm1150, %v1205, 0.0
          %1231 = vadd.xlane.f32.xlu0 %v1230
          %v1232 = vpop.xlane.xlu0 %1231
          %v1233 = vsel %vm1150, %v1207, 0.0
          %1234 = vadd.xlane.f32.xlu0 %v1233
          %v1235 = vpop.xlane.xlu0 %1234
          %v1236 = vsel %vm1150, %v1209, 0.0
          %1237 = vadd.xlane.f32.xlu0 %v1236
          %v1238 = vpop.xlane.xlu0 %1237
          %v1239 = vsel %vm1150, %v1211, 0.0
          %1240 = vadd.xlane.f32.xlu0 %v1239
          %v1241 = vpop.xlane.xlu0 %1240
          %v1242 = vsel %vm1150, %v1213, 0.0
          %1243 = vadd.xlane.f32.xlu0 %v1242
          %v1244 = vpop.xlane.xlu0 %1243
          %v1245 = vsel %vm1150, %v1215, 0.0
          %1246 = vadd.xlane.f32.xlu0 %v1245
          %v1247 = vpop.xlane.xlu0 %1246
          %v1248 = vsel %vm1150, %v1217, 0.0
          %1249 = vadd.xlane.f32.xlu0 %v1248
          %v1250 = vpop.xlane.xlu0 %1249
          %v1251 = vsel %vm1150, %v1219, 0.0
          %1252 = vadd.xlane.f32.xlu0 %v1251
          %v1253 = vpop.xlane.xlu0 %1252
          %v1254 = vsel %vm1150, %v1221, 0.0
          %1255 = vadd.xlane.f32.xlu0 %v1254
          %v1256 = vpop.xlane.xlu0 %1255
          %v1257 = vsel %vm1150, %v1223, 0.0
          %1258 = vadd.xlane.f32.xlu0 %v1257
          %v1259 = vpop.xlane.xlu0 %1258
          %v1260 = vsel %vm1150, %v1225, 0.0
          %1261 = vadd.xlane.f32.xlu0 %v1260
          %v1262 = vpop.xlane.xlu0 %1261
          %v1263 = vsel %vm1150, %v1227, 0.0
          %1264 = vadd.xlane.f32.xlu0 %v1263
          %v1265 = vpop.xlane.xlu0 %1264
          %v1266 = vsel %vm1187, %v1229, 0.0
          %1267 = vadd.xlane.f32.xlu0 %v1266
          %v1268 = vpop.xlane.xlu0 %1267
          %v1269 = vrcp.pop %v1232
          %v1270 = vrcp.pop %v1235
          %v1271 = vrcp.pop %v1238
          %v1272 = vrcp.pop %v1241
          %v1273 = vrcp.pop %v1244
          %v1274 = vrcp.pop %v1247
          %v1275 = vrcp.pop %v1250
          %v1276 = vrcp.pop %v1253
          %v1277 = vrcp.pop %v1256
          %v1278 = vrcp.pop %v1259
          %v1279 = vrcp.pop %v1262
          %v1280 = vrcp.pop %v1265
          %v1281 = vrcp.pop %v1268
          %v1282 = vmul.f32 %v1205, %v1269
          %v1283 = vmul.f32 %v1207, %v1270
          %v1284 = vmul.f32 %v1209, %v1271
          %v1285 = vmul.f32 %v1211, %v1272
          %v1286 = vmul.f32 %v1213, %v1273
          %v1287 = vmul.f32 %v1215, %v1274
          %v1288 = vmul.f32 %v1217, %v1275
          %v1289 = vmul.f32 %v1219, %v1276
          %v1290 = vmul.f32 %v1221, %v1277
          %v1291 = vmul.f32 %v1223, %v1278
          %v1292 = vmul.f32 %v1225, %v1279
          %v1293 = vmul.f32 %v1227, %v1280
          %v1294 = vmul.f32 %v1229, %v1281
          %v1295 = vpack.c.bf16 %v1283, %v1282
          %v1296 = vpack.c.bf16 %v1285, %v1284
          %v1297 = vpack.c.bf16 %v1287, %v1286
          %v1298 = vpack.c.bf16 %v1289, %v1288
          %v1299 = vpack.c.bf16 %v1291, %v1290
          %v1300 = vpack.c.bf16 %v1293, %v1292
          %v1301 = vpack.c.bf16 %v1294, %v1294
          %v1303 = vsel %vm1150, %v1295, 0
          %v1306 = vsel %vm1150, %v1296, 0
          %v1309 = vsel %vm1150, %v1297, 0
          %v1312 = vsel %vm1150, %v1298, 0
          %v1315 = vsel %vm1150, %v1299, 0
          %v1318 = vsel %vm1150, %v1300, 0
          %v1321 = vsel %vm1150, %v1301, 0
          %vm1323 = vcmask 1041408
          %v1325 = vsel %vm1323, %v984, 0
          %1327 = vmatprep.subr.bf16.mxu0 0
          %1328 = vmatpush1.bf16.msra.mxu0 0
          %1329 = vmatprep.subr.bf16.mxu0 0
          %1330 = vmatpush1.bf16.msra.mxu0 %v1325
          %1331 = vmatprep.subr.bf16.mxu0 0
          %1332 = vmatpush1.bf16.msra.mxu0 %v983
          %1333 = vmatprep.subr.bf16.mxu0 0
          %1334 = vmatpush1.bf16.msra.mxu0 %v982
          %1335 = vmatprep.subr.bf16.mxu0 0
          %1336 = vmatpush1.bf16.msra.mxu0 %v981
          %1337 = vmatprep.subr.bf16.mxu0 0
          %1338 = vmatpush1.bf16.msra.mxu0 %v980
          %1339 = vmatprep.subr.bf16.mxu0 0
          %1340 = vmatpush1.bf16.msra.mxu0 %v979
          %1341 = vmatprep.subr.bf16.mxu0 0
          %1342 = vmatpush1.bf16.msra.mxu0 %v978
          %1343 = vmatprep.subr.bf16.mxu0 0
          %1344 = vmatpush2.bf16.msra.mxu0 0
          %1345 = vmatprep.subr.bf16.mxu0 0
          %1346 = vmatpush2.bf16.msra.mxu0 0
          %1347 = vmatprep.subr.bf16.mxu0 0
          %1348 = vmatpush2.bf16.msra.mxu0 0
          %1349 = vmatprep.subr.bf16.mxu0 0
          %1350 = vmatpush2.bf16.msra.mxu0 0
          %1351 = vmatprep.subr.bf16.mxu0 0
          %1352 = vmatpush2.bf16.msra.mxu0 0
          %1353 = vmatprep.subr.bf16.mxu0 0
          %1354 = vmatpush2.bf16.msra.mxu0 0
          %1355 = vmatprep.subr.bf16.mxu0 0
          %1356 = vmatpush2.bf16.msra.mxu0 0
          %1357 = vmatprep.subr.bf16.mxu0 0
          %1358 = vmatpush2.bf16.msra.mxu0 0
          %1359 = vmatprep.mubr.bf16.mxu0 0
          %1360 = vmatmul.mubr.bf16.gmra.mxu0 %v1303
          %v1361 = vpop.f32.mrf.mxu0
          %v1362 = vadd.f32 0.0, %v1361
          %v1363 = vpop.f32.mrf.mxu0
          %v1364 = vpop.f32.mrf.mxu0
          %v1365 = vadd.f32 0.0, %v1364
          %v1366 = vpop.f32.mrf.mxu0
          %1367 = vmatprep.mubr.bf16.mxu0 0
          %1368 = vmatmul.mubr.bf16.gmra.mxu0 %v1306
          %v1369 = vpop.f32.mrf.mxu0
          %v1370 = vadd.f32 0.0, %v1369
          %v1371 = vpop.f32.mrf.mxu0
          %v1372 = vpop.f32.mrf.mxu0
          %v1373 = vadd.f32 0.0, %v1372
          %v1374 = vpop.f32.mrf.mxu0
          %1375 = vmatprep.mubr.bf16.mxu0 0
          %1376 = vmatmul.mubr.bf16.gmra.mxu0 %v1309
          %v1377 = vpop.f32.mrf.mxu0
          %v1378 = vadd.f32 0.0, %v1377
          %v1379 = vpop.f32.mrf.mxu0
          %v1380 = vpop.f32.mrf.mxu0
          %v1381 = vadd.f32 0.0, %v1380
          %v1382 = vpop.f32.mrf.mxu0
          %1383 = vmatprep.mubr.bf16.mxu0 0
          %1384 = vmatmul.mubr.bf16.gmra.mxu0 %v1312
          %v1385 = vpop.f32.mrf.mxu0
          %v1386 = vadd.f32 0.0, %v1385
          %v1387 = vpop.f32.mrf.mxu0
          %v1388 = vpop.f32.mrf.mxu0
          %v1389 = vadd.f32 0.0, %v1388
          %v1390 = vpop.f32.mrf.mxu0
          %1391 = vmatprep.mubr.bf16.mxu0 0
          %1392 = vmatmul.mubr.bf16.gmra.mxu0 %v1315
          %v1393 = vpop.f32.mrf.mxu0
          %v1394 = vadd.f32 0.0, %v1393
          %v1395 = vpop.f32.mrf.mxu0
          %v1396 = vpop.f32.mrf.mxu0
          %v1397 = vadd.f32 0.0, %v1396
          %v1398 = vpop.f32.mrf.mxu0
          %1399 = vmatprep.mubr.bf16.mxu0 0
          %1400 = vmatmul.mubr.bf16.gmra.mxu0 %v1318
          %v1401 = vpop.f32.mrf.mxu0
          %v1402 = vadd.f32 0.0, %v1401
          %v1403 = vpop.f32.mrf.mxu0
          %v1404 = vpop.f32.mrf.mxu0
          %v1405 = vadd.f32 0.0, %v1404
          %v1406 = vpop.f32.mrf.mxu0
          %1407 = vmatprep.mubr.bf16.mxu0 0
          %1408 = vmatmul.mubr.bf16.gmra.mxu0 %v1321
          %v1409 = vpop.f32.mrf.mxu0
          %v1410 = vadd.f32 0.0, %v1409
          %v1411 = vpop.f32.mrf.mxu0
          %v1412 = vpop.f32.mrf.mxu0
          %v1413 = vpop.f32.mrf.mxu0
          %1414 = vdwg.mxu0
          %1415 = vrot.lane.b32.xlu0 %v971, 96
          %v1416 = vpop.permute.xlu0 %1415
          %1417 = vrot.lane.b32.xlu0 %v972, 96
          %v1418 = vpop.permute.xlu0 %1417
          %1419 = vrot.lane.b32.xlu0 %v973, 96
          %v1420 = vpop.permute.xlu0 %1419
          %1421 = vrot.lane.b32.xlu0 %v974, 96
          %v1422 = vpop.permute.xlu0 %1421
          %1423 = vrot.lane.b32.xlu0 %v975, 96
          %v1424 = vpop.permute.xlu0 %1423
          %1425 = vrot.lane.b32.xlu0 %v976, 96
          %v1426 = vpop.permute.xlu0 %1425
          %1427 = vrot.lane.b32.xlu0 %v977, 96
          %v1428 = vpop.permute.xlu0 %1427
          %1429 = vrot.lane.b32.xlu0 %v971, 32
          %v1430 = vpop.permute.xlu0 %1429
          %1431 = vrot.lane.b32.xlu0 %v972, 32
          %v1432 = vpop.permute.xlu0 %1431
          %1433 = vrot.lane.b32.xlu0 %v973, 32
          %v1434 = vpop.permute.xlu0 %1433
          %1435 = vrot.lane.b32.xlu0 %v974, 32
          %v1436 = vpop.permute.xlu0 %1435
          %1437 = vrot.lane.b32.xlu0 %v975, 32
          %v1438 = vpop.permute.xlu0 %1437
          %1439 = vrot.lane.b32.xlu0 %v976, 32
          %v1440 = vpop.permute.xlu0 %1439
          %1441 = vrot.lane.b32.xlu0 %v977, 32
          %v1442 = vpop.permute.xlu0 %1441
          %v1444 = vsel %vm1006, %v1416, 0
          %v1447 = vsel %vm1006, %v1418, 0
          %v1450 = vsel %vm1006, %v1420, 0
          %v1453 = vsel %vm1006, %v1422, 0
          %v1456 = vsel %vm1006, %v1424, 0
          %v1459 = vsel %vm1006, %v1426, 0
          %v1462 = vsel %vm1006, %v1428, 0
          %v1465 = vsel %vm1006, %v1430, 0
          %v1468 = vsel %vm1006, %v1432, 0
          %v1471 = vsel %vm1006, %v1434, 0
          %v1474 = vsel %vm1006, %v1436, 0
          %v1477 = vsel %vm1006, %v1438, 0
          %v1480 = vsel %vm1006, %v1440, 0
          %v1483 = vsel %vm1006, %v1442, 0
          %1485 = vmatprep.subr.bf16.mxu0 0
          %1486 = vmatpush1.bf16.xpose.msra.mxu0 0
          %1487 = vmatprep.subr.bf16.mxu0 0
          %1488 = vmatpush1.bf16.xpose.msra.mxu0 %v1483
          %1489 = vmatprep.subr.bf16.mxu0 0
          %1490 = vmatpush1.bf16.xpose.msra.mxu0 %v1480
          %1491 = vmatprep.subr.bf16.mxu0 0
          %1492 = vmatpush1.bf16.xpose.msra.mxu0 %v1477
          %1493 = vmatprep.subr.bf16.mxu0 0
          %1494 = vmatpush1.bf16.xpose.msra.mxu0 %v1474
          %1495 = vmatprep.subr.bf16.mxu0 0
          %1496 = vmatpush1.bf16.xpose.msra.mxu0 %v1471
          %1497 = vmatprep.subr.bf16.mxu0 0
          %1498 = vmatpush1.bf16.xpose.msra.mxu0 %v1468
          %1499 = vmatprep.subr.bf16.mxu0 0
          %1500 = vmatpush1.bf16.xpose.msra.mxu0 %v1465
          %1501 = vmatprep.subr.bf16.mxu0 0
          %1502 = vmatpush2.bf16.xpose.msra.mxu0 0
          %1503 = vmatprep.subr.bf16.mxu0 0
          %1504 = vmatpush2.bf16.xpose.msra.mxu0 0
          %1505 = vmatprep.subr.bf16.mxu0 0
          %1506 = vmatpush2.bf16.xpose.msra.mxu0 0
          %1507 = vmatprep.subr.bf16.mxu0 0
          %1508 = vmatpush2.bf16.xpose.msra.mxu0 0
          %1509 = vmatprep.subr.bf16.mxu0 0
          %1510 = vmatpush2.bf16.xpose.msra.mxu0 0
          %1511 = vmatprep.subr.bf16.mxu0 0
          %1512 = vmatpush2.bf16.xpose.msra.mxu0 0
          %1513 = vmatprep.subr.bf16.mxu0 0
          %1514 = vmatpush2.bf16.xpose.msra.mxu0 0
          %1515 = vmatprep.subr.bf16.mxu0 0
          %1516 = vmatpush2.bf16.xpose.msra.mxu0 0
          %1517 = vmatprep.mubr.bf16.mxu0 0
          %1518 = vmatmul.mubr.bf16.gmra.mxu0 %v1444
          %v1519 = vpop.f32.mrf.mxu0
          %v1520 = vadd.f32 0.0, %v1519
          %v1521 = vpop.f32.mrf.mxu0
          %v1522 = vpop.f32.mrf.mxu0
          %v1523 = vadd.f32 0.0, %v1522
          %v1524 = vpop.f32.mrf.mxu0
          %1525 = vmatprep.mubr.bf16.mxu0 0
          %1526 = vmatmul.mubr.bf16.gmra.mxu0 %v1447
          %v1527 = vpop.f32.mrf.mxu0
          %v1528 = vadd.f32 0.0, %v1527
          %v1529 = vpop.f32.mrf.mxu0
          %v1530 = vpop.f32.mrf.mxu0
          %v1531 = vadd.f32 0.0, %v1530
          %v1532 = vpop.f32.mrf.mxu0
          %1533 = vmatprep.mubr.bf16.mxu0 0
          %1534 = vmatmul.mubr.bf16.gmra.mxu0 %v1450
          %v1535 = vpop.f32.mrf.mxu0
          %v1536 = vadd.f32 0.0, %v1535
          %v1537 = vpop.f32.mrf.mxu0
          %v1538 = vpop.f32.mrf.mxu0
          %v1539 = vadd.f32 0.0, %v1538
          %v1540 = vpop.f32.mrf.mxu0
          %1541 = vmatprep.mubr.bf16.mxu0 0
          %1542 = vmatmul.mubr.bf16.gmra.mxu0 %v1453
          %v1543 = vpop.f32.mrf.mxu0
          %v1544 = vadd.f32 0.0, %v1543
          %v1545 = vpop.f32.mrf.mxu0
          %v1546 = vpop.f32.mrf.mxu0
          %v1547 = vadd.f32 0.0, %v1546
          %v1548 = vpop.f32.mrf.mxu0
          %1549 = vmatprep.mubr.bf16.mxu0 0
          %1550 = vmatmul.mubr.bf16.gmra.mxu0 %v1456
          %v1551 = vpop.f32.mrf.mxu0
          %v1552 = vadd.f32 0.0, %v1551
          %v1553 = vpop.f32.mrf.mxu0
          %v1554 = vpop.f32.mrf.mxu0
          %v1555 = vadd.f32 0.0, %v1554
          %v1556 = vpop.f32.mrf.mxu0
          %1557 = vmatprep.mubr.bf16.mxu0 0
          %1558 = vmatmul.mubr.bf16.gmra.mxu0 %v1459
          %v1559 = vpop.f32.mrf.mxu0
          %v1560 = vadd.f32 0.0, %v1559
          %v1561 = vpop.f32.mrf.mxu0
          %v1562 = vpop.f32.mrf.mxu0
          %v1563 = vadd.f32 0.0, %v1562
          %v1564 = vpop.f32.mrf.mxu0
          %1565 = vmatprep.mubr.bf16.mxu0 0
          %1566 = vmatmul.mubr.bf16.gmra.mxu0 %v1462
          %v1567 = vpop.f32.mrf.mxu0
          %v1568 = vadd.f32 0.0, %v1567
          %v1569 = vpop.f32.mrf.mxu0
          %v1570 = vpop.f32.mrf.mxu0
          %v1571 = vpop.f32.mrf.mxu0
          %1572 = vdwg.mxu0
          %v1573 = vmul.f32 %v1520, 0.17677669
          %v1574 = vmul.f32 %v1523, 0.17677669
          %v1575 = vmul.f32 %v1528, 0.17677669
          %v1576 = vmul.f32 %v1531, 0.17677669
          %v1577 = vmul.f32 %v1536, 0.17677669
          %v1578 = vmul.f32 %v1539, 0.17677669
          %v1579 = vmul.f32 %v1544, 0.17677669
          %v1580 = vmul.f32 %v1547, 0.17677669
          %v1581 = vmul.f32 %v1552, 0.17677669
          %v1582 = vmul.f32 %v1555, 0.17677669
          %v1583 = vmul.f32 %v1560, 0.17677669
          %v1584 = vmul.f32 %v1563, 0.17677669
          %v1585 = vmul.f32 %v1568, 0.17677669
          %v1586 = vsel %vm1150, %v1573, -inf
          %1587 = vmax.xlane.f32.xlu0 %v1586
          %v1588 = vpop.xlane.xlu0 %1587
          %v1589 = vsel %vm1150, %v1574, -inf
          %1590 = vmax.xlane.f32.xlu0 %v1589
          %v1591 = vpop.xlane.xlu0 %1590
          %v1592 = vsel %vm1150, %v1575, -inf
          %1593 = vmax.xlane.f32.xlu0 %v1592
          %v1594 = vpop.xlane.xlu0 %1593
          %v1595 = vsel %vm1150, %v1576, -inf
          %1596 = vmax.xlane.f32.xlu0 %v1595
          %v1597 = vpop.xlane.xlu0 %1596
          %v1598 = vsel %vm1150, %v1577, -inf
          %1599 = vmax.xlane.f32.xlu0 %v1598
          %v1600 = vpop.xlane.xlu0 %1599
          %v1601 = vsel %vm1150, %v1578, -inf
          %1602 = vmax.xlane.f32.xlu0 %v1601
          %v1603 = vpop.xlane.xlu0 %1602
          %v1604 = vsel %vm1150, %v1579, -inf
          %1605 = vmax.xlane.f32.xlu0 %v1604
          %v1606 = vpop.xlane.xlu0 %1605
          %v1607 = vsel %vm1150, %v1580, -inf
          %1608 = vmax.xlane.f32.xlu0 %v1607
          %v1609 = vpop.xlane.xlu0 %1608
          %v1610 = vsel %vm1150, %v1581, -inf
          %1611 = vmax.xlane.f32.xlu0 %v1610
          %v1612 = vpop.xlane.xlu0 %1611
          %v1613 = vsel %vm1150, %v1582, -inf
          %1614 = vmax.xlane.f32.xlu0 %v1613
          %v1615 = vpop.xlane.xlu0 %1614
          %v1616 = vsel %vm1150, %v1583, -inf
          %1617 = vmax.xlane.f32.xlu0 %v1616
          %v1618 = vpop.xlane.xlu0 %1617
          %v1619 = vsel %vm1150, %v1584, -inf
          %1620 = vmax.xlane.f32.xlu0 %v1619
          %v1621 = vpop.xlane.xlu0 %1620
          %v1622 = vsel %vm1187, %v1585, -inf
          %1623 = vmax.xlane.f32.xlu0 %v1622
          %v1624 = vpop.xlane.xlu0 %1623
          %v1625 = vsub.f32 %v1573, %v1588
          %v1626 = vsub.f32 %v1574, %v1591
          %v1627 = vsub.f32 %v1575, %v1594
          %v1628 = vsub.f32 %v1576, %v1597
          %v1629 = vsub.f32 %v1577, %v1600
          %v1630 = vsub.f32 %v1578, %v1603
          %v1631 = vsub.f32 %v1579, %v1606
          %v1632 = vsub.f32 %v1580, %v1609
          %v1633 = vsub.f32 %v1581, %v1612
          %v1634 = vsub.f32 %v1582, %v1615
          %v1635 = vsub.f32 %v1583, %v1618
          %v1636 = vsub.f32 %v1584, %v1621
          %v1637 = vsub.f32 %v1585, %v1624
          %v1638 = vmul.f32 %v1625, 1.442695
          %v1639 = vpow.pop %v1638
          %v1640 = vmul.f32 %v1626, 1.442695
          %v1641 = vpow.pop %v1640
          %v1642 = vmul.f32 %v1627, 1.442695
          %v1643 = vpow.pop %v1642
          %v1644 = vmul.f32 %v1628, 1.442695
          %v1645 = vpow.pop %v1644
          %v1646 = vmul.f32 %v1629, 1.442695
          %v1647 = vpow.pop %v1646
          %v1648 = vmul.f32 %v1630, 1.442695
          %v1649 = vpow.pop %v1648
          %v1650 = vmul.f32 %v1631, 1.442695
          %v1651 = vpow.pop %v1650
          %v1652 = vmul.f32 %v1632, 1.442695
          %v1653 = vpow.pop %v1652
          %v1654 = vmul.f32 %v1633, 1.442695
          %v1655 = vpow.pop %v1654
          %v1656 = vmul.f32 %v1634, 1.442695
          %v1657 = vpow.pop %v1656
          %v1658 = vmul.f32 %v1635, 1.442695
          %v1659 = vpow.pop %v1658
          %v1660 = vmul.f32 %v1636, 1.442695
          %v1661 = vpow.pop %v1660
          %v1662 = vmul.f32 %v1637, 1.442695
          %v1663 = vpow.pop %v1662
          %v1664 = vsel %vm1150, %v1639, 0.0
          %1665 = vadd.xlane.f32.xlu0 %v1664
          %v1666 = vpop.xlane.xlu0 %1665
          %v1667 = vsel %vm1150, %v1641, 0.0
          %1668 = vadd.xlane.f32.xlu0 %v1667
          %v1669 = vpop.xlane.xlu0 %1668
          %v1670 = vsel %vm1150, %v1643, 0.0
          %1671 = vadd.xlane.f32.xlu0 %v1670
          %v1672 = vpop.xlane.xlu0 %1671
          %v1673 = vsel %vm1150, %v1645, 0.0
          %1674 = vadd.xlane.f32.xlu0 %v1673
          %v1675 = vpop.xlane.xlu0 %1674
          %v1676 = vsel %vm1150, %v1647, 0.0
          %1677 = vadd.xlane.f32.xlu0 %v1676
          %v1678 = vpop.xlane.xlu0 %1677
          %v1679 = vsel %vm1150, %v1649, 0.0
          %1680 = vadd.xlane.f32.xlu0 %v1679
          %v1681 = vpop.xlane.xlu0 %1680
          %v1682 = vsel %vm1150, %v1651, 0.0
          %1683 = vadd.xlane.f32.xlu0 %v1682
          %v1684 = vpop.xlane.xlu0 %1683
          %v1685 = vsel %vm1150, %v1653, 0.0
          %1686 = vadd.xlane.f32.xlu0 %v1685
          %v1687 = vpop.xlane.xlu0 %1686
          %v1688 = vsel %vm1150, %v1655, 0.0
          %1689 = vadd.xlane.f32.xlu0 %v1688
          %v1690 = vpop.xlane.xlu0 %1689
          %v1691 = vsel %vm1150, %v1657, 0.0
          %1692 = vadd.xlane.f32.xlu0 %v1691
          %v1693 = vpop.xlane.xlu0 %1692
          %v1694 = vsel %vm1150, %v1659, 0.0
          %1695 = vadd.xlane.f32.xlu0 %v1694
          %v1696 = vpop.xlane.xlu0 %1695
          %v1697 = vsel %vm1150, %v1661, 0.0
          %1698 = vadd.xlane.f32.xlu0 %v1697
          %v1699 = vpop.xlane.xlu0 %1698
          %v1700 = vsel %vm1187, %v1663, 0.0
          %1701 = vadd.xlane.f32.xlu0 %v1700
          %v1702 = vpop.xlane.xlu0 %1701
          %v1703 = vrcp.pop %v1666
          %v1704 = vrcp.pop %v1669
          %v1705 = vrcp.pop %v1672
          %v1706 = vrcp.pop %v1675
          %v1707 = vrcp.pop %v1678
          %v1708 = vrcp.pop %v1681
          %v1709 = vrcp.pop %v1684
          %v1710 = vrcp.pop %v1687
          %v1711 = vrcp.pop %v1690
          %v1712 = vrcp.pop %v1693
          %v1713 = vrcp.pop %v1696
          %v1714 = vrcp.pop %v1699
          %v1715 = vrcp.pop %v1702
          %v1716 = vmul.f32 %v1639, %v1703
          %v1717 = vmul.f32 %v1641, %v1704
          %v1718 = vmul.f32 %v1643, %v1705
          %v1719 = vmul.f32 %v1645, %v1706
          %v1720 = vmul.f32 %v1647, %v1707
          %v1721 = vmul.f32 %v1649, %v1708
          %v1722 = vmul.f32 %v1651, %v1709
          %v1723 = vmul.f32 %v1653, %v1710
          %v1724 = vmul.f32 %v1655, %v1711
          %v1725 = vmul.f32 %v1657, %v1712
          %v1726 = vmul.f32 %v1659, %v1713
          %v1727 = vmul.f32 %v1661, %v1714
          %v1728 = vmul.f32 %v1663, %v1715
          %v1729 = vpack.c.bf16 %v1717, %v1716
          %v1730 = vpack.c.bf16 %v1719, %v1718
          %v1731 = vpack.c.bf16 %v1721, %v1720
          %v1732 = vpack.c.bf16 %v1723, %v1722
          %v1733 = vpack.c.bf16 %v1725, %v1724
          %v1734 = vpack.c.bf16 %v1727, %v1726
          %v1735 = vpack.c.bf16 %v1728, %v1728
          %1743 = vrot.lane.b32.xlu0 %v978, 96
          %v1744 = vpop.permute.xlu0 %1743
          %1745 = vrot.lane.b32.xlu0 %v979, 96
          %v1746 = vpop.permute.xlu0 %1745
          %1747 = vrot.lane.b32.xlu0 %v980, 96
          %v1748 = vpop.permute.xlu0 %1747
          %1749 = vrot.lane.b32.xlu0 %v981, 96
          %v1750 = vpop.permute.xlu0 %1749
          %1751 = vrot.lane.b32.xlu0 %v982, 96
          %v1752 = vpop.permute.xlu0 %1751
          %1753 = vrot.lane.b32.xlu0 %v983, 96
          %v1754 = vpop.permute.xlu0 %1753
          %1755 = vrot.lane.b32.xlu0 %v984, 96
          %v1756 = vpop.permute.xlu0 %1755
          %v1764 = vsel %vm1150, %v1729, 0
          %v1767 = vsel %vm1150, %v1730, 0
          %v1770 = vsel %vm1150, %v1731, 0
          %v1773 = vsel %vm1150, %v1732, 0
          %v1776 = vsel %vm1150, %v1733, 0
          %v1779 = vsel %vm1150, %v1734, 0
          %v1782 = vsel %vm1150, %v1735, 0
          %v1785 = vsel %vm1323, %v1756, 0
          %1787 = vmatprep.subr.bf16.mxu0 0
          %1788 = vmatpush1.bf16.msra.mxu0 0
          %1789 = vmatprep.subr.bf16.mxu0 0
          %1790 = vmatpush1.bf16.msra.mxu0 %v1785
          %1791 = vmatprep.subr.bf16.mxu0 0
          %1792 = vmatpush1.bf16.msra.mxu0 %v1754
          %1793 = vmatprep.subr.bf16.mxu0 0
          %1794 = vmatpush1.bf16.msra.mxu0 %v1752
          %1795 = vmatprep.subr.bf16.mxu0 0
          %1796 = vmatpush1.bf16.msra.mxu0 %v1750
          %1797 = vmatprep.subr.bf16.mxu0 0
          %1798 = vmatpush1.bf16.msra.mxu0 %v1748
          %1799 = vmatprep.subr.bf16.mxu0 0
          %1800 = vmatpush1.bf16.msra.mxu0 %v1746
          %1801 = vmatprep.subr.bf16.mxu0 0
          %1802 = vmatpush1.bf16.msra.mxu0 %v1744
          %1803 = vmatprep.subr.bf16.mxu0 0
          %1804 = vmatpush2.bf16.msra.mxu0 0
          %1805 = vmatprep.subr.bf16.mxu0 0
          %1806 = vmatpush2.bf16.msra.mxu0 0
          %1807 = vmatprep.subr.bf16.mxu0 0
          %1808 = vmatpush2.bf16.msra.mxu0 0
          %1809 = vmatprep.subr.bf16.mxu0 0
          %1810 = vmatpush2.bf16.msra.mxu0 0
          %1811 = vmatprep.subr.bf16.mxu0 0
          %1812 = vmatpush2.bf16.msra.mxu0 0
          %1813 = vmatprep.subr.bf16.mxu0 0
          %1814 = vmatpush2.bf16.msra.mxu0 0
          %1815 = vmatprep.subr.bf16.mxu0 0
          %1816 = vmatpush2.bf16.msra.mxu0 0
          %1817 = vmatprep.subr.bf16.mxu0 0
          %1818 = vmatpush2.bf16.msra.mxu0 0
          %1819 = vmatprep.mubr.bf16.mxu0 0
          %1820 = vmatmul.mubr.bf16.gmra.mxu0 %v1764
          %v1821 = vpop.f32.mrf.mxu0
          %v1822 = vadd.f32 0.0, %v1821
          %v1823 = vpop.f32.mrf.mxu0
          %v1824 = vpop.f32.mrf.mxu0
          %v1825 = vadd.f32 0.0, %v1824
          %v1826 = vpop.f32.mrf.mxu0
          %1827 = vmatprep.mubr.bf16.mxu0 0
          %1828 = vmatmul.mubr.bf16.gmra.mxu0 %v1767
          %v1829 = vpop.f32.mrf.mxu0
          %v1830 = vadd.f32 0.0, %v1829
          %v1831 = vpop.f32.mrf.mxu0
          %v1832 = vpop.f32.mrf.mxu0
          %v1833 = vadd.f32 0.0, %v1832
          %v1834 = vpop.f32.mrf.mxu0
          %1835 = vmatprep.mubr.bf16.mxu0 0
          %1836 = vmatmul.mubr.bf16.gmra.mxu0 %v1770
          %v1837 = vpop.f32.mrf.mxu0
          %v1838 = vadd.f32 0.0, %v1837
          %v1839 = vpop.f32.mrf.mxu0
          %v1840 = vpop.f32.mrf.mxu0
          %v1841 = vadd.f32 0.0, %v1840
          %v1842 = vpop.f32.mrf.mxu0
          %1843 = vmatprep.mubr.bf16.mxu0 0
          %1844 = vmatmul.mubr.bf16.gmra.mxu0 %v1773
          %v1845 = vpop.f32.mrf.mxu0
          %v1846 = vadd.f32 0.0, %v1845
          %v1847 = vpop.f32.mrf.mxu0
          %v1848 = vpop.f32.mrf.mxu0
          %v1849 = vadd.f32 0.0, %v1848
          %v1850 = vpop.f32.mrf.mxu0
          %1851 = vmatprep.mubr.bf16.mxu0 0
          %1852 = vmatmul.mubr.bf16.gmra.mxu0 %v1776
          %v1853 = vpop.f32.mrf.mxu0
          %v1854 = vadd.f32 0.0, %v1853
          %v1855 = vpop.f32.mrf.mxu0
          %v1856 = vpop.f32.mrf.mxu0
          %v1857 = vadd.f32 0.0, %v1856
          %v1858 = vpop.f32.mrf.mxu0
          %1859 = vmatprep.mubr.bf16.mxu0 0
          %1860 = vmatmul.mubr.bf16.gmra.mxu0 %v1779
          %v1861 = vpop.f32.mrf.mxu0
          %v1862 = vadd.f32 0.0, %v1861
          %v1863 = vpop.f32.mrf.mxu0
          %v1864 = vpop.f32.mrf.mxu0
          %v1865 = vadd.f32 0.0, %v1864
          %v1866 = vpop.f32.mrf.mxu0
          %1867 = vmatprep.mubr.bf16.mxu0 0
          %1868 = vmatmul.mubr.bf16.gmra.mxu0 %v1782
          %v1869 = vpop.f32.mrf.mxu0
          %v1870 = vadd.f32 0.0, %v1869
          %v1871 = vpop.f32.mrf.mxu0
          %v1872 = vpop.f32.mrf.mxu0
          %v1873 = vpop.f32.mrf.mxu0
          %1874 = vdwg.mxu0
          %1888 = vrot.lane.b32.xlu0 %v1822, 32
          %v1889 = vpop.permute.xlu0 %1888
          %1890 = vrot.lane.b32.xlu0 %v1825, 32
          %v1891 = vpop.permute.xlu0 %1890
          %1892 = vrot.lane.b32.xlu0 %v1830, 32
          %v1893 = vpop.permute.xlu0 %1892
          %1894 = vrot.lane.b32.xlu0 %v1833, 32
          %v1895 = vpop.permute.xlu0 %1894
          %1896 = vrot.lane.b32.xlu0 %v1838, 32
          %v1897 = vpop.permute.xlu0 %1896
          %1898 = vrot.lane.b32.xlu0 %v1841, 32
          %v1899 = vpop.permute.xlu0 %1898
          %1900 = vrot.lane.b32.xlu0 %v1846, 32
          %v1901 = vpop.permute.xlu0 %1900
          %1902 = vrot.lane.b32.xlu0 %v1849, 32
          %v1903 = vpop.permute.xlu0 %1902
          %1904 = vrot.lane.b32.xlu0 %v1854, 32
          %v1905 = vpop.permute.xlu0 %1904
          %1906 = vrot.lane.b32.xlu0 %v1857, 32
          %v1907 = vpop.permute.xlu0 %1906
          %1908 = vrot.lane.b32.xlu0 %v1862, 32
          %v1909 = vpop.permute.xlu0 %1908
          %1910 = vrot.lane.b32.xlu0 %v1865, 32
          %v1911 = vpop.permute.xlu0 %1910
          %1912 = vrot.lane.b32.xlu0 %v1870, 32
          %v1913 = vpop.permute.xlu0 %1912
          %v1927 = vsel %vm1006, %v1362, %v1889
          %v1928 = vsel %vm1006, %v1365, %v1891
          %v1929 = vsel %vm1006, %v1370, %v1893
          %v1930 = vsel %vm1006, %v1373, %v1895
          %v1931 = vsel %vm1006, %v1378, %v1897
          %v1932 = vsel %vm1006, %v1381, %v1899
          %v1933 = vsel %vm1006, %v1386, %v1901
          %v1934 = vsel %vm1006, %v1389, %v1903
          %v1935 = vsel %vm1006, %v1394, %v1905
          %v1936 = vsel %vm1006, %v1397, %v1907
          %v1937 = vsel %vm1006, %v1402, %v1909
          %v1938 = vsel %vm1006, %v1405, %v1911
          %v1939 = vsel %vm1006, %v1410, %v1913
          %v1940 = vpack.c.bf16 %v1928, %v1927
          %v1941 = vpack.c.bf16 %v1930, %v1929
          %v1942 = vpack.c.bf16 %v1932, %v1931
          %v1943 = vpack.c.bf16 %v1934, %v1933
          %v1944 = vpack.c.bf16 %v1936, %v1935
          %v1945 = vpack.c.bf16 %v1938, %v1937
          %v1946 = vpack.c.bf16 %v1939, %v1939
          %v1947 = vld [vmem:[%s4] sm:$0xf]
          %v1948 = vld [vmem:[%s4 + $0x4] sm:$0xf]
          %v1949 = vld [vmem:[%s4 + $0x8] sm:$0xf]
          %v1950 = vld [vmem:[%s4 + $0xc] sm:$0xf]
          %v1951 = vld [vmem:[%s4 + $0x10] sm:$0xf]
          %v1952 = vld [vmem:[%s4 + $0x14] sm:$0xf]
          %v1953 = vld [vmem:[%s4 + $0x18] sm:$0xf]
          %v1954 = vld [vmem:[%s4 + $0x1c] sm:$0xf]
          %v1955 = vld [vmem:[%s5] sm:$0x1]
          %v1957 = vlaneseq
          %v1958 = vshrl.u32 %v1957, 7
          %v1959 = vsub.s32 0, %v1958
          %v1960 = vrot.slane %v1955, %v1959
          %v1970 = vunpack.c.l.b16 %v1947
          %v1971 = vunpack.c.l.b16 %v1948
          %v1972 = vunpack.c.l.b16 %v1949
          %v1973 = vunpack.c.l.b16 %v1950
          %v1974 = vunpack.c.l.b16 %v1951
          %v1975 = vunpack.c.l.b16 %v1952
          %v1976 = vunpack.c.l.b16 %v1953
          %v1977 = vunpack.c.l.b16 %v1954
          %v1978 = vpack.c.b16 %v1971, %v1970
          %v1979 = vpack.c.b16 %v1973, %v1972
          %v1980 = vpack.c.b16 %v1975, %v1974
          %v1981 = vpack.c.b16 %v1977, %v1976
          %v1987 = vsel %vm848, %v1940, 0
          %v1990 = vsel %vm848, %v1941, 0
          %v1993 = vsel %vm848, %v1942, 0
          %v1996 = vsel %vm848, %v1943, 0
          %v1999 = vsel %vm848, %v1944, 0
          %v2002 = vsel %vm848, %v1945, 0
          %v2005 = vsel %vm848, %v1946, 0
          %2007 = vmatprep.subr.bf16.mxu0 0
          %2008 = vmatpush1.bf16.msra.mxu0 0
          %2009 = vmatprep.subr.bf16.mxu0 0
          %2010 = vmatpush1.bf16.msra.mxu0 0
          %2011 = vmatprep.subr.bf16.mxu0 0
          %2012 = vmatpush1.bf16.msra.mxu0 0
          %2013 = vmatprep.subr.bf16.mxu0 0
          %2014 = vmatpush1.bf16.msra.mxu0 0
          %2015 = vmatprep.subr.bf16.mxu0 0
          %2016 = vmatpush1.bf16.msra.mxu0 %v1981
          %2017 = vmatprep.subr.bf16.mxu0 0
          %2018 = vmatpush1.bf16.msra.mxu0 %v1980
          %2019 = vmatprep.subr.bf16.mxu0 0
          %2020 = vmatpush1.bf16.msra.mxu0 %v1979
          %2021 = vmatprep.subr.bf16.mxu0 0
          %2022 = vmatpush1.bf16.msra.mxu0 %v1978
          %2023 = vmatprep.subr.bf16.mxu0 0
          %2024 = vmatpush2.bf16.msra.mxu0 0
          %2025 = vmatprep.subr.bf16.mxu0 0
          %2026 = vmatpush2.bf16.msra.mxu0 0
          %2027 = vmatprep.subr.bf16.mxu0 0
          %2028 = vmatpush2.bf16.msra.mxu0 0
          %2029 = vmatprep.subr.bf16.mxu0 0
          %2030 = vmatpush2.bf16.msra.mxu0 0
          %2031 = vmatprep.subr.bf16.mxu0 0
          %2032 = vmatpush2.bf16.msra.mxu0 0
          %2033 = vmatprep.subr.bf16.mxu0 0
          %2034 = vmatpush2.bf16.msra.mxu0 0
          %2035 = vmatprep.subr.bf16.mxu0 0
          %2036 = vmatpush2.bf16.msra.mxu0 0
          %2037 = vmatprep.subr.bf16.mxu0 0
          %2038 = vmatpush2.bf16.msra.mxu0 0
          %2039 = vmatprep.mubr.bf16.mxu0 0
          %2040 = vmatmul.mubr.bf16.gmra.mxu0 %v1987
          %v2041 = vpop.f32.mrf.mxu0
          %v2042 = vadd.f32 %v1960, %v2041
          %v2043 = vpop.f32.mrf.mxu0
          %v2044 = vpop.f32.mrf.mxu0
          %v2045 = vadd.f32 %v1960, %v2044
          %v2046 = vpop.f32.mrf.mxu0
          %2047 = vmatprep.mubr.bf16.mxu0 0
          %2048 = vmatmul.mubr.bf16.gmra.mxu0 %v1990
          %v2049 = vpop.f32.mrf.mxu0
          %v2050 = vadd.f32 %v1960, %v2049
          %v2051 = vpop.f32.mrf.mxu0
          %v2052 = vpop.f32.mrf.mxu0
          %v2053 = vadd.f32 %v1960, %v2052
          %v2054 = vpop.f32.mrf.mxu0
          %2055 = vmatprep.mubr.bf16.mxu0 0
          %2056 = vmatmul.mubr.bf16.gmra.mxu0 %v1993
          %v2057 = vpop.f32.mrf.mxu0
          %v2058 = vadd.f32 %v1960, %v2057
          %v2059 = vpop.f32.mrf.mxu0
          %v2060 = vpop.f32.mrf.mxu0
          %v2061 = vadd.f32 %v1960, %v2060
          %v2062 = vpop.f32.mrf.mxu0
          %2063 = vmatprep.mubr.bf16.mxu0 0
          %2064 = vmatmul.mubr.bf16.gmra.mxu0 %v1996
          %v2065 = vpop.f32.mrf.mxu0
          %v2066 = vadd.f32 %v1960, %v2065
          %v2067 = vpop.f32.mrf.mxu0
          %v2068 = vpop.f32.mrf.mxu0
          %v2069 = vadd.f32 %v1960, %v2068
          %v2070 = vpop.f32.mrf.mxu0
          %2071 = vmatprep.mubr.bf16.mxu0 0
          %2072 = vmatmul.mubr.bf16.gmra.mxu0 %v1999
          %v2073 = vpop.f32.mrf.mxu0
          %v2074 = vadd.f32 %v1960, %v2073
          %v2075 = vpop.f32.mrf.mxu0
          %v2076 = vpop.f32.mrf.mxu0
          %v2077 = vadd.f32 %v1960, %v2076
          %v2078 = vpop.f32.mrf.mxu0
          %2079 = vmatprep.mubr.bf16.mxu0 0
          %2080 = vmatmul.mubr.bf16.gmra.mxu0 %v2002
          %v2081 = vpop.f32.mrf.mxu0
          %v2082 = vadd.f32 %v1960, %v2081
          %v2083 = vpop.f32.mrf.mxu0
          %v2084 = vpop.f32.mrf.mxu0
          %v2085 = vadd.f32 %v1960, %v2084
          %v2086 = vpop.f32.mrf.mxu0
          %2087 = vmatprep.mubr.bf16.mxu0 0
          %2088 = vmatmul.mubr.bf16.gmra.mxu0 %v2005
          %v2089 = vpop.f32.mrf.mxu0
          %v2090 = vadd.f32 %v1960, %v2089
          %v2091 = vpop.f32.mrf.mxu0
          %v2092 = vpop.f32.mrf.mxu0
          %v2093 = vpop.f32.mrf.mxu0
          %2094 = vdwg.mxu0
          %v2095 = vadd.f32 %v766, %v2042
          %v2096 = vadd.f32 %v767, %v2045
          %v2097 = vadd.f32 %v768, %v2050
          %v2098 = vadd.f32 %v769, %v2053
          %v2099 = vadd.f32 %v770, %v2058
          %v2100 = vadd.f32 %v771, %v2061
          %v2101 = vadd.f32 %v772, %v2066
          %v2102 = vadd.f32 %v773, %v2069
          %v2103 = vadd.f32 %v774, %v2074
          %v2104 = vadd.f32 %v775, %v2077
          %v2105 = vadd.f32 %v776, %v2082
          %v2106 = vadd.f32 %v777, %v2085
          %v2107 = vadd.f32 %v778, %v2090
          %v2108 = vld [vmem:[%s6] sm:$0x1]
          %v2109 = vld [vmem:[%s7] sm:$0x1]
          %v2110 = vsel %vm848, %v2095, 0.0
          %2111 = vadd.xlane.f32.xlu0 %v2110
          %v2112 = vpop.xlane.xlu0 %2111
          %v2113 = vsel %vm848, %v2096, 0.0
          %2114 = vadd.xlane.f32.xlu0 %v2113
          %v2115 = vpop.xlane.xlu0 %2114
          %v2116 = vsel %vm848, %v2097, 0.0
          %2117 = vadd.xlane.f32.xlu0 %v2116
          %v2118 = vpop.xlane.xlu0 %2117
          %v2119 = vsel %vm848, %v2098, 0.0
          %2120 = vadd.xlane.f32.xlu0 %v2119
          %v2121 = vpop.xlane.xlu0 %2120
          %v2122 = vsel %vm848, %v2099, 0.0
          %2123 = vadd.xlane.f32.xlu0 %v2122
          %v2124 = vpop.xlane.xlu0 %2123
          %v2125 = vsel %vm848, %v2100, 0.0
          %2126 = vadd.xlane.f32.xlu0 %v2125
          %v2127 = vpop.xlane.xlu0 %2126
          %v2128 = vsel %vm848, %v2101, 0.0
          %2129 = vadd.xlane.f32.xlu0 %v2128
          %v2130 = vpop.xlane.xlu0 %2129
          %v2131 = vsel %vm848, %v2102, 0.0
          %2132 = vadd.xlane.f32.xlu0 %v2131
          %v2133 = vpop.xlane.xlu0 %2132
          %v2134 = vsel %vm848, %v2103, 0.0
          %2135 = vadd.xlane.f32.xlu0 %v2134
          %v2136 = vpop.xlane.xlu0 %2135
          %v2137 = vsel %vm848, %v2104, 0.0
          %2138 = vadd.xlane.f32.xlu0 %v2137
          %v2139 = vpop.xlane.xlu0 %2138
          %v2140 = vsel %vm848, %v2105, 0.0
          %2141 = vadd.xlane.f32.xlu0 %v2140
          %v2142 = vpop.xlane.xlu0 %2141
          %v2143 = vsel %vm848, %v2106, 0.0
          %2144 = vadd.xlane.f32.xlu0 %v2143
          %v2145 = vpop.xlane.xlu0 %2144
          %vm2146 = vcmask 519168
          %v2147 = vsel %vm2146, %v2107, 0.0
          %2148 = vadd.xlane.f32.xlu0 %v2147
          %v2149 = vpop.xlane.xlu0 %2148
          %v2150 = vrcp.pop 64.0
          %v2151 = vmul.f32 %v2112, %v2150
          %v2152 = vmul.f32 %v2115, %v2150
          %v2153 = vmul.f32 %v2118, %v2150
          %v2154 = vmul.f32 %v2121, %v2150
          %v2155 = vmul.f32 %v2124, %v2150
          %v2156 = vmul.f32 %v2127, %v2150
          %v2157 = vmul.f32 %v2130, %v2150
          %v2158 = vmul.f32 %v2133, %v2150
          %v2159 = vmul.f32 %v2136, %v2150
          %v2160 = vmul.f32 %v2139, %v2150
          %v2161 = vmul.f32 %v2142, %v2150
          %v2162 = vmul.f32 %v2145, %v2150
          %v2163 = vmul.f32 %v2149, %v2150
          %v2164 = vsub.f32 %v2095, %v2151
          %v2165 = vsub.f32 %v2096, %v2152
          %v2166 = vsub.f32 %v2097, %v2153
          %v2167 = vsub.f32 %v2098, %v2154
          %v2168 = vsub.f32 %v2099, %v2155
          %v2169 = vsub.f32 %v2100, %v2156
          %v2170 = vsub.f32 %v2101, %v2157
          %v2171 = vsub.f32 %v2102, %v2158
          %v2172 = vsub.f32 %v2103, %v2159
          %v2173 = vsub.f32 %v2104, %v2160
          %v2174 = vsub.f32 %v2105, %v2161
          %v2175 = vsub.f32 %v2106, %v2162
          %v2176 = vsub.f32 %v2107, %v2163
          %v2177 = vmul.f32 %v2164, %v2164
          %v2178 = vmul.f32 %v2165, %v2165
          %v2179 = vmul.f32 %v2166, %v2166
          %v2180 = vmul.f32 %v2167, %v2167
          %v2181 = vmul.f32 %v2168, %v2168
          %v2182 = vmul.f32 %v2169, %v2169
          %v2183 = vmul.f32 %v2170, %v2170
          %v2184 = vmul.f32 %v2171, %v2171
          %v2185 = vmul.f32 %v2172, %v2172
          %v2186 = vmul.f32 %v2173, %v2173
          %v2187 = vmul.f32 %v2174, %v2174
          %v2188 = vmul.f32 %v2175, %v2175
          %v2189 = vmul.f32 %v2176, %v2176
          %v2190 = vsel %vm848, %v2177, 0.0
          %2191 = vadd.xlane.f32.xlu0 %v2190
          %v2192 = vpop.xlane.xlu0 %2191
          %v2193 = vsel %vm848, %v2178, 0.0
          %2194 = vadd.xlane.f32.xlu0 %v2193
          %v2195 = vpop.xlane.xlu0 %2194
          %v2196 = vsel %vm848, %v2179, 0.0
          %2197 = vadd.xlane.f32.xlu0 %v2196
          %v2198 = vpop.xlane.xlu0 %2197
          %v2199 = vsel %vm848, %v2180, 0.0
          %2200 = vadd.xlane.f32.xlu0 %v2199
          %v2201 = vpop.xlane.xlu0 %2200
          %v2202 = vsel %vm848, %v2181, 0.0
          %2203 = vadd.xlane.f32.xlu0 %v2202
          %v2204 = vpop.xlane.xlu0 %2203
          %v2205 = vsel %vm848, %v2182, 0.0
          %2206 = vadd.xlane.f32.xlu0 %v2205
          %v2207 = vpop.xlane.xlu0 %2206
          %v2208 = vsel %vm848, %v2183, 0.0
          %2209 = vadd.xlane.f32.xlu0 %v2208
          %v2210 = vpop.xlane.xlu0 %2209
          %v2211 = vsel %vm848, %v2184, 0.0
          %2212 = vadd.xlane.f32.xlu0 %v2211
          %v2213 = vpop.xlane.xlu0 %2212
          %v2214 = vsel %vm848, %v2185, 0.0
          %2215 = vadd.xlane.f32.xlu0 %v2214
          %v2216 = vpop.xlane.xlu0 %2215
          %v2217 = vsel %vm848, %v2186, 0.0
          %2218 = vadd.xlane.f32.xlu0 %v2217
          %v2219 = vpop.xlane.xlu0 %2218
          %v2220 = vsel %vm848, %v2187, 0.0
          %2221 = vadd.xlane.f32.xlu0 %v2220
          %v2222 = vpop.xlane.xlu0 %2221
          %v2223 = vsel %vm848, %v2188, 0.0
          %2224 = vadd.xlane.f32.xlu0 %v2223
          %v2225 = vpop.xlane.xlu0 %2224
          %v2226 = vsel %vm2146, %v2189, 0.0
          %2227 = vadd.xlane.f32.xlu0 %v2226
          %v2228 = vpop.xlane.xlu0 %2227
          %v2229 = vmul.f32 %v2192, %v2150
          %v2230 = vmul.f32 %v2195, %v2150
          %v2231 = vmul.f32 %v2198, %v2150
          %v2232 = vmul.f32 %v2201, %v2150
          %v2233 = vmul.f32 %v2204, %v2150
          %v2234 = vmul.f32 %v2207, %v2150
          %v2235 = vmul.f32 %v2210, %v2150
          %v2236 = vmul.f32 %v2213, %v2150
          %v2237 = vmul.f32 %v2216, %v2150
          %v2238 = vmul.f32 %v2219, %v2150
          %v2239 = vmul.f32 %v2222, %v2150
          %v2240 = vmul.f32 %v2225, %v2150
          %v2241 = vmul.f32 %v2228, %v2150
          %v2242 = vadd.f32 %v2229, 1e-05
          %v2243 = vadd.f32 %v2230, 1e-05
          %v2244 = vadd.f32 %v2231, 1e-05
          %v2245 = vadd.f32 %v2232, 1e-05
          %v2246 = vadd.f32 %v2233, 1e-05
          %v2247 = vadd.f32 %v2234, 1e-05
          %v2248 = vadd.f32 %v2235, 1e-05
          %v2249 = vadd.f32 %v2236, 1e-05
          %v2250 = vadd.f32 %v2237, 1e-05
          %v2251 = vadd.f32 %v2238, 1e-05
          %v2252 = vadd.f32 %v2239, 1e-05
          %v2253 = vadd.f32 %v2240, 1e-05
          %v2254 = vadd.f32 %v2241, 1e-05
          %v2255 = vrsqrt.pop %v2242
          %v2256 = vrsqrt.pop %v2243
          %v2257 = vrsqrt.pop %v2244
          %v2258 = vrsqrt.pop %v2245
          %v2259 = vrsqrt.pop %v2246
          %v2260 = vrsqrt.pop %v2247
          %v2261 = vrsqrt.pop %v2248
          %v2262 = vrsqrt.pop %v2249
          %v2263 = vrsqrt.pop %v2250
          %v2264 = vrsqrt.pop %v2251
          %v2265 = vrsqrt.pop %v2252
          %v2266 = vrsqrt.pop %v2253
          %v2267 = vrsqrt.pop %v2254
          %v2268 = vmul.f32 %v2164, %v2255
          %v2269 = vmul.f32 %v2165, %v2256
          %v2270 = vmul.f32 %v2166, %v2257
          %v2271 = vmul.f32 %v2167, %v2258
          %v2272 = vmul.f32 %v2168, %v2259
          %v2273 = vmul.f32 %v2169, %v2260
          %v2274 = vmul.f32 %v2170, %v2261
          %v2275 = vmul.f32 %v2171, %v2262
          %v2276 = vmul.f32 %v2172, %v2263
          %v2277 = vmul.f32 %v2173, %v2264
          %v2278 = vmul.f32 %v2174, %v2265
          %v2279 = vmul.f32 %v2175, %v2266
          %v2280 = vmul.f32 %v2176, %v2267
          %v2282 = vlaneseq
          %v2283 = vshrl.u32 %v2282, 7
          %v2284 = vsub.s32 0, %v2283
          %v2285 = vrot.slane %v2108, %v2284
          %v2287 = vmul.f32 %v2268, %v2285
          %v2288 = vmul.f32 %v2269, %v2285
          %v2289 = vmul.f32 %v2270, %v2285
          %v2290 = vmul.f32 %v2271, %v2285
          %v2291 = vmul.f32 %v2272, %v2285
          %v2292 = vmul.f32 %v2273, %v2285
          %v2293 = vmul.f32 %v2274, %v2285
          %v2294 = vmul.f32 %v2275, %v2285
          %v2295 = vmul.f32 %v2276, %v2285
          %v2296 = vmul.f32 %v2277, %v2285
          %v2297 = vmul.f32 %v2278, %v2285
          %v2298 = vmul.f32 %v2279, %v2285
          %v2299 = vmul.f32 %v2280, %v2285
          %v2301 = vlaneseq
          %v2302 = vshrl.u32 %v2301, 7
          %v2303 = vsub.s32 0, %v2302
          %v2304 = vrot.slane %v2109, %v2303
          %v2306 = vadd.f32 %v2287, %v2304
          %v2307 = vadd.f32 %v2288, %v2304
          %v2308 = vadd.f32 %v2289, %v2304
          %v2309 = vadd.f32 %v2290, %v2304
          %v2310 = vadd.f32 %v2291, %v2304
          %v2311 = vadd.f32 %v2292, %v2304
          %v2312 = vadd.f32 %v2293, %v2304
          %v2313 = vadd.f32 %v2294, %v2304
          %v2314 = vadd.f32 %v2295, %v2304
          %v2315 = vadd.f32 %v2296, %v2304
          %v2316 = vadd.f32 %v2297, %v2304
          %v2317 = vadd.f32 %v2298, %v2304
          %v2318 = vadd.f32 %v2299, %v2304
          %v2319 = vpack.c.bf16 %v2307, %v2306
          %v2320 = vpack.c.bf16 %v2309, %v2308
          %v2321 = vpack.c.bf16 %v2311, %v2310
          %v2322 = vpack.c.bf16 %v2313, %v2312
          %v2323 = vpack.c.bf16 %v2315, %v2314
          %v2324 = vpack.c.bf16 %v2317, %v2316
          %v2325 = vpack.c.bf16 %v2318, %v2318
          %v2326 = vld [vmem:[%s8] sm:$0xf]
          %v2327 = vld [vmem:[%s8 + $0x4] sm:$0xf]
          %v2328 = vld [vmem:[%s8 + $0x8] sm:$0xf]
          %v2329 = vld [vmem:[%s8 + $0xc] sm:$0xf]
          %v2330 = vld [vmem:[%s8 + $0x10] sm:$0xf]
          %v2331 = vld [vmem:[%s8 + $0x14] sm:$0xf]
          %v2332 = vld [vmem:[%s8 + $0x18] sm:$0xf]
          %v2333 = vld [vmem:[%s8 + $0x1c] sm:$0xf]
          %v2334 = vld [vmem:[%s9] sm:$0x1]
          %v2336 = vlaneseq
          %v2337 = vshrl.u32 %v2336, 7
          %v2338 = vsub.s32 0, %v2337
          %v2339 = vrot.slane %v2334, %v2338
          %v2349 = vunpack.c.l.b16 %v2326
          %v2350 = vunpack.c.l.b16 %v2327
          %v2351 = vunpack.c.l.b16 %v2328
          %v2352 = vunpack.c.l.b16 %v2329
          %v2353 = vunpack.c.l.b16 %v2330
          %v2354 = vunpack.c.l.b16 %v2331
          %v2355 = vunpack.c.l.b16 %v2332
          %v2356 = vunpack.c.l.b16 %v2333
          %v2357 = vpack.c.b16 %v2350, %v2349
          %v2358 = vpack.c.b16 %v2352, %v2351
          %v2359 = vpack.c.b16 %v2354, %v2353
          %v2360 = vpack.c.b16 %v2356, %v2355
          %v2366 = vsel %vm848, %v2319, 0
          %v2369 = vsel %vm848, %v2320, 0
          %v2372 = vsel %vm848, %v2321, 0
          %v2375 = vsel %vm848, %v2322, 0
          %v2378 = vsel %vm848, %v2323, 0
          %v2381 = vsel %vm848, %v2324, 0
          %v2384 = vsel %vm848, %v2325, 0
          %2386 = vmatprep.subr.bf16.mxu0 0
          %2387 = vmatpush1.bf16.msra.mxu0 0
          %2388 = vmatprep.subr.bf16.mxu0 0
          %2389 = vmatpush1.bf16.msra.mxu0 0
          %2390 = vmatprep.subr.bf16.mxu0 0
          %2391 = vmatpush1.bf16.msra.mxu0 0
          %2392 = vmatprep.subr.bf16.mxu0 0
          %2393 = vmatpush1.bf16.msra.mxu0 0
          %2394 = vmatprep.subr.bf16.mxu0 0
          %2395 = vmatpush1.bf16.msra.mxu0 %v2360
          %2396 = vmatprep.subr.bf16.mxu0 0
          %2397 = vmatpush1.bf16.msra.mxu0 %v2359
          %2398 = vmatprep.subr.bf16.mxu0 0
          %2399 = vmatpush1.bf16.msra.mxu0 %v2358
          %2400 = vmatprep.subr.bf16.mxu0 0
          %2401 = vmatpush1.bf16.msra.mxu0 %v2357
          %2402 = vmatprep.subr.bf16.mxu0 0
          %2403 = vmatpush2.bf16.msra.mxu0 0
          %2404 = vmatprep.subr.bf16.mxu0 0
          %2405 = vmatpush2.bf16.msra.mxu0 0
          %2406 = vmatprep.subr.bf16.mxu0 0
          %2407 = vmatpush2.bf16.msra.mxu0 0
          %2408 = vmatprep.subr.bf16.mxu0 0
          %2409 = vmatpush2.bf16.msra.mxu0 0
          %2410 = vmatprep.subr.bf16.mxu0 0
          %2411 = vmatpush2.bf16.msra.mxu0 0
          %2412 = vmatprep.subr.bf16.mxu0 0
          %2413 = vmatpush2.bf16.msra.mxu0 0
          %2414 = vmatprep.subr.bf16.mxu0 0
          %2415 = vmatpush2.bf16.msra.mxu0 0
          %2416 = vmatprep.subr.bf16.mxu0 0
          %2417 = vmatpush2.bf16.msra.mxu0 0
          %2418 = vmatprep.mubr.bf16.mxu0 0
          %2419 = vmatmul.mubr.bf16.gmra.mxu0 %v2366
          %v2420 = vpop.f32.mrf.mxu0
          %v2421 = vadd.f32 %v2339, %v2420
          %v2422 = vpop.f32.mrf.mxu0
          %v2423 = vpop.f32.mrf.mxu0
          %v2424 = vadd.f32 %v2339, %v2423
          %v2425 = vpop.f32.mrf.mxu0
          %2426 = vmatprep.mubr.bf16.mxu0 0
          %2427 = vmatmul.mubr.bf16.gmra.mxu0 %v2369
          %v2428 = vpop.f32.mrf.mxu0
          %v2429 = vadd.f32 %v2339, %v2428
          %v2430 = vpop.f32.mrf.mxu0
          %v2431 = vpop.f32.mrf.mxu0
          %v2432 = vadd.f32 %v2339, %v2431
          %v2433 = vpop.f32.mrf.mxu0
          %2434 = vmatprep.mubr.bf16.mxu0 0
          %2435 = vmatmul.mubr.bf16.gmra.mxu0 %v2372
          %v2436 = vpop.f32.mrf.mxu0
          %v2437 = vadd.f32 %v2339, %v2436
          %v2438 = vpop.f32.mrf.mxu0
          %v2439 = vpop.f32.mrf.mxu0
          %v2440 = vadd.f32 %v2339, %v2439
          %v2441 = vpop.f32.mrf.mxu0
          %2442 = vmatprep.mubr.bf16.mxu0 0
          %2443 = vmatmul.mubr.bf16.gmra.mxu0 %v2375
          %v2444 = vpop.f32.mrf.mxu0
          %v2445 = vadd.f32 %v2339, %v2444
          %v2446 = vpop.f32.mrf.mxu0
          %v2447 = vpop.f32.mrf.mxu0
          %v2448 = vadd.f32 %v2339, %v2447
          %v2449 = vpop.f32.mrf.mxu0
          %2450 = vmatprep.mubr.bf16.mxu0 0
          %2451 = vmatmul.mubr.bf16.gmra.mxu0 %v2378
          %v2452 = vpop.f32.mrf.mxu0
          %v2453 = vadd.f32 %v2339, %v2452
          %v2454 = vpop.f32.mrf.mxu0
          %v2455 = vpop.f32.mrf.mxu0
          %v2456 = vadd.f32 %v2339, %v2455
          %v2457 = vpop.f32.mrf.mxu0
          %2458 = vmatprep.mubr.bf16.mxu0 0
          %2459 = vmatmul.mubr.bf16.gmra.mxu0 %v2381
          %v2460 = vpop.f32.mrf.mxu0
          %v2461 = vadd.f32 %v2339, %v2460
          %v2462 = vpop.f32.mrf.mxu0
          %v2463 = vpop.f32.mrf.mxu0
          %v2464 = vadd.f32 %v2339, %v2463
          %v2465 = vpop.f32.mrf.mxu0
          %2466 = vmatprep.mubr.bf16.mxu0 0
          %2467 = vmatmul.mubr.bf16.gmra.mxu0 %v2384
          %v2468 = vpop.f32.mrf.mxu0
          %v2469 = vadd.f32 %v2339, %v2468
          %v2470 = vpop.f32.mrf.mxu0
          %v2471 = vpop.f32.mrf.mxu0
          %v2472 = vpop.f32.mrf.mxu0
          %2473 = vdwg.mxu0
          %v2474 = vpack.c.bf16 %v780, %v779
          %v2475 = vld [vmem:[%s10] sm:$0xf]
          %v2476 = vld [vmem:[%s10 + $0x4] sm:$0xf]
          %v2477 = vld [vmem:[%s10 + $0x8] sm:$0xf]
          %v2478 = vld [vmem:[%s10 + $0xc] sm:$0xf]
          %v2479 = vld [vmem:[%s10 + $0x10] sm:$0xf]
          %v2480 = vld [vmem:[%s10 + $0x14] sm:$0xf]
          %v2481 = vld [vmem:[%s10 + $0x18] sm:$0xf]
          %v2482 = vld [vmem:[%s10 + $0x1c] sm:$0xf]
          %v2483 = vld [vmem:[%s11] sm:$0x1]
          %v2485 = vlaneseq
          %v2486 = vshrl.u32 %v2485, 7
          %v2487 = vsub.s32 0, %v2486
          %v2488 = vrot.slane %v2483, %v2487
          %v2498 = vunpack.c.l.b16 %v2475
          %v2499 = vunpack.c.l.b16 %v2476
          %v2500 = vunpack.c.l.b16 %v2477
          %v2501 = vunpack.c.l.b16 %v2478
          %v2502 = vunpack.c.l.b16 %v2479
          %v2503 = vunpack.c.l.b16 %v2480
          %v2504 = vunpack.c.l.b16 %v2481
          %v2505 = vunpack.c.l.b16 %v2482
          %v2506 = vpack.c.b16 %v2499, %v2498
          %v2507 = vpack.c.b16 %v2501, %v2500
          %v2508 = vpack.c.b16 %v2503, %v2502
          %v2509 = vpack.c.b16 %v2505, %v2504
          %v2515 = vsel %vm848, %v2474, 0
          %2517 = vmatprep.subr.bf16.mxu0 0
          %2518 = vmatpush1.bf16.msra.mxu0 0
          %2519 = vmatprep.subr.bf16.mxu0 0
          %2520 = vmatpush1.bf16.msra.mxu0 0
          %2521 = vmatprep.subr.bf16.mxu0 0
          %2522 = vmatpush1.bf16.msra.mxu0 0
          %2523 = vmatprep.subr.bf16.mxu0 0
          %2524 = vmatpush1.bf16.msra.mxu0 0
          %2525 = vmatprep.subr.bf16.mxu0 0
          %2526 = vmatpush1.bf16.msra.mxu0 %v2509
          %2527 = vmatprep.subr.bf16.mxu0 0
          %2528 = vmatpush1.bf16.msra.mxu0 %v2508
          %2529 = vmatprep.subr.bf16.mxu0 0
          %2530 = vmatpush1.bf16.msra.mxu0 %v2507
          %2531 = vmatprep.subr.bf16.mxu0 0
          %2532 = vmatpush1.bf16.msra.mxu0 %v2506
          %2533 = vmatprep.subr.bf16.mxu0 0
          %2534 = vmatpush2.bf16.msra.mxu0 0
          %2535 = vmatprep.subr.bf16.mxu0 0
          %2536 = vmatpush2.bf16.msra.mxu0 0
          %2537 = vmatprep.subr.bf16.mxu0 0
          %2538 = vmatpush2.bf16.msra.mxu0 0
          %2539 = vmatprep.subr.bf16.mxu0 0
          %2540 = vmatpush2.bf16.msra.mxu0 0
          %2541 = vmatprep.subr.bf16.mxu0 0
          %2542 = vmatpush2.bf16.msra.mxu0 0
          %2543 = vmatprep.subr.bf16.mxu0 0
          %2544 = vmatpush2.bf16.msra.mxu0 0
          %2545 = vmatprep.subr.bf16.mxu0 0
          %2546 = vmatpush2.bf16.msra.mxu0 0
          %2547 = vmatprep.subr.bf16.mxu0 0
          %2548 = vmatpush2.bf16.msra.mxu0 0
          %2549 = vmatprep.mubr.bf16.mxu0 0
          %2550 = vmatmul.mubr.bf16.gmra.mxu0 %v2515
          %v2551 = vpop.f32.mrf.mxu0
          %v2552 = vadd.f32 %v2488, %v2551
          %v2553 = vpop.f32.mrf.mxu0
          %v2554 = vpop.f32.mrf.mxu0
          %v2555 = vadd.f32 %v2488, %v2554
          %v2556 = vpop.f32.mrf.mxu0
          %2557 = vdwg.mxu0
          %v2558 = vpack.c.bf16 %v2424, %v2421
          %v2559 = vpack.c.bf16 %v2432, %v2429
          %v2560 = vpack.c.bf16 %v2440, %v2437
          %v2561 = vpack.c.bf16 %v2448, %v2445
          %v2562 = vpack.c.bf16 %v2456, %v2453
          %v2563 = vpack.c.bf16 %v2464, %v2461
          %v2564 = vpack.c.bf16 %v2469, %v2469
          %v2565 = vpack.c.bf16 %v2555, %v2552
          %v2567 = vsel %vm1006, %v2558, 0
          %v2570 = vsel %vm1006, %v2559, 0
          %v2573 = vsel %vm1006, %v2560, 0
          %v2576 = vsel %vm1006, %v2561, 0
          %v2579 = vsel %vm1006, %v2562, 0
          %v2582 = vsel %vm1006, %v2563, 0
          %v2585 = vsel %vm1006, %v2564, 0
          %v2588 = vsel %vm1006, %v2565, 0
          %2590 = vmatprep.subr.bf16.mxu0 0
          %2591 = vmatpush1.bf16.xpose.msra.mxu0 0
          %2592 = vmatprep.subr.bf16.mxu0 0
          %2593 = vmatpush1.bf16.xpose.msra.mxu0 0
          %2594 = vmatprep.subr.bf16.mxu0 0
          %2595 = vmatpush1.bf16.xpose.msra.mxu0 0
          %2596 = vmatprep.subr.bf16.mxu0 0
          %2597 = vmatpush1.bf16.xpose.msra.mxu0 0
          %2598 = vmatprep.subr.bf16.mxu0 0
          %2599 = vmatpush1.bf16.xpose.msra.mxu0 0
          %2600 = vmatprep.subr.bf16.mxu0 0
          %2601 = vmatpush1.bf16.xpose.msra.mxu0 0
          %2602 = vmatprep.subr.bf16.mxu0 0
          %2603 = vmatpush1.bf16.xpose.msra.mxu0 0
          %2604 = vmatprep.subr.bf16.mxu0 0
          %2605 = vmatpush1.bf16.xpose.msra.mxu0 %v2588
          %2606 = vmatprep.subr.bf16.mxu0 0
          %2607 = vmatpush2.bf16.xpose.msra.mxu0 0
          %2608 = vmatprep.subr.bf16.mxu0 0
          %2609 = vmatpush2.bf16.xpose.msra.mxu0 0
          %2610 = vmatprep.subr.bf16.mxu0 0
          %2611 = vmatpush2.bf16.xpose.msra.mxu0 0
          %2612 = vmatprep.subr.bf16.mxu0 0
          %2613 = vmatpush2.bf16.xpose.msra.mxu0 0
          %2614 = vmatprep.subr.bf16.mxu0 0
          %2615 = vmatpush2.bf16.xpose.msra.mxu0 0
          %2616 = vmatprep.subr.bf16.mxu0 0
          %2617 = vmatpush2.bf16.xpose.msra.mxu0 0
          %2618 = vmatprep.subr.bf16.mxu0 0
          %2619 = vmatpush2.bf16.xpose.msra.mxu0 0
          %2620 = vmatprep.subr.bf16.mxu0 0
          %2621 = vmatpush2.bf16.xpose.msra.mxu0 0
          %2622 = vmatprep.mubr.bf16.mxu0 0
          %2623 = vmatmul.mubr.bf16.gmra.mxu0 %v2567
          %v2624 = vpop.f32.mrf.mxu0
          %v2625 = vadd.f32 0.0, %v2624
          %v2626 = vpop.f32.mrf.mxu0
          %v2627 = vpop.f32.mrf.mxu0
          %v2628 = vadd.f32 0.0, %v2627
          %v2629 = vpop.f32.mrf.mxu0
          %2630 = vmatprep.mubr.bf16.mxu0 0
          %2631 = vmatmul.mubr.bf16.gmra.mxu0 %v2570
          %v2632 = vpop.f32.mrf.mxu0
          %v2633 = vadd.f32 0.0, %v2632
          %v2634 = vpop.f32.mrf.mxu0
          %v2635 = vpop.f32.mrf.mxu0
          %v2636 = vadd.f32 0.0, %v2635
          %v2637 = vpop.f32.mrf.mxu0
          %2638 = vmatprep.mubr.bf16.mxu0 0
          %2639 = vmatmul.mubr.bf16.gmra.mxu0 %v2573
          %v2640 = vpop.f32.mrf.mxu0
          %v2641 = vadd.f32 0.0, %v2640
          %v2642 = vpop.f32.mrf.mxu0
          %v2643 = vpop.f32.mrf.mxu0
          %v2644 = vadd.f32 0.0, %v2643
          %v2645 = vpop.f32.mrf.mxu0
          %2646 = vmatprep.mubr.bf16.mxu0 0
          %2647 = vmatmul.mubr.bf16.gmra.mxu0 %v2576
          %v2648 = vpop.f32.mrf.mxu0
          %v2649 = vadd.f32 0.0, %v2648
          %v2650 = vpop.f32.mrf.mxu0
          %v2651 = vpop.f32.mrf.mxu0
          %v2652 = vadd.f32 0.0, %v2651
          %v2653 = vpop.f32.mrf.mxu0
          %2654 = vmatprep.mubr.bf16.mxu0 0
          %2655 = vmatmul.mubr.bf16.gmra.mxu0 %v2579
          %v2656 = vpop.f32.mrf.mxu0
          %v2657 = vadd.f32 0.0, %v2656
          %v2658 = vpop.f32.mrf.mxu0
          %v2659 = vpop.f32.mrf.mxu0
          %v2660 = vadd.f32 0.0, %v2659
          %v2661 = vpop.f32.mrf.mxu0
          %2662 = vmatprep.mubr.bf16.mxu0 0
          %2663 = vmatmul.mubr.bf16.gmra.mxu0 %v2582
          %v2664 = vpop.f32.mrf.mxu0
          %v2665 = vadd.f32 0.0, %v2664
          %v2666 = vpop.f32.mrf.mxu0
          %v2667 = vpop.f32.mrf.mxu0
          %v2668 = vadd.f32 0.0, %v2667
          %v2669 = vpop.f32.mrf.mxu0
          %2670 = vmatprep.mubr.bf16.mxu0 0
          %2671 = vmatmul.mubr.bf16.gmra.mxu0 %v2585
          %v2672 = vpop.f32.mrf.mxu0
          %v2673 = vadd.f32 0.0, %v2672
          %v2674 = vpop.f32.mrf.mxu0
          %v2675 = vpop.f32.mrf.mxu0
          %v2676 = vpop.f32.mrf.mxu0
          %2677 = vdwg.mxu0
          %v2678 = vmul.f32 %v2625, 0.17677669
          %v2679 = vmul.f32 %v2628, 0.17677669
          %v2680 = vmul.f32 %v2633, 0.17677669
          %v2681 = vmul.f32 %v2636, 0.17677669
          %v2682 = vmul.f32 %v2641, 0.17677669
          %v2683 = vmul.f32 %v2644, 0.17677669
          %v2684 = vmul.f32 %v2649, 0.17677669
          %v2685 = vmul.f32 %v2652, 0.17677669
          %v2686 = vmul.f32 %v2657, 0.17677669
          %v2687 = vmul.f32 %v2660, 0.17677669
          %v2688 = vmul.f32 %v2665, 0.17677669
          %v2689 = vmul.f32 %v2668, 0.17677669
          %v2690 = vmul.f32 %v2673, 0.17677669
          %vm2691 = vcmask 130048
          %v2692 = vsel %vm2691, %v2678, -inf
          %2693 = vmax.xlane.f32.xlu0 %v2692
          %v2694 = vpop.xlane.xlu0 %2693
          %v2695 = vsel %vm2691, %v2679, -inf
          %2696 = vmax.xlane.f32.xlu0 %v2695
          %v2697 = vpop.xlane.xlu0 %2696
          %v2698 = vsel %vm2691, %v2680, -inf
          %2699 = vmax.xlane.f32.xlu0 %v2698
          %v2700 = vpop.xlane.xlu0 %2699
          %v2701 = vsel %vm2691, %v2681, -inf
          %2702 = vmax.xlane.f32.xlu0 %v2701
          %v2703 = vpop.xlane.xlu0 %2702
          %v2704 = vsel %vm2691, %v2682, -inf
          %2705 = vmax.xlane.f32.xlu0 %v2704
          %v2706 = vpop.xlane.xlu0 %2705
          %v2707 = vsel %vm2691, %v2683, -inf
          %2708 = vmax.xlane.f32.xlu0 %v2707
          %v2709 = vpop.xlane.xlu0 %2708
          %v2710 = vsel %vm2691, %v2684, -inf
          %2711 = vmax.xlane.f32.xlu0 %v2710
          %v2712 = vpop.xlane.xlu0 %2711
          %v2713 = vsel %vm2691, %v2685, -inf
          %2714 = vmax.xlane.f32.xlu0 %v2713
          %v2715 = vpop.xlane.xlu0 %2714
          %v2716 = vsel %vm2691, %v2686, -inf
          %2717 = vmax.xlane.f32.xlu0 %v2716
          %v2718 = vpop.xlane.xlu0 %2717
          %v2719 = vsel %vm2691, %v2687, -inf
          %2720 = vmax.xlane.f32.xlu0 %v2719
          %v2721 = vpop.xlane.xlu0 %2720
          %v2722 = vsel %vm2691, %v2688, -inf
          %2723 = vmax.xlane.f32.xlu0 %v2722
          %v2724 = vpop.xlane.xlu0 %2723
          %v2725 = vsel %vm2691, %v2689, -inf
          %2726 = vmax.xlane.f32.xlu0 %v2725
          %v2727 = vpop.xlane.xlu0 %2726
          %vm2728 = vcmask 125952
          %v2729 = vsel %vm2728, %v2690, -inf
          %2730 = vmax.xlane.f32.xlu0 %v2729
          %v2731 = vpop.xlane.xlu0 %2730
          %v2732 = vsub.f32 %v2678, %v2694
          %v2733 = vsub.f32 %v2679, %v2697
          %v2734 = vsub.f32 %v2680, %v2700
          %v2735 = vsub.f32 %v2681, %v2703
          %v2736 = vsub.f32 %v2682, %v2706
          %v2737 = vsub.f32 %v2683, %v2709
          %v2738 = vsub.f32 %v2684, %v2712
          %v2739 = vsub.f32 %v2685, %v2715
          %v2740 = vsub.f32 %v2686, %v2718
          %v2741 = vsub.f32 %v2687, %v2721
          %v2742 = vsub.f32 %v2688, %v2724
          %v2743 = vsub.f32 %v2689, %v2727
          %v2744 = vsub.f32 %v2690, %v2731
          %v2745 = vmul.f32 %v2732, 1.442695
          %v2746 = vpow.pop %v2745
          %v2747 = vmul.f32 %v2733, 1.442695
          %v2748 = vpow.pop %v2747
          %v2749 = vmul.f32 %v2734, 1.442695
          %v2750 = vpow.pop %v2749
          %v2751 = vmul.f32 %v2735, 1.442695
          %v2752 = vpow.pop %v2751
          %v2753 = vmul.f32 %v2736, 1.442695
          %v2754 = vpow.pop %v2753
          %v2755 = vmul.f32 %v2737, 1.442695
          %v2756 = vpow.pop %v2755
          %v2757 = vmul.f32 %v2738, 1.442695
          %v2758 = vpow.pop %v2757
          %v2759 = vmul.f32 %v2739, 1.442695
          %v2760 = vpow.pop %v2759
          %v2761 = vmul.f32 %v2740, 1.442695
          %v2762 = vpow.pop %v2761
          %v2763 = vmul.f32 %v2741, 1.442695
          %v2764 = vpow.pop %v2763
          %v2765 = vmul.f32 %v2742, 1.442695
          %v2766 = vpow.pop %v2765
          %v2767 = vmul.f32 %v2743, 1.442695
          %v2768 = vpow.pop %v2767
          %v2769 = vmul.f32 %v2744, 1.442695
          %v2770 = vpow.pop %v2769
          %v2771 = vsel %vm2691, %v2746, 0.0
          %2772 = vadd.xlane.f32.xlu0 %v2771
          %v2773 = vpop.xlane.xlu0 %2772
          %v2774 = vsel %vm2691, %v2748, 0.0
          %2775 = vadd.xlane.f32.xlu0 %v2774
          %v2776 = vpop.xlane.xlu0 %2775
          %v2777 = vsel %vm2691, %v2750, 0.0
          %2778 = vadd.xlane.f32.xlu0 %v2777
          %v2779 = vpop.xlane.xlu0 %2778
          %v2780 = vsel %vm2691, %v2752, 0.0
          %2781 = vadd.xlane.f32.xlu0 %v2780
          %v2782 = vpop.xlane.xlu0 %2781
          %v2783 = vsel %vm2691, %v2754, 0.0
          %2784 = vadd.xlane.f32.xlu0 %v2783
          %v2785 = vpop.xlane.xlu0 %2784
          %v2786 = vsel %vm2691, %v2756, 0.0
          %2787 = vadd.xlane.f32.xlu0 %v2786
          %v2788 = vpop.xlane.xlu0 %2787
          %v2789 = vsel %vm2691, %v2758, 0.0
          %2790 = vadd.xlane.f32.xlu0 %v2789
          %v2791 = vpop.xlane.xlu0 %2790
          %v2792 = vsel %vm2691, %v2760, 0.0
          %2793 = vadd.xlane.f32.xlu0 %v2792
          %v2794 = vpop.xlane.xlu0 %2793
          %v2795 = vsel %vm2691, %v2762, 0.0
          %2796 = vadd.xlane.f32.xlu0 %v2795
          %v2797 = vpop.xlane.xlu0 %2796
          %v2798 = vsel %vm2691, %v2764, 0.0
          %2799 = vadd.xlane.f32.xlu0 %v2798
          %v2800 = vpop.xlane.xlu0 %2799
          %v2801 = vsel %vm2691, %v2766, 0.0
          %2802 = vadd.xlane.f32.xlu0 %v2801
          %v2803 = vpop.xlane.xlu0 %2802
          %v2804 = vsel %vm2691, %v2768, 0.0
          %2805 = vadd.xlane.f32.xlu0 %v2804
          %v2806 = vpop.xlane.xlu0 %2805
          %v2807 = vsel %vm2728, %v2770, 0.0
          %2808 = vadd.xlane.f32.xlu0 %v2807
          %v2809 = vpop.xlane.xlu0 %2808
          %v2810 = vrcp.pop %v2773
          %v2811 = vrcp.pop %v2776
          %v2812 = vrcp.pop %v2779
          %v2813 = vrcp.pop %v2782
          %v2814 = vrcp.pop %v2785
          %v2815 = vrcp.pop %v2788
          %v2816 = vrcp.pop %v2791
          %v2817 = vrcp.pop %v2794
          %v2818 = vrcp.pop %v2797
          %v2819 = vrcp.pop %v2800
          %v2820 = vrcp.pop %v2803
          %v2821 = vrcp.pop %v2806
          %v2822 = vrcp.pop %v2809
          %v2823 = vmul.f32 %v2746, %v2810
          %v2824 = vmul.f32 %v2748, %v2811
          %v2825 = vmul.f32 %v2750, %v2812
          %v2826 = vmul.f32 %v2752, %v2813
          %v2827 = vmul.f32 %v2754, %v2814
          %v2828 = vmul.f32 %v2756, %v2815
          %v2829 = vmul.f32 %v2758, %v2816
          %v2830 = vmul.f32 %v2760, %v2817
          %v2831 = vmul.f32 %v2762, %v2818
          %v2832 = vmul.f32 %v2764, %v2819
          %v2833 = vmul.f32 %v2766, %v2820
          %v2834 = vmul.f32 %v2768, %v2821
          %v2835 = vmul.f32 %v2770, %v2822
          %v2836 = vpack.c.bf16 %v2824, %v2823
          %v2837 = vpack.c.bf16 %v2826, %v2825
          %v2838 = vpack.c.bf16 %v2828, %v2827
          %v2839 = vpack.c.bf16 %v2830, %v2829
          %v2840 = vpack.c.bf16 %v2832, %v2831
          %v2841 = vpack.c.bf16 %v2834, %v2833
          %v2842 = vpack.c.bf16 %v2835, %v2835
          %2844 = vrot.lane.b32.xlu0 %v2565, 64
          %v2845 = vpop.permute.xlu0 %2844
          %v2848 = vsel %vm2691, %v2836, 0
          %v2851 = vsel %vm2691, %v2837, 0
          %v2854 = vsel %vm2691, %v2838, 0
          %v2857 = vsel %vm2691, %v2839, 0
          %v2860 = vsel %vm2691, %v2840, 0
          %v2863 = vsel %vm2691, %v2841, 0
          %v2866 = vsel %vm2691, %v2842, 0
          %2868 = vmatprep.subr.bf16.mxu0 0
          %2869 = vmatpush1.bf16.msra.mxu0 0
          %2870 = vmatprep.subr.bf16.mxu0 0
          %2871 = vmatpush1.bf16.msra.mxu0 0
          %2872 = vmatprep.subr.bf16.mxu0 0
          %2873 = vmatpush1.bf16.msra.mxu0 0
          %2874 = vmatprep.subr.bf16.mxu0 0
          %2875 = vmatpush1.bf16.msra.mxu0 0
          %2876 = vmatprep.subr.bf16.mxu0 0
          %2877 = vmatpush1.bf16.msra.mxu0 0
          %2878 = vmatprep.subr.bf16.mxu0 0
          %2879 = vmatpush1.bf16.msra.mxu0 0
          %2880 = vmatprep.subr.bf16.mxu0 0
          %2881 = vmatpush1.bf16.msra.mxu0 0
          %2882 = vmatprep.subr.bf16.mxu0 0
          %2883 = vmatpush1.bf16.msra.mxu0 %v2845
          %2884 = vmatprep.subr.bf16.mxu0 0
          %2885 = vmatpush2.bf16.msra.mxu0 0
          %2886 = vmatprep.subr.bf16.mxu0 0
          %2887 = vmatpush2.bf16.msra.mxu0 0
          %2888 = vmatprep.subr.bf16.mxu0 0
          %2889 = vmatpush2.bf16.msra.mxu0 0
          %2890 = vmatprep.subr.bf16.mxu0 0
          %2891 = vmatpush2.bf16.msra.mxu0 0
          %2892 = vmatprep.subr.bf16.mxu0 0
          %2893 = vmatpush2.bf16.msra.mxu0 0
          %2894 = vmatprep.subr.bf16.mxu0 0
          %2895 = vmatpush2.bf16.msra.mxu0 0
          %2896 = vmatprep.subr.bf16.mxu0 0
          %2897 = vmatpush2.bf16.msra.mxu0 0
          %2898 = vmatprep.subr.bf16.mxu0 0
          %2899 = vmatpush2.bf16.msra.mxu0 0
          %2900 = vmatprep.mubr.bf16.mxu0 0
          %2901 = vmatmul.mubr.bf16.gmra.mxu0 %v2848
          %v2902 = vpop.f32.mrf.mxu0
          %v2903 = vadd.f32 0.0, %v2902
          %v2904 = vpop.f32.mrf.mxu0
          %v2905 = vpop.f32.mrf.mxu0
          %v2906 = vadd.f32 0.0, %v2905
          %v2907 = vpop.f32.mrf.mxu0
          %2908 = vmatprep.mubr.bf16.mxu0 0
          %2909 = vmatmul.mubr.bf16.gmra.mxu0 %v2851
          %v2910 = vpop.f32.mrf.mxu0
          %v2911 = vadd.f32 0.0, %v2910
          %v2912 = vpop.f32.mrf.mxu0
          %v2913 = vpop.f32.mrf.mxu0
          %v2914 = vadd.f32 0.0, %v2913
          %v2915 = vpop.f32.mrf.mxu0
          %2916 = vmatprep.mubr.bf16.mxu0 0
          %2917 = vmatmul.mubr.bf16.gmra.mxu0 %v2854
          %v2918 = vpop.f32.mrf.mxu0
          %v2919 = vadd.f32 0.0, %v2918
          %v2920 = vpop.f32.mrf.mxu0
          %v2921 = vpop.f32.mrf.mxu0
          %v2922 = vadd.f32 0.0, %v2921
          %v2923 = vpop.f32.mrf.mxu0
          %2924 = vmatprep.mubr.bf16.mxu0 0
          %2925 = vmatmul.mubr.bf16.gmra.mxu0 %v2857
          %v2926 = vpop.f32.mrf.mxu0
          %v2927 = vadd.f32 0.0, %v2926
          %v2928 = vpop.f32.mrf.mxu0
          %v2929 = vpop.f32.mrf.mxu0
          %v2930 = vadd.f32 0.0, %v2929
          %v2931 = vpop.f32.mrf.mxu0
          %2932 = vmatprep.mubr.bf16.mxu0 0
          %2933 = vmatmul.mubr.bf16.gmra.mxu0 %v2860
          %v2934 = vpop.f32.mrf.mxu0
          %v2935 = vadd.f32 0.0, %v2934
          %v2936 = vpop.f32.mrf.mxu0
          %v2937 = vpop.f32.mrf.mxu0
          %v2938 = vadd.f32 0.0, %v2937
          %v2939 = vpop.f32.mrf.mxu0
          %2940 = vmatprep.mubr.bf16.mxu0 0
          %2941 = vmatmul.mubr.bf16.gmra.mxu0 %v2863
          %v2942 = vpop.f32.mrf.mxu0
          %v2943 = vadd.f32 0.0, %v2942
          %v2944 = vpop.f32.mrf.mxu0
          %v2945 = vpop.f32.mrf.mxu0
          %v2946 = vadd.f32 0.0, %v2945
          %v2947 = vpop.f32.mrf.mxu0
          %2948 = vmatprep.mubr.bf16.mxu0 0
          %2949 = vmatmul.mubr.bf16.gmra.mxu0 %v2866
          %v2950 = vpop.f32.mrf.mxu0
          %v2951 = vadd.f32 0.0, %v2950
          %v2952 = vpop.f32.mrf.mxu0
          %v2953 = vpop.f32.mrf.mxu0
          %v2954 = vpop.f32.mrf.mxu0
          %2955 = vdwg.mxu0
          %2963 = vrot.lane.b32.xlu0 %v2558, 96
          %v2964 = vpop.permute.xlu0 %2963
          %2965 = vrot.lane.b32.xlu0 %v2559, 96
          %v2966 = vpop.permute.xlu0 %2965
          %2967 = vrot.lane.b32.xlu0 %v2560, 96
          %v2968 = vpop.permute.xlu0 %2967
          %2969 = vrot.lane.b32.xlu0 %v2561, 96
          %v2970 = vpop.permute.xlu0 %2969
          %2971 = vrot.lane.b32.xlu0 %v2562, 96
          %v2972 = vpop.permute.xlu0 %2971
          %2973 = vrot.lane.b32.xlu0 %v2563, 96
          %v2974 = vpop.permute.xlu0 %2973
          %2975 = vrot.lane.b32.xlu0 %v2564, 96
          %v2976 = vpop.permute.xlu0 %2975
          %2977 = vrot.lane.b32.xlu0 %v2565, 96
          %v2978 = vpop.permute.xlu0 %2977
          %v2980 = vsel %vm1006, %v2964, 0
          %v2983 = vsel %vm1006, %v2966, 0
          %v2986 = vsel %vm1006, %v2968, 0
          %v2989 = vsel %vm1006, %v2970, 0
          %v2992 = vsel %vm1006, %v2972, 0
          %v2995 = vsel %vm1006, %v2974, 0
          %v2998 = vsel %vm1006, %v2976, 0
          %v3001 = vsel %vm1006, %v2978, 0
          %3003 = vmatprep.subr.bf16.mxu0 0
          %3004 = vmatpush1.bf16.xpose.msra.mxu0 0
          %3005 = vmatprep.subr.bf16.mxu0 0
          %3006 = vmatpush1.bf16.xpose.msra.mxu0 0
          %3007 = vmatprep.subr.bf16.mxu0 0
          %3008 = vmatpush1.bf16.xpose.msra.mxu0 0
          %3009 = vmatprep.subr.bf16.mxu0 0
          %3010 = vmatpush1.bf16.xpose.msra.mxu0 0
          %3011 = vmatprep.subr.bf16.mxu0 0
          %3012 = vmatpush1.bf16.xpose.msra.mxu0 0
          %3013 = vmatprep.subr.bf16.mxu0 0
          %3014 = vmatpush1.bf16.xpose.msra.mxu0 0
          %3015 = vmatprep.subr.bf16.mxu0 0
          %3016 = vmatpush1.bf16.xpose.msra.mxu0 0
          %3017 = vmatprep.subr.bf16.mxu0 0
          %3018 = vmatpush1.bf16.xpose.msra.mxu0 %v3001
          %3019 = vmatprep.subr.bf16.mxu0 0
          %3020 = vmatpush2.bf16.xpose.msra.mxu0 0
          %3021 = vmatprep.subr.bf16.mxu0 0
          %3022 = vmatpush2.bf16.xpose.msra.mxu0 0
          %3023 = vmatprep.subr.bf16.mxu0 0
          %3024 = vmatpush2.bf16.xpose.msra.mxu0 0
          %3025 = vmatprep.subr.bf16.mxu0 0
          %3026 = vmatpush2.bf16.xpose.msra.mxu0 0
          %3027 = vmatprep.subr.bf16.mxu0 0
          %3028 = vmatpush2.bf16.xpose.msra.mxu0 0
          %3029 = vmatprep.subr.bf16.mxu0 0
          %3030 = vmatpush2.bf16.xpose.msra.mxu0 0
          %3031 = vmatprep.subr.bf16.mxu0 0
          %3032 = vmatpush2.bf16.xpose.msra.mxu0 0
          %3033 = vmatprep.subr.bf16.mxu0 0
          %3034 = vmatpush2.bf16.xpose.msra.mxu0 0
          %3035 = vmatprep.mubr.bf16.mxu0 0
          %3036 = vmatmul.mubr.bf16.gmra.mxu0 %v2980
          %v3037 = vpop.f32.mrf.mxu0
          %v3038 = vadd.f32 0.0, %v3037
          %v3039 = vpop.f32.mrf.mxu0
          %v3040 = vpop.f32.mrf.mxu0
          %v3041 = vadd.f32 0.0, %v3040
          %v3042 = vpop.f32.mrf.mxu0
          %3043 = vmatprep.mubr.bf16.mxu0 0
          %3044 = vmatmul.mubr.bf16.gmra.mxu0 %v2983
          %v3045 = vpop.f32.mrf.mxu0
          %v3046 = vadd.f32 0.0, %v3045
          %v3047 = vpop.f32.mrf.mxu0
          %v3048 = vpop.f32.mrf.mxu0
          %v3049 = vadd.f32 0.0, %v3048
          %v3050 = vpop.f32.mrf.mxu0
          %3051 = vmatprep.mubr.bf16.mxu0 0
          %3052 = vmatmul.mubr.bf16.gmra.mxu0 %v2986
          %v3053 = vpop.f32.mrf.mxu0
          %v3054 = vadd.f32 0.0, %v3053
          %v3055 = vpop.f32.mrf.mxu0
          %v3056 = vpop.f32.mrf.mxu0
          %v3057 = vadd.f32 0.0, %v3056
          %v3058 = vpop.f32.mrf.mxu0
          %3059 = vmatprep.mubr.bf16.mxu0 0
          %3060 = vmatmul.mubr.bf16.gmra.mxu0 %v2989
          %v3061 = vpop.f32.mrf.mxu0
          %v3062 = vadd.f32 0.0, %v3061
          %v3063 = vpop.f32.mrf.mxu0
          %v3064 = vpop.f32.mrf.mxu0
          %v3065 = vadd.f32 0.0, %v3064
          %v3066 = vpop.f32.mrf.mxu0
          %3067 = vmatprep.mubr.bf16.mxu0 0
          %3068 = vmatmul.mubr.bf16.gmra.mxu0 %v2992
          %v3069 = vpop.f32.mrf.mxu0
          %v3070 = vadd.f32 0.0, %v3069
          %v3071 = vpop.f32.mrf.mxu0
          %v3072 = vpop.f32.mrf.mxu0
          %v3073 = vadd.f32 0.0, %v3072
          %v3074 = vpop.f32.mrf.mxu0
          %3075 = vmatprep.mubr.bf16.mxu0 0
          %3076 = vmatmul.mubr.bf16.gmra.mxu0 %v2995
          %v3077 = vpop.f32.mrf.mxu0
          %v3078 = vadd.f32 0.0, %v3077
          %v3079 = vpop.f32.mrf.mxu0
          %v3080 = vpop.f32.mrf.mxu0
          %v3081 = vadd.f32 0.0, %v3080
          %v3082 = vpop.f32.mrf.mxu0
          %3083 = vmatprep.mubr.bf16.mxu0 0
          %3084 = vmatmul.mubr.bf16.gmra.mxu0 %v2998
          %v3085 = vpop.f32.mrf.mxu0
          %v3086 = vadd.f32 0.0, %v3085
          %v3087 = vpop.f32.mrf.mxu0
          %v3088 = vpop.f32.mrf.mxu0
          %v3089 = vpop.f32.mrf.mxu0
          %3090 = vdwg.mxu0
          %v3091 = vmul.f32 %v3038, 0.17677669
          %v3092 = vmul.f32 %v3041, 0.17677669
          %v3093 = vmul.f32 %v3046, 0.17677669
          %v3094 = vmul.f32 %v3049, 0.17677669
          %v3095 = vmul.f32 %v3054, 0.17677669
          %v3096 = vmul.f32 %v3057, 0.17677669
          %v3097 = vmul.f32 %v3062, 0.17677669
          %v3098 = vmul.f32 %v3065, 0.17677669
          %v3099 = vmul.f32 %v3070, 0.17677669
          %v3100 = vmul.f32 %v3073, 0.17677669
          %v3101 = vmul.f32 %v3078, 0.17677669
          %v3102 = vmul.f32 %v3081, 0.17677669
          %v3103 = vmul.f32 %v3086, 0.17677669
          %v3104 = vsel %vm2691, %v3091, -inf
          %3105 = vmax.xlane.f32.xlu0 %v3104
          %v3106 = vpop.xlane.xlu0 %3105
          %v3107 = vsel %vm2691, %v3092, -inf
          %3108 = vmax.xlane.f32.xlu0 %v3107
          %v3109 = vpop.xlane.xlu0 %3108
          %v3110 = vsel %vm2691, %v3093, -inf
          %3111 = vmax.xlane.f32.xlu0 %v3110
          %v3112 = vpop.xlane.xlu0 %3111
          %v3113 = vsel %vm2691, %v3094, -inf
          %3114 = vmax.xlane.f32.xlu0 %v3113
          %v3115 = vpop.xlane.xlu0 %3114
          %v3116 = vsel %vm2691, %v3095, -inf
          %3117 = vmax.xlane.f32.xlu0 %v3116
          %v3118 = vpop.xlane.xlu0 %3117
          %v3119 = vsel %vm2691, %v3096, -inf
          %3120 = vmax.xlane.f32.xlu0 %v3119
          %v3121 = vpop.xlane.xlu0 %3120
          %v3122 = vsel %vm2691, %v3097, -inf
          %3123 = vmax.xlane.f32.xlu0 %v3122
          %v3124 = vpop.xlane.xlu0 %3123
          %v3125 = vsel %vm2691, %v3098, -inf
          %3126 = vmax.xlane.f32.xlu0 %v3125
          %v3127 = vpop.xlane.xlu0 %3126
          %v3128 = vsel %vm2691, %v3099, -inf
          %3129 = vmax.xlane.f32.xlu0 %v3128
          %v3130 = vpop.xlane.xlu0 %3129
          %v3131 = vsel %vm2691, %v3100, -inf
          %3132 = vmax.xlane.f32.xlu0 %v3131
          %v3133 = vpop.xlane.xlu0 %3132
          %v3134 = vsel %vm2691, %v3101, -inf
          %3135 = vmax.xlane.f32.xlu0 %v3134
          %v3136 = vpop.xlane.xlu0 %3135
          %v3137 = vsel %vm2691, %v3102, -inf
          %3138 = vmax.xlane.f32.xlu0 %v3137
          %v3139 = vpop.xlane.xlu0 %3138
          %v3140 = vsel %vm2728, %v3103, -inf
          %3141 = vmax.xlane.f32.xlu0 %v3140
          %v3142 = vpop.xlane.xlu0 %3141
          %v3143 = vsub.f32 %v3091, %v3106
          %v3144 = vsub.f32 %v3092, %v3109
          %v3145 = vsub.f32 %v3093, %v3112
          %v3146 = vsub.f32 %v3094, %v3115
          %v3147 = vsub.f32 %v3095, %v3118
          %v3148 = vsub.f32 %v3096, %v3121
          %v3149 = vsub.f32 %v3097, %v3124
          %v3150 = vsub.f32 %v3098, %v3127
          %v3151 = vsub.f32 %v3099, %v3130
          %v3152 = vsub.f32 %v3100, %v3133
          %v3153 = vsub.f32 %v3101, %v3136
          %v3154 = vsub.f32 %v3102, %v3139
          %v3155 = vsub.f32 %v3103, %v3142
          %v3156 = vmul.f32 %v3143, 1.442695
          %v3157 = vpow.pop %v3156
          %v3158 = vmul.f32 %v3144, 1.442695
          %v3159 = vpow.pop %v3158
          %v3160 = vmul.f32 %v3145, 1.442695
          %v3161 = vpow.pop %v3160
          %v3162 = vmul.f32 %v3146, 1.442695
          %v3163 = vpow.pop %v3162
          %v3164 = vmul.f32 %v3147, 1.442695
          %v3165 = vpow.pop %v3164
          %v3166 = vmul.f32 %v3148, 1.442695
          %v3167 = vpow.pop %v3166
          %v3168 = vmul.f32 %v3149, 1.442695
          %v3169 = vpow.pop %v3168
          %v3170 = vmul.f32 %v3150, 1.442695
          %v3171 = vpow.pop %v3170
          %v3172 = vmul.f32 %v3151, 1.442695
          %v3173 = vpow.pop %v3172
          %v3174 = vmul.f32 %v3152, 1.442695
          %v3175 = vpow.pop %v3174
          %v3176 = vmul.f32 %v3153, 1.442695
          %v3177 = vpow.pop %v3176
          %v3178 = vmul.f32 %v3154, 1.442695
          %v3179 = vpow.pop %v3178
          %v3180 = vmul.f32 %v3155, 1.442695
          %v3181 = vpow.pop %v3180
          %v3182 = vsel %vm2691, %v3157, 0.0
          %3183 = vadd.xlane.f32.xlu0 %v3182
          %v3184 = vpop.xlane.xlu0 %3183
          %v3185 = vsel %vm2691, %v3159, 0.0
          %3186 = vadd.xlane.f32.xlu0 %v3185
          %v3187 = vpop.xlane.xlu0 %3186
          %v3188 = vsel %vm2691, %v3161, 0.0
          %3189 = vadd.xlane.f32.xlu0 %v3188
          %v3190 = vpop.xlane.xlu0 %3189
          %v3191 = vsel %vm2691, %v3163, 0.0
          %3192 = vadd.xlane.f32.xlu0 %v3191
          %v3193 = vpop.xlane.xlu0 %3192
          %v3194 = vsel %vm2691, %v3165, 0.0
          %3195 = vadd.xlane.f32.xlu0 %v3194
          %v3196 = vpop.xlane.xlu0 %3195
          %v3197 = vsel %vm2691, %v3167, 0.0
          %3198 = vadd.xlane.f32.xlu0 %v3197
          %v3199 = vpop.xlane.xlu0 %3198
          %v3200 = vsel %vm2691, %v3169, 0.0
          %3201 = vadd.xlane.f32.xlu0 %v3200
          %v3202 = vpop.xlane.xlu0 %3201
          %v3203 = vsel %vm2691, %v3171, 0.0
          %3204 = vadd.xlane.f32.xlu0 %v3203
          %v3205 = vpop.xlane.xlu0 %3204
          %v3206 = vsel %vm2691, %v3173, 0.0
          %3207 = vadd.xlane.f32.xlu0 %v3206
          %v3208 = vpop.xlane.xlu0 %3207
          %v3209 = vsel %vm2691, %v3175, 0.0
          %3210 = vadd.xlane.f32.xlu0 %v3209
          %v3211 = vpop.xlane.xlu0 %3210
          %v3212 = vsel %vm2691, %v3177, 0.0
          %3213 = vadd.xlane.f32.xlu0 %v3212
          %v3214 = vpop.xlane.xlu0 %3213
          %v3215 = vsel %vm2691, %v3179, 0.0
          %3216 = vadd.xlane.f32.xlu0 %v3215
          %v3217 = vpop.xlane.xlu0 %3216
          %v3218 = vsel %vm2728, %v3181, 0.0
          %3219 = vadd.xlane.f32.xlu0 %v3218
          %v3220 = vpop.xlane.xlu0 %3219
          %v3221 = vrcp.pop %v3184
          %v3222 = vrcp.pop %v3187
          %v3223 = vrcp.pop %v3190
          %v3224 = vrcp.pop %v3193
          %v3225 = vrcp.pop %v3196
          %v3226 = vrcp.pop %v3199
          %v3227 = vrcp.pop %v3202
          %v3228 = vrcp.pop %v3205
          %v3229 = vrcp.pop %v3208
          %v3230 = vrcp.pop %v3211
          %v3231 = vrcp.pop %v3214
          %v3232 = vrcp.pop %v3217
          %v3233 = vrcp.pop %v3220
          %v3234 = vmul.f32 %v3157, %v3221
          %v3235 = vmul.f32 %v3159, %v3222
          %v3236 = vmul.f32 %v3161, %v3223
          %v3237 = vmul.f32 %v3163, %v3224
          %v3238 = vmul.f32 %v3165, %v3225
          %v3239 = vmul.f32 %v3167, %v3226
          %v3240 = vmul.f32 %v3169, %v3227
          %v3241 = vmul.f32 %v3171, %v3228
          %v3242 = vmul.f32 %v3173, %v3229
          %v3243 = vmul.f32 %v3175, %v3230
          %v3244 = vmul.f32 %v3177, %v3231
          %v3245 = vmul.f32 %v3179, %v3232
          %v3246 = vmul.f32 %v3181, %v3233
          %v3247 = vpack.c.bf16 %v3235, %v3234
          %v3248 = vpack.c.bf16 %v3237, %v3236
          %v3249 = vpack.c.bf16 %v3239, %v3238
          %v3250 = vpack.c.bf16 %v3241, %v3240
          %v3251 = vpack.c.bf16 %v3243, %v3242
          %v3252 = vpack.c.bf16 %v3245, %v3244
          %v3253 = vpack.c.bf16 %v3246, %v3246
          %3254 = vrot.lane.b32.xlu0 %v2565, 32
          %v3255 = vpop.permute.xlu0 %3254
          %v3258 = vsel %vm2691, %v3247, 0
          %v3261 = vsel %vm2691, %v3248, 0
          %v3264 = vsel %vm2691, %v3249, 0
          %v3267 = vsel %vm2691, %v3250, 0
          %v3270 = vsel %vm2691, %v3251, 0
          %v3273 = vsel %vm2691, %v3252, 0
          %v3276 = vsel %vm2691, %v3253, 0
          %3278 = vmatprep.subr.bf16.mxu0 0
          %3279 = vmatpush1.bf16.msra.mxu0 0
          %3280 = vmatprep.subr.bf16.mxu0 0
          %3281 = vmatpush1.bf16.msra.mxu0 0
          %3282 = vmatprep.subr.bf16.mxu0 0
          %3283 = vmatpush1.bf16.msra.mxu0 0
          %3284 = vmatprep.subr.bf16.mxu0 0
          %3285 = vmatpush1.bf16.msra.mxu0 0
          %3286 = vmatprep.subr.bf16.mxu0 0
          %3287 = vmatpush1.bf16.msra.mxu0 0
          %3288 = vmatprep.subr.bf16.mxu0 0
          %3289 = vmatpush1.bf16.msra.mxu0 0
          %3290 = vmatprep.subr.bf16.mxu0 0
          %3291 = vmatpush1.bf16.msra.mxu0 0
          %3292 = vmatprep.subr.bf16.mxu0 0
          %3293 = vmatpush1.bf16.msra.mxu0 %v3255
          %3294 = vmatprep.subr.bf16.mxu0 0
          %3295 = vmatpush2.bf16.msra.mxu0 0
          %3296 = vmatprep.subr.bf16.mxu0 0
          %3297 = vmatpush2.bf16.msra.mxu0 0
          %3298 = vmatprep.subr.bf16.mxu0 0
          %3299 = vmatpush2.bf16.msra.mxu0 0
          %3300 = vmatprep.subr.bf16.mxu0 0
          %3301 = vmatpush2.bf16.msra.mxu0 0
          %3302 = vmatprep.subr.bf16.mxu0 0
          %3303 = vmatpush2.bf16.msra.mxu0 0
          %3304 = vmatprep.subr.bf16.mxu0 0
          %3305 = vmatpush2.bf16.msra.mxu0 0
          %3306 = vmatprep.subr.bf16.mxu0 0
          %3307 = vmatpush2.bf16.msra.mxu0 0
          %3308 = vmatprep.subr.bf16.mxu0 0
          %3309 = vmatpush2.bf16.msra.mxu0 0
          %3310 = vmatprep.mubr.bf16.mxu0 0
          %3311 = vmatmul.mubr.bf16.gmra.mxu0 %v3258
          %v3312 = vpop.f32.mrf.mxu0
          %v3313 = vadd.f32 0.0, %v3312
          %v3314 = vpop.f32.mrf.mxu0
          %v3315 = vpop.f32.mrf.mxu0
          %v3316 = vadd.f32 0.0, %v3315
          %v3317 = vpop.f32.mrf.mxu0
          %3318 = vmatprep.mubr.bf16.mxu0 0
          %3319 = vmatmul.mubr.bf16.gmra.mxu0 %v3261
          %v3320 = vpop.f32.mrf.mxu0
          %v3321 = vadd.f32 0.0, %v3320
          %v3322 = vpop.f32.mrf.mxu0
          %v3323 = vpop.f32.mrf.mxu0
          %v3324 = vadd.f32 0.0, %v3323
          %v3325 = vpop.f32.mrf.mxu0
          %3326 = vmatprep.mubr.bf16.mxu0 0
          %3327 = vmatmul.mubr.bf16.gmra.mxu0 %v3264
          %v3328 = vpop.f32.mrf.mxu0
          %v3329 = vadd.f32 0.0, %v3328
          %v3330 = vpop.f32.mrf.mxu0
          %v3331 = vpop.f32.mrf.mxu0
          %v3332 = vadd.f32 0.0, %v3331
          %v3333 = vpop.f32.mrf.mxu0
          %3334 = vmatprep.mubr.bf16.mxu0 0
          %3335 = vmatmul.mubr.bf16.gmra.mxu0 %v3267
          %v3336 = vpop.f32.mrf.mxu0
          %v3337 = vadd.f32 0.0, %v3336
          %v3338 = vpop.f32.mrf.mxu0
          %v3339 = vpop.f32.mrf.mxu0
          %v3340 = vadd.f32 0.0, %v3339
          %v3341 = vpop.f32.mrf.mxu0
          %3342 = vmatprep.mubr.bf16.mxu0 0
          %3343 = vmatmul.mubr.bf16.gmra.mxu0 %v3270
          %v3344 = vpop.f32.mrf.mxu0
          %v3345 = vadd.f32 0.0, %v3344
          %v3346 = vpop.f32.mrf.mxu0
          %v3347 = vpop.f32.mrf.mxu0
          %v3348 = vadd.f32 0.0, %v3347
          %v3349 = vpop.f32.mrf.mxu0
          %3350 = vmatprep.mubr.bf16.mxu0 0
          %3351 = vmatmul.mubr.bf16.gmra.mxu0 %v3273
          %v3352 = vpop.f32.mrf.mxu0
          %v3353 = vadd.f32 0.0, %v3352
          %v3354 = vpop.f32.mrf.mxu0
          %v3355 = vpop.f32.mrf.mxu0
          %v3356 = vadd.f32 0.0, %v3355
          %v3357 = vpop.f32.mrf.mxu0
          %3358 = vmatprep.mubr.bf16.mxu0 0
          %3359 = vmatmul.mubr.bf16.gmra.mxu0 %v3276
          %v3360 = vpop.f32.mrf.mxu0
          %v3361 = vadd.f32 0.0, %v3360
          %v3362 = vpop.f32.mrf.mxu0
          %v3363 = vpop.f32.mrf.mxu0
          %v3364 = vpop.f32.mrf.mxu0
          %3365 = vdwg.mxu0
          %3379 = vrot.lane.b32.xlu0 %v3313, 32
          %v3380 = vpop.permute.xlu0 %3379
          %3381 = vrot.lane.b32.xlu0 %v3316, 32
          %v3382 = vpop.permute.xlu0 %3381
          %3383 = vrot.lane.b32.xlu0 %v3321, 32
          %v3384 = vpop.permute.xlu0 %3383
          %3385 = vrot.lane.b32.xlu0 %v3324, 32
          %v3386 = vpop.permute.xlu0 %3385
          %3387 = vrot.lane.b32.xlu0 %v3329, 32
          %v3388 = vpop.permute.xlu0 %3387
          %3389 = vrot.lane.b32.xlu0 %v3332, 32
          %v3390 = vpop.permute.xlu0 %3389
          %3391 = vrot.lane.b32.xlu0 %v3337, 32
          %v3392 = vpop.permute.xlu0 %3391
          %3393 = vrot.lane.b32.xlu0 %v3340, 32
          %v3394 = vpop.permute.xlu0 %3393
          %3395 = vrot.lane.b32.xlu0 %v3345, 32
          %v3396 = vpop.permute.xlu0 %3395
          %3397 = vrot.lane.b32.xlu0 %v3348, 32
          %v3398 = vpop.permute.xlu0 %3397
          %3399 = vrot.lane.b32.xlu0 %v3353, 32
          %v3400 = vpop.permute.xlu0 %3399
          %3401 = vrot.lane.b32.xlu0 %v3356, 32
          %v3402 = vpop.permute.xlu0 %3401
          %3403 = vrot.lane.b32.xlu0 %v3361, 32
          %v3404 = vpop.permute.xlu0 %3403
          %v3418 = vsel %vm1006, %v2903, %v3380
          %v3419 = vsel %vm1006, %v2906, %v3382
          %v3420 = vsel %vm1006, %v2911, %v3384
          %v3421 = vsel %vm1006, %v2914, %v3386
          %v3422 = vsel %vm1006, %v2919, %v3388
          %v3423 = vsel %vm1006, %v2922, %v3390
          %v3424 = vsel %vm1006, %v2927, %v3392
          %v3425 = vsel %vm1006, %v2930, %v3394
          %v3426 = vsel %vm1006, %v2935, %v3396
          %v3427 = vsel %vm1006, %v2938, %v3398
          %v3428 = vsel %vm1006, %v2943, %v3400
          %v3429 = vsel %vm1006, %v2946, %v3402
          %v3430 = vsel %vm1006, %v2951, %v3404
          %v3431 = vpack.c.bf16 %v3419, %v3418
          %v3432 = vpack.c.bf16 %v3421, %v3420
          %v3433 = vpack.c.bf16 %v3423, %v3422
          %v3434 = vpack.c.bf16 %v3425, %v3424
          %v3435 = vpack.c.bf16 %v3427, %v3426
          %v3436 = vpack.c.bf16 %v3429, %v3428
          %v3437 = vpack.c.bf16 %v3430, %v3430
          %v3438 = vld [vmem:[%s12] sm:$0xf]
          %v3439 = vld [vmem:[%s12 + $0x4] sm:$0xf]
          %v3440 = vld [vmem:[%s12 + $0x8] sm:$0xf]
          %v3441 = vld [vmem:[%s12 + $0xc] sm:$0xf]
          %v3442 = vld [vmem:[%s12 + $0x10] sm:$0xf]
          %v3443 = vld [vmem:[%s12 + $0x14] sm:$0xf]
          %v3444 = vld [vmem:[%s12 + $0x18] sm:$0xf]
          %v3445 = vld [vmem:[%s12 + $0x1c] sm:$0xf]
          %v3446 = vld [vmem:[%s13] sm:$0x1]
          %v3448 = vlaneseq
          %v3449 = vshrl.u32 %v3448, 7
          %v3450 = vsub.s32 0, %v3449
          %v3451 = vrot.slane %v3446, %v3450
          %v3461 = vunpack.c.l.b16 %v3438
          %v3462 = vunpack.c.l.b16 %v3439
          %v3463 = vunpack.c.l.b16 %v3440
          %v3464 = vunpack.c.l.b16 %v3441
          %v3465 = vunpack.c.l.b16 %v3442
          %v3466 = vunpack.c.l.b16 %v3443
          %v3467 = vunpack.c.l.b16 %v3444
          %v3468 = vunpack.c.l.b16 %v3445
          %v3469 = vpack.c.b16 %v3462, %v3461
          %v3470 = vpack.c.b16 %v3464, %v3463
          %v3471 = vpack.c.b16 %v3466, %v3465
          %v3472 = vpack.c.b16 %v3468, %v3467
          %v3478 = vsel %vm848, %v3431, 0
          %v3481 = vsel %vm848, %v3432, 0
          %v3484 = vsel %vm848, %v3433, 0
          %v3487 = vsel %vm848, %v3434, 0
          %v3490 = vsel %vm848, %v3435, 0
          %v3493 = vsel %vm848, %v3436, 0
          %v3496 = vsel %vm848, %v3437, 0
          %3498 = vmatprep.subr.bf16.mxu0 0
          %3499 = vmatpush1.bf16.msra.mxu0 0
          %3500 = vmatprep.subr.bf16.mxu0 0
          %3501 = vmatpush1.bf16.msra.mxu0 0
          %3502 = vmatprep.subr.bf16.mxu0 0
          %3503 = vmatpush1.bf16.msra.mxu0 0
          %3504 = vmatprep.subr.bf16.mxu0 0
          %3505 = vmatpush1.bf16.msra.mxu0 0
          %3506 = vmatprep.subr.bf16.mxu0 0
          %3507 = vmatpush1.bf16.msra.mxu0 %v3472
          %3508 = vmatprep.subr.bf16.mxu0 0
          %3509 = vmatpush1.bf16.msra.mxu0 %v3471
          %3510 = vmatprep.subr.bf16.mxu0 0
          %3511 = vmatpush1.bf16.msra.mxu0 %v3470
          %3512 = vmatprep.subr.bf16.mxu0 0
          %3513 = vmatpush1.bf16.msra.mxu0 %v3469
          %3514 = vmatprep.subr.bf16.mxu0 0
          %3515 = vmatpush2.bf16.msra.mxu0 0
          %3516 = vmatprep.subr.bf16.mxu0 0
          %3517 = vmatpush2.bf16.msra.mxu0 0
          %3518 = vmatprep.subr.bf16.mxu0 0
          %3519 = vmatpush2.bf16.msra.mxu0 0
          %3520 = vmatprep.subr.bf16.mxu0 0
          %3521 = vmatpush2.bf16.msra.mxu0 0
          %3522 = vmatprep.subr.bf16.mxu0 0
          %3523 = vmatpush2.bf16.msra.mxu0 0
          %3524 = vmatprep.subr.bf16.mxu0 0
          %3525 = vmatpush2.bf16.msra.mxu0 0
          %3526 = vmatprep.subr.bf16.mxu0 0
          %3527 = vmatpush2.bf16.msra.mxu0 0
          %3528 = vmatprep.subr.bf16.mxu0 0
          %3529 = vmatpush2.bf16.msra.mxu0 0
          %3530 = vmatprep.mubr.bf16.mxu0 0
          %3531 = vmatmul.mubr.bf16.gmra.mxu0 %v3478
          %v3532 = vpop.f32.mrf.mxu0
          %v3533 = vadd.f32 %v3451, %v3532
          %v3534 = vpop.f32.mrf.mxu0
          %v3535 = vpop.f32.mrf.mxu0
          %v3536 = vadd.f32 %v3451, %v3535
          %v3537 = vpop.f32.mrf.mxu0
          %3538 = vmatprep.mubr.bf16.mxu0 0
          %3539 = vmatmul.mubr.bf16.gmra.mxu0 %v3481
          %v3540 = vpop.f32.mrf.mxu0
          %v3541 = vadd.f32 %v3451, %v3540
          %v3542 = vpop.f32.mrf.mxu0
          %v3543 = vpop.f32.mrf.mxu0
          %v3544 = vadd.f32 %v3451, %v3543
          %v3545 = vpop.f32.mrf.mxu0
          %3546 = vmatprep.mubr.bf16.mxu0 0
          %3547 = vmatmul.mubr.bf16.gmra.mxu0 %v3484
          %v3548 = vpop.f32.mrf.mxu0
          %v3549 = vadd.f32 %v3451, %v3548
          %v3550 = vpop.f32.mrf.mxu0
          %v3551 = vpop.f32.mrf.mxu0
          %v3552 = vadd.f32 %v3451, %v3551
          %v3553 = vpop.f32.mrf.mxu0
          %3554 = vmatprep.mubr.bf16.mxu0 0
          %3555 = vmatmul.mubr.bf16.gmra.mxu0 %v3487
          %v3556 = vpop.f32.mrf.mxu0
          %v3557 = vadd.f32 %v3451, %v3556
          %v3558 = vpop.f32.mrf.mxu0
          %v3559 = vpop.f32.mrf.mxu0
          %v3560 = vadd.f32 %v3451, %v3559
          %v3561 = vpop.f32.mrf.mxu0
          %3562 = vmatprep.mubr.bf16.mxu0 0
          %3563 = vmatmul.mubr.bf16.gmra.mxu0 %v3490
          %v3564 = vpop.f32.mrf.mxu0
          %v3565 = vadd.f32 %v3451, %v3564
          %v3566 = vpop.f32.mrf.mxu0
          %v3567 = vpop.f32.mrf.mxu0
          %v3568 = vadd.f32 %v3451, %v3567
          %v3569 = vpop.f32.mrf.mxu0
          %3570 = vmatprep.mubr.bf16.mxu0 0
          %3571 = vmatmul.mubr.bf16.gmra.mxu0 %v3493
          %v3572 = vpop.f32.mrf.mxu0
          %v3573 = vadd.f32 %v3451, %v3572
          %v3574 = vpop.f32.mrf.mxu0
          %v3575 = vpop.f32.mrf.mxu0
          %v3576 = vadd.f32 %v3451, %v3575
          %v3577 = vpop.f32.mrf.mxu0
          %3578 = vmatprep.mubr.bf16.mxu0 0
          %3579 = vmatmul.mubr.bf16.gmra.mxu0 %v3496
          %v3580 = vpop.f32.mrf.mxu0
          %v3581 = vadd.f32 %v3451, %v3580
          %v3582 = vpop.f32.mrf.mxu0
          %v3583 = vpop.f32.mrf.mxu0
          %v3584 = vpop.f32.mrf.mxu0
          %3585 = vdwg.mxu0
          %v3586 = vadd.f32 %v2306, %v3533
          %v3587 = vadd.f32 %v2307, %v3536
          %v3588 = vadd.f32 %v2308, %v3541
          %v3589 = vadd.f32 %v2309, %v3544
          %v3590 = vadd.f32 %v2310, %v3549
          %v3591 = vadd.f32 %v2311, %v3552
          %v3592 = vadd.f32 %v2312, %v3557
          %v3593 = vadd.f32 %v2313, %v3560
          %v3594 = vadd.f32 %v2314, %v3565
          %v3595 = vadd.f32 %v2315, %v3568
          %v3596 = vadd.f32 %v2316, %v3573
          %v3597 = vadd.f32 %v2317, %v3576
          %v3598 = vadd.f32 %v2318, %v3581
          %v3599 = vld [vmem:[%s14] sm:$0x1]
          %v3600 = vld [vmem:[%s15] sm:$0x1]
          %v3601 = vsel %vm848, %v3586, 0.0
          %3602 = vadd.xlane.f32.xlu0 %v3601
          %v3603 = vpop.xlane.xlu0 %3602
          %v3604 = vsel %vm848, %v3587, 0.0
          %3605 = vadd.xlane.f32.xlu0 %v3604
          %v3606 = vpop.xlane.xlu0 %3605
          %v3607 = vsel %vm848, %v3588, 0.0
          %3608 = vadd.xlane.f32.xlu0 %v3607
          %v3609 = vpop.xlane.xlu0 %3608
          %v3610 = vsel %vm848, %v3589, 0.0
          %3611 = vadd.xlane.f32.xlu0 %v3610
          %v3612 = vpop.xlane.xlu0 %3611
          %v3613 = vsel %vm848, %v3590, 0.0
          %3614 = vadd.xlane.f32.xlu0 %v3613
          %v3615 = vpop.xlane.xlu0 %3614
          %v3616 = vsel %vm848, %v3591, 0.0
          %3617 = vadd.xlane.f32.xlu0 %v3616
          %v3618 = vpop.xlane.xlu0 %3617
          %v3619 = vsel %vm848, %v3592, 0.0
          %3620 = vadd.xlane.f32.xlu0 %v3619
          %v3621 = vpop.xlane.xlu0 %3620
          %v3622 = vsel %vm848, %v3593, 0.0
          %3623 = vadd.xlane.f32.xlu0 %v3622
          %v3624 = vpop.xlane.xlu0 %3623
          %v3625 = vsel %vm848, %v3594, 0.0
          %3626 = vadd.xlane.f32.xlu0 %v3625
          %v3627 = vpop.xlane.xlu0 %3626
          %v3628 = vsel %vm848, %v3595, 0.0
          %3629 = vadd.xlane.f32.xlu0 %v3628
          %v3630 = vpop.xlane.xlu0 %3629
          %v3631 = vsel %vm848, %v3596, 0.0
          %3632 = vadd.xlane.f32.xlu0 %v3631
          %v3633 = vpop.xlane.xlu0 %3632
          %v3634 = vsel %vm848, %v3597, 0.0
          %3635 = vadd.xlane.f32.xlu0 %v3634
          %v3636 = vpop.xlane.xlu0 %3635
          %v3637 = vsel %vm2146, %v3598, 0.0
          %3638 = vadd.xlane.f32.xlu0 %v3637
          %v3639 = vpop.xlane.xlu0 %3638
          %v3640 = vmul.f32 %v3603, %v2150
          %v3641 = vmul.f32 %v3606, %v2150
          %v3642 = vmul.f32 %v3609, %v2150
          %v3643 = vmul.f32 %v3612, %v2150
          %v3644 = vmul.f32 %v3615, %v2150
          %v3645 = vmul.f32 %v3618, %v2150
          %v3646 = vmul.f32 %v3621, %v2150
          %v3647 = vmul.f32 %v3624, %v2150
          %v3648 = vmul.f32 %v3627, %v2150
          %v3649 = vmul.f32 %v3630, %v2150
          %v3650 = vmul.f32 %v3633, %v2150
          %v3651 = vmul.f32 %v3636, %v2150
          %v3652 = vmul.f32 %v3639, %v2150
          %v3653 = vsub.f32 %v3586, %v3640
          %v3654 = vsub.f32 %v3587, %v3641
          %v3655 = vsub.f32 %v3588, %v3642
          %v3656 = vsub.f32 %v3589, %v3643
          %v3657 = vsub.f32 %v3590, %v3644
          %v3658 = vsub.f32 %v3591, %v3645
          %v3659 = vsub.f32 %v3592, %v3646
          %v3660 = vsub.f32 %v3593, %v3647
          %v3661 = vsub.f32 %v3594, %v3648
          %v3662 = vsub.f32 %v3595, %v3649
          %v3663 = vsub.f32 %v3596, %v3650
          %v3664 = vsub.f32 %v3597, %v3651
          %v3665 = vsub.f32 %v3598, %v3652
          %v3666 = vmul.f32 %v3653, %v3653
          %v3667 = vmul.f32 %v3654, %v3654
          %v3668 = vmul.f32 %v3655, %v3655
          %v3669 = vmul.f32 %v3656, %v3656
          %v3670 = vmul.f32 %v3657, %v3657
          %v3671 = vmul.f32 %v3658, %v3658
          %v3672 = vmul.f32 %v3659, %v3659
          %v3673 = vmul.f32 %v3660, %v3660
          %v3674 = vmul.f32 %v3661, %v3661
          %v3675 = vmul.f32 %v3662, %v3662
          %v3676 = vmul.f32 %v3663, %v3663
          %v3677 = vmul.f32 %v3664, %v3664
          %v3678 = vmul.f32 %v3665, %v3665
          %v3679 = vsel %vm848, %v3666, 0.0
          %3680 = vadd.xlane.f32.xlu0 %v3679
          %v3681 = vpop.xlane.xlu0 %3680
          %v3682 = vsel %vm848, %v3667, 0.0
          %3683 = vadd.xlane.f32.xlu0 %v3682
          %v3684 = vpop.xlane.xlu0 %3683
          %v3685 = vsel %vm848, %v3668, 0.0
          %3686 = vadd.xlane.f32.xlu0 %v3685
          %v3687 = vpop.xlane.xlu0 %3686
          %v3688 = vsel %vm848, %v3669, 0.0
          %3689 = vadd.xlane.f32.xlu0 %v3688
          %v3690 = vpop.xlane.xlu0 %3689
          %v3691 = vsel %vm848, %v3670, 0.0
          %3692 = vadd.xlane.f32.xlu0 %v3691
          %v3693 = vpop.xlane.xlu0 %3692
          %v3694 = vsel %vm848, %v3671, 0.0
          %3695 = vadd.xlane.f32.xlu0 %v3694
          %v3696 = vpop.xlane.xlu0 %3695
          %v3697 = vsel %vm848, %v3672, 0.0
          %3698 = vadd.xlane.f32.xlu0 %v3697
          %v3699 = vpop.xlane.xlu0 %3698
          %v3700 = vsel %vm848, %v3673, 0.0
          %3701 = vadd.xlane.f32.xlu0 %v3700
          %v3702 = vpop.xlane.xlu0 %3701
          %v3703 = vsel %vm848, %v3674, 0.0
          %3704 = vadd.xlane.f32.xlu0 %v3703
          %v3705 = vpop.xlane.xlu0 %3704
          %v3706 = vsel %vm848, %v3675, 0.0
          %3707 = vadd.xlane.f32.xlu0 %v3706
          %v3708 = vpop.xlane.xlu0 %3707
          %v3709 = vsel %vm848, %v3676, 0.0
          %3710 = vadd.xlane.f32.xlu0 %v3709
          %v3711 = vpop.xlane.xlu0 %3710
          %v3712 = vsel %vm848, %v3677, 0.0
          %3713 = vadd.xlane.f32.xlu0 %v3712
          %v3714 = vpop.xlane.xlu0 %3713
          %v3715 = vsel %vm2146, %v3678, 0.0
          %3716 = vadd.xlane.f32.xlu0 %v3715
          %v3717 = vpop.xlane.xlu0 %3716
          %v3718 = vmul.f32 %v3681, %v2150
          %v3719 = vmul.f32 %v3684, %v2150
          %v3720 = vmul.f32 %v3687, %v2150
          %v3721 = vmul.f32 %v3690, %v2150
          %v3722 = vmul.f32 %v3693, %v2150
          %v3723 = vmul.f32 %v3696, %v2150
          %v3724 = vmul.f32 %v3699, %v2150
          %v3725 = vmul.f32 %v3702, %v2150
          %v3726 = vmul.f32 %v3705, %v2150
          %v3727 = vmul.f32 %v3708, %v2150
          %v3728 = vmul.f32 %v3711, %v2150
          %v3729 = vmul.f32 %v3714, %v2150
          %v3730 = vmul.f32 %v3717, %v2150
          %v3731 = vadd.f32 %v3718, 1e-05
          %v3732 = vadd.f32 %v3719, 1e-05
          %v3733 = vadd.f32 %v3720, 1e-05
          %v3734 = vadd.f32 %v3721, 1e-05
          %v3735 = vadd.f32 %v3722, 1e-05
          %v3736 = vadd.f32 %v3723, 1e-05
          %v3737 = vadd.f32 %v3724, 1e-05
          %v3738 = vadd.f32 %v3725, 1e-05
          %v3739 = vadd.f32 %v3726, 1e-05
          %v3740 = vadd.f32 %v3727, 1e-05
          %v3741 = vadd.f32 %v3728, 1e-05
          %v3742 = vadd.f32 %v3729, 1e-05
          %v3743 = vadd.f32 %v3730, 1e-05
          %v3744 = vrsqrt.pop %v3731
          %v3745 = vrsqrt.pop %v3732
          %v3746 = vrsqrt.pop %v3733
          %v3747 = vrsqrt.pop %v3734
          %v3748 = vrsqrt.pop %v3735
          %v3749 = vrsqrt.pop %v3736
          %v3750 = vrsqrt.pop %v3737
          %v3751 = vrsqrt.pop %v3738
          %v3752 = vrsqrt.pop %v3739
          %v3753 = vrsqrt.pop %v3740
          %v3754 = vrsqrt.pop %v3741
          %v3755 = vrsqrt.pop %v3742
          %v3756 = vrsqrt.pop %v3743
          %v3757 = vmul.f32 %v3653, %v3744
          %v3758 = vmul.f32 %v3654, %v3745
          %v3759 = vmul.f32 %v3655, %v3746
          %v3760 = vmul.f32 %v3656, %v3747
          %v3761 = vmul.f32 %v3657, %v3748
          %v3762 = vmul.f32 %v3658, %v3749
          %v3763 = vmul.f32 %v3659, %v3750
          %v3764 = vmul.f32 %v3660, %v3751
          %v3765 = vmul.f32 %v3661, %v3752
          %v3766 = vmul.f32 %v3662, %v3753
          %v3767 = vmul.f32 %v3663, %v3754
          %v3768 = vmul.f32 %v3664, %v3755
          %v3769 = vmul.f32 %v3665, %v3756
          %v3771 = vlaneseq
          %v3772 = vshrl.u32 %v3771, 7
          %v3773 = vsub.s32 0, %v3772
          %v3774 = vrot.slane %v3599, %v3773
          %v3776 = vmul.f32 %v3757, %v3774
          %v3777 = vmul.f32 %v3758, %v3774
          %v3778 = vmul.f32 %v3759, %v3774
          %v3779 = vmul.f32 %v3760, %v3774
          %v3780 = vmul.f32 %v3761, %v3774
          %v3781 = vmul.f32 %v3762, %v3774
          %v3782 = vmul.f32 %v3763, %v3774
          %v3783 = vmul.f32 %v3764, %v3774
          %v3784 = vmul.f32 %v3765, %v3774
          %v3785 = vmul.f32 %v3766, %v3774
          %v3786 = vmul.f32 %v3767, %v3774
          %v3787 = vmul.f32 %v3768, %v3774
          %v3788 = vmul.f32 %v3769, %v3774
          %v3790 = vlaneseq
          %v3791 = vshrl.u32 %v3790, 7
          %v3792 = vsub.s32 0, %v3791
          %v3793 = vrot.slane %v3600, %v3792
          %v3795 = vadd.f32 %v3776, %v3793
          %v3796 = vadd.f32 %v3777, %v3793
          %v3797 = vadd.f32 %v3778, %v3793
          %v3798 = vadd.f32 %v3779, %v3793
          %v3799 = vadd.f32 %v3780, %v3793
          %v3800 = vadd.f32 %v3781, %v3793
          %v3801 = vadd.f32 %v3782, %v3793
          %v3802 = vadd.f32 %v3783, %v3793
          %v3803 = vadd.f32 %v3784, %v3793
          %v3804 = vadd.f32 %v3785, %v3793
          %v3805 = vadd.f32 %v3786, %v3793
          %v3806 = vadd.f32 %v3787, %v3793
          %v3807 = vadd.f32 %v3788, %v3793
          %3808 = vst.msk [vmem:[#allocation2] sm:$0xff] %vm848, %v3795
          %3809 = vst.msk [vmem:[#allocation2 + $0x8] sm:$0xff] %vm848, %v3796
          %3810 = vst.msk [vmem:[#allocation2 + $0x10] sm:$0xff] %vm848, %v3797
          %3811 = vst.msk [vmem:[#allocation2 + $0x18] sm:$0xff] %vm848, %v3798
          %3812 = vst.msk [vmem:[#allocation2 + $0x20] sm:$0xff] %vm848, %v3799
          %3813 = vst.msk [vmem:[#allocation2 + $0x28] sm:$0xff] %vm848, %v3800
          %3814 = vst.msk [vmem:[#allocation2 + $0x30] sm:$0xff] %vm848, %v3801
          %3815 = vst.msk [vmem:[#allocation2 + $0x38] sm:$0xff] %vm848, %v3802
          %3816 = vst.msk [vmem:[#allocation2 + $0x40] sm:$0xff] %vm848, %v3803
          %3817 = vst.msk [vmem:[#allocation2 + $0x48] sm:$0xff] %vm848, %v3804
          %3818 = vst.msk [vmem:[#allocation2 + $0x50] sm:$0xff] %vm848, %v3805
          %3819 = vst.msk [vmem:[#allocation2 + $0x58] sm:$0xff] %vm848, %v3806
          %3820 = vst.msk [vmem:[#allocation2 + $0x60] sm:$0xf] %vm2146, %v3807
          %3821 = vst.msk [vmem:[#allocation3] sm:$0xff] %vm848, 0.0
          %3822 = vst.msk [vmem:[#allocation3 + $0x8] sm:$0xff] %vm848, 0.0
          %3823 = vst.msk [vmem:[#allocation3 + $0x10] sm:$0xff] %vm848, 0.0
          %3824 = vst.msk [vmem:[#allocation3 + $0x18] sm:$0xff] %vm848, 0.0
          %3825 = vst.msk [vmem:[#allocation3 + $0x20] sm:$0xff] %vm848, 0.0
          %3826 = vst.msk [vmem:[#allocation3 + $0x28] sm:$0xff] %vm848, 0.0
          %3827 = vst.msk [vmem:[#allocation3 + $0x30] sm:$0xff] %vm848, 0.0
          %3828 = vst.msk [vmem:[#allocation3 + $0x38] sm:$0xff] %vm848, 0.0
          %3829 = vst.msk [vmem:[#allocation3 + $0x40] sm:$0xff] %vm848, 0.0
          %3830 = vst.msk [vmem:[#allocation3 + $0x48] sm:$0xff] %vm848, 0.0
          %3831 = vst.msk [vmem:[#allocation3 + $0x50] sm:$0xff] %vm848, 0.0
          %3832 = vst.msk [vmem:[#allocation3 + $0x58] sm:$0xff] %vm848, 0.0
          %3833 = vst.msk [vmem:[#allocation3 + $0x60] sm:$0xf] %vm2146, 0.0
        $region135: #{detr_forward.8} parent=126 // pred_fallthru
          _
        %v3834 = vld [vmem:[#allocation2] sm:$0xff]
        %v3835 = vld [vmem:[#allocation2 + $0x8] sm:$0xff]
        %v3836 = vld [vmem:[#allocation2 + $0x10] sm:$0xff]
        %v3837 = vld [vmem:[#allocation2 + $0x18] sm:$0xff]
        %v3838 = vld [vmem:[#allocation2 + $0x20] sm:$0xff]
        %v3839 = vld [vmem:[#allocation2 + $0x28] sm:$0xff]
        %v3840 = vld [vmem:[#allocation2 + $0x30] sm:$0xff]
        %v3841 = vld [vmem:[#allocation2 + $0x38] sm:$0xff]
        %v3842 = vld [vmem:[#allocation2 + $0x40] sm:$0xff]
        %v3843 = vld [vmem:[#allocation2 + $0x48] sm:$0xff]
        %v3844 = vld [vmem:[#allocation2 + $0x50] sm:$0xff]
        %v3845 = vld [vmem:[#allocation2 + $0x58] sm:$0xff]
        %v3846 = vld [vmem:[#allocation2 + $0x60] sm:$0xf]
        %v3847 = vpack.c.bf16 %v3835, %v3834
        %v3848 = vpack.c.bf16 %v3837, %v3836
        %v3849 = vpack.c.bf16 %v3839, %v3838
        %v3850 = vpack.c.bf16 %v3841, %v3840
        %v3851 = vpack.c.bf16 %v3843, %v3842
        %v3852 = vpack.c.bf16 %v3845, %v3844
        %v3853 = vpack.c.bf16 %v3846, %v3846
        %v3854 = vld [vmem:[%s686] sm:$0xff]
        %v3855 = vld [vmem:[%s686 + $0x8] sm:$0xff]
        %v3856 = vld [vmem:[%s686 + $0x10] sm:$0xff]
        %v3857 = vld [vmem:[%s686 + $0x18] sm:$0xff]
        %v3858 = vld [vmem:[%s686 + $0x20] sm:$0xff]
        %v3859 = vld [vmem:[%s686 + $0x28] sm:$0xff]
        %v3860 = vld [vmem:[%s686 + $0x30] sm:$0xff]
        %v3861 = vld [vmem:[%s686 + $0x38] sm:$0xff]
        %v3862 = vld [vmem:[%s686 + $0x40] sm:$0xff]
        %v3863 = vld [vmem:[%s686 + $0x48] sm:$0xff]
        %v3864 = vld [vmem:[%s686 + $0x50] sm:$0xff]
        %v3865 = vld [vmem:[%s686 + $0x58] sm:$0xff]
        %v3866 = vld [vmem:[%s686 + $0x60] sm:$0xff]
        %v3867 = vld [vmem:[%s686 + $0x68] sm:$0xff]
        %v3868 = vld [vmem:[%s686 + $0x70] sm:$0xff]
        %v3869 = vld [vmem:[%s686 + $0x78] sm:$0xff]
        %v3870 = vld [vmem:[%s753] sm:$0xf]
        %v3872 = vlaneseq
        %v3873 = vshrl.u32 %v3872, 7
        %v3874 = vsub.s32 0, %v3873
        %v3875 = vrot.slane %v3870, %v3874
        %v3876 = vlaneseq
        %v3877 = vshrl.u32 %v3876, 7
        %v3878 = vsub.s32 1, %v3877
        %v3879 = vrot.slane %v3870, %v3878
        %v3880 = vlaneseq
        %v3881 = vshrl.u32 %v3880, 7
        %v3882 = vsub.s32 2, %v3881
        %v3883 = vrot.slane %v3870, %v3882
        %v3884 = vlaneseq
        %v3885 = vshrl.u32 %v3884, 7
        %v3886 = vsub.s32 3, %v3885
        %v3887 = vrot.slane %v3870, %v3886
        %v3908 = vunpack.c.l.b16 %v3854
        %v3909 = vunpack.c.h.b16 %v3854
        %v3910 = vunpack.c.l.b16 %v3855
        %v3911 = vunpack.c.h.b16 %v3855
        %v3912 = vunpack.c.l.b16 %v3856
        %v3913 = vunpack.c.h.b16 %v3856
        %v3914 = vunpack.c.l.b16 %v3857
        %v3915 = vunpack.c.h.b16 %v3857
        %v3916 = vunpack.c.l.b16 %v3858
        %v3917 = vunpack.c.h.b16 %v3858
        %v3918 = vunpack.c.l.b16 %v3859
        %v3919 = vunpack.c.h.b16 %v3859
        %v3920 = vunpack.c.l.b16 %v3860
        %v3921 = vunpack.c.h.b16 %v3860
        %v3922 = vunpack.c.l.b16 %v3861
        %v3923 = vunpack.c.h.b16 %v3861
        %v3924 = vunpack.c.l.b16 %v3862
        %v3925 = vunpack.c.h.b16 %v3862
        %v3926 = vunpack.c.l.b16 %v3863
        %v3927 = vunpack.c.h.b16 %v3863
        %v3928 = vunpack.c.l.b16 %v3864
        %v3929 = vunpack.c.h.b16 %v3864
        %v3930 = vunpack.c.l.b16 %v3865
        %v3931 = vunpack.c.h.b16 %v3865
        %v3932 = vunpack.c.l.b16 %v3866
        %v3933 = vunpack.c.h.b16 %v3866
        %v3934 = vunpack.c.l.b16 %v3867
        %v3935 = vunpack.c.h.b16 %v3867
        %v3936 = vunpack.c.l.b16 %v3868
        %v3937 = vunpack.c.h.b16 %v3868
        %v3938 = vunpack.c.l.b16 %v3869
        %v3939 = vunpack.c.h.b16 %v3869
        %v3940 = vpack.c.b16 %v3912, %v3908
        %v3941 = vpack.c.b16 %v3913, %v3909
        %v3942 = vpack.c.b16 %v3914, %v3910
        %v3943 = vpack.c.b16 %v3915, %v3911
        %v3944 = vpack.c.b16 %v3920, %v3916
        %v3945 = vpack.c.b16 %v3921, %v3917
        %v3946 = vpack.c.b16 %v3922, %v3918
        %v3947 = vpack.c.b16 %v3923, %v3919
        %v3948 = vpack.c.b16 %v3928, %v3924
        %v3949 = vpack.c.b16 %v3929, %v3925
        %v3950 = vpack.c.b16 %v3930, %v3926
        %v3951 = vpack.c.b16 %v3931, %v3927
        %v3952 = vpack.c.b16 %v3936, %v3932
        %v3953 = vpack.c.b16 %v3937, %v3933
        %v3954 = vpack.c.b16 %v3938, %v3934
        %v3955 = vpack.c.b16 %v3939, %v3935
        %vm3972 = vcmask 523264
        %v3974 = vsel %vm3972, %v3847, 0
        %v3977 = vsel %vm3972, %v3848, 0
        %v3980 = vsel %vm3972, %v3849, 0
        %v3983 = vsel %vm3972, %v3850, 0
        %v3986 = vsel %vm3972, %v3851, 0
        %v3989 = vsel %vm3972, %v3852, 0
        %v3992 = vsel %vm3972, %v3853, 0
        %3994 = vmatprep.subr.bf16.mxu0 0
        %3995 = vmatpush1.bf16.msra.mxu0 0
        %3996 = vmatprep.subr.bf16.mxu0 0
        %3997 = vmatpush1.bf16.msra.mxu0 0
        %3998 = vmatprep.subr.bf16.mxu0 0
        %3999 = vmatpush1.bf16.msra.mxu0 0
        %4000 = vmatprep.subr.bf16.mxu0 0
        %4001 = vmatpush1.bf16.msra.mxu0 0
        %4002 = vmatprep.subr.bf16.mxu0 %v3953
        %4003 = vmatpush1.bf16.msra.mxu0 %v3952
        %4004 = vmatprep.subr.bf16.mxu0 %v3949
        %4005 = vmatpush1.bf16.msra.mxu0 %v3948
        %4006 = vmatprep.subr.bf16.mxu0 %v3945
        %4007 = vmatpush1.bf16.msra.mxu0 %v3944
        %4008 = vmatprep.subr.bf16.mxu0 %v3941
        %4009 = vmatpush1.bf16.msra.mxu0 %v3940
        %4010 = vmatprep.subr.bf16.mxu0 0
        %4011 = vmatpush2.bf16.msra.mxu0 0
        %4012 = vmatprep.subr.bf16.mxu0 0
        %4013 = vmatpush2.bf16.msra.mxu0 0
        %4014 = vmatprep.subr.bf16.mxu0 0
        %4015 = vmatpush2.bf16.msra.mxu0 0
        %4016 = vmatprep.subr.bf16.mxu0 0
        %4017 = vmatpush2.bf16.msra.mxu0 0
        %4018 = vmatprep.subr.bf16.mxu0 0
        %4019 = vmatpush2.bf16.msra.mxu0 0
        %4020 = vmatprep.subr.bf16.mxu0 0
        %4021 = vmatpush2.bf16.msra.mxu0 0
        %4022 = vmatprep.subr.bf16.mxu0 0
        %4023 = vmatpush2.bf16.msra.mxu0 0
        %4024 = vmatprep.subr.bf16.mxu0 0
        %4025 = vmatpush2.bf16.msra.mxu0 0
        %4026 = vmatprep.mubr.bf16.mxu0 0
        %4027 = vmatmul.mubr.bf16.gmra.mxu0 %v3974
        %v4028 = vpop.f32.mrf.mxu0
        %v4029 = vadd.f32 %v3875, %v4028
        %v4030 = vpop.f32.mrf.mxu0
        %v4031 = vadd.f32 %v3879, %v4030
        %v4032 = vpop.f32.mrf.mxu0
        %v4033 = vadd.f32 %v3875, %v4032
        %v4034 = vpop.f32.mrf.mxu0
        %v4035 = vadd.f32 %v3879, %v4034
        %4036 = vmatprep.mubr.bf16.mxu0 0
        %4037 = vmatmul.mubr.bf16.gmra.mxu0 %v3977
        %v4038 = vpop.f32.mrf.mxu0
        %v4039 = vadd.f32 %v3875, %v4038
        %v4040 = vpop.f32.mrf.mxu0
        %v4041 = vadd.f32 %v3879, %v4040
        %v4042 = vpop.f32.mrf.mxu0
        %v4043 = vadd.f32 %v3875, %v4042
        %v4044 = vpop.f32.mrf.mxu0
        %v4045 = vadd.f32 %v3879, %v4044
        %4046 = vmatprep.mubr.bf16.mxu0 0
        %4047 = vmatmul.mubr.bf16.gmra.mxu0 %v3980
        %v4048 = vpop.f32.mrf.mxu0
        %v4049 = vadd.f32 %v3875, %v4048
        %v4050 = vpop.f32.mrf.mxu0
        %v4051 = vadd.f32 %v3879, %v4050
        %v4052 = vpop.f32.mrf.mxu0
        %v4053 = vadd.f32 %v3875, %v4052
        %v4054 = vpop.f32.mrf.mxu0
        %v4055 = vadd.f32 %v3879, %v4054
        %4056 = vmatprep.mubr.bf16.mxu0 0
        %4057 = vmatmul.mubr.bf16.gmra.mxu0 %v3983
        %v4058 = vpop.f32.mrf.mxu0
        %v4059 = vadd.f32 %v3875, %v4058
        %v4060 = vpop.f32.mrf.mxu0
        %v4061 = vadd.f32 %v3879, %v4060
        %v4062 = vpop.f32.mrf.mxu0
        %v4063 = vadd.f32 %v3875, %v4062
        %v4064 = vpop.f32.mrf.mxu0
        %v4065 = vadd.f32 %v3879, %v4064
        %4066 = vmatprep.mubr.bf16.mxu0 0
        %4067 = vmatmul.mubr.bf16.gmra.mxu0 %v3986
        %v4068 = vpop.f32.mrf.mxu0
        %v4069 = vadd.f32 %v3875, %v4068
        %v4070 = vpop.f32.mrf.mxu0
        %v4071 = vadd.f32 %v3879, %v4070
        %v4072 = vpop.f32.mrf.mxu0
        %v4073 = vadd.f32 %v3875, %v4072
        %v4074 = vpop.f32.mrf.mxu0
        %v4075 = vadd.f32 %v3879, %v4074
        %4076 = vmatprep.mubr.bf16.mxu0 0
        %4077 = vmatmul.mubr.bf16.gmra.mxu0 %v3989
        %v4078 = vpop.f32.mrf.mxu0
        %v4079 = vadd.f32 %v3875, %v4078
        %v4080 = vpop.f32.mrf.mxu0
        %v4081 = vadd.f32 %v3879, %v4080
        %v4082 = vpop.f32.mrf.mxu0
        %v4083 = vadd.f32 %v3875, %v4082
        %v4084 = vpop.f32.mrf.mxu0
        %v4085 = vadd.f32 %v3879, %v4084
        %4086 = vmatprep.mubr.bf16.mxu0 0
        %4087 = vmatmul.mubr.bf16.gmra.mxu0 %v3992
        %v4088 = vpop.f32.mrf.mxu0
        %v4089 = vadd.f32 %v3875, %v4088
        %v4090 = vpop.f32.mrf.mxu0
        %v4091 = vadd.f32 %v3879, %v4090
        %v4092 = vpop.f32.mrf.mxu0
        %v4093 = vpop.f32.mrf.mxu0
        %4094 = vdwg.mxu0
        %4095 = vmatprep.subr.bf16.mxu0 0
        %4096 = vmatpush1.bf16.msra.mxu0 0
        %4097 = vmatprep.subr.bf16.mxu0 0
        %4098 = vmatpush1.bf16.msra.mxu0 0
        %4099 = vmatprep.subr.bf16.mxu0 0
        %4100 = vmatpush1.bf16.msra.mxu0 0
        %4101 = vmatprep.subr.bf16.mxu0 0
        %4102 = vmatpush1.bf16.msra.mxu0 0
        %4103 = vmatprep.subr.bf16.mxu0 %v3955
        %4104 = vmatpush1.bf16.msra.mxu0 %v3954
        %4105 = vmatprep.subr.bf16.mxu0 %v3951
        %4106 = vmatpush1.bf16.msra.mxu0 %v3950
        %4107 = vmatprep.subr.bf16.mxu0 %v3947
        %4108 = vmatpush1.bf16.msra.mxu0 %v3946
        %4109 = vmatprep.subr.bf16.mxu0 %v3943
        %4110 = vmatpush1.bf16.msra.mxu0 %v3942
        %4111 = vmatprep.subr.bf16.mxu0 0
        %4112 = vmatpush2.bf16.msra.mxu0 0
        %4113 = vmatprep.subr.bf16.mxu0 0
        %4114 = vmatpush2.bf16.msra.mxu0 0
        %4115 = vmatprep.subr.bf16.mxu0 0
        %4116 = vmatpush2.bf16.msra.mxu0 0
        %4117 = vmatprep.subr.bf16.mxu0 0
        %4118 = vmatpush2.bf16.msra.mxu0 0
        %4119 = vmatprep.subr.bf16.mxu0 0
        %4120 = vmatpush2.bf16.msra.mxu0 0
        %4121 = vmatprep.subr.bf16.mxu0 0
        %4122 = vmatpush2.bf16.msra.mxu0 0
        %4123 = vmatprep.subr.bf16.mxu0 0
        %4124 = vmatpush2.bf16.msra.mxu0 0
        %4125 = vmatprep.subr.bf16.mxu0 0
        %4126 = vmatpush2.bf16.msra.mxu0 0
        %4127 = vmatprep.mubr.bf16.mxu0 0
        %4128 = vmatmul.mubr.bf16.gmra.mxu0 %v3974
        %v4129 = vpop.f32.mrf.mxu0
        %v4130 = vadd.f32 %v3883, %v4129
        %v4131 = vpop.f32.mrf.mxu0
        %v4132 = vadd.f32 %v3887, %v4131
        %v4133 = vpop.f32.mrf.mxu0
        %v4134 = vadd.f32 %v3883, %v4133
        %v4135 = vpop.f32.mrf.mxu0
        %v4136 = vadd.f32 %v3887, %v4135
        %4137 = vmatprep.mubr.bf16.mxu0 0
        %4138 = vmatmul.mubr.bf16.gmra.mxu0 %v3977
        %v4139 = vpop.f32.mrf.mxu0
        %v4140 = vadd.f32 %v3883, %v4139
        %v4141 = vpop.f32.mrf.mxu0
        %v4142 = vadd.f32 %v3887, %v4141
        %v4143 = vpop.f32.mrf.mxu0
        %v4144 = vadd.f32 %v3883, %v4143
        %v4145 = vpop.f32.mrf.mxu0
        %v4146 = vadd.f32 %v3887, %v4145
        %4147 = vmatprep.mubr.bf16.mxu0 0
        %4148 = vmatmul.mubr.bf16.gmra.mxu0 %v3980
        %v4149 = vpop.f32.mrf.mxu0
        %v4150 = vadd.f32 %v3883, %v4149
        %v4151 = vpop.f32.mrf.mxu0
        %v4152 = vadd.f32 %v3887, %v4151
        %v4153 = vpop.f32.mrf.mxu0
        %v4154 = vadd.f32 %v3883, %v4153
        %v4155 = vpop.f32.mrf.mxu0
        %v4156 = vadd.f32 %v3887, %v4155
        %4157 = vmatprep.mubr.bf16.mxu0 0
        %4158 = vmatmul.mubr.bf16.gmra.mxu0 %v3983
        %v4159 = vpop.f32.mrf.mxu0
        %v4160 = vadd.f32 %v3883, %v4159
        %v4161 = vpop.f32.mrf.mxu0
        %v4162 = vadd.f32 %v3887, %v4161
        %v4163 = vpop.f32.mrf.mxu0
        %v4164 = vadd.f32 %v3883, %v4163
        %v4165 = vpop.f32.mrf.mxu0
        %v4166 = vadd.f32 %v3887, %v4165
        %4167 = vmatprep.mubr.bf16.mxu0 0
        %4168 = vmatmul.mubr.bf16.gmra.mxu0 %v3986
        %v4169 = vpop.f32.mrf.mxu0
        %v4170 = vadd.f32 %v3883, %v4169
        %v4171 = vpop.f32.mrf.mxu0
        %v4172 = vadd.f32 %v3887, %v4171
        %v4173 = vpop.f32.mrf.mxu0
        %v4174 = vadd.f32 %v3883, %v4173
        %v4175 = vpop.f32.mrf.mxu0
        %v4176 = vadd.f32 %v3887, %v4175
        %4177 = vmatprep.mubr.bf16.mxu0 0
        %4178 = vmatmul.mubr.bf16.gmra.mxu0 %v3989
        %v4179 = vpop.f32.mrf.mxu0
        %v4180 = vadd.f32 %v3883, %v4179
        %v4181 = vpop.f32.mrf.mxu0
        %v4182 = vadd.f32 %v3887, %v4181
        %v4183 = vpop.f32.mrf.mxu0
        %v4184 = vadd.f32 %v3883, %v4183
        %v4185 = vpop.f32.mrf.mxu0
        %v4186 = vadd.f32 %v3887, %v4185
        %4187 = vmatprep.mubr.bf16.mxu0 0
        %4188 = vmatmul.mubr.bf16.gmra.mxu0 %v3992
        %v4189 = vpop.f32.mrf.mxu0
        %v4190 = vadd.f32 %v3883, %v4189
        %v4191 = vpop.f32.mrf.mxu0
        %v4192 = vadd.f32 %v3887, %v4191
        %v4193 = vpop.f32.mrf.mxu0
        %v4194 = vpop.f32.mrf.mxu0
        %4195 = vdwg.mxu0
        %v4196 = vmax.f32 %v4029, 0.0
        %v4197 = vmax.f32 %v4031, 0.0
        %v4198 = vmax.f32 %v4130, 0.0
        %v4199 = vmax.f32 %v4132, 0.0
        %v4200 = vmax.f32 %v4033, 0.0
        %v4201 = vmax.f32 %v4035, 0.0
        %v4202 = vmax.f32 %v4134, 0.0
        %v4203 = vmax.f32 %v4136, 0.0
        %v4204 = vmax.f32 %v4039, 0.0
        %v4205 = vmax.f32 %v4041, 0.0
        %v4206 = vmax.f32 %v4140, 0.0
        %v4207 = vmax.f32 %v4142, 0.0
        %v4208 = vmax.f32 %v4043, 0.0
        %v4209 = vmax.f32 %v4045, 0.0
        %v4210 = vmax.f32 %v4144, 0.0
        %v4211 = vmax.f32 %v4146, 0.0
        %v4212 = vmax.f32 %v4049, 0.0
        %v4213 = vmax.f32 %v4051, 0.0
        %v4214 = vmax.f32 %v4150, 0.0
        %v4215 = vmax.f32 %v4152, 0.0
        %v4216 = vmax.f32 %v4053, 0.0
        %v4217 = vmax.f32 %v4055, 0.0
        %v4218 = vmax.f32 %v4154, 0.0
        %v4219 = vmax.f32 %v4156, 0.0
        %v4220 = vmax.f32 %v4059, 0.0
        %v4221 = vmax.f32 %v4061, 0.0
        %v4222 = vmax.f32 %v4160, 0.0
        %v4223 = vmax.f32 %v4162, 0.0
        %v4224 = vmax.f32 %v4063, 0.0
        %v4225 = vmax.f32 %v4065, 0.0
        %v4226 = vmax.f32 %v4164, 0.0
        %v4227 = vmax.f32 %v4166, 0.0
        %v4228 = vmax.f32 %v4069, 0.0
        %v4229 = vmax.f32 %v4071, 0.0
        %v4230 = vmax.f32 %v4170, 0.0
        %v4231 = vmax.f32 %v4172, 0.0
        %v4232 = vmax.f32 %v4073, 0.0
        %v4233 = vmax.f32 %v4075, 0.0
        %v4234 = vmax.f32 %v4174, 0.0
        %v4235 = vmax.f32 %v4176, 0.0
        %v4236 = vmax.f32 %v4079, 0.0
        %v4237 = vmax.f32 %v4081, 0.0
        %v4238 = vmax.f32 %v4180, 0.0
        %v4239 = vmax.f32 %v4182, 0.0
        %v4240 = vmax.f32 %v4083, 0.0
        %v4241 = vmax.f32 %v4085, 0.0
        %v4242 = vmax.f32 %v4184, 0.0
        %v4243 = vmax.f32 %v4186, 0.0
        %v4244 = vmax.f32 %v4089, 0.0
        %v4245 = vmax.f32 %v4091, 0.0
        %v4246 = vmax.f32 %v4190, 0.0
        %v4247 = vmax.f32 %v4192, 0.0
        %v4248 = vld [vmem:[#allocation3] sm:$0xff]
        %v4249 = vld [vmem:[#allocation3 + $0x8] sm:$0xff]
        %v4250 = vld [vmem:[#allocation3 + $0x10] sm:$0xff]
        %v4251 = vld [vmem:[#allocation3 + $0x18] sm:$0xff]
        %v4252 = vld [vmem:[#allocation3 + $0x20] sm:$0xff]
        %v4253 = vld [vmem:[#allocation3 + $0x28] sm:$0xff]
        %v4254 = vld [vmem:[#allocation3 + $0x30] sm:$0xff]
        %v4255 = vld [vmem:[#allocation3 + $0x38] sm:$0xff]
        %v4256 = vld [vmem:[#allocation3 + $0x40] sm:$0xff]
        %v4257 = vld [vmem:[#allocation3 + $0x48] sm:$0xff]
        %v4258 = vld [vmem:[#allocation3 + $0x50] sm:$0xff]
        %v4259 = vld [vmem:[#allocation3 + $0x58] sm:$0xff]
        %v4260 = vld [vmem:[#allocation3 + $0x60] sm:$0xf]
        %v4261 = vpack.c.bf16 %v4200, %v4196
        %v4262 = vpack.c.bf16 %v4201, %v4197
        %v4263 = vpack.c.bf16 %v4202, %v4198
        %v4264 = vpack.c.bf16 %v4203, %v4199
        %v4265 = vpack.c.bf16 %v4208, %v4204
        %v4266 = vpack.c.bf16 %v4209, %v4205
        %v4267 = vpack.c.bf16 %v4210, %v4206
        %v4268 = vpack.c.bf16 %v4211, %v4207
        %v4269 = vpack.c.bf16 %v4216, %v4212
        %v4270 = vpack.c.bf16 %v4217, %v4213
        %v4271 = vpack.c.bf16 %v4218, %v4214
        %v4272 = vpack.c.bf16 %v4219, %v4215
        %v4273 = vpack.c.bf16 %v4224, %v4220
        %v4274 = vpack.c.bf16 %v4225, %v4221
        %v4275 = vpack.c.bf16 %v4226, %v4222
        %v4276 = vpack.c.bf16 %v4227, %v4223
        %v4277 = vpack.c.bf16 %v4232, %v4228
        %v4278 = vpack.c.bf16 %v4233, %v4229
        %v4279 = vpack.c.bf16 %v4234, %v4230
        %v4280 = vpack.c.bf16 %v4235, %v4231
        %v4281 = vpack.c.bf16 %v4240, %v4236
        %v4282 = vpack.c.bf16 %v4241, %v4237
        %v4283 = vpack.c.bf16 %v4242, %v4238
        %v4284 = vpack.c.bf16 %v4243, %v4239
        %v4285 = vpack.c.bf16 %v4244, %v4244
        %v4286 = vpack.c.bf16 %v4245, %v4245
        %v4287 = vpack.c.bf16 %v4246, %v4246
        %v4288 = vpack.c.bf16 %v4247, %v4247
        %v4289 = vld [vmem:[%s759] sm:$0xf]
        %v4290 = vld [vmem:[%s759 + $0x4] sm:$0xf]
        %v4291 = vld [vmem:[%s759 + $0x8] sm:$0xf]
        %v4292 = vld [vmem:[%s759 + $0xc] sm:$0xf]
        %v4293 = vld [vmem:[%s759 + $0x10] sm:$0xf]
        %v4294 = vld [vmem:[%s759 + $0x14] sm:$0xf]
        %v4295 = vld [vmem:[%s759 + $0x18] sm:$0xf]
        %v4296 = vld [vmem:[%s759 + $0x1c] sm:$0xf]
        %v4297 = vld [vmem:[%s759 + $0x20] sm:$0xf]
        %v4298 = vld [vmem:[%s759 + $0x24] sm:$0xf]
        %v4299 = vld [vmem:[%s759 + $0x28] sm:$0xf]
        %v4300 = vld [vmem:[%s759 + $0x2c] sm:$0xf]
        %v4301 = vld [vmem:[%s759 + $0x30] sm:$0xf]
        %v4302 = vld [vmem:[%s759 + $0x34] sm:$0xf]
        %v4303 = vld [vmem:[%s759 + $0x38] sm:$0xf]
        %v4304 = vld [vmem:[%s759 + $0x3c] sm:$0xf]
        %v4305 = vld [vmem:[%s759 + $0x40] sm:$0xf]
        %v4306 = vld [vmem:[%s759 + $0x44] sm:$0xf]
        %v4307 = vld [vmem:[%s759 + $0x48] sm:$0xf]
        %v4308 = vld [vmem:[%s759 + $0x4c] sm:$0xf]
        %v4309 = vld [vmem:[%s759 + $0x50] sm:$0xf]
        %v4310 = vld [vmem:[%s759 + $0x54] sm:$0xf]
        %v4311 = vld [vmem:[%s759 + $0x58] sm:$0xf]
        %v4312 = vld [vmem:[%s759 + $0x5c] sm:$0xf]
        %v4313 = vld [vmem:[%s759 + $0x60] sm:$0xf]
        %v4314 = vld [vmem:[%s759 + $0x64] sm:$0xf]
        %v4315 = vld [vmem:[%s759 + $0x68] sm:$0xf]
        %v4316 = vld [vmem:[%s759 + $0x6c] sm:$0xf]
        %v4317 = vld [vmem:[%s759 + $0x70] sm:$0xf]
        %v4318 = vld [vmem:[%s759 + $0x74] sm:$0xf]
        %v4319 = vld [vmem:[%s759 + $0x78] sm:$0xf]
        %v4320 = vld [vmem:[%s759 + $0x7c] sm:$0xf]
        %v4321 = vld [vmem:[%s759 + $0x80] sm:$0xf]
        %v4322 = vld [vmem:[%s759 + $0x84] sm:$0xf]
        %v4323 = vld [vmem:[%s759 + $0x88] sm:$0xf]
        %v4324 = vld [vmem:[%s759 + $0x8c] sm:$0xf]
        %v4325 = vld [vmem:[%s759 + $0x90] sm:$0xf]
        %v4326 = vld [vmem:[%s759 + $0x94] sm:$0xf]
        %v4327 = vld [vmem:[%s759 + $0x98] sm:$0xf]
        %v4328 = vld [vmem:[%s759 + $0x9c] sm:$0xf]
        %v4329 = vld [vmem:[%s759 + $0xa0] sm:$0xf]
        %v4330 = vld [vmem:[%s759 + $0xa4] sm:$0xf]
        %v4331 = vld [vmem:[%s759 + $0xa8] sm:$0xf]
        %v4332 = vld [vmem:[%s759 + $0xac] sm:$0xf]
        %v4333 = vld [vmem:[%s759 + $0xb0] sm:$0xf]
        %v4334 = vld [vmem:[%s759 + $0xb4] sm:$0xf]
        %v4335 = vld [vmem:[%s759 + $0xb8] sm:$0xf]
        %v4336 = vld [vmem:[%s759 + $0xbc] sm:$0xf]
        %v4337 = vld [vmem:[%s759 + $0xc0] sm:$0xf]
        %v4338 = vld [vmem:[%s759 + $0xc4] sm:$0xf]
        %v4339 = vld [vmem:[%s759 + $0xc8] sm:$0xf]
        %v4340 = vld [vmem:[%s759 + $0xcc] sm:$0xf]
        %v4341 = vld [vmem:[%s759 + $0xd0] sm:$0xf]
        %v4342 = vld [vmem:[%s759 + $0xd4] sm:$0xf]
        %v4343 = vld [vmem:[%s759 + $0xd8] sm:$0xf]
        %v4344 = vld [vmem:[%s759 + $0xdc] sm:$0xf]
        %v4345 = vld [vmem:[%s759 + $0xe0] sm:$0xf]
        %v4346 = vld [vmem:[%s759 + $0xe4] sm:$0xf]
        %v4347 = vld [vmem:[%s759 + $0xe8] sm:$0xf]
        %v4348 = vld [vmem:[%s759 + $0xec] sm:$0xf]
        %v4349 = vld [vmem:[%s759 + $0xf0] sm:$0xf]
        %v4350 = vld [vmem:[%s759 + $0xf4] sm:$0xf]
        %v4351 = vld [vmem:[%s759 + $0xf8] sm:$0xf]
        %v4352 = vld [vmem:[%s759 + $0xfc] sm:$0xf]
        %v4417 = vunpack.c.l.b16 %v4289
        %v4418 = vunpack.c.l.b16 %v4290
        %v4419 = vunpack.c.l.b16 %v4291
        %v4420 = vunpack.c.l.b16 %v4292
        %v4421 = vunpack.c.l.b16 %v4293
        %v4422 = vunpack.c.l.b16 %v4294
        %v4423 = vunpack.c.l.b16 %v4295
        %v4424 = vunpack.c.l.b16 %v4296
        %v4425 = vunpack.c.l.b16 %v4297
        %v4426 = vunpack.c.l.b16 %v4298
        %v4427 = vunpack.c.l.b16 %v4299
        %v4428 = vunpack.c.l.b16 %v4300
        %v4429 = vunpack.c.l.b16 %v4301
        %v4430 = vunpack.c.l.b16 %v4302
        %v4431 = vunpack.c.l.b16 %v4303
        %v4432 = vunpack.c.l.b16 %v4304
        %v4433 = vunpack.c.l.b16 %v4305
        %v4434 = vunpack.c.l.b16 %v4306
        %v4435 = vunpack.c.l.b16 %v4307
        %v4436 = vunpack.c.l.b16 %v4308
        %v4437 = vunpack.c.l.b16 %v4309
        %v4438 = vunpack.c.l.b16 %v4310
        %v4439 = vunpack.c.l.b16 %v4311
        %v4440 = vunpack.c.l.b16 %v4312
        %v4441 = vunpack.c.l.b16 %v4313
        %v4442 = vunpack.c.l.b16 %v4314
        %v4443 = vunpack.c.l.b16 %v4315
        %v4444 = vunpack.c.l.b16 %v4316
        %v4445 = vunpack.c.l.b16 %v4317
        %v4446 = vunpack.c.l.b16 %v4318
        %v4447 = vunpack.c.l.b16 %v4319
        %v4448 = vunpack.c.l.b16 %v4320
        %v4449 = vunpack.c.l.b16 %v4321
        %v4450 = vunpack.c.l.b16 %v4322
        %v4451 = vunpack.c.l.b16 %v4323
        %v4452 = vunpack.c.l.b16 %v4324
        %v4453 = vunpack.c.l.b16 %v4325
        %v4454 = vunpack.c.l.b16 %v4326
        %v4455 = vunpack.c.l.b16 %v4327
        %v4456 = vunpack.c.l.b16 %v4328
        %v4457 = vunpack.c.l.b16 %v4329
        %v4458 = vunpack.c.l.b16 %v4330
        %v4459 = vunpack.c.l.b16 %v4331
        %v4460 = vunpack.c.l.b16 %v4332
        %v4461 = vunpack.c.l.b16 %v4333
        %v4462 = vunpack.c.l.b16 %v4334
        %v4463 = vunpack.c.l.b16 %v4335
        %v4464 = vunpack.c.l.b16 %v4336
        %v4465 = vunpack.c.l.b16 %v4337
        %v4466 = vunpack.c.l.b16 %v4338
        %v4467 = vunpack.c.l.b16 %v4339
        %v4468 = vunpack.c.l.b16 %v4340
        %v4469 = vunpack.c.l.b16 %v4341
        %v4470 = vunpack.c.l.b16 %v4342
        %v4471 = vunpack.c.l.b16 %v4343
        %v4472 = vunpack.c.l.b16 %v4344
        %v4473 = vunpack.c.l.b16 %v4345
        %v4474 = vunpack.c.l.b16 %v4346
        %v4475 = vunpack.c.l.b16 %v4347
        %v4476 = vunpack.c.l.b16 %v4348
        %v4477 = vunpack.c.l.b16 %v4349
        %v4478 = vunpack.c.l.b16 %v4350
        %v4479 = vunpack.c.l.b16 %v4351
        %v4480 = vunpack.c.l.b16 %v4352
        %v4481 = vpack.c.b16 %v4418, %v4417
        %v4482 = vpack.c.b16 %v4420, %v4419
        %v4483 = vpack.c.b16 %v4422, %v4421
        %v4484 = vpack.c.b16 %v4424, %v4423
        %v4485 = vpack.c.b16 %v4426, %v4425
        %v4486 = vpack.c.b16 %v4428, %v4427
        %v4487 = vpack.c.b16 %v4430, %v4429
        %v4488 = vpack.c.b16 %v4432, %v4431
        %v4489 = vpack.c.b16 %v4434, %v4433
        %v4490 = vpack.c.b16 %v4436, %v4435
        %v4491 = vpack.c.b16 %v4438, %v4437
        %v4492 = vpack.c.b16 %v4440, %v4439
        %v4493 = vpack.c.b16 %v4442, %v4441
        %v4494 = vpack.c.b16 %v4444, %v4443
        %v4495 = vpack.c.b16 %v4446, %v4445
        %v4496 = vpack.c.b16 %v4448, %v4447
        %v4497 = vpack.c.b16 %v4450, %v4449
        %v4498 = vpack.c.b16 %v4452, %v4451
        %v4499 = vpack.c.b16 %v4454, %v4453
        %v4500 = vpack.c.b16 %v4456, %v4455
        %v4501 = vpack.c.b16 %v4458, %v4457
        %v4502 = vpack.c.b16 %v4460, %v4459
        %v4503 = vpack.c.b16 %v4462, %v4461
        %v4504 = vpack.c.b16 %v4464, %v4463
        %v4505 = vpack.c.b16 %v4466, %v4465
        %v4506 = vpack.c.b16 %v4468, %v4467
        %v4507 = vpack.c.b16 %v4470, %v4469
        %v4508 = vpack.c.b16 %v4472, %v4471
        %v4509 = vpack.c.b16 %v4474, %v4473
        %v4510 = vpack.c.b16 %v4476, %v4475
        %v4511 = vpack.c.b16 %v4478, %v4477
        %v4512 = vpack.c.b16 %v4480, %v4479
        %4545 = vmatprep.subr.bf16.mxu0 0
        %4546 = vmatpush1.bf16.msra.mxu0 %v4488
        %4547 = vmatprep.subr.bf16.mxu0 0
        %4548 = vmatpush1.bf16.msra.mxu0 %v4487
        %4549 = vmatprep.subr.bf16.mxu0 0
        %4550 = vmatpush1.bf16.msra.mxu0 %v4486
        %4551 = vmatprep.subr.bf16.mxu0 0
        %4552 = vmatpush1.bf16.msra.mxu0 %v4485
        %4553 = vmatprep.subr.bf16.mxu0 0
        %4554 = vmatpush1.bf16.msra.mxu0 %v4484
        %4555 = vmatprep.subr.bf16.mxu0 0
        %4556 = vmatpush1.bf16.msra.mxu0 %v4483
        %4557 = vmatprep.subr.bf16.mxu0 0
        %4558 = vmatpush1.bf16.msra.mxu0 %v4482
        %4559 = vmatprep.subr.bf16.mxu0 0
        %4560 = vmatpush1.bf16.msra.mxu0 %v4481
        %4561 = vmatprep.subr.bf16.mxu0 0
        %4562 = vmatpush2.bf16.msra.mxu0 %v4496
        %4563 = vmatprep.subr.bf16.mxu0 0
        %4564 = vmatpush2.bf16.msra.mxu0 %v4495
        %4565 = vmatprep.subr.bf16.mxu0 0
        %4566 = vmatpush2.bf16.msra.mxu0 %v4494
        %4567 = vmatprep.subr.bf16.mxu0 0
        %4568 = vmatpush2.bf16.msra.mxu0 %v4493
        %4569 = vmatprep.subr.bf16.mxu0 0
        %4570 = vmatpush2.bf16.msra.mxu0 %v4492
        %4571 = vmatprep.subr.bf16.mxu0 0
        %4572 = vmatpush2.bf16.msra.mxu0 %v4491
        %4573 = vmatprep.subr.bf16.mxu0 0
        %4574 = vmatpush2.bf16.msra.mxu0 %v4490
        %4575 = vmatprep.subr.bf16.mxu0 0
        %4576 = vmatpush2.bf16.msra.mxu0 %v4489
        %4577 = vmatprep.mubr.bf16.mxu0 %v4262
        %4578 = vmatmul.mubr.bf16.gmra.mxu0 %v4261
        %v4579 = vpop.f32.mrf.mxu0
        %v4580 = vadd.f32 0.0, %v4579
        %v4581 = vpop.f32.mrf.mxu0
        %v4582 = vpop.f32.mrf.mxu0
        %v4583 = vadd.f32 0.0, %v4582
        %v4584 = vpop.f32.mrf.mxu0
        %4585 = vmatprep.mubr.bf16.mxu0 %v4266
        %4586 = vmatmul.mubr.bf16.gmra.mxu0 %v4265
        %v4587 = vpop.f32.mrf.mxu0
        %v4588 = vadd.f32 0.0, %v4587
        %v4589 = vpop.f32.mrf.mxu0
        %v4590 = vpop.f32.mrf.mxu0
        %v4591 = vadd.f32 0.0, %v4590
        %v4592 = vpop.f32.mrf.mxu0
        %4593 = vmatprep.mubr.bf16.mxu0 %v4270
        %4594 = vmatmul.mubr.bf16.gmra.mxu0 %v4269
        %v4595 = vpop.f32.mrf.mxu0
        %v4596 = vadd.f32 0.0, %v4595
        %v4597 = vpop.f32.mrf.mxu0
        %v4598 = vpop.f32.mrf.mxu0
        %v4599 = vadd.f32 0.0, %v4598
        %v4600 = vpop.f32.mrf.mxu0
        %4601 = vmatprep.mubr.bf16.mxu0 %v4274
        %4602 = vmatmul.mubr.bf16.gmra.mxu0 %v4273
        %v4603 = vpop.f32.mrf.mxu0
        %v4604 = vadd.f32 0.0, %v4603
        %v4605 = vpop.f32.mrf.mxu0
        %v4606 = vpop.f32.mrf.mxu0
        %v4607 = vadd.f32 0.0, %v4606
        %v4608 = vpop.f32.mrf.mxu0
        %4609 = vmatprep.mubr.bf16.mxu0 %v4278
        %4610 = vmatmul.mubr.bf16.gmra.mxu0 %v4277
        %v4611 = vpop.f32.mrf.mxu0
        %v4612 = vadd.f32 0.0, %v4611
        %v4613 = vpop.f32.mrf.mxu0
        %v4614 = vpop.f32.mrf.mxu0
        %v4615 = vadd.f32 0.0, %v4614
        %v4616 = vpop.f32.mrf.mxu0
        %4617 = vmatprep.mubr.bf16.mxu0 %v4282
        %4618 = vmatmul.mubr.bf16.gmra.mxu0 %v4281
        %v4619 = vpop.f32.mrf.mxu0
        %v4620 = vadd.f32 0.0, %v4619
        %v4621 = vpop.f32.mrf.mxu0
        %v4622 = vpop.f32.mrf.mxu0
        %v4623 = vadd.f32 0.0, %v4622
        %v4624 = vpop.f32.mrf.mxu0
        %4625 = vmatprep.mubr.bf16.mxu0 %v4286
        %4626 = vmatmul.mubr.bf16.gmra.mxu0 %v4285
        %v4627 = vpop.f32.mrf.mxu0
        %v4628 = vadd.f32 0.0, %v4627
        %v4629 = vpop.f32.mrf.mxu0
        %v4630 = vpop.f32.mrf.mxu0
        %v4631 = vpop.f32.mrf.mxu0
        %4632 = vdwg.mxu0
        %4633 = vmatprep.subr.bf16.mxu0 0
        %4634 = vmatpush1.bf16.msra.mxu0 %v4504
        %4635 = vmatprep.subr.bf16.mxu0 0
        %4636 = vmatpush1.bf16.msra.mxu0 %v4503
        %4637 = vmatprep.subr.bf16.mxu0 0
        %4638 = vmatpush1.bf16.msra.mxu0 %v4502
        %4639 = vmatprep.subr.bf16.mxu0 0
        %4640 = vmatpush1.bf16.msra.mxu0 %v4501
        %4641 = vmatprep.subr.bf16.mxu0 0
        %4642 = vmatpush1.bf16.msra.mxu0 %v4500
        %4643 = vmatprep.subr.bf16.mxu0 0
        %4644 = vmatpush1.bf16.msra.mxu0 %v4499
        %4645 = vmatprep.subr.bf16.mxu0 0
        %4646 = vmatpush1.bf16.msra.mxu0 %v4498
        %4647 = vmatprep.subr.bf16.mxu0 0
        %4648 = vmatpush1.bf16.msra.mxu0 %v4497
        %4649 = vmatprep.subr.bf16.mxu0 0
        %4650 = vmatpush2.bf16.msra.mxu0 %v4512
        %4651 = vmatprep.subr.bf16.mxu0 0
        %4652 = vmatpush2.bf16.msra.mxu0 %v4511
        %4653 = vmatprep.subr.bf16.mxu0 0
        %4654 = vmatpush2.bf16.msra.mxu0 %v4510
        %4655 = vmatprep.subr.bf16.mxu0 0
        %4656 = vmatpush2.bf16.msra.mxu0 %v4509
        %4657 = vmatprep.subr.bf16.mxu0 0
        %4658 = vmatpush2.bf16.msra.mxu0 %v4508
        %4659 = vmatprep.subr.bf16.mxu0 0
        %4660 = vmatpush2.bf16.msra.mxu0 %v4507
        %4661 = vmatprep.subr.bf16.mxu0 0
        %4662 = vmatpush2.bf16.msra.mxu0 %v4506
        %4663 = vmatprep.subr.bf16.mxu0 0
        %4664 = vmatpush2.bf16.msra.mxu0 %v4505
        %4665 = vmatprep.mubr.bf16.mxu0 %v4264
        %4666 = vmatmul.mubr.bf16.gmra.mxu0 %v4263
        %v4667 = vpop.f32.mrf.mxu0
        %v4668 = vadd.f32 %v4580, %v4667
        %v4669 = vpop.f32.mrf.mxu0
        %v4670 = vpop.f32.mrf.mxu0
        %v4671 = vadd.f32 %v4583, %v4670
        %v4672 = vpop.f32.mrf.mxu0
        %4673 = vmatprep.mubr.bf16.mxu0 %v4268
        %4674 = vmatmul.mubr.bf16.gmra.mxu0 %v4267
        %v4675 = vpop.f32.mrf.mxu0
        %v4676 = vadd.f32 %v4588, %v4675
        %v4677 = vpop.f32.mrf.mxu0
        %v4678 = vpop.f32.mrf.mxu0
        %v4679 = vadd.f32 %v4591, %v4678
        %v4680 = vpop.f32.mrf.mxu0
        %4681 = vmatprep.mubr.bf16.mxu0 %v4272
        %4682 = vmatmul.mubr.bf16.gmra.mxu0 %v4271
        %v4683 = vpop.f32.mrf.mxu0
        %v4684 = vadd.f32 %v4596, %v4683
        %v4685 = vpop.f32.mrf.mxu0
        %v4686 = vpop.f32.mrf.mxu0
        %v4687 = vadd.f32 %v4599, %v4686
        %v4688 = vpop.f32.mrf.mxu0
        %4689 = vmatprep.mubr.bf16.mxu0 %v4276
        %4690 = vmatmul.mubr.bf16.gmra.mxu0 %v4275
        %v4691 = vpop.f32.mrf.mxu0
        %v4692 = vadd.f32 %v4604, %v4691
        %v4693 = vpop.f32.mrf.mxu0
        %v4694 = vpop.f32.mrf.mxu0
        %v4695 = vadd.f32 %v4607, %v4694
        %v4696 = vpop.f32.mrf.mxu0
        %4697 = vmatprep.mubr.bf16.mxu0 %v4280
        %4698 = vmatmul.mubr.bf16.gmra.mxu0 %v4279
        %v4699 = vpop.f32.mrf.mxu0
        %v4700 = vadd.f32 %v4612, %v4699
        %v4701 = vpop.f32.mrf.mxu0
        %v4702 = vpop.f32.mrf.mxu0
        %v4703 = vadd.f32 %v4615, %v4702
        %v4704 = vpop.f32.mrf.mxu0
        %4705 = vmatprep.mubr.bf16.mxu0 %v4284
        %4706 = vmatmul.mubr.bf16.gmra.mxu0 %v4283
        %v4707 = vpop.f32.mrf.mxu0
        %v4708 = vadd.f32 %v4620, %v4707
        %v4709 = vpop.f32.mrf.mxu0
        %v4710 = vpop.f32.mrf.mxu0
        %v4711 = vadd.f32 %v4623, %v4710
        %v4712 = vpop.f32.mrf.mxu0
        %4713 = vmatprep.mubr.bf16.mxu0 %v4288
        %4714 = vmatmul.mubr.bf16.gmra.mxu0 %v4287
        %v4715 = vpop.f32.mrf.mxu0
        %v4716 = vadd.f32 %v4628, %v4715
        %v4717 = vpop.f32.mrf.mxu0
        %v4718 = vpop.f32.mrf.mxu0
        %v4719 = vpop.f32.mrf.mxu0
        %4720 = vdwg.mxu0
        %v4721 = vadd.f32 %v4248, %v4668
        %v4722 = vadd.f32 %v4249, %v4671
        %v4723 = vadd.f32 %v4250, %v4676
        %v4724 = vadd.f32 %v4251, %v4679
        %v4725 = vadd.f32 %v4252, %v4684
        %v4726 = vadd.f32 %v4253, %v4687
        %v4727 = vadd.f32 %v4254, %v4692
        %v4728 = vadd.f32 %v4255, %v4695
        %v4729 = vadd.f32 %v4256, %v4700
        %v4730 = vadd.f32 %v4257, %v4703
        %v4731 = vadd.f32 %v4258, %v4708
        %v4732 = vadd.f32 %v4259, %v4711
        %v4733 = vadd.f32 %v4260, %v4716
        %4734 = vst.msk [vmem:[#allocation3] sm:$0xff] %vm3972, %v4721
        %4735 = vst.msk [vmem:[#allocation3 + $0x8] sm:$0xff] %vm3972, %v4722
        %4736 = vst.msk [vmem:[#allocation3 + $0x10] sm:$0xff] %vm3972, %v4723
        %4737 = vst.msk [vmem:[#allocation3 + $0x18] sm:$0xff] %vm3972, %v4724
        %4738 = vst.msk [vmem:[#allocation3 + $0x20] sm:$0xff] %vm3972, %v4725
        %4739 = vst.msk [vmem:[#allocation3 + $0x28] sm:$0xff] %vm3972, %v4726
        %4740 = vst.msk [vmem:[#allocation3 + $0x30] sm:$0xff] %vm3972, %v4727
        %4741 = vst.msk [vmem:[#allocation3 + $0x38] sm:$0xff] %vm3972, %v4728
        %4742 = vst.msk [vmem:[#allocation3 + $0x40] sm:$0xff] %vm3972, %v4729
        %4743 = vst.msk [vmem:[#allocation3 + $0x48] sm:$0xff] %vm3972, %v4730
        %4744 = vst.msk [vmem:[#allocation3 + $0x50] sm:$0xff] %vm3972, %v4731
        %4745 = vst.msk [vmem:[#allocation3 + $0x58] sm:$0xff] %vm3972, %v4732
        %vm4746 = vcmask 519168
        %4747 = vst.msk [vmem:[#allocation3 + $0x60] sm:$0xf] %vm4746, %v4733
        %p4748 = scmp.eq.s32.totalorder %s33, 3
        // Predicated region
        $region136: #{detr_forward.8} parent=126 // pred_check
          %p4749 = pneg %p4748
        $region137: #{detr_forward.8} parent=126 // pred_check_branch
          %4751 = sbr.rel (%p4749) target = $region139
        $region138: #{detr_forward.8} parent=126 // pred_region
          %v4752 = vld [vmem:[#allocation2] sm:$0xff]
          %v4753 = vld [vmem:[#allocation2 + $0x8] sm:$0xff]
          %v4754 = vld [vmem:[#allocation2 + $0x10] sm:$0xff]
          %v4755 = vld [vmem:[#allocation2 + $0x18] sm:$0xff]
          %v4756 = vld [vmem:[#allocation2 + $0x20] sm:$0xff]
          %v4757 = vld [vmem:[#allocation2 + $0x28] sm:$0xff]
          %v4758 = vld [vmem:[#allocation2 + $0x30] sm:$0xff]
          %v4759 = vld [vmem:[#allocation2 + $0x38] sm:$0xff]
          %v4760 = vld [vmem:[#allocation2 + $0x40] sm:$0xff]
          %v4761 = vld [vmem:[#allocation2 + $0x48] sm:$0xff]
          %v4762 = vld [vmem:[#allocation2 + $0x50] sm:$0xff]
          %v4763 = vld [vmem:[#allocation2 + $0x58] sm:$0xff]
          %v4764 = vld [vmem:[#allocation2 + $0x60] sm:$0xf]
          %v4765 = vld [vmem:[#allocation3] sm:$0xff]
          %v4766 = vld [vmem:[#allocation3 + $0x8] sm:$0xff]
          %v4767 = vld [vmem:[#allocation3 + $0x10] sm:$0xff]
          %v4768 = vld [vmem:[#allocation3 + $0x18] sm:$0xff]
          %v4769 = vld [vmem:[#allocation3 + $0x20] sm:$0xff]
          %v4770 = vld [vmem:[#allocation3 + $0x28] sm:$0xff]
          %v4771 = vld [vmem:[#allocation3 + $0x30] sm:$0xff]
          %v4772 = vld [vmem:[#allocation3 + $0x38] sm:$0xff]
          %v4773 = vld [vmem:[#allocation3 + $0x40] sm:$0xff]
          %v4774 = vld [vmem:[#allocation3 + $0x48] sm:$0xff]
          %v4775 = vld [vmem:[#allocation3 + $0x50] sm:$0xff]
          %v4776 = vld [vmem:[#allocation3 + $0x58] sm:$0xff]
          %v4777 = vld [vmem:[#allocation3 + $0x60] sm:$0xf]
          %v4778 = vadd.f32 %v4752, %v4765
          %v4779 = vadd.f32 %v4753, %v4766
          %v4780 = vadd.f32 %v4754, %v4767
          %v4781 = vadd.f32 %v4755, %v4768
          %v4782 = vadd.f32 %v4756, %v4769
          %v4783 = vadd.f32 %v4757, %v4770
          %v4784 = vadd.f32 %v4758, %v4771
          %v4785 = vadd.f32 %v4759, %v4772
          %v4786 = vadd.f32 %v4760, %v4773
          %v4787 = vadd.f32 %v4761, %v4774
          %v4788 = vadd.f32 %v4762, %v4775
          %v4789 = vadd.f32 %v4763, %v4776
          %v4790 = vadd.f32 %v4764, %v4777
          %v4791 = vld [vmem:[%s19] sm:$0x1]
          %v4793 = vlaneseq
          %v4794 = vshrl.u32 %v4793, 7
          %v4795 = vsub.s32 0, %v4794
          %v4796 = vrot.slane %v4791, %v4795
          %v4798 = vadd.f32 %v4778, %v4796
          %v4799 = vadd.f32 %v4779, %v4796
          %v4800 = vadd.f32 %v4780, %v4796
          %v4801 = vadd.f32 %v4781, %v4796
          %v4802 = vadd.f32 %v4782, %v4796
          %v4803 = vadd.f32 %v4783, %v4796
          %v4804 = vadd.f32 %v4784, %v4796
          %v4805 = vadd.f32 %v4785, %v4796
          %v4806 = vadd.f32 %v4786, %v4796
          %v4807 = vadd.f32 %v4787, %v4796
          %v4808 = vadd.f32 %v4788, %v4796
          %v4809 = vadd.f32 %v4789, %v4796
          %v4810 = vadd.f32 %v4790, %v4796
          %v4811 = vld [vmem:[%s20] sm:$0x1]
          %v4812 = vld [vmem:[%s21] sm:$0x1]
          %v4813 = vsel %vm3972, %v4798, 0.0
          %4814 = vadd.xlane.f32.xlu0 %v4813
          %v4815 = vpop.xlane.xlu0 %4814
          %v4816 = vsel %vm3972, %v4799, 0.0
          %4817 = vadd.xlane.f32.xlu0 %v4816
          %v4818 = vpop.xlane.xlu0 %4817
          %v4819 = vsel %vm3972, %v4800, 0.0
          %4820 = vadd.xlane.f32.xlu0 %v4819
          %v4821 = vpop.xlane.xlu0 %4820
          %v4822 = vsel %vm3972, %v4801, 0.0
          %4823 = vadd.xlane.f32.xlu0 %v4822
          %v4824 = vpop.xlane.xlu0 %4823
          %v4825 = vsel %vm3972, %v4802, 0.0
          %4826 = vadd.xlane.f32.xlu0 %v4825
          %v4827 = vpop.xlane.xlu0 %4826
          %v4828 = vsel %vm3972, %v4803, 0.0
          %4829 = vadd.xlane.f32.xlu0 %v4828
          %v4830 = vpop.xlane.xlu0 %4829
          %v4831 = vsel %vm3972, %v4804, 0.0
          %4832 = vadd.xlane.f32.xlu0 %v4831
          %v4833 = vpop.xlane.xlu0 %4832
          %v4834 = vsel %vm3972, %v4805, 0.0
          %4835 = vadd.xlane.f32.xlu0 %v4834
          %v4836 = vpop.xlane.xlu0 %4835
          %v4837 = vsel %vm3972, %v4806, 0.0
          %4838 = vadd.xlane.f32.xlu0 %v4837
          %v4839 = vpop.xlane.xlu0 %4838
          %v4840 = vsel %vm3972, %v4807, 0.0
          %4841 = vadd.xlane.f32.xlu0 %v4840
          %v4842 = vpop.xlane.xlu0 %4841
          %v4843 = vsel %vm3972, %v4808, 0.0
          %4844 = vadd.xlane.f32.xlu0 %v4843
          %v4845 = vpop.xlane.xlu0 %4844
          %v4846 = vsel %vm3972, %v4809, 0.0
          %4847 = vadd.xlane.f32.xlu0 %v4846
          %v4848 = vpop.xlane.xlu0 %4847
          %v4849 = vsel %vm4746, %v4810, 0.0
          %4850 = vadd.xlane.f32.xlu0 %v4849
          %v4851 = vpop.xlane.xlu0 %4850
          %v4852 = vrcp.pop 64.0
          %v4853 = vmul.f32 %v4815, %v4852
          %v4854 = vmul.f32 %v4818, %v4852
          %v4855 = vmul.f32 %v4821, %v4852
          %v4856 = vmul.f32 %v4824, %v4852
          %v4857 = vmul.f32 %v4827, %v4852
          %v4858 = vmul.f32 %v4830, %v4852
          %v4859 = vmul.f32 %v4833, %v4852
          %v4860 = vmul.f32 %v4836, %v4852
          %v4861 = vmul.f32 %v4839, %v4852
          %v4862 = vmul.f32 %v4842, %v4852
          %v4863 = vmul.f32 %v4845, %v4852
          %v4864 = vmul.f32 %v4848, %v4852
          %v4865 = vmul.f32 %v4851, %v4852
          %v4866 = vsub.f32 %v4798, %v4853
          %v4867 = vsub.f32 %v4799, %v4854
          %v4868 = vsub.f32 %v4800, %v4855
          %v4869 = vsub.f32 %v4801, %v4856
          %v4870 = vsub.f32 %v4802, %v4857
          %v4871 = vsub.f32 %v4803, %v4858
          %v4872 = vsub.f32 %v4804, %v4859
          %v4873 = vsub.f32 %v4805, %v4860
          %v4874 = vsub.f32 %v4806, %v4861
          %v4875 = vsub.f32 %v4807, %v4862
          %v4876 = vsub.f32 %v4808, %v4863
          %v4877 = vsub.f32 %v4809, %v4864
          %v4878 = vsub.f32 %v4810, %v4865
          %v4879 = vmul.f32 %v4866, %v4866
          %v4880 = vmul.f32 %v4867, %v4867
          %v4881 = vmul.f32 %v4868, %v4868
          %v4882 = vmul.f32 %v4869, %v4869
          %v4883 = vmul.f32 %v4870, %v4870
          %v4884 = vmul.f32 %v4871, %v4871
          %v4885 = vmul.f32 %v4872, %v4872
          %v4886 = vmul.f32 %v4873, %v4873
          %v4887 = vmul.f32 %v4874, %v4874
          %v4888 = vmul.f32 %v4875, %v4875
          %v4889 = vmul.f32 %v4876, %v4876
          %v4890 = vmul.f32 %v4877, %v4877
          %v4891 = vmul.f32 %v4878, %v4878
          %v4892 = vsel %vm3972, %v4879, 0.0
          %4893 = vadd.xlane.f32.xlu0 %v4892
          %v4894 = vpop.xlane.xlu0 %4893
          %v4895 = vsel %vm3972, %v4880, 0.0
          %4896 = vadd.xlane.f32.xlu0 %v4895
          %v4897 = vpop.xlane.xlu0 %4896
          %v4898 = vsel %vm3972, %v4881, 0.0
          %4899 = vadd.xlane.f32.xlu0 %v4898
          %v4900 = vpop.xlane.xlu0 %4899
          %v4901 = vsel %vm3972, %v4882, 0.0
          %4902 = vadd.xlane.f32.xlu0 %v4901
          %v4903 = vpop.xlane.xlu0 %4902
          %v4904 = vsel %vm3972, %v4883, 0.0
          %4905 = vadd.xlane.f32.xlu0 %v4904
          %v4906 = vpop.xlane.xlu0 %4905
          %v4907 = vsel %vm3972, %v4884, 0.0
          %4908 = vadd.xlane.f32.xlu0 %v4907
          %v4909 = vpop.xlane.xlu0 %4908
          %v4910 = vsel %vm3972, %v4885, 0.0
          %4911 = vadd.xlane.f32.xlu0 %v4910
          %v4912 = vpop.xlane.xlu0 %4911
          %v4913 = vsel %vm3972, %v4886, 0.0
          %4914 = vadd.xlane.f32.xlu0 %v4913
          %v4915 = vpop.xlane.xlu0 %4914
          %v4916 = vsel %vm3972, %v4887, 0.0
          %4917 = vadd.xlane.f32.xlu0 %v4916
          %v4918 = vpop.xlane.xlu0 %4917
          %v4919 = vsel %vm3972, %v4888, 0.0
          %4920 = vadd.xlane.f32.xlu0 %v4919
          %v4921 = vpop.xlane.xlu0 %4920
          %v4922 = vsel %vm3972, %v4889, 0.0
          %4923 = vadd.xlane.f32.xlu0 %v4922
          %v4924 = vpop.xlane.xlu0 %4923
          %v4925 = vsel %vm3972, %v4890, 0.0
          %4926 = vadd.xlane.f32.xlu0 %v4925
          %v4927 = vpop.xlane.xlu0 %4926
          %v4928 = vsel %vm4746, %v4891, 0.0
          %4929 = vadd.xlane.f32.xlu0 %v4928
          %v4930 = vpop.xlane.xlu0 %4929
          %v4931 = vmul.f32 %v4894, %v4852
          %v4932 = vmul.f32 %v4897, %v4852
          %v4933 = vmul.f32 %v4900, %v4852
          %v4934 = vmul.f32 %v4903, %v4852
          %v4935 = vmul.f32 %v4906, %v4852
          %v4936 = vmul.f32 %v4909, %v4852
          %v4937 = vmul.f32 %v4912, %v4852
          %v4938 = vmul.f32 %v4915, %v4852
          %v4939 = vmul.f32 %v4918, %v4852
          %v4940 = vmul.f32 %v4921, %v4852
          %v4941 = vmul.f32 %v4924, %v4852
          %v4942 = vmul.f32 %v4927, %v4852
          %v4943 = vmul.f32 %v4930, %v4852
          %v4944 = vadd.f32 %v4931, 1e-05
          %v4945 = vadd.f32 %v4932, 1e-05
          %v4946 = vadd.f32 %v4933, 1e-05
          %v4947 = vadd.f32 %v4934, 1e-05
          %v4948 = vadd.f32 %v4935, 1e-05
          %v4949 = vadd.f32 %v4936, 1e-05
          %v4950 = vadd.f32 %v4937, 1e-05
          %v4951 = vadd.f32 %v4938, 1e-05
          %v4952 = vadd.f32 %v4939, 1e-05
          %v4953 = vadd.f32 %v4940, 1e-05
          %v4954 = vadd.f32 %v4941, 1e-05
          %v4955 = vadd.f32 %v4942, 1e-05
          %v4956 = vadd.f32 %v4943, 1e-05
          %v4957 = vrsqrt.pop %v4944
          %v4958 = vrsqrt.pop %v4945
          %v4959 = vrsqrt.pop %v4946
          %v4960 = vrsqrt.pop %v4947
          %v4961 = vrsqrt.pop %v4948
          %v4962 = vrsqrt.pop %v4949
          %v4963 = vrsqrt.pop %v4950
          %v4964 = vrsqrt.pop %v4951
          %v4965 = vrsqrt.pop %v4952
          %v4966 = vrsqrt.pop %v4953
          %v4967 = vrsqrt.pop %v4954
          %v4968 = vrsqrt.pop %v4955
          %v4969 = vrsqrt.pop %v4956
          %v4970 = vmul.f32 %v4866, %v4957
          %v4971 = vmul.f32 %v4867, %v4958
          %v4972 = vmul.f32 %v4868, %v4959
          %v4973 = vmul.f32 %v4869, %v4960
          %v4974 = vmul.f32 %v4870, %v4961
          %v4975 = vmul.f32 %v4871, %v4962
          %v4976 = vmul.f32 %v4872, %v4963
          %v4977 = vmul.f32 %v4873, %v4964
          %v4978 = vmul.f32 %v4874, %v4965
          %v4979 = vmul.f32 %v4875, %v4966
          %v4980 = vmul.f32 %v4876, %v4967
          %v4981 = vmul.f32 %v4877, %v4968
          %v4982 = vmul.f32 %v4878, %v4969
          %v4984 = vlaneseq
          %v4985 = vshrl.u32 %v4984, 7
          %v4986 = vsub.s32 0, %v4985
          %v4987 = vrot.slane %v4811, %v4986
          %v4989 = vmul.f32 %v4970, %v4987
          %v4990 = vmul.f32 %v4971, %v4987
          %v4991 = vmul.f32 %v4972, %v4987
          %v4992 = vmul.f32 %v4973, %v4987
          %v4993 = vmul.f32 %v4974, %v4987
          %v4994 = vmul.f32 %v4975, %v4987
          %v4995 = vmul.f32 %v4976, %v4987
          %v4996 = vmul.f32 %v4977, %v4987
          %v4997 = vmul.f32 %v4978, %v4987
          %v4998 = vmul.f32 %v4979, %v4987
          %v4999 = vmul.f32 %v4980, %v4987
          %v5000 = vmul.f32 %v4981, %v4987
          %v5001 = vmul.f32 %v4982, %v4987
          %v5003 = vlaneseq
          %v5004 = vshrl.u32 %v5003, 7
          %v5005 = vsub.s32 0, %v5004
          %v5006 = vrot.slane %v4812, %v5005
          %v5008 = vadd.f32 %v4989, %v5006
          %v5009 = vadd.f32 %v4990, %v5006
          %v5010 = vadd.f32 %v4991, %v5006
          %v5011 = vadd.f32 %v4992, %v5006
          %v5012 = vadd.f32 %v4993, %v5006
          %v5013 = vadd.f32 %v4994, %v5006
          %v5014 = vadd.f32 %v4995, %v5006
          %v5015 = vadd.f32 %v4996, %v5006
          %v5016 = vadd.f32 %v4997, %v5006
          %v5017 = vadd.f32 %v4998, %v5006
          %v5018 = vadd.f32 %v4999, %v5006
          %v5019 = vadd.f32 %v5000, %v5006
          %v5020 = vadd.f32 %v5001, %v5006
          %5021 = vst.msk [vmem:[%s22] sm:$0xff] %vm3972, %v5008
          %5022 = vst.msk [vmem:[%s22 + $0x8] sm:$0xff] %vm3972, %v5009
          %5023 = vst.msk [vmem:[%s22 + $0x10] sm:$0xff] %vm3972, %v5010
          %5024 = vst.msk [vmem:[%s22 + $0x18] sm:$0xff] %vm3972, %v5011
          %5025 = vst.msk [vmem:[%s22 + $0x20] sm:$0xff] %vm3972, %v5012
          %5026 = vst.msk [vmem:[%s22 + $0x28] sm:$0xff] %vm3972, %v5013
          %5027 = vst.msk [vmem:[%s22 + $0x30] sm:$0xff] %vm3972, %v5014
          %5028 = vst.msk [vmem:[%s22 + $0x38] sm:$0xff] %vm3972, %v5015
          %5029 = vst.msk [vmem:[%s22 + $0x40] sm:$0xff] %vm3972, %v5016
          %5030 = vst.msk [vmem:[%s22 + $0x48] sm:$0xff] %vm3972, %v5017
          %5031 = vst.msk [vmem:[%s22 + $0x50] sm:$0xff] %vm3972, %v5018
          %5032 = vst.msk [vmem:[%s22 + $0x58] sm:$0xff] %vm3972, %v5019
          %5033 = vst.msk [vmem:[%s22 + $0x60] sm:$0xf] %vm4746, %v5020
        $region139: #{detr_forward.8} parent=126 // pred_fallthru
          _
        // Predicated region
        $region140: #{detr_forward.8} parent=126 // pred_check
          %p5034 = pneg %p523
        $region141: #{detr_forward.8} parent=126 // pred_check_branch
          %5036 = sbr.rel (%p5034) target = $region143
        $region142: #{detr_forward.8} parent=126 // pred_region
          _
        $region143: #{detr_forward.8} parent=126 // pred_fallthru
          _
        // Predicated region
        $region144: #{detr_forward.8} parent=126 // pred_check
          %p5037 = pneg %p523
        $region145: #{detr_forward.8} parent=126 // pred_check_branch
          %5039 = sbr.rel (%p5037) target = $region147
        $region146: #{detr_forward.8} parent=126 // pred_region
          _
        $region147: #{detr_forward.8} parent=126 // pred_fallthru
          _
      $region127: #{detr_forward.8} parent=5 // pred_fallthru
        _
      %p5040 = scmp.le.s32.totalorder 2, %s28
      // Predicated region
      $region148: #{detr_forward.8} parent=5 // pred_check
        %p5041 = pneg %p5040
      $region149: #{detr_forward.8} parent=5 // pred_check_branch
        %5043 = sbr.rel (%p5041) target = $region151
      $region150: #{detr_forward.8} parent=5 // pred_region
        %s5044 = ssub.s32 %s28, 2
      $region151: #{detr_forward.8} parent=5 // pred_fallthru
        _
    $region6: #{detr_forward.8} parent=1 // loop_footer
      %s32 = sadd.s32 1, %s28
    $region7: #{detr_forward.8} parent=1 // loop_footer_branch
      %27 = sbr.rel target = $region3
    $region8: #{detr_forward.8} parent=1 // loop_exit
      _

</llo_original>
